<compile_context>
chip_gen: v6e
topology: v6e:2x2x1
jax: 0.10.0
libtpu: 0.0.40
codegen_flags: <defaults>
</compile_context>

<pallas_src>
import functools
import math

import jax
import jax.numpy as jnp
from jax import lax
from jax.experimental import pallas as pl
from jax.experimental.pallas import tpu as pltpu


def _gelu_exact(x):
    # exact (erf-based) GELU, matching torch.nn.GELU() default
    return 0.5 * x * (1.0 + lax.erf(x * (1.0 / math.sqrt(2.0))))


def _gelu_tanh(x):
    # tanh-approximate GELU: the tanh lands on the otherwise-idle EUP slot.
    return jax.nn.gelu(x, approximate=True)


def _round_up(a, m):
    return (a + m - 1) // m * m


def _tensorcores_per_chip():
    # v7x has 2 TensorCores per chip; v5e/v6e have 1.  Heuristic only
    # (affects performance, never correctness).
    try:
        kind = str(jax.devices()[0].device_kind).lower()
        if "7" in kind:
            return 2
    except Exception:
        pass
    return 1


def pointnet_kernel(x_ref, w1_ref, b1_ref, w2_ref, b2_ref, w3_ref, b3_ref,
                    w4_ref, b4_ref, o_ref, acc_ref, *,
                    blocks_per_chunk, compute_dtype, exact_gelu, l1_on_vpu):
    n = pl.program_id(2)      # reduction axis over point tiles ("arbitrary")

    @pl.when(n == 0)
    def _():
        acc_ref[...] = jnp.full(acc_ref.shape, -jnp.inf, acc_ref.dtype)

    gelu = _gelu_exact if exact_gelu else _gelu_tanh

    x = x_ref[...]                                   # (tile_n, Cin), compute dtype

    if l1_on_vpu:
        # K=Cin (tiny) first layer as broadcast FMAs on the VPU, f32 accumulate.
        h = b1_ref[...]                              # (1, 64) f32, broadcasts
        for c in range(x.shape[-1]):
            h = h + (x[:, c:c + 1].astype(jnp.float32)
                     * w1_ref[c:c + 1, :].astype(jnp.float32))
    else:
        h = jnp.dot(x, w1_ref[...],
                    preferred_element_type=jnp.float32) + b1_ref[...]
    h = gelu(h).astype(compute_dtype)                # (tile_n, 64)

    def layer(v, w_ref, b_ref):
        # MXU matmul in compute dtype, f32 accumulate, bias add in f32.
        return jnp.dot(v, w_ref[...],
                       preferred_element_type=jnp.float32) + b_ref[...]

    h = gelu(layer(h, w2_ref, b2_ref)).astype(compute_dtype)   # (tile_n, 64)
    h = gelu(layer(h, w3_ref, b3_ref)).astype(compute_dtype)   # (tile_n, 128)
    h = layer(h, w4_ref, b4_ref)                                # (tile_n, D) f32

    d = h.shape[-1]
    # Per-step: elementwise VPU max folded into the (8, D) running max
    # (no XLU, no masked store in the hot loop).
    acc_ref[...] = jnp.maximum(acc_ref[...],
                               jnp.max(h.reshape(-1, 8, d), axis=0))

    @pl.when(n == blocks_per_chunk - 1)
    def _():
        # sublane- and lane-dense unmasked store; the wrapper does the final
        # 8 -> 1 fold (negligible XLA work).
        o_ref[...] = acc_ref[...]


def init_params(key, point_channel=3, output_dim=256):
    # deterministic synthetic init: ~ trunc_normal(std=0.02) weights, zero biases
    dims = [point_channel, 64, 64, 128, output_dim]
    params = []
    for i in range(4):
        key, k = jax.random.split(key)
        w = jax.random.normal(k, (dims[i], dims[i + 1]), jnp.float32) * 0.02
        b = jnp.zeros((1, dims[i + 1]), jnp.float32)
        params += [w, b]
    return params


def pointnet_medium(x, params, *, tile_n=1024, num_chunks=None,
                    compute_dtype=jnp.bfloat16, exact_gelu=None,
                    l1_on_vpu=False):
    B, N, Cin = x.shape
    D = params[6].shape[1]

    if exact_gelu is None:
        # exact erf GELU for the f32 path; EUP tanh approximation otherwise.
        exact_gelu = (jnp.dtype(compute_dtype) == jnp.dtype(jnp.float32))

    if num_chunks is None:
        # split the point axis only on 2-TC chips and only when the batch axis
        # cannot feed both cores by itself.
        num_chunks = 2 if (B == 1 and _tensorcores_per_chip() >= 2) else 1

    # tile_n is the primary sweep knob (1024-4096 on realistic point clouds):
    # multiple of 8 sublanes, clamped to the per-chunk problem size.
    per_chunk = -(-N // num_chunks)
    tile_n = max(8, min(_round_up(tile_n, 8), _round_up(per_chunk, 8)))
    blocks_per_chunk = -(-per_chunk // tile_n)
    n_pad = num_chunks * blocks_per_chunk * tile_n

    # pre-cast points to the compute dtype (halves input DMA / VMEM x buffer).
    x = x.astype(compute_dtype)
    if n_pad != N:
        # edge-replicate the last point: duplicates cannot change the max, so
        # no in-kernel masking is needed (bit-identical result).
        x = jnp.pad(x, ((0, 0), (0, n_pad - N), (0, 0)), mode="edge")

    # weights in compute dtype (bf16 -> full-rate MXU on v6e/v7x); biases f32.
    ws = [params[2 * i].astype(compute_dtype) for i in range(4)]
    bs = [params[2 * i + 1].astype(jnp.float32) for i in range(4)]
    flat = [v for pair in zip(ws, bs) for v in pair]

    kernel = functools.partial(
        pointnet_kernel, blocks_per_chunk=blocks_per_chunk,
        compute_dtype=compute_dtype, exact_gelu=exact_gelu,
        l1_on_vpu=l1_on_vpu)

    # VMEM budget: double-buffered lane-padded x block + f32/bf16 layer
    # intermediates; clamp to [32, 48] MiB (safe on v7x's 64 MiB physical,
    # ample headroom on v5e/v6e's 128 MiB).
    vmem_limit = int(min(48 * 2**20, max(32 * 2**20, 4 * 2**20 + tile_n * 4096)))

    bpc = blocks_per_chunk
    out = pl.pallas_call(
        kernel,
        out_shape=jax.ShapeDtypeStruct((num_chunks, B, 8, D), jnp.float32),
        grid_spec=pltpu.PrefetchScalarGridSpec(
            num_scalar_prefetch=0,
            grid=(num_chunks, B, blocks_per_chunk),
            in_specs=[pl.BlockSpec((None, tile_n, Cin),
                                   lambda c, b, n: (b, c * bpc + n, 0))]
                     + [pl.BlockSpec(p.shape, lambda c, b, n: (0, 0))
                        for p in flat],
            out_specs=pl.BlockSpec((None, None, 8, D),
                                   lambda c, b, n: (c, b, 0, 0)),
            scratch_shapes=[pltpu.VMEM((8, D), jnp.float32)],
        ),
        compiler_params=pltpu.CompilerParams(
            dimension_semantics=("parallel", "parallel", "arbitrary"),
            vmem_limit_bytes=vmem_limit),
    )(x, *flat)

    # fold per-chunk (8, D) partial maxes -> [B, D]
    return jnp.max(out, axis=(0, 2))


def ref_forward(x, params):
    w1, b1, w2, b2, w3, b3, w4, b4 = params
    dot = lambda a, b: jnp.dot(a, b, precision=lax.Precision.HIGHEST)
    h = _gelu_exact(dot(x, w1) + b1)
    h = _gelu_exact(dot(h, w2) + b2)
    h = _gelu_exact(dot(h, w3) + b3)
    h = dot(h, w4) + b4
    return jnp.max(h, axis=1)


if __name__ == "__main__":
    key = jax.random.PRNGKey(0)
    k_param, k_x = jax.random.split(key)

    B, N, C, D = 2, 1000, 3, 256     # small point cloud; N non-multiple exercises edge padding
    params = init_params(k_param, point_channel=C, output_dim=D)
    x = jax.random.normal(k_x, (B, N, C), jnp.float32)

    ref = ref_forward(x, params)
    scale = float(jnp.max(jnp.abs(ref)))

    # default path: bf16 MXU, tanh-GELU on EUP, auto num_chunks, tile_n=1024
    out_bf16 = jax.block_until_ready(pointnet_medium(x, params))
    assert out_bf16.shape == (B, D)
    assert float(jnp.max(jnp.abs(out_bf16 - ref))) <= 3e-2 * scale + 1e-6

    # f32 / exact-GELU path with an explicit 2-chunk split and the VPU layer-1
    # option (exercises chunk folding, edge padding, and the alternate layer-1).
    out_f32 = jax.block_until_ready(
        pointnet_medium(x, params, tile_n=512, num_chunks=2,
                        compute_dtype=jnp.float32, l1_on_vpu=True))
    assert out_f32.shape == (B, D)
    assert float(jnp.max(jnp.abs(out_f32 - ref))) <= 1e-2 * scale + 1e-7

    print("KERNEL_OK")
</pallas_src>

<mosaic_0001>
module attributes {stable_mosaic.version = 11 : i64} {
  func.func @pointnet_kernel(%arg0: i32, %arg1: i32, %arg2: i32, %arg3: memref<1x1000x3xbf16, #tpu.memory_space<vmem>>, %arg4: memref<3x64xbf16, #tpu.memory_space<vmem>>, %arg5: memref<1x64xf32, #tpu.memory_space<vmem>>, %arg6: memref<64x64xbf16, #tpu.memory_space<vmem>>, %arg7: memref<1x64xf32, #tpu.memory_space<vmem>>, %arg8: memref<64x128xbf16, #tpu.memory_space<vmem>>, %arg9: memref<1x128xf32, #tpu.memory_space<vmem>>, %arg10: memref<128x256xbf16, #tpu.memory_space<vmem>>, %arg11: memref<1x256xf32, #tpu.memory_space<vmem>>, %arg12: memref<1x1x8x256xf32, #tpu.memory_space<vmem>>, %arg13: memref<8x256xf32, #tpu.memory_space<vmem>>) attributes {dimension_semantics = [#tpu.dimension_semantics<parallel>, #tpu.dimension_semantics<parallel>, #tpu.dimension_semantics<arbitrary>], iteration_bounds = array<i64: 1, 2, 1>, scalar_prefetch = 0 : i64, scratch_operands = 1 : i64, tpu.core_type = #tpu.core_type<tc>, window_params = [{transform_indices = @transform_0, window_bounds = array<i64: 1, 1000, 3>}, {pipeline_mode = #tpu.pipeline_mode<synchronous>, transform_indices = @transform_1, window_bounds = array<i64: 3, 64>}, {pipeline_mode = #tpu.pipeline_mode<synchronous>, transform_indices = @transform_2, window_bounds = array<i64: 1, 64>}, {pipeline_mode = #tpu.pipeline_mode<synchronous>, transform_indices = @transform_3, window_bounds = array<i64: 64, 64>}, {pipeline_mode = #tpu.pipeline_mode<synchronous>, transform_indices = @transform_4, window_bounds = array<i64: 1, 64>}, {pipeline_mode = #tpu.pipeline_mode<synchronous>, transform_indices = @transform_5, window_bounds = array<i64: 64, 128>}, {pipeline_mode = #tpu.pipeline_mode<synchronous>, transform_indices = @transform_6, window_bounds = array<i64: 1, 128>}, {pipeline_mode = #tpu.pipeline_mode<synchronous>, transform_indices = @transform_7, window_bounds = array<i64: 128, 256>}, {pipeline_mode = #tpu.pipeline_mode<synchronous>, transform_indices = @transform_8, window_bounds = array<i64: 1, 256>}, {transform_indices = @transform_9, window_bounds = array<i64: 1, 1, 8, 256>}]} {
    %c0_i32 = arith.constant 0 : i32
    %0 = arith.cmpi eq, %arg2, %c0_i32 : i32
    %1 = arith.extui %0 : i1 to i32
    %c0_i32_0 = arith.constant 0 : i32
    %2 = arith.cmpi ne, %1, %c0_i32_0 : i32
    scf.if %2 {
      %cst_41 = arith.constant 0xFF800000 : f32
      %75 = vector.broadcast %cst_41 : f32 to vector<8x256xf32>
      %c0_42 = arith.constant 0 : index
      %c0_43 = arith.constant 0 : index
      %76 = vector.load %arg13[%c0_42, %c0_43] : memref<8x256xf32, #tpu.memory_space<vmem>>, vector<8x256xf32>
      tpu.vector_store %arg13[%c0_42, %c0_43], %75 {strides = array<i32>} : memref<8x256xf32, #tpu.memory_space<vmem>>, vector<8x256xf32>,
    } else {
    }
    %c0 = arith.constant 0 : index
    %c0_1 = arith.constant 0 : index
    %c0_2 = arith.constant 0 : index
    %3 = vector.load %arg3[%c0, %c0_1, %c0_2] : memref<1x1000x3xbf16, #tpu.memory_space<vmem>>, vector<1x1000x3xbf16>
    %4 = vector.shape_cast %3 : vector<1x1000x3xbf16> to vector<1000x3xbf16>
    %c0_3 = arith.constant 0 : index
    %c0_4 = arith.constant 0 : index
    %5 = vector.load %arg4[%c0_3, %c0_4] : memref<3x64xbf16, #tpu.memory_space<vmem>>, vector<3x64xbf16>
    %cst = arith.constant dense<0.000000e+00> : vector<1000x64xf32>
    %6 = tpu.matmul %4, %5, %cst {dimension_numbers = #tpu.dot_dimension_numbers<[1], [0], [0], [1], [0, 0, 1, 1], [], []>} : vector<1000x3xbf16>, vector<3x64xbf16>, vector<1000x64xf32> -> vector<1000x64xf32>
    %c0_5 = arith.constant 0 : index
    %c0_6 = arith.constant 0 : index
    %7 = vector.load %arg5[%c0_5, %c0_6] : memref<1x64xf32, #tpu.memory_space<vmem>>, vector<1x64xf32>
    %8 = vector.broadcast %7 : vector<1x64xf32> to vector<1000x64xf32>
    %9 = arith.addf %6, %8 : vector<1000x64xf32>
    %10 = arith.mulf %9, %9 : vector<1000x64xf32>
    %11 = arith.mulf %9, %10 : vector<1000x64xf32>
    %cst_7 = arith.constant 4.471500e-02 : f32
    %12 = vector.broadcast %cst_7 : f32 to vector<1000x64xf32>
    %13 = arith.mulf %12, %11 : vector<1000x64xf32>
    %14 = arith.addf %9, %13 : vector<1000x64xf32>
    %cst_8 = arith.constant 0.797884583 : f32
    %15 = vector.broadcast %cst_8 : f32 to vector<1000x64xf32>
    %16 = arith.mulf %15, %14 : vector<1000x64xf32>
    %17 = math.tanh %16 : vector<1000x64xf32>
    %cst_9 = arith.constant 1.000000e+00 : f32
    %18 = vector.broadcast %cst_9 : f32 to vector<1000x64xf32>
    %19 = arith.addf %18, %17 : vector<1000x64xf32>
    %cst_10 = arith.constant 5.000000e-01 : f32
    %20 = vector.broadcast %cst_10 : f32 to vector<1000x64xf32>
    %21 = arith.mulf %20, %19 : vector<1000x64xf32>
    %22 = arith.mulf %9, %21 : vector<1000x64xf32>
    %23 = arith.truncf %22 : vector<1000x64xf32> to vector<1000x64xbf16>
    %c0_11 = arith.constant 0 : index
    %c0_12 = arith.constant 0 : index
    %24 = vector.load %arg6[%c0_11, %c0_12] : memref<64x64xbf16, #tpu.memory_space<vmem>>, vector<64x64xbf16>
    %cst_13 = arith.constant dense<0.000000e+00> : vector<1000x64xf32>
    %25 = tpu.matmul %23, %24, %cst_13 {dimension_numbers = #tpu.dot_dimension_numbers<[1], [0], [0], [1], [0, 0, 1, 1], [], []>} : vector<1000x64xbf16>, vector<64x64xbf16>, vector<1000x64xf32> -> vector<1000x64xf32>
    %c0_14 = arith.constant 0 : index
    %c0_15 = arith.constant 0 : index
    %26 = vector.load %arg7[%c0_14, %c0_15] : memref<1x64xf32, #tpu.memory_space<vmem>>, vector<1x64xf32>
    %27 = vector.broadcast %26 : vector<1x64xf32> to vector<1000x64xf32>
    %28 = arith.addf %25, %27 : vector<1000x64xf32>
    %29 = arith.mulf %28, %28 : vector<1000x64xf32>
    %30 = arith.mulf %28, %29 : vector<1000x64xf32>
    %cst_16 = arith.constant 4.471500e-02 : f32
    %31 = vector.broadcast %cst_16 : f32 to vector<1000x64xf32>
    %32 = arith.mulf %31, %30 : vector<1000x64xf32>
    %33 = arith.addf %28, %32 : vector<1000x64xf32>
    %cst_17 = arith.constant 0.797884583 : f32
    %34 = vector.broadcast %cst_17 : f32 to vector<1000x64xf32>
    %35 = arith.mulf %34, %33 : vector<1000x64xf32>
    %36 = math.tanh %35 : vector<1000x64xf32>
    %cst_18 = arith.constant 1.000000e+00 : f32
    %37 = vector.broadcast %cst_18 : f32 to vector<1000x64xf32>
    %38 = arith.addf %37, %36 : vector<1000x64xf32>
    %cst_19 = arith.constant 5.000000e-01 : f32
    %39 = vector.broadcast %cst_19 : f32 to vector<1000x64xf32>
    %40 = arith.mulf %39, %38 : vector<1000x64xf32>
    %41 = arith.mulf %28, %40 : vector<1000x64xf32>
    %42 = arith.truncf %41 : vector<1000x64xf32> to vector<1000x64xbf16>
    %c0_20 = arith.constant 0 : index
    %c0_21 = arith.constant 0 : index
    %43 = vector.load %arg8[%c0_20, %c0_21] : memref<64x128xbf16, #tpu.memory_space<vmem>>, vector<64x128xbf16>
    %cst_22 = arith.constant dense<0.000000e+00> : vector<1000x128xf32>
    %44 = tpu.matmul %42, %43, %cst_22 {dimension_numbers = #tpu.dot_dimension_numbers<[1], [0], [0], [1], [0, 0, 1, 1], [], []>} : vector<1000x64xbf16>, vector<64x128xbf16>, vector<1000x128xf32> -> vector<1000x128xf32>
    %c0_23 = arith.constant 0 : index
    %c0_24 = arith.constant 0 : index
    %45 = vector.load %arg9[%c0_23, %c0_24] : memref<1x128xf32, #tpu.memory_space<vmem>>, vector<1x128xf32>
    %46 = vector.broadcast %45 : vector<1x128xf32> to vector<1000x128xf32>
    %47 = arith.addf %44, %46 : vector<1000x128xf32>
    %48 = arith.mulf %47, %47 : vector<1000x128xf32>
    %49 = arith.mulf %47, %48 : vector<1000x128xf32>
    %cst_25 = arith.constant 4.471500e-02 : f32
    %50 = vector.broadcast %cst_25 : f32 to vector<1000x128xf32>
    %51 = arith.mulf %50, %49 : vector<1000x128xf32>
    %52 = arith.addf %47, %51 : vector<1000x128xf32>
    %cst_26 = arith.constant 0.797884583 : f32
    %53 = vector.broadcast %cst_26 : f32 to vector<1000x128xf32>
    %54 = arith.mulf %53, %52 : vector<1000x128xf32>
    %55 = math.tanh %54 : vector<1000x128xf32>
    %cst_27 = arith.constant 1.000000e+00 : f32
    %56 = vector.broadcast %cst_27 : f32 to vector<1000x128xf32>
    %57 = arith.addf %56, %55 : vector<1000x128xf32>
    %cst_28 = arith.constant 5.000000e-01 : f32
    %58 = vector.broadcast %cst_28 : f32 to vector<1000x128xf32>
    %59 = arith.mulf %58, %57 : vector<1000x128xf32>
    %60 = arith.mulf %47, %59 : vector<1000x128xf32>
    %61 = arith.truncf %60 : vector<1000x128xf32> to vector<1000x128xbf16>
    %c0_29 = arith.constant 0 : index
    %c0_30 = arith.constant 0 : index
    %62 = vector.load %arg10[%c0_29, %c0_30] : memref<128x256xbf16, #tpu.memory_space<vmem>>, vector<128x256xbf16>
    %cst_31 = arith.constant dense<0.000000e+00> : vector<1000x256xf32>
    %63 = tpu.matmul %61, %62, %cst_31 {dimension_numbers = #tpu.dot_dimension_numbers<[1], [0], [0], [1], [0, 0, 1, 1], [], []>} : vector<1000x128xbf16>, vector<128x256xbf16>, vector<1000x256xf32> -> vector<1000x256xf32>
    %c0_32 = arith.constant 0 : index
    %c0_33 = arith.constant 0 : index
    %64 = vector.load %arg11[%c0_32, %c0_33] : memref<1x256xf32, #tpu.memory_space<vmem>>, vector<1x256xf32>
    %65 = vector.broadcast %64 : vector<1x256xf32> to vector<1000x256xf32>
    %66 = arith.addf %63, %65 : vector<1000x256xf32>
    %c0_34 = arith.constant 0 : index
    %c0_35 = arith.constant 0 : index
    %67 = vector.load %arg13[%c0_34, %c0_35] : memref<8x256xf32, #tpu.memory_space<vmem>>, vector<8x256xf32>
    %68 = vector.shape_cast %66 : vector<1000x256xf32> to vector<125x8x256xf32>
    %cst_36 = arith.constant dense<0xFF800000> : vector<8x256xf32>
    %69 = vector.multi_reduction <maximumf>, %68, %cst_36 [0] : vector<125x8x256xf32> to vector<8x256xf32>
    %70 = arith.maximumf %67, %69 : vector<8x256xf32>
    %c0_37 = arith.constant 0 : index
    %c0_38 = arith.constant 0 : index
    %71 = vector.load %arg13[%c0_37, %c0_38] : memref<8x256xf32, #tpu.memory_space<vmem>>, vector<8x256xf32>
    tpu.vector_store %arg13[%c0_37, %c0_38], %70 {strides = array<i32>} : memref<8x256xf32, #tpu.memory_space<vmem>>, vector<8x256xf32>,
    %c0_i32_39 = arith.constant 0 : i32
    %72 = arith.cmpi eq, %arg2, %c0_i32_39 : i32
    %73 = arith.extui %72 : i1 to i32
    %c0_i32_40 = arith.constant 0 : i32
    %74 = arith.cmpi ne, %73, %c0_i32_40 : i32
    scf.if %74 {
      %c0_41 = arith.constant 0 : index
      %c0_42 = arith.constant 0 : index
      %75 = vector.load %arg13[%c0_41, %c0_42] : memref<8x256xf32, #tpu.memory_space<vmem>>, vector<8x256xf32>
      %c0_43 = arith.constant 0 : index
      %c0_44 = arith.constant 0 : index
      %c0_45 = arith.constant 0 : index
      %c0_46 = arith.constant 0 : index
      %76 = vector.load %arg12[%c0_43, %c0_44, %c0_45, %c0_46] : memref<1x1x8x256xf32, #tpu.memory_space<vmem>>, vector<1x1x8x256xf32>
      %77 = vector.shape_cast %76 : vector<1x1x8x256xf32> to vector<8x256xf32>
      %78 = vector.shape_cast %75 : vector<8x256xf32> to vector<1x1x8x256xf32>
      tpu.vector_store %arg12[%c0_43, %c0_44, %c0_45, %c0_46], %78 {strides = array<i32>} : memref<1x1x8x256xf32, #tpu.memory_space<vmem>>, vector<1x1x8x256xf32>,
    } else {
    }
    return
  }
  func.func @transform_0(%arg0: i32, %arg1: i32, %arg2: i32) -> (i32, i32, i32) {
    %c1_i32 = arith.constant 1 : i32
    %0 = arith.muli %arg0, %c1_i32 : i32
    %1 = arith.addi %0, %arg2 : i32
    %c0_i32 = arith.constant 0 : i32
    %c0_i32_0 = arith.constant 0 : i32
    return %arg1, %1, %c0_i32 : i32, i32, i32
  }
  func.func @transform_1(%arg0: i32, %arg1: i32, %arg2: i32) -> (i32, i32) {
    %c0_i32 = arith.constant 0 : i32
    %c0_i32_0 = arith.constant 0 : i32
    %c0_i32_1 = arith.constant 0 : i32
    return %c0_i32, %c0_i32_0 : i32, i32
  }
  func.func @transform_2(%arg0: i32, %arg1: i32, %arg2: i32) -> (i32, i32) {
    %c0_i32 = arith.constant 0 : i32
    %c0_i32_0 = arith.constant 0 : i32
    %c0_i32_1 = arith.constant 0 : i32
    return %c0_i32, %c0_i32_0 : i32, i32
  }
  func.func @transform_3(%arg0: i32, %arg1: i32, %arg2: i32) -> (i32, i32) {
    %c0_i32 = arith.constant 0 : i32
    %c0_i32_0 = arith.constant 0 : i32
    %c0_i32_1 = arith.constant 0 : i32
    return %c0_i32, %c0_i32_0 : i32, i32
  }
  func.func @transform_4(%arg0: i32, %arg1: i32, %arg2: i32) -> (i32, i32) {
    %c0_i32 = arith.constant 0 : i32
    %c0_i32_0 = arith.constant 0 : i32
    %c0_i32_1 = arith.constant 0 : i32
    return %c0_i32, %c0_i32_0 : i32, i32
  }
  func.func @transform_5(%arg0: i32, %arg1: i32, %arg2: i32) -> (i32, i32) {
    %c0_i32 = arith.constant 0 : i32
    %c0_i32_0 = arith.constant 0 : i32
    %c0_i32_1 = arith.constant 0 : i32
    return %c0_i32, %c0_i32_0 : i32, i32
  }
  func.func @transform_6(%arg0: i32, %arg1: i32, %arg2: i32) -> (i32, i32) {
    %c0_i32 = arith.constant 0 : i32
    %c0_i32_0 = arith.constant 0 : i32
    %c0_i32_1 = arith.constant 0 : i32
    return %c0_i32, %c0_i32_0 : i32, i32
  }
  func.func @transform_7(%arg0: i32, %arg1: i32, %arg2: i32) -> (i32, i32) {
    %c0_i32 = arith.constant 0 : i32
    %c0_i32_0 = arith.constant 0 : i32
    %c0_i32_1 = arith.constant 0 : i32
    return %c0_i32, %c0_i32_0 : i32, i32
  }
  func.func @transform_8(%arg0: i32, %arg1: i32, %arg2: i32) -> (i32, i32) {
    %c0_i32 = arith.constant 0 : i32
    %c0_i32_0 = arith.constant 0 : i32
    %c0_i32_1 = arith.constant 0 : i32
    return %c0_i32, %c0_i32_0 : i32, i32
  }
  func.func @transform_9(%arg0: i32, %arg1: i32, %arg2: i32) -> (i32, i32, i32, i32) {
    %c0_i32 = arith.constant 0 : i32
    %c0_i32_0 = arith.constant 0 : i32
    %c0_i32_1 = arith.constant 0 : i32
    return %arg0, %arg1, %c0_i32, %c0_i32_0 : i32, i32, i32, i32
  }
}

</mosaic_0001>

<llo_original>
// kernel: tpu_custom_call.1
$region0: #{tpu_custom_call.1}
  #allocation0 [shape = 'u32[]', space=smem, size = 0x4, offset = 0x4, fixed_abs, tag = 'smem constant byte address 0x4 - core index']
  #allocation1 [shape = 'u32[144,128]{1,0:T(1,128)}', space=vmem, size = 0x12000, scoped, tag = 'internal scratch']
  #allocation2 [shape = 'f32[8,256]{1,0:T(8,128)}', space=vmem, size = 0x2000, scoped, tag = 'scratch operand']
  %s0 = inlined_call_operand.vmem [shape: bf16[2,1000,3], index: 0, kind: input, shape index: {}]
  %s1 = inlined_call_operand.vmem [shape: bf16[3,64], index: 1, kind: input, shape index: {}]
  %s2 = inlined_call_operand.vmem [shape: f32[1,64], index: 2, kind: input, shape index: {}]
  %s3 = inlined_call_operand.vmem [shape: bf16[64,64], index: 3, kind: input, shape index: {}]
  %s4 = inlined_call_operand.vmem [shape: f32[1,64], index: 4, kind: input, shape index: {}]
  %s5 = inlined_call_operand.vmem [shape: bf16[64,128], index: 5, kind: input, shape index: {}]
  %s6 = inlined_call_operand.vmem [shape: f32[1,128], index: 6, kind: input, shape index: {}]
  %s7 = inlined_call_operand.vmem [shape: bf16[128,256], index: 7, kind: input, shape index: {}]
  %s8 = inlined_call_operand.vmem [shape: f32[1,256], index: 8, kind: input, shape index: {}]
  %s9 = inlined_call_operand.hbm [shape: f32[1,2,8,256], index: 9, kind: output, shape index: {}]
  %s10 = sld [smem:[#allocation0]]
  $region77: #{tpu_custom_call.1} parent=0
    _
  %s12 = ssub.s32 1, %s10
  %s13 = scalar_select 0, %s12, %s10
  $region1: #{tpu_custom_call.1} parent=0
    #allocation3 [shape = 'u8[16384]{0}', space=vmem, size = 0x4000, scoped, tag = 'output window, operand 0']
    #allocation4 [shape = 's32[2]{0}', space=sflag, size = 0x8, scoped, tag = 'scoped memory for tpu_custom_call.1']
    %14 = vsyncpa [#allocation4], 0
    %s15 = scalar_lea.sflag [#allocation4], 1
    %16 = vsyncpa %s15, 0
    loop: start=0, step=1, limit=4
    $region2: #{tpu_custom_call.1} parent=1 // loop_pre_header
      _
    $region3: #{tpu_custom_call.1} parent=1 // loop_header
      %s18 = sphi 0, %s22
      %p19 = scmp.ge.s32.totalorder %s18, 4
      %s25 = sphi 0, %s44
      %s26 = sphi 0, %s40
      %s27 = sphi 0, %s36
      %s28 = sphi 0, %s25
      %s29 = sphi 0, %s26
      %s30 = sphi 0, %s27
      %s31 = sphi 0, %s28
      %s32 = sphi 0, %s29
      %s33 = sphi 0, %s30
      %s51 = sphi 0, %s53
      %s54 = sphi 0, %s51
      %s55 = sphi 0, %s54
      %s71 = sphi 0, %s55
      %s75 = sphi 0, %s75
      %s77 = sphi 0, %s75
      %s78 = sphi 0, %s77
      %s92 = sphi 0, %s78
      %s96 = sphi 0, %s96
      %s98 = sphi 0, %s96
      %s99 = sphi 0, %s98
      %s113 = sphi 0, %s99
      %s117 = sphi 0, %s117
      %s119 = sphi 0, %s117
      %s120 = sphi 0, %s119
      %s134 = sphi 0, %s120
      %s138 = sphi 0, %s138
      %s140 = sphi 0, %s138
      %s141 = sphi 0, %s140
      %s155 = sphi 0, %s141
      %s159 = sphi 0, %s159
      %s161 = sphi 0, %s159
      %s162 = sphi 0, %s161
      %s176 = sphi 0, %s162
      %s180 = sphi 0, %s180
      %s182 = sphi 0, %s180
      %s183 = sphi 0, %s182
      %s197 = sphi 0, %s183
      %s201 = sphi 0, %s201
      %s203 = sphi 0, %s201
      %s204 = sphi 0, %s203
      %s218 = sphi 0, %s204
      %s222 = sphi 0, %s222
      %s224 = sphi 0, %s222
      %s225 = sphi 0, %s224
      %s239 = sphi 0, %s225
      %s247 = sphi 0, %s249
      %s250 = sphi 0, %s247
      %s251 = sphi 0, %s250
      %s267 = sphi 0, %s251
    $region4: #{tpu_custom_call.1} parent=1 // loop_header_branch
      %21 = sbr.rel (%p19) target = $region8
    $region5: #{tpu_custom_call.1} parent=1 // loop_body
      %s23 = ssub.s32 %s18, 1
      %s24 = ssub.s32 %s18, 2
      %s34 = sadd.s32 1, %s27
      %p35 = scmp.ge.s32.totalorder %s34, 1
      %s36 = scalar_select %p35, 0, %s34
      %s37 = sadd.s32 1, %s26
      %s38 = scalar_select %p35, %s37, %s26
      %p39 = scmp.ge.s32.totalorder %s38, 2
      %s40 = scalar_select %p39, 0, %s38
      %s41 = sadd.s32 1, %s25
      %s42 = scalar_select %p39, %s41, %s25
      %p43 = scmp.ge.s32.totalorder %s42, 1
      %s44 = scalar_select %p43, 0, %s42
      %s45 = sadd.s32 %s25, %s27
      %s46 = sadd.s32 %s44, %s36
      %s47 = ssub.s32 %s26, %s40
      %s48 = ssub.s32 %s45, %s46
      %s49 = sor.u32 %s47, %s48
      %p50 = scmp.eq.s32.totalorder %s49, 0
      %s52 = sadd.s32 %s51, 1
      %s53 = scalar_select %p50, %s51, %s52
      %p56 = pneg %p50
      %p57 = scmp.eq.s32.totalorder %s18, 1
      %p58 = por %p56, %p57
      %p59 = scmp.ne.s32.totalorder %s51, %s54
      %p60 = scmp.eq.s32.totalorder %s18, 0
      %p61 = por %p59, %p60
      %p62 = scmp.ne.s32.totalorder %s51, %s54
      %p63 = scmp.eq.s32.totalorder %s23, 1
      %p64 = por %p62, %p63
      %p65 = scmp.ne.s32.totalorder %s54, %s55
      %p66 = scmp.eq.s32.totalorder %s23, 0
      %p67 = por %p65, %p66
      %p68 = scmp.ne.s32.totalorder %s54, %s55
      %p69 = scmp.eq.s32.totalorder %s24, 1
      %p70 = por %p68, %p69
      %p72 = scmp.ne.s32.totalorder %s55, %s71
      %p73 = scmp.eq.s32.totalorder %s24, 0
      %p74 = por %p72, %p73
      %s76 = sadd.s32 %s75, 1
      %p79 = scmp.eq.s32.totalorder %s18, 1
      %p80 = scmp.ne.s32.totalorder %s75, %s77
      %p81 = scmp.eq.s32.totalorder %s18, 0
      %p82 = por %p80, %p81
      %p83 = scmp.ne.s32.totalorder %s75, %s77
      %p84 = scmp.eq.s32.totalorder %s23, 1
      %p85 = por %p83, %p84
      %p86 = scmp.ne.s32.totalorder %s77, %s78
      %p87 = scmp.eq.s32.totalorder %s23, 0
      %p88 = por %p86, %p87
      %p89 = scmp.ne.s32.totalorder %s77, %s78
      %p90 = scmp.eq.s32.totalorder %s24, 1
      %p91 = por %p89, %p90
      %p93 = scmp.ne.s32.totalorder %s78, %s92
      %p94 = scmp.eq.s32.totalorder %s24, 0
      %p95 = por %p93, %p94
      %s97 = sadd.s32 %s96, 1
      %p100 = scmp.eq.s32.totalorder %s18, 1
      %p101 = scmp.ne.s32.totalorder %s96, %s98
      %p102 = scmp.eq.s32.totalorder %s18, 0
      %p103 = por %p101, %p102
      %p104 = scmp.ne.s32.totalorder %s96, %s98
      %p105 = scmp.eq.s32.totalorder %s23, 1
      %p106 = por %p104, %p105
      %p107 = scmp.ne.s32.totalorder %s98, %s99
      %p108 = scmp.eq.s32.totalorder %s23, 0
      %p109 = por %p107, %p108
      %p110 = scmp.ne.s32.totalorder %s98, %s99
      %p111 = scmp.eq.s32.totalorder %s24, 1
      %p112 = por %p110, %p111
      %p114 = scmp.ne.s32.totalorder %s99, %s113
      %p115 = scmp.eq.s32.totalorder %s24, 0
      %p116 = por %p114, %p115
      %s118 = sadd.s32 %s117, 1
      %p121 = scmp.eq.s32.totalorder %s18, 1
      %p122 = scmp.ne.s32.totalorder %s117, %s119
      %p123 = scmp.eq.s32.totalorder %s18, 0
      %p124 = por %p122, %p123
      %p125 = scmp.ne.s32.totalorder %s117, %s119
      %p126 = scmp.eq.s32.totalorder %s23, 1
      %p127 = por %p125, %p126
      %p128 = scmp.ne.s32.totalorder %s119, %s120
      %p129 = scmp.eq.s32.totalorder %s23, 0
      %p130 = por %p128, %p129
      %p131 = scmp.ne.s32.totalorder %s119, %s120
      %p132 = scmp.eq.s32.totalorder %s24, 1
      %p133 = por %p131, %p132
      %p135 = scmp.ne.s32.totalorder %s120, %s134
      %p136 = scmp.eq.s32.totalorder %s24, 0
      %p137 = por %p135, %p136
      %s139 = sadd.s32 %s138, 1
      %p142 = scmp.eq.s32.totalorder %s18, 1
      %p143 = scmp.ne.s32.totalorder %s138, %s140
      %p144 = scmp.eq.s32.totalorder %s18, 0
      %p145 = por %p143, %p144
      %p146 = scmp.ne.s32.totalorder %s138, %s140
      %p147 = scmp.eq.s32.totalorder %s23, 1
      %p148 = por %p146, %p147
      %p149 = scmp.ne.s32.totalorder %s140, %s141
      %p150 = scmp.eq.s32.totalorder %s23, 0
      %p151 = por %p149, %p150
      %p152 = scmp.ne.s32.totalorder %s140, %s141
      %p153 = scmp.eq.s32.totalorder %s24, 1
      %p154 = por %p152, %p153
      %p156 = scmp.ne.s32.totalorder %s141, %s155
      %p157 = scmp.eq.s32.totalorder %s24, 0
      %p158 = por %p156, %p157
      %s160 = sadd.s32 %s159, 1
      %p163 = scmp.eq.s32.totalorder %s18, 1
      %p164 = scmp.ne.s32.totalorder %s159, %s161
      %p165 = scmp.eq.s32.totalorder %s18, 0
      %p166 = por %p164, %p165
      %p167 = scmp.ne.s32.totalorder %s159, %s161
      %p168 = scmp.eq.s32.totalorder %s23, 1
      %p169 = por %p167, %p168
      %p170 = scmp.ne.s32.totalorder %s161, %s162
      %p171 = scmp.eq.s32.totalorder %s23, 0
      %p172 = por %p170, %p171
      %p173 = scmp.ne.s32.totalorder %s161, %s162
      %p174 = scmp.eq.s32.totalorder %s24, 1
      %p175 = por %p173, %p174
      %p177 = scmp.ne.s32.totalorder %s162, %s176
      %p178 = scmp.eq.s32.totalorder %s24, 0
      %p179 = por %p177, %p178
      %s181 = sadd.s32 %s180, 1
      %p184 = scmp.eq.s32.totalorder %s18, 1
      %p185 = scmp.ne.s32.totalorder %s180, %s182
      %p186 = scmp.eq.s32.totalorder %s18, 0
      %p187 = por %p185, %p186
      %p188 = scmp.ne.s32.totalorder %s180, %s182
      %p189 = scmp.eq.s32.totalorder %s23, 1
      %p190 = por %p188, %p189
      %p191 = scmp.ne.s32.totalorder %s182, %s183
      %p192 = scmp.eq.s32.totalorder %s23, 0
      %p193 = por %p191, %p192
      %p194 = scmp.ne.s32.totalorder %s182, %s183
      %p195 = scmp.eq.s32.totalorder %s24, 1
      %p196 = por %p194, %p195
      %p198 = scmp.ne.s32.totalorder %s183, %s197
      %p199 = scmp.eq.s32.totalorder %s24, 0
      %p200 = por %p198, %p199
      %s202 = sadd.s32 %s201, 1
      %p205 = scmp.eq.s32.totalorder %s18, 1
      %p206 = scmp.ne.s32.totalorder %s201, %s203
      %p207 = scmp.eq.s32.totalorder %s18, 0
      %p208 = por %p206, %p207
      %p209 = scmp.ne.s32.totalorder %s201, %s203
      %p210 = scmp.eq.s32.totalorder %s23, 1
      %p211 = por %p209, %p210
      %p212 = scmp.ne.s32.totalorder %s203, %s204
      %p213 = scmp.eq.s32.totalorder %s23, 0
      %p214 = por %p212, %p213
      %p215 = scmp.ne.s32.totalorder %s203, %s204
      %p216 = scmp.eq.s32.totalorder %s24, 1
      %p217 = por %p215, %p216
      %p219 = scmp.ne.s32.totalorder %s204, %s218
      %p220 = scmp.eq.s32.totalorder %s24, 0
      %p221 = por %p219, %p220
      %s223 = sadd.s32 %s222, 1
      %p226 = scmp.eq.s32.totalorder %s18, 1
      %p227 = scmp.ne.s32.totalorder %s222, %s224
      %p228 = scmp.eq.s32.totalorder %s18, 0
      %p229 = por %p227, %p228
      %p230 = scmp.ne.s32.totalorder %s222, %s224
      %p231 = scmp.eq.s32.totalorder %s23, 1
      %p232 = por %p230, %p231
      %p233 = scmp.ne.s32.totalorder %s224, %s225
      %p234 = scmp.eq.s32.totalorder %s23, 0
      %p235 = por %p233, %p234
      %p236 = scmp.ne.s32.totalorder %s224, %s225
      %p237 = scmp.eq.s32.totalorder %s24, 1
      %p238 = por %p236, %p237
      %p240 = scmp.ne.s32.totalorder %s225, %s239
      %p241 = scmp.eq.s32.totalorder %s24, 0
      %p242 = por %p240, %p241
      %s243 = ssub.s32 %s25, %s44
      %s244 = ssub.s32 %s26, %s40
      %s245 = sor.u32 %s243, %s244
      %p246 = scmp.eq.s32.totalorder %s245, 0
      %s248 = sadd.s32 %s247, 1
      %s249 = scalar_select %p246, %s247, %s248
      %p252 = pneg %p246
      %p253 = scmp.eq.s32.totalorder %s18, 1
      %p254 = por %p252, %p253
      %p255 = scmp.ne.s32.totalorder %s247, %s250
      %p256 = scmp.eq.s32.totalorder %s18, 0
      %p257 = por %p255, %p256
      %p258 = scmp.ne.s32.totalorder %s247, %s250
      %p259 = scmp.eq.s32.totalorder %s23, 1
      %p260 = por %p258, %p259
      %p261 = scmp.ne.s32.totalorder %s250, %s251
      %p262 = scmp.eq.s32.totalorder %s23, 0
      %p263 = por %p261, %p262
      %p264 = scmp.ne.s32.totalorder %s250, %s251
      %p265 = scmp.eq.s32.totalorder %s24, 1
      %p266 = por %p264, %p265
      %p268 = scmp.ne.s32.totalorder %s251, %s267
      %p269 = scmp.eq.s32.totalorder %s24, 0
      %p270 = por %p268, %p269
      %p271 = scmp.le.s32.totalorder 1, %s18
      %p272 = scmp.lt.s32.totalorder %s18, 3
      %p273 = pnand %p271, %p272
      %p274 = pneg %p273
      // Predicated region
      $region9: #{tpu_custom_call.1} parent=5 // pred_check
        _
      $region10: #{tpu_custom_call.1} parent=5 // pred_check_branch
        %276 = sbr.rel (%p273) target = $region12
      $region11: #{tpu_custom_call.1} parent=5 // pred_region
        %s277 = ssub.s32 %s18, 1
        // Predicated region
        $region13: #{tpu_custom_call.1} parent=11 // pred_check
          %p278 = pneg %p88
        $region14: #{tpu_custom_call.1} parent=11 // pred_check_branch
          %280 = sbr.rel (%p278) target = $region16
        $region15: #{tpu_custom_call.1} parent=11 // pred_region
          _
        $region16: #{tpu_custom_call.1} parent=11 // pred_fallthru
          _
        // Predicated region
        $region17: #{tpu_custom_call.1} parent=11 // pred_check
          %p281 = pneg %p109
        $region18: #{tpu_custom_call.1} parent=11 // pred_check_branch
          %283 = sbr.rel (%p281) target = $region20
        $region19: #{tpu_custom_call.1} parent=11 // pred_region
          _
        $region20: #{tpu_custom_call.1} parent=11 // pred_fallthru
          _
        // Predicated region
        $region21: #{tpu_custom_call.1} parent=11 // pred_check
          %p284 = pneg %p130
        $region22: #{tpu_custom_call.1} parent=11 // pred_check_branch
          %286 = sbr.rel (%p284) target = $region24
        $region23: #{tpu_custom_call.1} parent=11 // pred_region
          _
        $region24: #{tpu_custom_call.1} parent=11 // pred_fallthru
          _
        // Predicated region
        $region25: #{tpu_custom_call.1} parent=11 // pred_check
          %p287 = pneg %p151
        $region26: #{tpu_custom_call.1} parent=11 // pred_check_branch
          %289 = sbr.rel (%p287) target = $region28
        $region27: #{tpu_custom_call.1} parent=11 // pred_region
          _
        $region28: #{tpu_custom_call.1} parent=11 // pred_fallthru
          _
        // Predicated region
        $region29: #{tpu_custom_call.1} parent=11 // pred_check
          %p290 = pneg %p172
        $region30: #{tpu_custom_call.1} parent=11 // pred_check_branch
          %292 = sbr.rel (%p290) target = $region32
        $region31: #{tpu_custom_call.1} parent=11 // pred_region
          _
        $region32: #{tpu_custom_call.1} parent=11 // pred_fallthru
          _
        // Predicated region
        $region33: #{tpu_custom_call.1} parent=11 // pred_check
          %p293 = pneg %p193
        $region34: #{tpu_custom_call.1} parent=11 // pred_check_branch
          %295 = sbr.rel (%p293) target = $region36
        $region35: #{tpu_custom_call.1} parent=11 // pred_region
          _
        $region36: #{tpu_custom_call.1} parent=11 // pred_fallthru
          _
        // Predicated region
        $region37: #{tpu_custom_call.1} parent=11 // pred_check
          %p296 = pneg %p214
        $region38: #{tpu_custom_call.1} parent=11 // pred_check_branch
          %298 = sbr.rel (%p296) target = $region40
        $region39: #{tpu_custom_call.1} parent=11 // pred_region
          _
        $region40: #{tpu_custom_call.1} parent=11 // pred_fallthru
          _
        // Predicated region
        $region41: #{tpu_custom_call.1} parent=11 // pred_check
          %p299 = pneg %p235
        $region42: #{tpu_custom_call.1} parent=11 // pred_check_branch
          %301 = sbr.rel (%p299) target = $region44
        $region43: #{tpu_custom_call.1} parent=11 // pred_region
          _
        $region44: #{tpu_custom_call.1} parent=11 // pred_fallthru
          _
      $region12: #{tpu_custom_call.1} parent=5 // pred_fallthru
        _
      %p302 = scmp.lt.s32.totalorder %s18, 2
      // Predicated region
      $region45: #{tpu_custom_call.1} parent=5 // pred_check
        %p303 = pneg %p302
      $region46: #{tpu_custom_call.1} parent=5 // pred_check_branch
        %305 = sbr.rel (%p303) target = $region48
      $region47: #{tpu_custom_call.1} parent=5 // pred_region
        // Predicated region
        $region49: #{tpu_custom_call.1} parent=47 // pred_check
          %p306 = pneg %p61
        $region50: #{tpu_custom_call.1} parent=47 // pred_check_branch
          %308 = sbr.rel (%p306) target = $region52
        $region51: #{tpu_custom_call.1} parent=47 // pred_region
          %s309 = sadd.s32 %s25, %s27
          %s310 = smul.u32 125, %s309
          %p311 = scmp.lt.s32.totalorder %s26, 1
          %s312 = scalar_select %p311, %s26, 1
          %p313 = scmp.lt.s32.totalorder %s310, 124
          %s314 = scalar_select %p313, %s310, 124
          %s315 = smul.addr %s312, 125
          %s316 = sadd.s32 %s314, %s315
          %s317 = smul.addr %s316, 4
          %s318 = scalar_lea.vmem %s0, %s317
          %s319 = sadd.s32 %s25, %s27
          %s320 = smul.u32 125, %s319
        $region52: #{tpu_custom_call.1} parent=47 // pred_fallthru
          _
      $region48: #{tpu_custom_call.1} parent=5 // pred_fallthru
        _
      %p321 = scmp.le.s32.totalorder 1, %s18
      %p322 = scmp.lt.s32.totalorder %s18, 3
      %p323 = pnand %p321, %p322
      %p324 = pneg %p323
      // Predicated region
      $region53: #{tpu_custom_call.1} parent=5 // pred_check
        _
      $region54: #{tpu_custom_call.1} parent=5 // pred_check_branch
        %326 = sbr.rel (%p323) target = $region56
      $region55: #{tpu_custom_call.1} parent=5 // pred_region
        %s327 = ssub.s32 %s18, 1
        %s328 = sadd.s32 %s28, %s30
        %s329 = smul.u32 125, %s328
        %p330 = scmp.lt.s32.totalorder %s29, 1
        %s331 = scalar_select %p330, %s29, 1
        %p332 = scmp.lt.s32.totalorder %s329, 124
        %s333 = scalar_select %p332, %s329, 124
        %s334 = smul.addr %s331, 125
        %s335 = sadd.s32 %s333, %s334
        %s336 = smul.addr %s335, 4
        %s337 = scalar_lea.vmem %s0, %s336
        %p338 = pneg %p67
        %p339 = pneg %p64
        %p340 = pneg %p88
        %p341 = pneg %p85
        %p342 = pneg %p109
        %p343 = pneg %p106
        %p344 = pneg %p130
        %p345 = pneg %p127
        %p346 = pneg %p151
        %p347 = pneg %p148
        %p348 = pneg %p172
        %p349 = pneg %p169
        %p350 = pneg %p193
        %p351 = pneg %p190
        %p352 = pneg %p214
        %p353 = pneg %p211
        %p354 = pneg %p235
        %p355 = pneg %p232
        %p356 = pneg %p263
        %p357 = pneg %p260
        %s358 = sand.u32 %s250, 1
        %s359 = scalar_lea.sflag [#allocation4], %s358
        %s360 = sand.u32 %s250, 1
        %s361 = smul.addr %s360, 16
        %s362 = scalar_lea.vmem [#allocation3], %s361
        %s363 = sadd.s32 %s28, %s30
        %s364 = smul.u32 125, %s363
        %p365 = scmp.lt.s32.totalorder %s29, 1
        %s366 = scalar_select %p365, %s29, 1
        %p367 = scmp.lt.s32.totalorder %s364, 124
        %s368 = scalar_select %p367, %s364, 124
        %s369 = smul.addr %s366, 125
        %s370 = sadd.s32 %s368, %s369
        %s371 = smul.addr %s370, 4
        %s372 = scalar_lea.vmem %s0, %s371
        %s373 = sadd.s32 %s28, %s30
        %s374 = smul.u32 125, %s373
        %p376 = scmp.eq.s32.totalorder %s30, 0
        // Predicated region
        $region57: #{tpu_custom_call.1} parent=55 // pred_check
          %p377 = pneg %p376
        $region58: #{tpu_custom_call.1} parent=55 // pred_check_branch
          %379 = sbr.rel (%p377) target = $region60
        $region59: #{tpu_custom_call.1} parent=55 // pred_region
          %380 = vst [vmem:[#allocation2] sm:$0xff] -inf
          %381 = vst [vmem:[#allocation2 + $0x8] sm:$0xff] -inf
        $region60: #{tpu_custom_call.1} parent=55 // pred_fallthru
          _
        %v382 = vld [vmem:[%s372] sm:$0xf]
        %v383 = vld [vmem:[%s372 + $0x4] sm:$0xf]
        %v384 = vld [vmem:[%s372 + $0x8] sm:$0xf]
        %v385 = vld [vmem:[%s372 + $0xc] sm:$0xf]
        %v386 = vld [vmem:[%s372 + $0x10] sm:$0xf]
        %v387 = vld [vmem:[%s372 + $0x14] sm:$0xf]
        %v388 = vld [vmem:[%s372 + $0x18] sm:$0xf]
        %v389 = vld [vmem:[%s372 + $0x1c] sm:$0xf]
        %v390 = vld [vmem:[%s372 + $0x20] sm:$0xf]
        %v391 = vld [vmem:[%s372 + $0x24] sm:$0xf]
        %v392 = vld [vmem:[%s372 + $0x28] sm:$0xf]
        %v393 = vld [vmem:[%s372 + $0x2c] sm:$0xf]
        %v394 = vld [vmem:[%s372 + $0x30] sm:$0xf]
        %v395 = vld [vmem:[%s372 + $0x34] sm:$0xf]
        %v396 = vld [vmem:[%s372 + $0x38] sm:$0xf]
        %v397 = vld [vmem:[%s372 + $0x3c] sm:$0xf]
        %v398 = vld [vmem:[%s372 + $0x40] sm:$0xf]
        %v399 = vld [vmem:[%s372 + $0x44] sm:$0xf]
        %v400 = vld [vmem:[%s372 + $0x48] sm:$0xf]
        %v401 = vld [vmem:[%s372 + $0x4c] sm:$0xf]
        %v402 = vld [vmem:[%s372 + $0x50] sm:$0xf]
        %v403 = vld [vmem:[%s372 + $0x54] sm:$0xf]
        %v404 = vld [vmem:[%s372 + $0x58] sm:$0xf]
        %v405 = vld [vmem:[%s372 + $0x5c] sm:$0xf]
        %v406 = vld [vmem:[%s372 + $0x60] sm:$0xf]
        %v407 = vld [vmem:[%s372 + $0x64] sm:$0xf]
        %v408 = vld [vmem:[%s372 + $0x68] sm:$0xf]
        %v409 = vld [vmem:[%s372 + $0x6c] sm:$0xf]
        %v410 = vld [vmem:[%s372 + $0x70] sm:$0xf]
        %v411 = vld [vmem:[%s372 + $0x74] sm:$0xf]
        %v412 = vld [vmem:[%s372 + $0x78] sm:$0xf]
        %v413 = vld [vmem:[%s372 + $0x7c] sm:$0xf]
        %v414 = vld [vmem:[%s372 + $0x80] sm:$0xf]
        %v415 = vld [vmem:[%s372 + $0x84] sm:$0xf]
        %v416 = vld [vmem:[%s372 + $0x88] sm:$0xf]
        %v417 = vld [vmem:[%s372 + $0x8c] sm:$0xf]
        %v418 = vld [vmem:[%s372 + $0x90] sm:$0xf]
        %v419 = vld [vmem:[%s372 + $0x94] sm:$0xf]
        %v420 = vld [vmem:[%s372 + $0x98] sm:$0xf]
        %v421 = vld [vmem:[%s372 + $0x9c] sm:$0xf]
        %v422 = vld [vmem:[%s372 + $0xa0] sm:$0xf]
        %v423 = vld [vmem:[%s372 + $0xa4] sm:$0xf]
        %v424 = vld [vmem:[%s372 + $0xa8] sm:$0xf]
        %v425 = vld [vmem:[%s372 + $0xac] sm:$0xf]
        %v426 = vld [vmem:[%s372 + $0xb0] sm:$0xf]
        %v427 = vld [vmem:[%s372 + $0xb4] sm:$0xf]
        %v428 = vld [vmem:[%s372 + $0xb8] sm:$0xf]
        %v429 = vld [vmem:[%s372 + $0xbc] sm:$0xf]
        %v430 = vld [vmem:[%s372 + $0xc0] sm:$0xf]
        %v431 = vld [vmem:[%s372 + $0xc4] sm:$0xf]
        %v432 = vld [vmem:[%s372 + $0xc8] sm:$0xf]
        %v433 = vld [vmem:[%s372 + $0xcc] sm:$0xf]
        %v434 = vld [vmem:[%s372 + $0xd0] sm:$0xf]
        %v435 = vld [vmem:[%s372 + $0xd4] sm:$0xf]
        %v436 = vld [vmem:[%s372 + $0xd8] sm:$0xf]
        %v437 = vld [vmem:[%s372 + $0xdc] sm:$0xf]
        %v438 = vld [vmem:[%s372 + $0xe0] sm:$0xf]
        %v439 = vld [vmem:[%s372 + $0xe4] sm:$0xf]
        %v440 = vld [vmem:[%s372 + $0xe8] sm:$0xf]
        %v441 = vld [vmem:[%s372 + $0xec] sm:$0xf]
        %v442 = vld [vmem:[%s372 + $0xf0] sm:$0xf]
        %v443 = vld [vmem:[%s372 + $0xf4] sm:$0xf]
        %v444 = vld [vmem:[%s372 + $0xf8] sm:$0xf]
        %v445 = vld [vmem:[%s372 + $0xfc] sm:$0xf]
        %v446 = vld [vmem:[%s372 + $0x100] sm:$0xf]
        %v447 = vld [vmem:[%s372 + $0x104] sm:$0xf]
        %v448 = vld [vmem:[%s372 + $0x108] sm:$0xf]
        %v449 = vld [vmem:[%s372 + $0x10c] sm:$0xf]
        %v450 = vld [vmem:[%s372 + $0x110] sm:$0xf]
        %v451 = vld [vmem:[%s372 + $0x114] sm:$0xf]
        %v452 = vld [vmem:[%s372 + $0x118] sm:$0xf]
        %v453 = vld [vmem:[%s372 + $0x11c] sm:$0xf]
        %v454 = vld [vmem:[%s372 + $0x120] sm:$0xf]
        %v455 = vld [vmem:[%s372 + $0x124] sm:$0xf]
        %v456 = vld [vmem:[%s372 + $0x128] sm:$0xf]
        %v457 = vld [vmem:[%s372 + $0x12c] sm:$0xf]
        %v458 = vld [vmem:[%s372 + $0x130] sm:$0xf]
        %v459 = vld [vmem:[%s372 + $0x134] sm:$0xf]
        %v460 = vld [vmem:[%s372 + $0x138] sm:$0xf]
        %v461 = vld [vmem:[%s372 + $0x13c] sm:$0xf]
        %v462 = vld [vmem:[%s372 + $0x140] sm:$0xf]
        %v463 = vld [vmem:[%s372 + $0x144] sm:$0xf]
        %v464 = vld [vmem:[%s372 + $0x148] sm:$0xf]
        %v465 = vld [vmem:[%s372 + $0x14c] sm:$0xf]
        %v466 = vld [vmem:[%s372 + $0x150] sm:$0xf]
        %v467 = vld [vmem:[%s372 + $0x154] sm:$0xf]
        %v468 = vld [vmem:[%s372 + $0x158] sm:$0xf]
        %v469 = vld [vmem:[%s372 + $0x15c] sm:$0xf]
        %v470 = vld [vmem:[%s372 + $0x160] sm:$0xf]
        %v471 = vld [vmem:[%s372 + $0x164] sm:$0xf]
        %v472 = vld [vmem:[%s372 + $0x168] sm:$0xf]
        %v473 = vld [vmem:[%s372 + $0x16c] sm:$0xf]
        %v474 = vld [vmem:[%s372 + $0x170] sm:$0xf]
        %v475 = vld [vmem:[%s372 + $0x174] sm:$0xf]
        %v476 = vld [vmem:[%s372 + $0x178] sm:$0xf]
        %v477 = vld [vmem:[%s372 + $0x17c] sm:$0xf]
        %v478 = vld [vmem:[%s372 + $0x180] sm:$0xf]
        %v479 = vld [vmem:[%s372 + $0x184] sm:$0xf]
        %v480 = vld [vmem:[%s372 + $0x188] sm:$0xf]
        %v481 = vld [vmem:[%s372 + $0x18c] sm:$0xf]
        %v482 = vld [vmem:[%s372 + $0x190] sm:$0xf]
        %v483 = vld [vmem:[%s372 + $0x194] sm:$0xf]
        %v484 = vld [vmem:[%s372 + $0x198] sm:$0xf]
        %v485 = vld [vmem:[%s372 + $0x19c] sm:$0xf]
        %v486 = vld [vmem:[%s372 + $0x1a0] sm:$0xf]
        %v487 = vld [vmem:[%s372 + $0x1a4] sm:$0xf]
        %v488 = vld [vmem:[%s372 + $0x1a8] sm:$0xf]
        %v489 = vld [vmem:[%s372 + $0x1ac] sm:$0xf]
        %v490 = vld [vmem:[%s372 + $0x1b0] sm:$0xf]
        %v491 = vld [vmem:[%s372 + $0x1b4] sm:$0xf]
        %v492 = vld [vmem:[%s372 + $0x1b8] sm:$0xf]
        %v493 = vld [vmem:[%s372 + $0x1bc] sm:$0xf]
        %v494 = vld [vmem:[%s372 + $0x1c0] sm:$0xf]
        %v495 = vld [vmem:[%s372 + $0x1c4] sm:$0xf]
        %v496 = vld [vmem:[%s372 + $0x1c8] sm:$0xf]
        %v497 = vld [vmem:[%s372 + $0x1cc] sm:$0xf]
        %v498 = vld [vmem:[%s372 + $0x1d0] sm:$0xf]
        %v499 = vld [vmem:[%s372 + $0x1d4] sm:$0xf]
        %v500 = vld [vmem:[%s372 + $0x1d8] sm:$0xf]
        %v501 = vld [vmem:[%s372 + $0x1dc] sm:$0xf]
        %v502 = vld [vmem:[%s372 + $0x1e0] sm:$0xf]
        %v503 = vld [vmem:[%s372 + $0x1e4] sm:$0xf]
        %v504 = vld [vmem:[%s372 + $0x1e8] sm:$0xf]
        %v505 = vld [vmem:[%s372 + $0x1ec] sm:$0xf]
        %v506 = vld [vmem:[%s372 + $0x1f0] sm:$0xf]
        %v507 = vld [vmem:[%s1] sm:$0x3]
        %v508 = vld [vmem:[%s2] sm:$0x1]
        %v510 = vlaneseq
        %v511 = vshrl.u32 %v510, 7
        %v512 = vsub.s32 0, %v511
        %v513 = vrot.slane %v508, %v512
        %v640 = vunpack.c.l.b16 %v382
        %v641 = vunpack.c.l.b16 %v383
        %v642 = vunpack.c.l.b16 %v384
        %v643 = vunpack.c.l.b16 %v385
        %v644 = vunpack.c.l.b16 %v386
        %v645 = vunpack.c.l.b16 %v387
        %v646 = vunpack.c.l.b16 %v388
        %v647 = vunpack.c.l.b16 %v389
        %v648 = vunpack.c.l.b16 %v390
        %v649 = vunpack.c.l.b16 %v391
        %v650 = vunpack.c.l.b16 %v392
        %v651 = vunpack.c.l.b16 %v393
        %v652 = vunpack.c.l.b16 %v394
        %v653 = vunpack.c.l.b16 %v395
        %v654 = vunpack.c.l.b16 %v396
        %v655 = vunpack.c.l.b16 %v397
        %v656 = vunpack.c.l.b16 %v398
        %v657 = vunpack.c.l.b16 %v399
        %v658 = vunpack.c.l.b16 %v400
        %v659 = vunpack.c.l.b16 %v401
        %v660 = vunpack.c.l.b16 %v402
        %v661 = vunpack.c.l.b16 %v403
        %v662 = vunpack.c.l.b16 %v404
        %v663 = vunpack.c.l.b16 %v405
        %v664 = vunpack.c.l.b16 %v406
        %v665 = vunpack.c.l.b16 %v407
        %v666 = vunpack.c.l.b16 %v408
        %v667 = vunpack.c.l.b16 %v409
        %v668 = vunpack.c.l.b16 %v410
        %v669 = vunpack.c.l.b16 %v411
        %v670 = vunpack.c.l.b16 %v412
        %v671 = vunpack.c.l.b16 %v413
        %v672 = vunpack.c.l.b16 %v414
        %v673 = vunpack.c.l.b16 %v415
        %v674 = vunpack.c.l.b16 %v416
        %v675 = vunpack.c.l.b16 %v417
        %v676 = vunpack.c.l.b16 %v418
        %v677 = vunpack.c.l.b16 %v419
        %v678 = vunpack.c.l.b16 %v420
        %v679 = vunpack.c.l.b16 %v421
        %v680 = vunpack.c.l.b16 %v422
        %v681 = vunpack.c.l.b16 %v423
        %v682 = vunpack.c.l.b16 %v424
        %v683 = vunpack.c.l.b16 %v425
        %v684 = vunpack.c.l.b16 %v426
        %v685 = vunpack.c.l.b16 %v427
        %v686 = vunpack.c.l.b16 %v428
        %v687 = vunpack.c.l.b16 %v429
        %v688 = vunpack.c.l.b16 %v430
        %v689 = vunpack.c.l.b16 %v431
        %v690 = vunpack.c.l.b16 %v432
        %v691 = vunpack.c.l.b16 %v433
        %v692 = vunpack.c.l.b16 %v434
        %v693 = vunpack.c.l.b16 %v435
        %v694 = vunpack.c.l.b16 %v436
        %v695 = vunpack.c.l.b16 %v437
        %v696 = vunpack.c.l.b16 %v438
        %v697 = vunpack.c.l.b16 %v439
        %v698 = vunpack.c.l.b16 %v440
        %v699 = vunpack.c.l.b16 %v441
        %v700 = vunpack.c.l.b16 %v442
        %v701 = vunpack.c.l.b16 %v443
        %v702 = vunpack.c.l.b16 %v444
        %v703 = vunpack.c.l.b16 %v445
        %v704 = vunpack.c.l.b16 %v446
        %v705 = vunpack.c.l.b16 %v447
        %v706 = vunpack.c.l.b16 %v448
        %v707 = vunpack.c.l.b16 %v449
        %v708 = vunpack.c.l.b16 %v450
        %v709 = vunpack.c.l.b16 %v451
        %v710 = vunpack.c.l.b16 %v452
        %v711 = vunpack.c.l.b16 %v453
        %v712 = vunpack.c.l.b16 %v454
        %v713 = vunpack.c.l.b16 %v455
        %v714 = vunpack.c.l.b16 %v456
        %v715 = vunpack.c.l.b16 %v457
        %v716 = vunpack.c.l.b16 %v458
        %v717 = vunpack.c.l.b16 %v459
        %v718 = vunpack.c.l.b16 %v460
        %v719 = vunpack.c.l.b16 %v461
        %v720 = vunpack.c.l.b16 %v462
        %v721 = vunpack.c.l.b16 %v463
        %v722 = vunpack.c.l.b16 %v464
        %v723 = vunpack.c.l.b16 %v465
        %v724 = vunpack.c.l.b16 %v466
        %v725 = vunpack.c.l.b16 %v467
        %v726 = vunpack.c.l.b16 %v468
        %v727 = vunpack.c.l.b16 %v469
        %v728 = vunpack.c.l.b16 %v470
        %v729 = vunpack.c.l.b16 %v471
        %v730 = vunpack.c.l.b16 %v472
        %v731 = vunpack.c.l.b16 %v473
        %v732 = vunpack.c.l.b16 %v474
        %v733 = vunpack.c.l.b16 %v475
        %v734 = vunpack.c.l.b16 %v476
        %v735 = vunpack.c.l.b16 %v477
        %v736 = vunpack.c.l.b16 %v478
        %v737 = vunpack.c.l.b16 %v479
        %v738 = vunpack.c.l.b16 %v480
        %v739 = vunpack.c.l.b16 %v481
        %v740 = vunpack.c.l.b16 %v482
        %v741 = vunpack.c.l.b16 %v483
        %v742 = vunpack.c.l.b16 %v484
        %v743 = vunpack.c.l.b16 %v485
        %v744 = vunpack.c.l.b16 %v486
        %v745 = vunpack.c.l.b16 %v487
        %v746 = vunpack.c.l.b16 %v488
        %v747 = vunpack.c.l.b16 %v489
        %v748 = vunpack.c.l.b16 %v490
        %v749 = vunpack.c.l.b16 %v491
        %v750 = vunpack.c.l.b16 %v492
        %v751 = vunpack.c.l.b16 %v493
        %v752 = vunpack.c.l.b16 %v494
        %v753 = vunpack.c.l.b16 %v495
        %v754 = vunpack.c.l.b16 %v496
        %v755 = vunpack.c.l.b16 %v497
        %v756 = vunpack.c.l.b16 %v498
        %v757 = vunpack.c.l.b16 %v499
        %v758 = vunpack.c.l.b16 %v500
        %v759 = vunpack.c.l.b16 %v501
        %v760 = vunpack.c.l.b16 %v502
        %v761 = vunpack.c.l.b16 %v503
        %v762 = vunpack.c.l.b16 %v504
        %v763 = vunpack.c.l.b16 %v505
        %v764 = vunpack.c.l.b16 %v506
        %v765 = vpack.c.b16 %v641, %v640
        %v766 = vpack.c.b16 %v643, %v642
        %v767 = vpack.c.b16 %v645, %v644
        %v768 = vpack.c.b16 %v647, %v646
        %v769 = vpack.c.b16 %v649, %v648
        %v770 = vpack.c.b16 %v651, %v650
        %v771 = vpack.c.b16 %v653, %v652
        %v772 = vpack.c.b16 %v655, %v654
        %v773 = vpack.c.b16 %v657, %v656
        %v774 = vpack.c.b16 %v659, %v658
        %v775 = vpack.c.b16 %v661, %v660
        %v776 = vpack.c.b16 %v663, %v662
        %v777 = vpack.c.b16 %v665, %v664
        %v778 = vpack.c.b16 %v667, %v666
        %v779 = vpack.c.b16 %v669, %v668
        %v780 = vpack.c.b16 %v671, %v670
        %v781 = vpack.c.b16 %v673, %v672
        %v782 = vpack.c.b16 %v675, %v674
        %v783 = vpack.c.b16 %v677, %v676
        %v784 = vpack.c.b16 %v679, %v678
        %v785 = vpack.c.b16 %v681, %v680
        %v786 = vpack.c.b16 %v683, %v682
        %v787 = vpack.c.b16 %v685, %v684
        %v788 = vpack.c.b16 %v687, %v686
        %v789 = vpack.c.b16 %v689, %v688
        %v790 = vpack.c.b16 %v691, %v690
        %v791 = vpack.c.b16 %v693, %v692
        %v792 = vpack.c.b16 %v695, %v694
        %v793 = vpack.c.b16 %v697, %v696
        %v794 = vpack.c.b16 %v699, %v698
        %v795 = vpack.c.b16 %v701, %v700
        %v796 = vpack.c.b16 %v703, %v702
        %v797 = vpack.c.b16 %v705, %v704
        %v798 = vpack.c.b16 %v707, %v706
        %v799 = vpack.c.b16 %v709, %v708
        %v800 = vpack.c.b16 %v711, %v710
        %v801 = vpack.c.b16 %v713, %v712
        %v802 = vpack.c.b16 %v715, %v714
        %v803 = vpack.c.b16 %v717, %v716
        %v804 = vpack.c.b16 %v719, %v718
        %v805 = vpack.c.b16 %v721, %v720
        %v806 = vpack.c.b16 %v723, %v722
        %v807 = vpack.c.b16 %v725, %v724
        %v808 = vpack.c.b16 %v727, %v726
        %v809 = vpack.c.b16 %v729, %v728
        %v810 = vpack.c.b16 %v731, %v730
        %v811 = vpack.c.b16 %v733, %v732
        %v812 = vpack.c.b16 %v735, %v734
        %v813 = vpack.c.b16 %v737, %v736
        %v814 = vpack.c.b16 %v739, %v738
        %v815 = vpack.c.b16 %v741, %v740
        %v816 = vpack.c.b16 %v743, %v742
        %v817 = vpack.c.b16 %v745, %v744
        %v818 = vpack.c.b16 %v747, %v746
        %v819 = vpack.c.b16 %v749, %v748
        %v820 = vpack.c.b16 %v751, %v750
        %v821 = vpack.c.b16 %v753, %v752
        %v822 = vpack.c.b16 %v755, %v754
        %v823 = vpack.c.b16 %v757, %v756
        %v824 = vpack.c.b16 %v759, %v758
        %v825 = vpack.c.b16 %v761, %v760
        %v826 = vpack.c.b16 %v763, %v762
        %v827 = vpack.c.b16 %v764, %v764
        %vm828 = vcmask 23552
        %v830 = vsel %vm828, %v765, 0
        %v833 = vsel %vm828, %v766, 0
        %v836 = vsel %vm828, %v767, 0
        %v839 = vsel %vm828, %v768, 0
        %v842 = vsel %vm828, %v769, 0
        %v845 = vsel %vm828, %v770, 0
        %v848 = vsel %vm828, %v771, 0
        %v851 = vsel %vm828, %v772, 0
        %v854 = vsel %vm828, %v773, 0
        %v857 = vsel %vm828, %v774, 0
        %v860 = vsel %vm828, %v775, 0
        %v863 = vsel %vm828, %v776, 0
        %v866 = vsel %vm828, %v777, 0
        %v869 = vsel %vm828, %v778, 0
        %v872 = vsel %vm828, %v779, 0
        %v875 = vsel %vm828, %v780, 0
        %v878 = vsel %vm828, %v781, 0
        %v881 = vsel %vm828, %v782, 0
        %v884 = vsel %vm828, %v783, 0
        %v887 = vsel %vm828, %v784, 0
        %v890 = vsel %vm828, %v785, 0
        %v893 = vsel %vm828, %v786, 0
        %v896 = vsel %vm828, %v787, 0
        %v899 = vsel %vm828, %v788, 0
        %v902 = vsel %vm828, %v789, 0
        %v905 = vsel %vm828, %v790, 0
        %v908 = vsel %vm828, %v791, 0
        %v911 = vsel %vm828, %v792, 0
        %v914 = vsel %vm828, %v793, 0
        %v917 = vsel %vm828, %v794, 0
        %v920 = vsel %vm828, %v795, 0
        %v923 = vsel %vm828, %v796, 0
        %v926 = vsel %vm828, %v797, 0
        %v929 = vsel %vm828, %v798, 0
        %v932 = vsel %vm828, %v799, 0
        %v935 = vsel %vm828, %v800, 0
        %v938 = vsel %vm828, %v801, 0
        %v941 = vsel %vm828, %v802, 0
        %v944 = vsel %vm828, %v803, 0
        %v947 = vsel %vm828, %v804, 0
        %v950 = vsel %vm828, %v805, 0
        %v953 = vsel %vm828, %v806, 0
        %v956 = vsel %vm828, %v807, 0
        %v959 = vsel %vm828, %v808, 0
        %v962 = vsel %vm828, %v809, 0
        %v965 = vsel %vm828, %v810, 0
        %v968 = vsel %vm828, %v811, 0
        %v971 = vsel %vm828, %v812, 0
        %v974 = vsel %vm828, %v813, 0
        %v977 = vsel %vm828, %v814, 0
        %v980 = vsel %vm828, %v815, 0
        %v983 = vsel %vm828, %v816, 0
        %v986 = vsel %vm828, %v817, 0
        %v989 = vsel %vm828, %v818, 0
        %v992 = vsel %vm828, %v819, 0
        %v995 = vsel %vm828, %v820, 0
        %v998 = vsel %vm828, %v821, 0
        %v1001 = vsel %vm828, %v822, 0
        %v1004 = vsel %vm828, %v823, 0
        %v1007 = vsel %vm828, %v824, 0
        %v1010 = vsel %vm828, %v825, 0
        %v1013 = vsel %vm828, %v826, 0
        %v1016 = vsel %vm828, %v827, 0
        %vm1018 = vcmask 1040384
        %vm1019 = vcmask 1041408
        %v1020 = vsel %vm1018, 4294967295, 65535
        %v1021 = vsel %vm1019, %v1020, 0
        %v1023 = vand.u32 %v507, %v1021
        %1025 = vmatprep.subr.bf16.mxu0 0
        %1026 = vmatpush1.bf16.msra.mxu0 0
        %1027 = vmatprep.subr.bf16.mxu0 0
        %1028 = vmatpush1.bf16.msra.mxu0 0
        %1029 = vmatprep.subr.bf16.mxu0 0
        %1030 = vmatpush1.bf16.msra.mxu0 0
        %1031 = vmatprep.subr.bf16.mxu0 0
        %1032 = vmatpush1.bf16.msra.mxu0 0
        %1033 = vmatprep.subr.bf16.mxu0 0
        %1034 = vmatpush1.bf16.msra.mxu0 0
        %1035 = vmatprep.subr.bf16.mxu0 0
        %1036 = vmatpush1.bf16.msra.mxu0 0
        %1037 = vmatprep.subr.bf16.mxu0 0
        %1038 = vmatpush1.bf16.msra.mxu0 0
        %1039 = vmatprep.subr.bf16.mxu0 0
        %1040 = vmatpush1.bf16.msra.mxu0 %v1023
        %1041 = vmatprep.subr.bf16.mxu0 0
        %1042 = vmatpush2.bf16.msra.mxu0 0
        %1043 = vmatprep.subr.bf16.mxu0 0
        %1044 = vmatpush2.bf16.msra.mxu0 0
        %1045 = vmatprep.subr.bf16.mxu0 0
        %1046 = vmatpush2.bf16.msra.mxu0 0
        %1047 = vmatprep.subr.bf16.mxu0 0
        %1048 = vmatpush2.bf16.msra.mxu0 0
        %1049 = vmatprep.subr.bf16.mxu0 0
        %1050 = vmatpush2.bf16.msra.mxu0 0
        %1051 = vmatprep.subr.bf16.mxu0 0
        %1052 = vmatpush2.bf16.msra.mxu0 0
        %1053 = vmatprep.subr.bf16.mxu0 0
        %1054 = vmatpush2.bf16.msra.mxu0 0
        %1055 = vmatprep.subr.bf16.mxu0 0
        %1056 = vmatpush2.bf16.msra.mxu0 0
        %1057 = vmatprep.mubr.bf16.mxu0 0
        %1058 = vmatmul.mubr.bf16.gmra.mxu0 %v830
        %v1059 = vpop.f32.mrf.mxu0
        %v1060 = vadd.f32 %v513, %v1059
        %v1061 = vpop.f32.mrf.mxu0
        %v1062 = vpop.f32.mrf.mxu0
        %v1063 = vadd.f32 %v513, %v1062
        %v1064 = vpop.f32.mrf.mxu0
        %1065 = vmatprep.mubr.bf16.mxu0 0
        %1066 = vmatmul.mubr.bf16.gmra.mxu0 %v833
        %v1067 = vpop.f32.mrf.mxu0
        %v1068 = vadd.f32 %v513, %v1067
        %v1069 = vpop.f32.mrf.mxu0
        %v1070 = vpop.f32.mrf.mxu0
        %v1071 = vadd.f32 %v513, %v1070
        %v1072 = vpop.f32.mrf.mxu0
        %1073 = vmatprep.mubr.bf16.mxu0 0
        %1074 = vmatmul.mubr.bf16.gmra.mxu0 %v836
        %v1075 = vpop.f32.mrf.mxu0
        %v1076 = vadd.f32 %v513, %v1075
        %v1077 = vpop.f32.mrf.mxu0
        %v1078 = vpop.f32.mrf.mxu0
        %v1079 = vadd.f32 %v513, %v1078
        %v1080 = vpop.f32.mrf.mxu0
        %1081 = vmatprep.mubr.bf16.mxu0 0
        %1082 = vmatmul.mubr.bf16.gmra.mxu0 %v839
        %v1083 = vpop.f32.mrf.mxu0
        %v1084 = vadd.f32 %v513, %v1083
        %v1085 = vpop.f32.mrf.mxu0
        %v1086 = vpop.f32.mrf.mxu0
        %v1087 = vadd.f32 %v513, %v1086
        %v1088 = vpop.f32.mrf.mxu0
        %1089 = vmatprep.mubr.bf16.mxu0 0
        %1090 = vmatmul.mubr.bf16.gmra.mxu0 %v842
        %v1091 = vpop.f32.mrf.mxu0
        %v1092 = vadd.f32 %v513, %v1091
        %v1093 = vpop.f32.mrf.mxu0
        %v1094 = vpop.f32.mrf.mxu0
        %v1095 = vadd.f32 %v513, %v1094
        %v1096 = vpop.f32.mrf.mxu0
        %1097 = vmatprep.mubr.bf16.mxu0 0
        %1098 = vmatmul.mubr.bf16.gmra.mxu0 %v845
        %v1099 = vpop.f32.mrf.mxu0
        %v1100 = vadd.f32 %v513, %v1099
        %v1101 = vpop.f32.mrf.mxu0
        %v1102 = vpop.f32.mrf.mxu0
        %v1103 = vadd.f32 %v513, %v1102
        %v1104 = vpop.f32.mrf.mxu0
        %1105 = vmatprep.mubr.bf16.mxu0 0
        %1106 = vmatmul.mubr.bf16.gmra.mxu0 %v848
        %v1107 = vpop.f32.mrf.mxu0
        %v1108 = vadd.f32 %v513, %v1107
        %v1109 = vpop.f32.mrf.mxu0
        %v1110 = vpop.f32.mrf.mxu0
        %v1111 = vadd.f32 %v513, %v1110
        %v1112 = vpop.f32.mrf.mxu0
        %1113 = vmatprep.mubr.bf16.mxu0 0
        %1114 = vmatmul.mubr.bf16.gmra.mxu0 %v851
        %v1115 = vpop.f32.mrf.mxu0
        %v1116 = vadd.f32 %v513, %v1115
        %v1117 = vpop.f32.mrf.mxu0
        %v1118 = vpop.f32.mrf.mxu0
        %v1119 = vadd.f32 %v513, %v1118
        %v1120 = vpop.f32.mrf.mxu0
        %1121 = vmatprep.mubr.bf16.mxu0 0
        %1122 = vmatmul.mubr.bf16.gmra.mxu0 %v854
        %v1123 = vpop.f32.mrf.mxu0
        %v1124 = vadd.f32 %v513, %v1123
        %v1125 = vpop.f32.mrf.mxu0
        %v1126 = vpop.f32.mrf.mxu0
        %v1127 = vadd.f32 %v513, %v1126
        %v1128 = vpop.f32.mrf.mxu0
        %1129 = vmatprep.mubr.bf16.mxu0 0
        %1130 = vmatmul.mubr.bf16.gmra.mxu0 %v857
        %v1131 = vpop.f32.mrf.mxu0
        %v1132 = vadd.f32 %v513, %v1131
        %v1133 = vpop.f32.mrf.mxu0
        %v1134 = vpop.f32.mrf.mxu0
        %v1135 = vadd.f32 %v513, %v1134
        %v1136 = vpop.f32.mrf.mxu0
        %1137 = vmatprep.mubr.bf16.mxu0 0
        %1138 = vmatmul.mubr.bf16.gmra.mxu0 %v860
        %v1139 = vpop.f32.mrf.mxu0
        %v1140 = vadd.f32 %v513, %v1139
        %v1141 = vpop.f32.mrf.mxu0
        %v1142 = vpop.f32.mrf.mxu0
        %v1143 = vadd.f32 %v513, %v1142
        %v1144 = vpop.f32.mrf.mxu0
        %1145 = vmatprep.mubr.bf16.mxu0 0
        %1146 = vmatmul.mubr.bf16.gmra.mxu0 %v863
        %v1147 = vpop.f32.mrf.mxu0
        %v1148 = vadd.f32 %v513, %v1147
        %v1149 = vpop.f32.mrf.mxu0
        %v1150 = vpop.f32.mrf.mxu0
        %v1151 = vadd.f32 %v513, %v1150
        %v1152 = vpop.f32.mrf.mxu0
        %1153 = vmatprep.mubr.bf16.mxu0 0
        %1154 = vmatmul.mubr.bf16.gmra.mxu0 %v866
        %v1155 = vpop.f32.mrf.mxu0
        %v1156 = vadd.f32 %v513, %v1155
        %v1157 = vpop.f32.mrf.mxu0
        %v1158 = vpop.f32.mrf.mxu0
        %v1159 = vadd.f32 %v513, %v1158
        %v1160 = vpop.f32.mrf.mxu0
        %1161 = vmatprep.mubr.bf16.mxu0 0
        %1162 = vmatmul.mubr.bf16.gmra.mxu0 %v869
        %v1163 = vpop.f32.mrf.mxu0
        %v1164 = vadd.f32 %v513, %v1163
        %v1165 = vpop.f32.mrf.mxu0
        %v1166 = vpop.f32.mrf.mxu0
        %v1167 = vadd.f32 %v513, %v1166
        %v1168 = vpop.f32.mrf.mxu0
        %1169 = vmatprep.mubr.bf16.mxu0 0
        %1170 = vmatmul.mubr.bf16.gmra.mxu0 %v872
        %v1171 = vpop.f32.mrf.mxu0
        %v1172 = vadd.f32 %v513, %v1171
        %v1173 = vpop.f32.mrf.mxu0
        %v1174 = vpop.f32.mrf.mxu0
        %v1175 = vadd.f32 %v513, %v1174
        %v1176 = vpop.f32.mrf.mxu0
        %1177 = vmatprep.mubr.bf16.mxu0 0
        %1178 = vmatmul.mubr.bf16.gmra.mxu0 %v875
        %v1179 = vpop.f32.mrf.mxu0
        %v1180 = vadd.f32 %v513, %v1179
        %v1181 = vpop.f32.mrf.mxu0
        %v1182 = vpop.f32.mrf.mxu0
        %v1183 = vadd.f32 %v513, %v1182
        %v1184 = vpop.f32.mrf.mxu0
        %1185 = vmatprep.mubr.bf16.mxu0 0
        %1186 = vmatmul.mubr.bf16.gmra.mxu0 %v878
        %v1187 = vpop.f32.mrf.mxu0
        %v1188 = vadd.f32 %v513, %v1187
        %v1189 = vpop.f32.mrf.mxu0
        %v1190 = vpop.f32.mrf.mxu0
        %v1191 = vadd.f32 %v513, %v1190
        %v1192 = vpop.f32.mrf.mxu0
        %1193 = vmatprep.mubr.bf16.mxu0 0
        %1194 = vmatmul.mubr.bf16.gmra.mxu0 %v881
        %v1195 = vpop.f32.mrf.mxu0
        %v1196 = vadd.f32 %v513, %v1195
        %v1197 = vpop.f32.mrf.mxu0
        %v1198 = vpop.f32.mrf.mxu0
        %v1199 = vadd.f32 %v513, %v1198
        %v1200 = vpop.f32.mrf.mxu0
        %1201 = vmatprep.mubr.bf16.mxu0 0
        %1202 = vmatmul.mubr.bf16.gmra.mxu0 %v884
        %v1203 = vpop.f32.mrf.mxu0
        %v1204 = vadd.f32 %v513, %v1203
        %v1205 = vpop.f32.mrf.mxu0
        %v1206 = vpop.f32.mrf.mxu0
        %v1207 = vadd.f32 %v513, %v1206
        %v1208 = vpop.f32.mrf.mxu0
        %1209 = vmatprep.mubr.bf16.mxu0 0
        %1210 = vmatmul.mubr.bf16.gmra.mxu0 %v887
        %v1211 = vpop.f32.mrf.mxu0
        %v1212 = vadd.f32 %v513, %v1211
        %v1213 = vpop.f32.mrf.mxu0
        %v1214 = vpop.f32.mrf.mxu0
        %v1215 = vadd.f32 %v513, %v1214
        %v1216 = vpop.f32.mrf.mxu0
        %1217 = vmatprep.mubr.bf16.mxu0 0
        %1218 = vmatmul.mubr.bf16.gmra.mxu0 %v890
        %v1219 = vpop.f32.mrf.mxu0
        %v1220 = vadd.f32 %v513, %v1219
        %v1221 = vpop.f32.mrf.mxu0
        %v1222 = vpop.f32.mrf.mxu0
        %v1223 = vadd.f32 %v513, %v1222
        %v1224 = vpop.f32.mrf.mxu0
        %1225 = vmatprep.mubr.bf16.mxu0 0
        %1226 = vmatmul.mubr.bf16.gmra.mxu0 %v893
        %v1227 = vpop.f32.mrf.mxu0
        %v1228 = vadd.f32 %v513, %v1227
        %v1229 = vpop.f32.mrf.mxu0
        %v1230 = vpop.f32.mrf.mxu0
        %v1231 = vadd.f32 %v513, %v1230
        %v1232 = vpop.f32.mrf.mxu0
        %1233 = vmatprep.mubr.bf16.mxu0 0
        %1234 = vmatmul.mubr.bf16.gmra.mxu0 %v896
        %v1235 = vpop.f32.mrf.mxu0
        %v1236 = vadd.f32 %v513, %v1235
        %v1237 = vpop.f32.mrf.mxu0
        %v1238 = vpop.f32.mrf.mxu0
        %v1239 = vadd.f32 %v513, %v1238
        %v1240 = vpop.f32.mrf.mxu0
        %1241 = vmatprep.mubr.bf16.mxu0 0
        %1242 = vmatmul.mubr.bf16.gmra.mxu0 %v899
        %v1243 = vpop.f32.mrf.mxu0
        %v1244 = vadd.f32 %v513, %v1243
        %v1245 = vpop.f32.mrf.mxu0
        %v1246 = vpop.f32.mrf.mxu0
        %v1247 = vadd.f32 %v513, %v1246
        %v1248 = vpop.f32.mrf.mxu0
        %1249 = vmatprep.mubr.bf16.mxu0 0
        %1250 = vmatmul.mubr.bf16.gmra.mxu0 %v902
        %v1251 = vpop.f32.mrf.mxu0
        %v1252 = vadd.f32 %v513, %v1251
        %v1253 = vpop.f32.mrf.mxu0
        %v1254 = vpop.f32.mrf.mxu0
        %v1255 = vadd.f32 %v513, %v1254
        %v1256 = vpop.f32.mrf.mxu0
        %1257 = vmatprep.mubr.bf16.mxu0 0
        %1258 = vmatmul.mubr.bf16.gmra.mxu0 %v905
        %v1259 = vpop.f32.mrf.mxu0
        %v1260 = vadd.f32 %v513, %v1259
        %v1261 = vpop.f32.mrf.mxu0
        %v1262 = vpop.f32.mrf.mxu0
        %v1263 = vadd.f32 %v513, %v1262
        %v1264 = vpop.f32.mrf.mxu0
        %1265 = vmatprep.mubr.bf16.mxu0 0
        %1266 = vmatmul.mubr.bf16.gmra.mxu0 %v908
        %v1267 = vpop.f32.mrf.mxu0
        %v1268 = vadd.f32 %v513, %v1267
        %v1269 = vpop.f32.mrf.mxu0
        %v1270 = vpop.f32.mrf.mxu0
        %v1271 = vadd.f32 %v513, %v1270
        %v1272 = vpop.f32.mrf.mxu0
        %1273 = vmatprep.mubr.bf16.mxu0 0
        %1274 = vmatmul.mubr.bf16.gmra.mxu0 %v911
        %v1275 = vpop.f32.mrf.mxu0
        %v1276 = vadd.f32 %v513, %v1275
        %v1277 = vpop.f32.mrf.mxu0
        %v1278 = vpop.f32.mrf.mxu0
        %v1279 = vadd.f32 %v513, %v1278
        %v1280 = vpop.f32.mrf.mxu0
        %1281 = vmatprep.mubr.bf16.mxu0 0
        %1282 = vmatmul.mubr.bf16.gmra.mxu0 %v914
        %v1283 = vpop.f32.mrf.mxu0
        %v1284 = vadd.f32 %v513, %v1283
        %v1285 = vpop.f32.mrf.mxu0
        %v1286 = vpop.f32.mrf.mxu0
        %v1287 = vadd.f32 %v513, %v1286
        %v1288 = vpop.f32.mrf.mxu0
        %1289 = vmatprep.mubr.bf16.mxu0 0
        %1290 = vmatmul.mubr.bf16.gmra.mxu0 %v917
        %v1291 = vpop.f32.mrf.mxu0
        %v1292 = vadd.f32 %v513, %v1291
        %v1293 = vpop.f32.mrf.mxu0
        %v1294 = vpop.f32.mrf.mxu0
        %v1295 = vadd.f32 %v513, %v1294
        %v1296 = vpop.f32.mrf.mxu0
        %1297 = vmatprep.mubr.bf16.mxu0 0
        %1298 = vmatmul.mubr.bf16.gmra.mxu0 %v920
        %v1299 = vpop.f32.mrf.mxu0
        %v1300 = vadd.f32 %v513, %v1299
        %v1301 = vpop.f32.mrf.mxu0
        %v1302 = vpop.f32.mrf.mxu0
        %v1303 = vadd.f32 %v513, %v1302
        %v1304 = vpop.f32.mrf.mxu0
        %1305 = vmatprep.mubr.bf16.mxu0 0
        %1306 = vmatmul.mubr.bf16.gmra.mxu0 %v923
        %v1307 = vpop.f32.mrf.mxu0
        %v1308 = vadd.f32 %v513, %v1307
        %v1309 = vpop.f32.mrf.mxu0
        %v1310 = vpop.f32.mrf.mxu0
        %v1311 = vadd.f32 %v513, %v1310
        %v1312 = vpop.f32.mrf.mxu0
        %1313 = vmatprep.mubr.bf16.mxu0 0
        %1314 = vmatmul.mubr.bf16.gmra.mxu0 %v926
        %v1315 = vpop.f32.mrf.mxu0
        %v1316 = vadd.f32 %v513, %v1315
        %v1317 = vpop.f32.mrf.mxu0
        %v1318 = vpop.f32.mrf.mxu0
        %v1319 = vadd.f32 %v513, %v1318
        %v1320 = vpop.f32.mrf.mxu0
        %1321 = vmatprep.mubr.bf16.mxu0 0
        %1322 = vmatmul.mubr.bf16.gmra.mxu0 %v929
        %v1323 = vpop.f32.mrf.mxu0
        %v1324 = vadd.f32 %v513, %v1323
        %v1325 = vpop.f32.mrf.mxu0
        %v1326 = vpop.f32.mrf.mxu0
        %v1327 = vadd.f32 %v513, %v1326
        %v1328 = vpop.f32.mrf.mxu0
        %1329 = vmatprep.mubr.bf16.mxu0 0
        %1330 = vmatmul.mubr.bf16.gmra.mxu0 %v932
        %v1331 = vpop.f32.mrf.mxu0
        %v1332 = vadd.f32 %v513, %v1331
        %v1333 = vpop.f32.mrf.mxu0
        %v1334 = vpop.f32.mrf.mxu0
        %v1335 = vadd.f32 %v513, %v1334
        %v1336 = vpop.f32.mrf.mxu0
        %1337 = vmatprep.mubr.bf16.mxu0 0
        %1338 = vmatmul.mubr.bf16.gmra.mxu0 %v935
        %v1339 = vpop.f32.mrf.mxu0
        %v1340 = vadd.f32 %v513, %v1339
        %v1341 = vpop.f32.mrf.mxu0
        %v1342 = vpop.f32.mrf.mxu0
        %v1343 = vadd.f32 %v513, %v1342
        %v1344 = vpop.f32.mrf.mxu0
        %1345 = vmatprep.mubr.bf16.mxu0 0
        %1346 = vmatmul.mubr.bf16.gmra.mxu0 %v938
        %v1347 = vpop.f32.mrf.mxu0
        %v1348 = vadd.f32 %v513, %v1347
        %v1349 = vpop.f32.mrf.mxu0
        %v1350 = vpop.f32.mrf.mxu0
        %v1351 = vadd.f32 %v513, %v1350
        %v1352 = vpop.f32.mrf.mxu0
        %1353 = vmatprep.mubr.bf16.mxu0 0
        %1354 = vmatmul.mubr.bf16.gmra.mxu0 %v941
        %v1355 = vpop.f32.mrf.mxu0
        %v1356 = vadd.f32 %v513, %v1355
        %v1357 = vpop.f32.mrf.mxu0
        %v1358 = vpop.f32.mrf.mxu0
        %v1359 = vadd.f32 %v513, %v1358
        %v1360 = vpop.f32.mrf.mxu0
        %1361 = vmatprep.mubr.bf16.mxu0 0
        %1362 = vmatmul.mubr.bf16.gmra.mxu0 %v944
        %v1363 = vpop.f32.mrf.mxu0
        %v1364 = vadd.f32 %v513, %v1363
        %v1365 = vpop.f32.mrf.mxu0
        %v1366 = vpop.f32.mrf.mxu0
        %v1367 = vadd.f32 %v513, %v1366
        %v1368 = vpop.f32.mrf.mxu0
        %1369 = vmatprep.mubr.bf16.mxu0 0
        %1370 = vmatmul.mubr.bf16.gmra.mxu0 %v947
        %v1371 = vpop.f32.mrf.mxu0
        %v1372 = vadd.f32 %v513, %v1371
        %v1373 = vpop.f32.mrf.mxu0
        %v1374 = vpop.f32.mrf.mxu0
        %v1375 = vadd.f32 %v513, %v1374
        %v1376 = vpop.f32.mrf.mxu0
        %1377 = vmatprep.mubr.bf16.mxu0 0
        %1378 = vmatmul.mubr.bf16.gmra.mxu0 %v950
        %v1379 = vpop.f32.mrf.mxu0
        %v1380 = vadd.f32 %v513, %v1379
        %v1381 = vpop.f32.mrf.mxu0
        %v1382 = vpop.f32.mrf.mxu0
        %v1383 = vadd.f32 %v513, %v1382
        %v1384 = vpop.f32.mrf.mxu0
        %1385 = vmatprep.mubr.bf16.mxu0 0
        %1386 = vmatmul.mubr.bf16.gmra.mxu0 %v953
        %v1387 = vpop.f32.mrf.mxu0
        %v1388 = vadd.f32 %v513, %v1387
        %v1389 = vpop.f32.mrf.mxu0
        %v1390 = vpop.f32.mrf.mxu0
        %v1391 = vadd.f32 %v513, %v1390
        %v1392 = vpop.f32.mrf.mxu0
        %1393 = vmatprep.mubr.bf16.mxu0 0
        %1394 = vmatmul.mubr.bf16.gmra.mxu0 %v956
        %v1395 = vpop.f32.mrf.mxu0
        %v1396 = vadd.f32 %v513, %v1395
        %v1397 = vpop.f32.mrf.mxu0
        %v1398 = vpop.f32.mrf.mxu0
        %v1399 = vadd.f32 %v513, %v1398
        %v1400 = vpop.f32.mrf.mxu0
        %1401 = vmatprep.mubr.bf16.mxu0 0
        %1402 = vmatmul.mubr.bf16.gmra.mxu0 %v959
        %v1403 = vpop.f32.mrf.mxu0
        %v1404 = vadd.f32 %v513, %v1403
        %v1405 = vpop.f32.mrf.mxu0
        %v1406 = vpop.f32.mrf.mxu0
        %v1407 = vadd.f32 %v513, %v1406
        %v1408 = vpop.f32.mrf.mxu0
        %1409 = vmatprep.mubr.bf16.mxu0 0
        %1410 = vmatmul.mubr.bf16.gmra.mxu0 %v962
        %v1411 = vpop.f32.mrf.mxu0
        %v1412 = vadd.f32 %v513, %v1411
        %v1413 = vpop.f32.mrf.mxu0
        %v1414 = vpop.f32.mrf.mxu0
        %v1415 = vadd.f32 %v513, %v1414
        %v1416 = vpop.f32.mrf.mxu0
        %1417 = vmatprep.mubr.bf16.mxu0 0
        %1418 = vmatmul.mubr.bf16.gmra.mxu0 %v965
        %v1419 = vpop.f32.mrf.mxu0
        %v1420 = vadd.f32 %v513, %v1419
        %v1421 = vpop.f32.mrf.mxu0
        %v1422 = vpop.f32.mrf.mxu0
        %v1423 = vadd.f32 %v513, %v1422
        %v1424 = vpop.f32.mrf.mxu0
        %1425 = vmatprep.mubr.bf16.mxu0 0
        %1426 = vmatmul.mubr.bf16.gmra.mxu0 %v968
        %v1427 = vpop.f32.mrf.mxu0
        %v1428 = vadd.f32 %v513, %v1427
        %v1429 = vpop.f32.mrf.mxu0
        %v1430 = vpop.f32.mrf.mxu0
        %v1431 = vadd.f32 %v513, %v1430
        %v1432 = vpop.f32.mrf.mxu0
        %1433 = vmatprep.mubr.bf16.mxu0 0
        %1434 = vmatmul.mubr.bf16.gmra.mxu0 %v971
        %v1435 = vpop.f32.mrf.mxu0
        %v1436 = vadd.f32 %v513, %v1435
        %v1437 = vpop.f32.mrf.mxu0
        %v1438 = vpop.f32.mrf.mxu0
        %v1439 = vadd.f32 %v513, %v1438
        %v1440 = vpop.f32.mrf.mxu0
        %1441 = vmatprep.mubr.bf16.mxu0 0
        %1442 = vmatmul.mubr.bf16.gmra.mxu0 %v974
        %v1443 = vpop.f32.mrf.mxu0
        %v1444 = vadd.f32 %v513, %v1443
        %v1445 = vpop.f32.mrf.mxu0
        %v1446 = vpop.f32.mrf.mxu0
        %v1447 = vadd.f32 %v513, %v1446
        %v1448 = vpop.f32.mrf.mxu0
        %1449 = vmatprep.mubr.bf16.mxu0 0
        %1450 = vmatmul.mubr.bf16.gmra.mxu0 %v977
        %v1451 = vpop.f32.mrf.mxu0
        %v1452 = vadd.f32 %v513, %v1451
        %v1453 = vpop.f32.mrf.mxu0
        %v1454 = vpop.f32.mrf.mxu0
        %v1455 = vadd.f32 %v513, %v1454
        %v1456 = vpop.f32.mrf.mxu0
        %1457 = vmatprep.mubr.bf16.mxu0 0
        %1458 = vmatmul.mubr.bf16.gmra.mxu0 %v980
        %v1459 = vpop.f32.mrf.mxu0
        %v1460 = vadd.f32 %v513, %v1459
        %v1461 = vpop.f32.mrf.mxu0
        %v1462 = vpop.f32.mrf.mxu0
        %v1463 = vadd.f32 %v513, %v1462
        %v1464 = vpop.f32.mrf.mxu0
        %1465 = vmatprep.mubr.bf16.mxu0 0
        %1466 = vmatmul.mubr.bf16.gmra.mxu0 %v983
        %v1467 = vpop.f32.mrf.mxu0
        %v1468 = vadd.f32 %v513, %v1467
        %v1469 = vpop.f32.mrf.mxu0
        %v1470 = vpop.f32.mrf.mxu0
        %v1471 = vadd.f32 %v513, %v1470
        %v1472 = vpop.f32.mrf.mxu0
        %1473 = vmatprep.mubr.bf16.mxu0 0
        %1474 = vmatmul.mubr.bf16.gmra.mxu0 %v986
        %v1475 = vpop.f32.mrf.mxu0
        %v1476 = vadd.f32 %v513, %v1475
        %v1477 = vpop.f32.mrf.mxu0
        %v1478 = vpop.f32.mrf.mxu0
        %v1479 = vadd.f32 %v513, %v1478
        %v1480 = vpop.f32.mrf.mxu0
        %1481 = vmatprep.mubr.bf16.mxu0 0
        %1482 = vmatmul.mubr.bf16.gmra.mxu0 %v989
        %v1483 = vpop.f32.mrf.mxu0
        %v1484 = vadd.f32 %v513, %v1483
        %v1485 = vpop.f32.mrf.mxu0
        %v1486 = vpop.f32.mrf.mxu0
        %v1487 = vadd.f32 %v513, %v1486
        %v1488 = vpop.f32.mrf.mxu0
        %1489 = vmatprep.mubr.bf16.mxu0 0
        %1490 = vmatmul.mubr.bf16.gmra.mxu0 %v992
        %v1491 = vpop.f32.mrf.mxu0
        %v1492 = vadd.f32 %v513, %v1491
        %v1493 = vpop.f32.mrf.mxu0
        %v1494 = vpop.f32.mrf.mxu0
        %v1495 = vadd.f32 %v513, %v1494
        %v1496 = vpop.f32.mrf.mxu0
        %1497 = vmatprep.mubr.bf16.mxu0 0
        %1498 = vmatmul.mubr.bf16.gmra.mxu0 %v995
        %v1499 = vpop.f32.mrf.mxu0
        %v1500 = vadd.f32 %v513, %v1499
        %v1501 = vpop.f32.mrf.mxu0
        %v1502 = vpop.f32.mrf.mxu0
        %v1503 = vadd.f32 %v513, %v1502
        %v1504 = vpop.f32.mrf.mxu0
        %1505 = vmatprep.mubr.bf16.mxu0 0
        %1506 = vmatmul.mubr.bf16.gmra.mxu0 %v998
        %v1507 = vpop.f32.mrf.mxu0
        %v1508 = vadd.f32 %v513, %v1507
        %v1509 = vpop.f32.mrf.mxu0
        %v1510 = vpop.f32.mrf.mxu0
        %v1511 = vadd.f32 %v513, %v1510
        %v1512 = vpop.f32.mrf.mxu0
        %1513 = vmatprep.mubr.bf16.mxu0 0
        %1514 = vmatmul.mubr.bf16.gmra.mxu0 %v1001
        %v1515 = vpop.f32.mrf.mxu0
        %v1516 = vadd.f32 %v513, %v1515
        %v1517 = vpop.f32.mrf.mxu0
        %v1518 = vpop.f32.mrf.mxu0
        %v1519 = vadd.f32 %v513, %v1518
        %v1520 = vpop.f32.mrf.mxu0
        %1521 = vmatprep.mubr.bf16.mxu0 0
        %1522 = vmatmul.mubr.bf16.gmra.mxu0 %v1004
        %v1523 = vpop.f32.mrf.mxu0
        %v1524 = vadd.f32 %v513, %v1523
        %v1525 = vpop.f32.mrf.mxu0
        %v1526 = vpop.f32.mrf.mxu0
        %v1527 = vadd.f32 %v513, %v1526
        %v1528 = vpop.f32.mrf.mxu0
        %1529 = vmatprep.mubr.bf16.mxu0 0
        %1530 = vmatmul.mubr.bf16.gmra.mxu0 %v1007
        %v1531 = vpop.f32.mrf.mxu0
        %v1532 = vadd.f32 %v513, %v1531
        %v1533 = vpop.f32.mrf.mxu0
        %v1534 = vpop.f32.mrf.mxu0
        %v1535 = vadd.f32 %v513, %v1534
        %v1536 = vpop.f32.mrf.mxu0
        %1537 = vmatprep.mubr.bf16.mxu0 0
        %1538 = vmatmul.mubr.bf16.gmra.mxu0 %v1010
        %v1539 = vpop.f32.mrf.mxu0
        %v1540 = vadd.f32 %v513, %v1539
        %v1541 = vpop.f32.mrf.mxu0
        %v1542 = vpop.f32.mrf.mxu0
        %v1543 = vadd.f32 %v513, %v1542
        %v1544 = vpop.f32.mrf.mxu0
        %1545 = vmatprep.mubr.bf16.mxu0 0
        %1546 = vmatmul.mubr.bf16.gmra.mxu0 %v1013
        %v1547 = vpop.f32.mrf.mxu0
        %v1548 = vadd.f32 %v513, %v1547
        %v1549 = vpop.f32.mrf.mxu0
        %v1550 = vpop.f32.mrf.mxu0
        %v1551 = vadd.f32 %v513, %v1550
        %v1552 = vpop.f32.mrf.mxu0
        %1553 = vmatprep.mubr.bf16.mxu0 0
        %1554 = vmatmul.mubr.bf16.gmra.mxu0 %v1016
        %v1555 = vpop.f32.mrf.mxu0
        %v1556 = vadd.f32 %v513, %v1555
        %v1557 = vpop.f32.mrf.mxu0
        %v1558 = vpop.f32.mrf.mxu0
        %v1559 = vpop.f32.mrf.mxu0
        %1560 = vdwg.mxu0
        %v1561 = vmul.f32 %v1060, %v1060
        %v1562 = vmul.f32 %v1063, %v1063
        %v1563 = vmul.f32 %v1068, %v1068
        %v1564 = vmul.f32 %v1071, %v1071
        %v1565 = vmul.f32 %v1076, %v1076
        %v1566 = vmul.f32 %v1079, %v1079
        %v1567 = vmul.f32 %v1084, %v1084
        %v1568 = vmul.f32 %v1087, %v1087
        %v1569 = vmul.f32 %v1092, %v1092
        %v1570 = vmul.f32 %v1095, %v1095
        %v1571 = vmul.f32 %v1100, %v1100
        %v1572 = vmul.f32 %v1103, %v1103
        %v1573 = vmul.f32 %v1108, %v1108
        %v1574 = vmul.f32 %v1111, %v1111
        %v1575 = vmul.f32 %v1116, %v1116
        %v1576 = vmul.f32 %v1119, %v1119
        %v1577 = vmul.f32 %v1124, %v1124
        %v1578 = vmul.f32 %v1127, %v1127
        %v1579 = vmul.f32 %v1132, %v1132
        %v1580 = vmul.f32 %v1135, %v1135
        %v1581 = vmul.f32 %v1140, %v1140
        %v1582 = vmul.f32 %v1143, %v1143
        %v1583 = vmul.f32 %v1148, %v1148
        %v1584 = vmul.f32 %v1151, %v1151
        %v1585 = vmul.f32 %v1156, %v1156
        %v1586 = vmul.f32 %v1159, %v1159
        %v1587 = vmul.f32 %v1164, %v1164
        %v1588 = vmul.f32 %v1167, %v1167
        %v1589 = vmul.f32 %v1172, %v1172
        %v1590 = vmul.f32 %v1175, %v1175
        %v1591 = vmul.f32 %v1180, %v1180
        %v1592 = vmul.f32 %v1183, %v1183
        %v1593 = vmul.f32 %v1188, %v1188
        %v1594 = vmul.f32 %v1191, %v1191
        %v1595 = vmul.f32 %v1196, %v1196
        %v1596 = vmul.f32 %v1199, %v1199
        %v1597 = vmul.f32 %v1204, %v1204
        %v1598 = vmul.f32 %v1207, %v1207
        %v1599 = vmul.f32 %v1212, %v1212
        %v1600 = vmul.f32 %v1215, %v1215
        %v1601 = vmul.f32 %v1220, %v1220
        %v1602 = vmul.f32 %v1223, %v1223
        %v1603 = vmul.f32 %v1228, %v1228
        %v1604 = vmul.f32 %v1231, %v1231
        %v1605 = vmul.f32 %v1236, %v1236
        %v1606 = vmul.f32 %v1239, %v1239
        %v1607 = vmul.f32 %v1244, %v1244
        %v1608 = vmul.f32 %v1247, %v1247
        %v1609 = vmul.f32 %v1252, %v1252
        %v1610 = vmul.f32 %v1255, %v1255
        %v1611 = vmul.f32 %v1260, %v1260
        %v1612 = vmul.f32 %v1263, %v1263
        %v1613 = vmul.f32 %v1268, %v1268
        %v1614 = vmul.f32 %v1271, %v1271
        %v1615 = vmul.f32 %v1276, %v1276
        %v1616 = vmul.f32 %v1279, %v1279
        %v1617 = vmul.f32 %v1284, %v1284
        %v1618 = vmul.f32 %v1287, %v1287
        %v1619 = vmul.f32 %v1292, %v1292
        %v1620 = vmul.f32 %v1295, %v1295
        %v1621 = vmul.f32 %v1300, %v1300
        %v1622 = vmul.f32 %v1303, %v1303
        %v1623 = vmul.f32 %v1308, %v1308
        %v1624 = vmul.f32 %v1311, %v1311
        %v1625 = vmul.f32 %v1316, %v1316
        %v1626 = vmul.f32 %v1319, %v1319
        %v1627 = vmul.f32 %v1324, %v1324
        %v1628 = vmul.f32 %v1327, %v1327
        %v1629 = vmul.f32 %v1332, %v1332
        %v1630 = vmul.f32 %v1335, %v1335
        %v1631 = vmul.f32 %v1340, %v1340
        %v1632 = vmul.f32 %v1343, %v1343
        %v1633 = vmul.f32 %v1348, %v1348
        %v1634 = vmul.f32 %v1351, %v1351
        %v1635 = vmul.f32 %v1356, %v1356
        %v1636 = vmul.f32 %v1359, %v1359
        %v1637 = vmul.f32 %v1364, %v1364
        %v1638 = vmul.f32 %v1367, %v1367
        %v1639 = vmul.f32 %v1372, %v1372
        %v1640 = vmul.f32 %v1375, %v1375
        %v1641 = vmul.f32 %v1380, %v1380
        %v1642 = vmul.f32 %v1383, %v1383
        %v1643 = vmul.f32 %v1388, %v1388
        %v1644 = vmul.f32 %v1391, %v1391
        %v1645 = vmul.f32 %v1396, %v1396
        %v1646 = vmul.f32 %v1399, %v1399
        %v1647 = vmul.f32 %v1404, %v1404
        %v1648 = vmul.f32 %v1407, %v1407
        %v1649 = vmul.f32 %v1412, %v1412
        %v1650 = vmul.f32 %v1415, %v1415
        %v1651 = vmul.f32 %v1420, %v1420
        %v1652 = vmul.f32 %v1423, %v1423
        %v1653 = vmul.f32 %v1428, %v1428
        %v1654 = vmul.f32 %v1431, %v1431
        %v1655 = vmul.f32 %v1436, %v1436
        %v1656 = vmul.f32 %v1439, %v1439
        %v1657 = vmul.f32 %v1444, %v1444
        %v1658 = vmul.f32 %v1447, %v1447
        %v1659 = vmul.f32 %v1452, %v1452
        %v1660 = vmul.f32 %v1455, %v1455
        %v1661 = vmul.f32 %v1460, %v1460
        %v1662 = vmul.f32 %v1463, %v1463
        %v1663 = vmul.f32 %v1468, %v1468
        %v1664 = vmul.f32 %v1471, %v1471
        %v1665 = vmul.f32 %v1476, %v1476
        %v1666 = vmul.f32 %v1479, %v1479
        %v1667 = vmul.f32 %v1484, %v1484
        %v1668 = vmul.f32 %v1487, %v1487
        %v1669 = vmul.f32 %v1492, %v1492
        %v1670 = vmul.f32 %v1495, %v1495
        %v1671 = vmul.f32 %v1500, %v1500
        %v1672 = vmul.f32 %v1503, %v1503
        %v1673 = vmul.f32 %v1508, %v1508
        %v1674 = vmul.f32 %v1511, %v1511
        %v1675 = vmul.f32 %v1516, %v1516
        %v1676 = vmul.f32 %v1519, %v1519
        %v1677 = vmul.f32 %v1524, %v1524
        %v1678 = vmul.f32 %v1527, %v1527
        %v1679 = vmul.f32 %v1532, %v1532
        %v1680 = vmul.f32 %v1535, %v1535
        %v1681 = vmul.f32 %v1540, %v1540
        %v1682 = vmul.f32 %v1543, %v1543
        %v1683 = vmul.f32 %v1548, %v1548
        %v1684 = vmul.f32 %v1551, %v1551
        %v1685 = vmul.f32 %v1556, %v1556
        %v1686 = vmul.f32 %v1060, %v1561
        %v1687 = vmul.f32 %v1063, %v1562
        %v1688 = vmul.f32 %v1068, %v1563
        %v1689 = vmul.f32 %v1071, %v1564
        %v1690 = vmul.f32 %v1076, %v1565
        %v1691 = vmul.f32 %v1079, %v1566
        %v1692 = vmul.f32 %v1084, %v1567
        %v1693 = vmul.f32 %v1087, %v1568
        %v1694 = vmul.f32 %v1092, %v1569
        %v1695 = vmul.f32 %v1095, %v1570
        %v1696 = vmul.f32 %v1100, %v1571
        %v1697 = vmul.f32 %v1103, %v1572
        %v1698 = vmul.f32 %v1108, %v1573
        %v1699 = vmul.f32 %v1111, %v1574
        %v1700 = vmul.f32 %v1116, %v1575
        %v1701 = vmul.f32 %v1119, %v1576
        %v1702 = vmul.f32 %v1124, %v1577
        %v1703 = vmul.f32 %v1127, %v1578
        %v1704 = vmul.f32 %v1132, %v1579
        %v1705 = vmul.f32 %v1135, %v1580
        %v1706 = vmul.f32 %v1140, %v1581
        %v1707 = vmul.f32 %v1143, %v1582
        %v1708 = vmul.f32 %v1148, %v1583
        %v1709 = vmul.f32 %v1151, %v1584
        %v1710 = vmul.f32 %v1156, %v1585
        %v1711 = vmul.f32 %v1159, %v1586
        %v1712 = vmul.f32 %v1164, %v1587
        %v1713 = vmul.f32 %v1167, %v1588
        %v1714 = vmul.f32 %v1172, %v1589
        %v1715 = vmul.f32 %v1175, %v1590
        %v1716 = vmul.f32 %v1180, %v1591
        %v1717 = vmul.f32 %v1183, %v1592
        %v1718 = vmul.f32 %v1188, %v1593
        %v1719 = vmul.f32 %v1191, %v1594
        %v1720 = vmul.f32 %v1196, %v1595
        %v1721 = vmul.f32 %v1199, %v1596
        %v1722 = vmul.f32 %v1204, %v1597
        %v1723 = vmul.f32 %v1207, %v1598
        %v1724 = vmul.f32 %v1212, %v1599
        %v1725 = vmul.f32 %v1215, %v1600
        %v1726 = vmul.f32 %v1220, %v1601
        %v1727 = vmul.f32 %v1223, %v1602
        %v1728 = vmul.f32 %v1228, %v1603
        %v1729 = vmul.f32 %v1231, %v1604
        %v1730 = vmul.f32 %v1236, %v1605
        %v1731 = vmul.f32 %v1239, %v1606
        %v1732 = vmul.f32 %v1244, %v1607
        %v1733 = vmul.f32 %v1247, %v1608
        %v1734 = vmul.f32 %v1252, %v1609
        %v1735 = vmul.f32 %v1255, %v1610
        %v1736 = vmul.f32 %v1260, %v1611
        %v1737 = vmul.f32 %v1263, %v1612
        %v1738 = vmul.f32 %v1268, %v1613
        %v1739 = vmul.f32 %v1271, %v1614
        %v1740 = vmul.f32 %v1276, %v1615
        %v1741 = vmul.f32 %v1279, %v1616
        %v1742 = vmul.f32 %v1284, %v1617
        %v1743 = vmul.f32 %v1287, %v1618
        %v1744 = vmul.f32 %v1292, %v1619
        %v1745 = vmul.f32 %v1295, %v1620
        %v1746 = vmul.f32 %v1300, %v1621
        %v1747 = vmul.f32 %v1303, %v1622
        %v1748 = vmul.f32 %v1308, %v1623
        %v1749 = vmul.f32 %v1311, %v1624
        %v1750 = vmul.f32 %v1316, %v1625
        %v1751 = vmul.f32 %v1319, %v1626
        %v1752 = vmul.f32 %v1324, %v1627
        %v1753 = vmul.f32 %v1327, %v1628
        %v1754 = vmul.f32 %v1332, %v1629
        %v1755 = vmul.f32 %v1335, %v1630
        %v1756 = vmul.f32 %v1340, %v1631
        %v1757 = vmul.f32 %v1343, %v1632
        %v1758 = vmul.f32 %v1348, %v1633
        %v1759 = vmul.f32 %v1351, %v1634
        %v1760 = vmul.f32 %v1356, %v1635
        %v1761 = vmul.f32 %v1359, %v1636
        %v1762 = vmul.f32 %v1364, %v1637
        %v1763 = vmul.f32 %v1367, %v1638
        %v1764 = vmul.f32 %v1372, %v1639
        %v1765 = vmul.f32 %v1375, %v1640
        %v1766 = vmul.f32 %v1380, %v1641
        %v1767 = vmul.f32 %v1383, %v1642
        %v1768 = vmul.f32 %v1388, %v1643
        %v1769 = vmul.f32 %v1391, %v1644
        %v1770 = vmul.f32 %v1396, %v1645
        %v1771 = vmul.f32 %v1399, %v1646
        %v1772 = vmul.f32 %v1404, %v1647
        %v1773 = vmul.f32 %v1407, %v1648
        %v1774 = vmul.f32 %v1412, %v1649
        %v1775 = vmul.f32 %v1415, %v1650
        %v1776 = vmul.f32 %v1420, %v1651
        %v1777 = vmul.f32 %v1423, %v1652
        %v1778 = vmul.f32 %v1428, %v1653
        %v1779 = vmul.f32 %v1431, %v1654
        %v1780 = vmul.f32 %v1436, %v1655
        %v1781 = vmul.f32 %v1439, %v1656
        %v1782 = vmul.f32 %v1444, %v1657
        %v1783 = vmul.f32 %v1447, %v1658
        %v1784 = vmul.f32 %v1452, %v1659
        %v1785 = vmul.f32 %v1455, %v1660
        %v1786 = vmul.f32 %v1460, %v1661
        %v1787 = vmul.f32 %v1463, %v1662
        %v1788 = vmul.f32 %v1468, %v1663
        %v1789 = vmul.f32 %v1471, %v1664
        %v1790 = vmul.f32 %v1476, %v1665
        %v1791 = vmul.f32 %v1479, %v1666
        %v1792 = vmul.f32 %v1484, %v1667
        %v1793 = vmul.f32 %v1487, %v1668
        %v1794 = vmul.f32 %v1492, %v1669
        %v1795 = vmul.f32 %v1495, %v1670
        %v1796 = vmul.f32 %v1500, %v1671
        %v1797 = vmul.f32 %v1503, %v1672
        %v1798 = vmul.f32 %v1508, %v1673
        %v1799 = vmul.f32 %v1511, %v1674
        %v1800 = vmul.f32 %v1516, %v1675
        %v1801 = vmul.f32 %v1519, %v1676
        %v1802 = vmul.f32 %v1524, %v1677
        %v1803 = vmul.f32 %v1527, %v1678
        %v1804 = vmul.f32 %v1532, %v1679
        %v1805 = vmul.f32 %v1535, %v1680
        %v1806 = vmul.f32 %v1540, %v1681
        %v1807 = vmul.f32 %v1543, %v1682
        %v1808 = vmul.f32 %v1548, %v1683
        %v1809 = vmul.f32 %v1551, %v1684
        %v1810 = vmul.f32 %v1556, %v1685
        %v1811 = vmul.f32 %v1686, 0.044715
        %v1812 = vmul.f32 %v1687, 0.044715
        %v1813 = vmul.f32 %v1688, 0.044715
        %v1814 = vmul.f32 %v1689, 0.044715
        %v1815 = vmul.f32 %v1690, 0.044715
        %v1816 = vmul.f32 %v1691, 0.044715
        %v1817 = vmul.f32 %v1692, 0.044715
        %v1818 = vmul.f32 %v1693, 0.044715
        %v1819 = vmul.f32 %v1694, 0.044715
        %v1820 = vmul.f32 %v1695, 0.044715
        %v1821 = vmul.f32 %v1696, 0.044715
        %v1822 = vmul.f32 %v1697, 0.044715
        %v1823 = vmul.f32 %v1698, 0.044715
        %v1824 = vmul.f32 %v1699, 0.044715
        %v1825 = vmul.f32 %v1700, 0.044715
        %v1826 = vmul.f32 %v1701, 0.044715
        %v1827 = vmul.f32 %v1702, 0.044715
        %v1828 = vmul.f32 %v1703, 0.044715
        %v1829 = vmul.f32 %v1704, 0.044715
        %v1830 = vmul.f32 %v1705, 0.044715
        %v1831 = vmul.f32 %v1706, 0.044715
        %v1832 = vmul.f32 %v1707, 0.044715
        %v1833 = vmul.f32 %v1708, 0.044715
        %v1834 = vmul.f32 %v1709, 0.044715
        %v1835 = vmul.f32 %v1710, 0.044715
        %v1836 = vmul.f32 %v1711, 0.044715
        %v1837 = vmul.f32 %v1712, 0.044715
        %v1838 = vmul.f32 %v1713, 0.044715
        %v1839 = vmul.f32 %v1714, 0.044715
        %v1840 = vmul.f32 %v1715, 0.044715
        %v1841 = vmul.f32 %v1716, 0.044715
        %v1842 = vmul.f32 %v1717, 0.044715
        %v1843 = vmul.f32 %v1718, 0.044715
        %v1844 = vmul.f32 %v1719, 0.044715
        %v1845 = vmul.f32 %v1720, 0.044715
        %v1846 = vmul.f32 %v1721, 0.044715
        %v1847 = vmul.f32 %v1722, 0.044715
        %v1848 = vmul.f32 %v1723, 0.044715
        %v1849 = vmul.f32 %v1724, 0.044715
        %v1850 = vmul.f32 %v1725, 0.044715
        %v1851 = vmul.f32 %v1726, 0.044715
        %v1852 = vmul.f32 %v1727, 0.044715
        %v1853 = vmul.f32 %v1728, 0.044715
        %v1854 = vmul.f32 %v1729, 0.044715
        %v1855 = vmul.f32 %v1730, 0.044715
        %v1856 = vmul.f32 %v1731, 0.044715
        %v1857 = vmul.f32 %v1732, 0.044715
        %v1858 = vmul.f32 %v1733, 0.044715
        %v1859 = vmul.f32 %v1734, 0.044715
        %v1860 = vmul.f32 %v1735, 0.044715
        %v1861 = vmul.f32 %v1736, 0.044715
        %v1862 = vmul.f32 %v1737, 0.044715
        %v1863 = vmul.f32 %v1738, 0.044715
        %v1864 = vmul.f32 %v1739, 0.044715
        %v1865 = vmul.f32 %v1740, 0.044715
        %v1866 = vmul.f32 %v1741, 0.044715
        %v1867 = vmul.f32 %v1742, 0.044715
        %v1868 = vmul.f32 %v1743, 0.044715
        %v1869 = vmul.f32 %v1744, 0.044715
        %v1870 = vmul.f32 %v1745, 0.044715
        %v1871 = vmul.f32 %v1746, 0.044715
        %v1872 = vmul.f32 %v1747, 0.044715
        %v1873 = vmul.f32 %v1748, 0.044715
        %v1874 = vmul.f32 %v1749, 0.044715
        %v1875 = vmul.f32 %v1750, 0.044715
        %v1876 = vmul.f32 %v1751, 0.044715
        %v1877 = vmul.f32 %v1752, 0.044715
        %v1878 = vmul.f32 %v1753, 0.044715
        %v1879 = vmul.f32 %v1754, 0.044715
        %v1880 = vmul.f32 %v1755, 0.044715
        %v1881 = vmul.f32 %v1756, 0.044715
        %v1882 = vmul.f32 %v1757, 0.044715
        %v1883 = vmul.f32 %v1758, 0.044715
        %v1884 = vmul.f32 %v1759, 0.044715
        %v1885 = vmul.f32 %v1760, 0.044715
        %v1886 = vmul.f32 %v1761, 0.044715
        %v1887 = vmul.f32 %v1762, 0.044715
        %v1888 = vmul.f32 %v1763, 0.044715
        %v1889 = vmul.f32 %v1764, 0.044715
        %v1890 = vmul.f32 %v1765, 0.044715
        %v1891 = vmul.f32 %v1766, 0.044715
        %v1892 = vmul.f32 %v1767, 0.044715
        %v1893 = vmul.f32 %v1768, 0.044715
        %v1894 = vmul.f32 %v1769, 0.044715
        %v1895 = vmul.f32 %v1770, 0.044715
        %v1896 = vmul.f32 %v1771, 0.044715
        %v1897 = vmul.f32 %v1772, 0.044715
        %v1898 = vmul.f32 %v1773, 0.044715
        %v1899 = vmul.f32 %v1774, 0.044715
        %v1900 = vmul.f32 %v1775, 0.044715
        %v1901 = vmul.f32 %v1776, 0.044715
        %v1902 = vmul.f32 %v1777, 0.044715
        %v1903 = vmul.f32 %v1778, 0.044715
        %v1904 = vmul.f32 %v1779, 0.044715
        %v1905 = vmul.f32 %v1780, 0.044715
        %v1906 = vmul.f32 %v1781, 0.044715
        %v1907 = vmul.f32 %v1782, 0.044715
        %v1908 = vmul.f32 %v1783, 0.044715
        %v1909 = vmul.f32 %v1784, 0.044715
        %v1910 = vmul.f32 %v1785, 0.044715
        %v1911 = vmul.f32 %v1786, 0.044715
        %v1912 = vmul.f32 %v1787, 0.044715
        %v1913 = vmul.f32 %v1788, 0.044715
        %v1914 = vmul.f32 %v1789, 0.044715
        %v1915 = vmul.f32 %v1790, 0.044715
        %v1916 = vmul.f32 %v1791, 0.044715
        %v1917 = vmul.f32 %v1792, 0.044715
        %v1918 = vmul.f32 %v1793, 0.044715
        %v1919 = vmul.f32 %v1794, 0.044715
        %v1920 = vmul.f32 %v1795, 0.044715
        %v1921 = vmul.f32 %v1796, 0.044715
        %v1922 = vmul.f32 %v1797, 0.044715
        %v1923 = vmul.f32 %v1798, 0.044715
        %v1924 = vmul.f32 %v1799, 0.044715
        %v1925 = vmul.f32 %v1800, 0.044715
        %v1926 = vmul.f32 %v1801, 0.044715
        %v1927 = vmul.f32 %v1802, 0.044715
        %v1928 = vmul.f32 %v1803, 0.044715
        %v1929 = vmul.f32 %v1804, 0.044715
        %v1930 = vmul.f32 %v1805, 0.044715
        %v1931 = vmul.f32 %v1806, 0.044715
        %v1932 = vmul.f32 %v1807, 0.044715
        %v1933 = vmul.f32 %v1808, 0.044715
        %v1934 = vmul.f32 %v1809, 0.044715
        %v1935 = vmul.f32 %v1810, 0.044715
        %v1936 = vadd.f32 %v1060, %v1811
        %v1937 = vadd.f32 %v1063, %v1812
        %v1938 = vadd.f32 %v1068, %v1813
        %v1939 = vadd.f32 %v1071, %v1814
        %v1940 = vadd.f32 %v1076, %v1815
        %v1941 = vadd.f32 %v1079, %v1816
        %v1942 = vadd.f32 %v1084, %v1817
        %v1943 = vadd.f32 %v1087, %v1818
        %v1944 = vadd.f32 %v1092, %v1819
        %v1945 = vadd.f32 %v1095, %v1820
        %v1946 = vadd.f32 %v1100, %v1821
        %v1947 = vadd.f32 %v1103, %v1822
        %v1948 = vadd.f32 %v1108, %v1823
        %v1949 = vadd.f32 %v1111, %v1824
        %v1950 = vadd.f32 %v1116, %v1825
        %v1951 = vadd.f32 %v1119, %v1826
        %v1952 = vadd.f32 %v1124, %v1827
        %v1953 = vadd.f32 %v1127, %v1828
        %v1954 = vadd.f32 %v1132, %v1829
        %v1955 = vadd.f32 %v1135, %v1830
        %v1956 = vadd.f32 %v1140, %v1831
        %v1957 = vadd.f32 %v1143, %v1832
        %v1958 = vadd.f32 %v1148, %v1833
        %v1959 = vadd.f32 %v1151, %v1834
        %v1960 = vadd.f32 %v1156, %v1835
        %v1961 = vadd.f32 %v1159, %v1836
        %v1962 = vadd.f32 %v1164, %v1837
        %v1963 = vadd.f32 %v1167, %v1838
        %v1964 = vadd.f32 %v1172, %v1839
        %v1965 = vadd.f32 %v1175, %v1840
        %v1966 = vadd.f32 %v1180, %v1841
        %v1967 = vadd.f32 %v1183, %v1842
        %v1968 = vadd.f32 %v1188, %v1843
        %v1969 = vadd.f32 %v1191, %v1844
        %v1970 = vadd.f32 %v1196, %v1845
        %v1971 = vadd.f32 %v1199, %v1846
        %v1972 = vadd.f32 %v1204, %v1847
        %v1973 = vadd.f32 %v1207, %v1848
        %v1974 = vadd.f32 %v1212, %v1849
        %v1975 = vadd.f32 %v1215, %v1850
        %v1976 = vadd.f32 %v1220, %v1851
        %v1977 = vadd.f32 %v1223, %v1852
        %v1978 = vadd.f32 %v1228, %v1853
        %v1979 = vadd.f32 %v1231, %v1854
        %v1980 = vadd.f32 %v1236, %v1855
        %v1981 = vadd.f32 %v1239, %v1856
        %v1982 = vadd.f32 %v1244, %v1857
        %v1983 = vadd.f32 %v1247, %v1858
        %v1984 = vadd.f32 %v1252, %v1859
        %v1985 = vadd.f32 %v1255, %v1860
        %v1986 = vadd.f32 %v1260, %v1861
        %v1987 = vadd.f32 %v1263, %v1862
        %v1988 = vadd.f32 %v1268, %v1863
        %v1989 = vadd.f32 %v1271, %v1864
        %v1990 = vadd.f32 %v1276, %v1865
        %v1991 = vadd.f32 %v1279, %v1866
        %v1992 = vadd.f32 %v1284, %v1867
        %v1993 = vadd.f32 %v1287, %v1868
        %v1994 = vadd.f32 %v1292, %v1869
        %v1995 = vadd.f32 %v1295, %v1870
        %v1996 = vadd.f32 %v1300, %v1871
        %v1997 = vadd.f32 %v1303, %v1872
        %v1998 = vadd.f32 %v1308, %v1873
        %v1999 = vadd.f32 %v1311, %v1874
        %v2000 = vadd.f32 %v1316, %v1875
        %v2001 = vadd.f32 %v1319, %v1876
        %v2002 = vadd.f32 %v1324, %v1877
        %v2003 = vadd.f32 %v1327, %v1878
        %v2004 = vadd.f32 %v1332, %v1879
        %v2005 = vadd.f32 %v1335, %v1880
        %v2006 = vadd.f32 %v1340, %v1881
        %v2007 = vadd.f32 %v1343, %v1882
        %v2008 = vadd.f32 %v1348, %v1883
        %v2009 = vadd.f32 %v1351, %v1884
        %v2010 = vadd.f32 %v1356, %v1885
        %v2011 = vadd.f32 %v1359, %v1886
        %v2012 = vadd.f32 %v1364, %v1887
        %v2013 = vadd.f32 %v1367, %v1888
        %v2014 = vadd.f32 %v1372, %v1889
        %v2015 = vadd.f32 %v1375, %v1890
        %v2016 = vadd.f32 %v1380, %v1891
        %v2017 = vadd.f32 %v1383, %v1892
        %v2018 = vadd.f32 %v1388, %v1893
        %v2019 = vadd.f32 %v1391, %v1894
        %v2020 = vadd.f32 %v1396, %v1895
        %v2021 = vadd.f32 %v1399, %v1896
        %v2022 = vadd.f32 %v1404, %v1897
        %v2023 = vadd.f32 %v1407, %v1898
        %v2024 = vadd.f32 %v1412, %v1899
        %v2025 = vadd.f32 %v1415, %v1900
        %v2026 = vadd.f32 %v1420, %v1901
        %v2027 = vadd.f32 %v1423, %v1902
        %v2028 = vadd.f32 %v1428, %v1903
        %v2029 = vadd.f32 %v1431, %v1904
        %v2030 = vadd.f32 %v1436, %v1905
        %v2031 = vadd.f32 %v1439, %v1906
        %v2032 = vadd.f32 %v1444, %v1907
        %v2033 = vadd.f32 %v1447, %v1908
        %v2034 = vadd.f32 %v1452, %v1909
        %v2035 = vadd.f32 %v1455, %v1910
        %v2036 = vadd.f32 %v1460, %v1911
        %v2037 = vadd.f32 %v1463, %v1912
        %v2038 = vadd.f32 %v1468, %v1913
        %v2039 = vadd.f32 %v1471, %v1914
        %v2040 = vadd.f32 %v1476, %v1915
        %v2041 = vadd.f32 %v1479, %v1916
        %v2042 = vadd.f32 %v1484, %v1917
        %v2043 = vadd.f32 %v1487, %v1918
        %v2044 = vadd.f32 %v1492, %v1919
        %v2045 = vadd.f32 %v1495, %v1920
        %v2046 = vadd.f32 %v1500, %v1921
        %v2047 = vadd.f32 %v1503, %v1922
        %v2048 = vadd.f32 %v1508, %v1923
        %v2049 = vadd.f32 %v1511, %v1924
        %v2050 = vadd.f32 %v1516, %v1925
        %v2051 = vadd.f32 %v1519, %v1926
        %v2052 = vadd.f32 %v1524, %v1927
        %v2053 = vadd.f32 %v1527, %v1928
        %v2054 = vadd.f32 %v1532, %v1929
        %v2055 = vadd.f32 %v1535, %v1930
        %v2056 = vadd.f32 %v1540, %v1931
        %v2057 = vadd.f32 %v1543, %v1932
        %v2058 = vadd.f32 %v1548, %v1933
        %v2059 = vadd.f32 %v1551, %v1934
        %v2060 = vadd.f32 %v1556, %v1935
        %v2061 = vmul.f32 %v1936, 0.7978846
        %v2062 = vmul.f32 %v1937, 0.7978846
        %v2063 = vmul.f32 %v1938, 0.7978846
        %v2064 = vmul.f32 %v1939, 0.7978846
        %v2065 = vmul.f32 %v1940, 0.7978846
        %v2066 = vmul.f32 %v1941, 0.7978846
        %v2067 = vmul.f32 %v1942, 0.7978846
        %v2068 = vmul.f32 %v1943, 0.7978846
        %v2069 = vmul.f32 %v1944, 0.7978846
        %v2070 = vmul.f32 %v1945, 0.7978846
        %v2071 = vmul.f32 %v1946, 0.7978846
        %v2072 = vmul.f32 %v1947, 0.7978846
        %v2073 = vmul.f32 %v1948, 0.7978846
        %v2074 = vmul.f32 %v1949, 0.7978846
        %v2075 = vmul.f32 %v1950, 0.7978846
        %v2076 = vmul.f32 %v1951, 0.7978846
        %v2077 = vmul.f32 %v1952, 0.7978846
        %v2078 = vmul.f32 %v1953, 0.7978846
        %v2079 = vmul.f32 %v1954, 0.7978846
        %v2080 = vmul.f32 %v1955, 0.7978846
        %v2081 = vmul.f32 %v1956, 0.7978846
        %v2082 = vmul.f32 %v1957, 0.7978846
        %v2083 = vmul.f32 %v1958, 0.7978846
        %v2084 = vmul.f32 %v1959, 0.7978846
        %v2085 = vmul.f32 %v1960, 0.7978846
        %v2086 = vmul.f32 %v1961, 0.7978846
        %v2087 = vmul.f32 %v1962, 0.7978846
        %v2088 = vmul.f32 %v1963, 0.7978846
        %v2089 = vmul.f32 %v1964, 0.7978846
        %v2090 = vmul.f32 %v1965, 0.7978846
        %v2091 = vmul.f32 %v1966, 0.7978846
        %v2092 = vmul.f32 %v1967, 0.7978846
        %v2093 = vmul.f32 %v1968, 0.7978846
        %v2094 = vmul.f32 %v1969, 0.7978846
        %v2095 = vmul.f32 %v1970, 0.7978846
        %v2096 = vmul.f32 %v1971, 0.7978846
        %v2097 = vmul.f32 %v1972, 0.7978846
        %v2098 = vmul.f32 %v1973, 0.7978846
        %v2099 = vmul.f32 %v1974, 0.7978846
        %v2100 = vmul.f32 %v1975, 0.7978846
        %v2101 = vmul.f32 %v1976, 0.7978846
        %v2102 = vmul.f32 %v1977, 0.7978846
        %v2103 = vmul.f32 %v1978, 0.7978846
        %v2104 = vmul.f32 %v1979, 0.7978846
        %v2105 = vmul.f32 %v1980, 0.7978846
        %v2106 = vmul.f32 %v1981, 0.7978846
        %v2107 = vmul.f32 %v1982, 0.7978846
        %v2108 = vmul.f32 %v1983, 0.7978846
        %v2109 = vmul.f32 %v1984, 0.7978846
        %v2110 = vmul.f32 %v1985, 0.7978846
        %v2111 = vmul.f32 %v1986, 0.7978846
        %v2112 = vmul.f32 %v1987, 0.7978846
        %v2113 = vmul.f32 %v1988, 0.7978846
        %v2114 = vmul.f32 %v1989, 0.7978846
        %v2115 = vmul.f32 %v1990, 0.7978846
        %v2116 = vmul.f32 %v1991, 0.7978846
        %v2117 = vmul.f32 %v1992, 0.7978846
        %v2118 = vmul.f32 %v1993, 0.7978846
        %v2119 = vmul.f32 %v1994, 0.7978846
        %v2120 = vmul.f32 %v1995, 0.7978846
        %v2121 = vmul.f32 %v1996, 0.7978846
        %v2122 = vmul.f32 %v1997, 0.7978846
        %v2123 = vmul.f32 %v1998, 0.7978846
        %v2124 = vmul.f32 %v1999, 0.7978846
        %v2125 = vmul.f32 %v2000, 0.7978846
        %v2126 = vmul.f32 %v2001, 0.7978846
        %v2127 = vmul.f32 %v2002, 0.7978846
        %v2128 = vmul.f32 %v2003, 0.7978846
        %v2129 = vmul.f32 %v2004, 0.7978846
        %v2130 = vmul.f32 %v2005, 0.7978846
        %v2131 = vmul.f32 %v2006, 0.7978846
        %v2132 = vmul.f32 %v2007, 0.7978846
        %v2133 = vmul.f32 %v2008, 0.7978846
        %v2134 = vmul.f32 %v2009, 0.7978846
        %v2135 = vmul.f32 %v2010, 0.7978846
        %v2136 = vmul.f32 %v2011, 0.7978846
        %v2137 = vmul.f32 %v2012, 0.7978846
        %v2138 = vmul.f32 %v2013, 0.7978846
        %v2139 = vmul.f32 %v2014, 0.7978846
        %v2140 = vmul.f32 %v2015, 0.7978846
        %v2141 = vmul.f32 %v2016, 0.7978846
        %v2142 = vmul.f32 %v2017, 0.7978846
        %v2143 = vmul.f32 %v2018, 0.7978846
        %v2144 = vmul.f32 %v2019, 0.7978846
        %v2145 = vmul.f32 %v2020, 0.7978846
        %v2146 = vmul.f32 %v2021, 0.7978846
        %v2147 = vmul.f32 %v2022, 0.7978846
        %v2148 = vmul.f32 %v2023, 0.7978846
        %v2149 = vmul.f32 %v2024, 0.7978846
        %v2150 = vmul.f32 %v2025, 0.7978846
        %v2151 = vmul.f32 %v2026, 0.7978846
        %v2152 = vmul.f32 %v2027, 0.7978846
        %v2153 = vmul.f32 %v2028, 0.7978846
        %v2154 = vmul.f32 %v2029, 0.7978846
        %v2155 = vmul.f32 %v2030, 0.7978846
        %v2156 = vmul.f32 %v2031, 0.7978846
        %v2157 = vmul.f32 %v2032, 0.7978846
        %v2158 = vmul.f32 %v2033, 0.7978846
        %v2159 = vmul.f32 %v2034, 0.7978846
        %v2160 = vmul.f32 %v2035, 0.7978846
        %v2161 = vmul.f32 %v2036, 0.7978846
        %v2162 = vmul.f32 %v2037, 0.7978846
        %v2163 = vmul.f32 %v2038, 0.7978846
        %v2164 = vmul.f32 %v2039, 0.7978846
        %v2165 = vmul.f32 %v2040, 0.7978846
        %v2166 = vmul.f32 %v2041, 0.7978846
        %v2167 = vmul.f32 %v2042, 0.7978846
        %v2168 = vmul.f32 %v2043, 0.7978846
        %v2169 = vmul.f32 %v2044, 0.7978846
        %v2170 = vmul.f32 %v2045, 0.7978846
        %v2171 = vmul.f32 %v2046, 0.7978846
        %v2172 = vmul.f32 %v2047, 0.7978846
        %v2173 = vmul.f32 %v2048, 0.7978846
        %v2174 = vmul.f32 %v2049, 0.7978846
        %v2175 = vmul.f32 %v2050, 0.7978846
        %v2176 = vmul.f32 %v2051, 0.7978846
        %v2177 = vmul.f32 %v2052, 0.7978846
        %v2178 = vmul.f32 %v2053, 0.7978846
        %v2179 = vmul.f32 %v2054, 0.7978846
        %v2180 = vmul.f32 %v2055, 0.7978846
        %v2181 = vmul.f32 %v2056, 0.7978846
        %v2182 = vmul.f32 %v2057, 0.7978846
        %v2183 = vmul.f32 %v2058, 0.7978846
        %v2184 = vmul.f32 %v2059, 0.7978846
        %v2185 = vmul.f32 %v2060, 0.7978846
        %v2186 = vtanh.pop %v2061
        %v2187 = vtanh.pop %v2062
        %v2188 = vtanh.pop %v2063
        %v2189 = vtanh.pop %v2064
        %v2190 = vtanh.pop %v2065
        %v2191 = vtanh.pop %v2066
        %v2192 = vtanh.pop %v2067
        %v2193 = vtanh.pop %v2068
        %v2194 = vtanh.pop %v2069
        %v2195 = vtanh.pop %v2070
        %v2196 = vtanh.pop %v2071
        %v2197 = vtanh.pop %v2072
        %v2198 = vtanh.pop %v2073
        %v2199 = vtanh.pop %v2074
        %v2200 = vtanh.pop %v2075
        %v2201 = vtanh.pop %v2076
        %v2202 = vtanh.pop %v2077
        %v2203 = vtanh.pop %v2078
        %v2204 = vtanh.pop %v2079
        %v2205 = vtanh.pop %v2080
        %v2206 = vtanh.pop %v2081
        %v2207 = vtanh.pop %v2082
        %v2208 = vtanh.pop %v2083
        %v2209 = vtanh.pop %v2084
        %v2210 = vtanh.pop %v2085
        %v2211 = vtanh.pop %v2086
        %v2212 = vtanh.pop %v2087
        %v2213 = vtanh.pop %v2088
        %v2214 = vtanh.pop %v2089
        %v2215 = vtanh.pop %v2090
        %v2216 = vtanh.pop %v2091
        %v2217 = vtanh.pop %v2092
        %v2218 = vtanh.pop %v2093
        %v2219 = vtanh.pop %v2094
        %v2220 = vtanh.pop %v2095
        %v2221 = vtanh.pop %v2096
        %v2222 = vtanh.pop %v2097
        %v2223 = vtanh.pop %v2098
        %v2224 = vtanh.pop %v2099
        %v2225 = vtanh.pop %v2100
        %v2226 = vtanh.pop %v2101
        %v2227 = vtanh.pop %v2102
        %v2228 = vtanh.pop %v2103
        %v2229 = vtanh.pop %v2104
        %v2230 = vtanh.pop %v2105
        %v2231 = vtanh.pop %v2106
        %v2232 = vtanh.pop %v2107
        %v2233 = vtanh.pop %v2108
        %v2234 = vtanh.pop %v2109
        %v2235 = vtanh.pop %v2110
        %v2236 = vtanh.pop %v2111
        %v2237 = vtanh.pop %v2112
        %v2238 = vtanh.pop %v2113
        %v2239 = vtanh.pop %v2114
        %v2240 = vtanh.pop %v2115
        %v2241 = vtanh.pop %v2116
        %v2242 = vtanh.pop %v2117
        %v2243 = vtanh.pop %v2118
        %v2244 = vtanh.pop %v2119
        %v2245 = vtanh.pop %v2120
        %v2246 = vtanh.pop %v2121
        %v2247 = vtanh.pop %v2122
        %v2248 = vtanh.pop %v2123
        %v2249 = vtanh.pop %v2124
        %v2250 = vtanh.pop %v2125
        %v2251 = vtanh.pop %v2126
        %v2252 = vtanh.pop %v2127
        %v2253 = vtanh.pop %v2128
        %v2254 = vtanh.pop %v2129
        %v2255 = vtanh.pop %v2130
        %v2256 = vtanh.pop %v2131
        %v2257 = vtanh.pop %v2132
        %v2258 = vtanh.pop %v2133
        %v2259 = vtanh.pop %v2134
        %v2260 = vtanh.pop %v2135
        %v2261 = vtanh.pop %v2136
        %v2262 = vtanh.pop %v2137
        %v2263 = vtanh.pop %v2138
        %v2264 = vtanh.pop %v2139
        %v2265 = vtanh.pop %v2140
        %v2266 = vtanh.pop %v2141
        %v2267 = vtanh.pop %v2142
        %v2268 = vtanh.pop %v2143
        %v2269 = vtanh.pop %v2144
        %v2270 = vtanh.pop %v2145
        %v2271 = vtanh.pop %v2146
        %v2272 = vtanh.pop %v2147
        %v2273 = vtanh.pop %v2148
        %v2274 = vtanh.pop %v2149
        %v2275 = vtanh.pop %v2150
        %v2276 = vtanh.pop %v2151
        %v2277 = vtanh.pop %v2152
        %v2278 = vtanh.pop %v2153
        %v2279 = vtanh.pop %v2154
        %v2280 = vtanh.pop %v2155
        %v2281 = vtanh.pop %v2156
        %v2282 = vtanh.pop %v2157
        %v2283 = vtanh.pop %v2158
        %v2284 = vtanh.pop %v2159
        %v2285 = vtanh.pop %v2160
        %v2286 = vtanh.pop %v2161
        %v2287 = vtanh.pop %v2162
        %v2288 = vtanh.pop %v2163
        %v2289 = vtanh.pop %v2164
        %v2290 = vtanh.pop %v2165
        %v2291 = vtanh.pop %v2166
        %v2292 = vtanh.pop %v2167
        %v2293 = vtanh.pop %v2168
        %v2294 = vtanh.pop %v2169
        %v2295 = vtanh.pop %v2170
        %v2296 = vtanh.pop %v2171
        %v2297 = vtanh.pop %v2172
        %v2298 = vtanh.pop %v2173
        %v2299 = vtanh.pop %v2174
        %v2300 = vtanh.pop %v2175
        %v2301 = vtanh.pop %v2176
        %v2302 = vtanh.pop %v2177
        %v2303 = vtanh.pop %v2178
        %v2304 = vtanh.pop %v2179
        %v2305 = vtanh.pop %v2180
        %v2306 = vtanh.pop %v2181
        %v2307 = vtanh.pop %v2182
        %v2308 = vtanh.pop %v2183
        %v2309 = vtanh.pop %v2184
        %v2310 = vtanh.pop %v2185
        %v2311 = vadd.f32 %v2186, 1.0
        %v2312 = vadd.f32 %v2187, 1.0
        %v2313 = vadd.f32 %v2188, 1.0
        %v2314 = vadd.f32 %v2189, 1.0
        %v2315 = vadd.f32 %v2190, 1.0
        %v2316 = vadd.f32 %v2191, 1.0
        %v2317 = vadd.f32 %v2192, 1.0
        %v2318 = vadd.f32 %v2193, 1.0
        %v2319 = vadd.f32 %v2194, 1.0
        %v2320 = vadd.f32 %v2195, 1.0
        %v2321 = vadd.f32 %v2196, 1.0
        %v2322 = vadd.f32 %v2197, 1.0
        %v2323 = vadd.f32 %v2198, 1.0
        %v2324 = vadd.f32 %v2199, 1.0
        %v2325 = vadd.f32 %v2200, 1.0
        %v2326 = vadd.f32 %v2201, 1.0
        %v2327 = vadd.f32 %v2202, 1.0
        %v2328 = vadd.f32 %v2203, 1.0
        %v2329 = vadd.f32 %v2204, 1.0
        %v2330 = vadd.f32 %v2205, 1.0
        %v2331 = vadd.f32 %v2206, 1.0
        %v2332 = vadd.f32 %v2207, 1.0
        %v2333 = vadd.f32 %v2208, 1.0
        %v2334 = vadd.f32 %v2209, 1.0
        %v2335 = vadd.f32 %v2210, 1.0
        %v2336 = vadd.f32 %v2211, 1.0
        %v2337 = vadd.f32 %v2212, 1.0
        %v2338 = vadd.f32 %v2213, 1.0
        %v2339 = vadd.f32 %v2214, 1.0
        %v2340 = vadd.f32 %v2215, 1.0
        %v2341 = vadd.f32 %v2216, 1.0
        %v2342 = vadd.f32 %v2217, 1.0
        %v2343 = vadd.f32 %v2218, 1.0
        %v2344 = vadd.f32 %v2219, 1.0
        %v2345 = vadd.f32 %v2220, 1.0
        %v2346 = vadd.f32 %v2221, 1.0
        %v2347 = vadd.f32 %v2222, 1.0
        %v2348 = vadd.f32 %v2223, 1.0
        %v2349 = vadd.f32 %v2224, 1.0
        %v2350 = vadd.f32 %v2225, 1.0
        %v2351 = vadd.f32 %v2226, 1.0
        %v2352 = vadd.f32 %v2227, 1.0
        %v2353 = vadd.f32 %v2228, 1.0
        %v2354 = vadd.f32 %v2229, 1.0
        %v2355 = vadd.f32 %v2230, 1.0
        %v2356 = vadd.f32 %v2231, 1.0
        %v2357 = vadd.f32 %v2232, 1.0
        %v2358 = vadd.f32 %v2233, 1.0
        %v2359 = vadd.f32 %v2234, 1.0
        %v2360 = vadd.f32 %v2235, 1.0
        %v2361 = vadd.f32 %v2236, 1.0
        %v2362 = vadd.f32 %v2237, 1.0
        %v2363 = vadd.f32 %v2238, 1.0
        %v2364 = vadd.f32 %v2239, 1.0
        %v2365 = vadd.f32 %v2240, 1.0
        %v2366 = vadd.f32 %v2241, 1.0
        %v2367 = vadd.f32 %v2242, 1.0
        %v2368 = vadd.f32 %v2243, 1.0
        %v2369 = vadd.f32 %v2244, 1.0
        %v2370 = vadd.f32 %v2245, 1.0
        %v2371 = vadd.f32 %v2246, 1.0
        %v2372 = vadd.f32 %v2247, 1.0
        %v2373 = vadd.f32 %v2248, 1.0
        %v2374 = vadd.f32 %v2249, 1.0
        %v2375 = vadd.f32 %v2250, 1.0
        %v2376 = vadd.f32 %v2251, 1.0
        %v2377 = vadd.f32 %v2252, 1.0
        %v2378 = vadd.f32 %v2253, 1.0
        %v2379 = vadd.f32 %v2254, 1.0
        %v2380 = vadd.f32 %v2255, 1.0
        %v2381 = vadd.f32 %v2256, 1.0
        %v2382 = vadd.f32 %v2257, 1.0
        %v2383 = vadd.f32 %v2258, 1.0
        %v2384 = vadd.f32 %v2259, 1.0
        %v2385 = vadd.f32 %v2260, 1.0
        %v2386 = vadd.f32 %v2261, 1.0
        %v2387 = vadd.f32 %v2262, 1.0
        %v2388 = vadd.f32 %v2263, 1.0
        %v2389 = vadd.f32 %v2264, 1.0
        %v2390 = vadd.f32 %v2265, 1.0
        %v2391 = vadd.f32 %v2266, 1.0
        %v2392 = vadd.f32 %v2267, 1.0
        %v2393 = vadd.f32 %v2268, 1.0
        %v2394 = vadd.f32 %v2269, 1.0
        %v2395 = vadd.f32 %v2270, 1.0
        %v2396 = vadd.f32 %v2271, 1.0
        %v2397 = vadd.f32 %v2272, 1.0
        %v2398 = vadd.f32 %v2273, 1.0
        %v2399 = vadd.f32 %v2274, 1.0
        %v2400 = vadd.f32 %v2275, 1.0
        %v2401 = vadd.f32 %v2276, 1.0
        %v2402 = vadd.f32 %v2277, 1.0
        %v2403 = vadd.f32 %v2278, 1.0
        %v2404 = vadd.f32 %v2279, 1.0
        %v2405 = vadd.f32 %v2280, 1.0
        %v2406 = vadd.f32 %v2281, 1.0
        %v2407 = vadd.f32 %v2282, 1.0
        %v2408 = vadd.f32 %v2283, 1.0
        %v2409 = vadd.f32 %v2284, 1.0
        %v2410 = vadd.f32 %v2285, 1.0
        %v2411 = vadd.f32 %v2286, 1.0
        %v2412 = vadd.f32 %v2287, 1.0
        %v2413 = vadd.f32 %v2288, 1.0
        %v2414 = vadd.f32 %v2289, 1.0
        %v2415 = vadd.f32 %v2290, 1.0
        %v2416 = vadd.f32 %v2291, 1.0
        %v2417 = vadd.f32 %v2292, 1.0
        %v2418 = vadd.f32 %v2293, 1.0
        %v2419 = vadd.f32 %v2294, 1.0
        %v2420 = vadd.f32 %v2295, 1.0
        %v2421 = vadd.f32 %v2296, 1.0
        %v2422 = vadd.f32 %v2297, 1.0
        %v2423 = vadd.f32 %v2298, 1.0
        %v2424 = vadd.f32 %v2299, 1.0
        %v2425 = vadd.f32 %v2300, 1.0
        %v2426 = vadd.f32 %v2301, 1.0
        %v2427 = vadd.f32 %v2302, 1.0
        %v2428 = vadd.f32 %v2303, 1.0
        %v2429 = vadd.f32 %v2304, 1.0
        %v2430 = vadd.f32 %v2305, 1.0
        %v2431 = vadd.f32 %v2306, 1.0
        %v2432 = vadd.f32 %v2307, 1.0
        %v2433 = vadd.f32 %v2308, 1.0
        %v2434 = vadd.f32 %v2309, 1.0
        %v2435 = vadd.f32 %v2310, 1.0
        %v2436 = vmul.f32 %v2311, 0.5
        %v2437 = vmul.f32 %v2312, 0.5
        %v2438 = vmul.f32 %v2313, 0.5
        %v2439 = vmul.f32 %v2314, 0.5
        %v2440 = vmul.f32 %v2315, 0.5
        %v2441 = vmul.f32 %v2316, 0.5
        %v2442 = vmul.f32 %v2317, 0.5
        %v2443 = vmul.f32 %v2318, 0.5
        %v2444 = vmul.f32 %v2319, 0.5
        %v2445 = vmul.f32 %v2320, 0.5
        %v2446 = vmul.f32 %v2321, 0.5
        %v2447 = vmul.f32 %v2322, 0.5
        %v2448 = vmul.f32 %v2323, 0.5
        %v2449 = vmul.f32 %v2324, 0.5
        %v2450 = vmul.f32 %v2325, 0.5
        %v2451 = vmul.f32 %v2326, 0.5
        %v2452 = vmul.f32 %v2327, 0.5
        %v2453 = vmul.f32 %v2328, 0.5
        %v2454 = vmul.f32 %v2329, 0.5
        %v2455 = vmul.f32 %v2330, 0.5
        %v2456 = vmul.f32 %v2331, 0.5
        %v2457 = vmul.f32 %v2332, 0.5
        %v2458 = vmul.f32 %v2333, 0.5
        %v2459 = vmul.f32 %v2334, 0.5
        %v2460 = vmul.f32 %v2335, 0.5
        %v2461 = vmul.f32 %v2336, 0.5
        %v2462 = vmul.f32 %v2337, 0.5
        %v2463 = vmul.f32 %v2338, 0.5
        %v2464 = vmul.f32 %v2339, 0.5
        %v2465 = vmul.f32 %v2340, 0.5
        %v2466 = vmul.f32 %v2341, 0.5
        %v2467 = vmul.f32 %v2342, 0.5
        %v2468 = vmul.f32 %v2343, 0.5
        %v2469 = vmul.f32 %v2344, 0.5
        %v2470 = vmul.f32 %v2345, 0.5
        %v2471 = vmul.f32 %v2346, 0.5
        %v2472 = vmul.f32 %v2347, 0.5
        %v2473 = vmul.f32 %v2348, 0.5
        %v2474 = vmul.f32 %v2349, 0.5
        %v2475 = vmul.f32 %v2350, 0.5
        %v2476 = vmul.f32 %v2351, 0.5
        %v2477 = vmul.f32 %v2352, 0.5
        %v2478 = vmul.f32 %v2353, 0.5
        %v2479 = vmul.f32 %v2354, 0.5
        %v2480 = vmul.f32 %v2355, 0.5
        %v2481 = vmul.f32 %v2356, 0.5
        %v2482 = vmul.f32 %v2357, 0.5
        %v2483 = vmul.f32 %v2358, 0.5
        %v2484 = vmul.f32 %v2359, 0.5
        %v2485 = vmul.f32 %v2360, 0.5
        %v2486 = vmul.f32 %v2361, 0.5
        %v2487 = vmul.f32 %v2362, 0.5
        %v2488 = vmul.f32 %v2363, 0.5
        %v2489 = vmul.f32 %v2364, 0.5
        %v2490 = vmul.f32 %v2365, 0.5
        %v2491 = vmul.f32 %v2366, 0.5
        %v2492 = vmul.f32 %v2367, 0.5
        %v2493 = vmul.f32 %v2368, 0.5
        %v2494 = vmul.f32 %v2369, 0.5
        %v2495 = vmul.f32 %v2370, 0.5
        %v2496 = vmul.f32 %v2371, 0.5
        %v2497 = vmul.f32 %v2372, 0.5
        %v2498 = vmul.f32 %v2373, 0.5
        %v2499 = vmul.f32 %v2374, 0.5
        %v2500 = vmul.f32 %v2375, 0.5
        %v2501 = vmul.f32 %v2376, 0.5
        %v2502 = vmul.f32 %v2377, 0.5
        %v2503 = vmul.f32 %v2378, 0.5
        %v2504 = vmul.f32 %v2379, 0.5
        %v2505 = vmul.f32 %v2380, 0.5
        %v2506 = vmul.f32 %v2381, 0.5
        %v2507 = vmul.f32 %v2382, 0.5
        %v2508 = vmul.f32 %v2383, 0.5
        %v2509 = vmul.f32 %v2384, 0.5
        %v2510 = vmul.f32 %v2385, 0.5
        %v2511 = vmul.f32 %v2386, 0.5
        %v2512 = vmul.f32 %v2387, 0.5
        %v2513 = vmul.f32 %v2388, 0.5
        %v2514 = vmul.f32 %v2389, 0.5
        %v2515 = vmul.f32 %v2390, 0.5
        %v2516 = vmul.f32 %v2391, 0.5
        %v2517 = vmul.f32 %v2392, 0.5
        %v2518 = vmul.f32 %v2393, 0.5
        %v2519 = vmul.f32 %v2394, 0.5
        %v2520 = vmul.f32 %v2395, 0.5
        %v2521 = vmul.f32 %v2396, 0.5
        %v2522 = vmul.f32 %v2397, 0.5
        %v2523 = vmul.f32 %v2398, 0.5
        %v2524 = vmul.f32 %v2399, 0.5
        %v2525 = vmul.f32 %v2400, 0.5
        %v2526 = vmul.f32 %v2401, 0.5
        %v2527 = vmul.f32 %v2402, 0.5
        %v2528 = vmul.f32 %v2403, 0.5
        %v2529 = vmul.f32 %v2404, 0.5
        %v2530 = vmul.f32 %v2405, 0.5
        %v2531 = vmul.f32 %v2406, 0.5
        %v2532 = vmul.f32 %v2407, 0.5
        %v2533 = vmul.f32 %v2408, 0.5
        %v2534 = vmul.f32 %v2409, 0.5
        %v2535 = vmul.f32 %v2410, 0.5
        %v2536 = vmul.f32 %v2411, 0.5
        %v2537 = vmul.f32 %v2412, 0.5
        %v2538 = vmul.f32 %v2413, 0.5
        %v2539 = vmul.f32 %v2414, 0.5
        %v2540 = vmul.f32 %v2415, 0.5
        %v2541 = vmul.f32 %v2416, 0.5
        %v2542 = vmul.f32 %v2417, 0.5
        %v2543 = vmul.f32 %v2418, 0.5
        %v2544 = vmul.f32 %v2419, 0.5
        %v2545 = vmul.f32 %v2420, 0.5
        %v2546 = vmul.f32 %v2421, 0.5
        %v2547 = vmul.f32 %v2422, 0.5
        %v2548 = vmul.f32 %v2423, 0.5
        %v2549 = vmul.f32 %v2424, 0.5
        %v2550 = vmul.f32 %v2425, 0.5
        %v2551 = vmul.f32 %v2426, 0.5
        %v2552 = vmul.f32 %v2427, 0.5
        %v2553 = vmul.f32 %v2428, 0.5
        %v2554 = vmul.f32 %v2429, 0.5
        %v2555 = vmul.f32 %v2430, 0.5
        %v2556 = vmul.f32 %v2431, 0.5
        %v2557 = vmul.f32 %v2432, 0.5
        %v2558 = vmul.f32 %v2433, 0.5
        %v2559 = vmul.f32 %v2434, 0.5
        %v2560 = vmul.f32 %v2435, 0.5
        %v2561 = vmul.f32 %v1060, %v2436
        %v2562 = vmul.f32 %v1063, %v2437
        %v2563 = vmul.f32 %v1068, %v2438
        %v2564 = vmul.f32 %v1071, %v2439
        %v2565 = vmul.f32 %v1076, %v2440
        %v2566 = vmul.f32 %v1079, %v2441
        %v2567 = vmul.f32 %v1084, %v2442
        %v2568 = vmul.f32 %v1087, %v2443
        %v2569 = vmul.f32 %v1092, %v2444
        %v2570 = vmul.f32 %v1095, %v2445
        %v2571 = vmul.f32 %v1100, %v2446
        %v2572 = vmul.f32 %v1103, %v2447
        %v2573 = vmul.f32 %v1108, %v2448
        %v2574 = vmul.f32 %v1111, %v2449
        %v2575 = vmul.f32 %v1116, %v2450
        %v2576 = vmul.f32 %v1119, %v2451
        %v2577 = vmul.f32 %v1124, %v2452
        %v2578 = vmul.f32 %v1127, %v2453
        %v2579 = vmul.f32 %v1132, %v2454
        %v2580 = vmul.f32 %v1135, %v2455
        %v2581 = vmul.f32 %v1140, %v2456
        %v2582 = vmul.f32 %v1143, %v2457
        %v2583 = vmul.f32 %v1148, %v2458
        %v2584 = vmul.f32 %v1151, %v2459
        %v2585 = vmul.f32 %v1156, %v2460
        %v2586 = vmul.f32 %v1159, %v2461
        %v2587 = vmul.f32 %v1164, %v2462
        %v2588 = vmul.f32 %v1167, %v2463
        %v2589 = vmul.f32 %v1172, %v2464
        %v2590 = vmul.f32 %v1175, %v2465
        %v2591 = vmul.f32 %v1180, %v2466
        %v2592 = vmul.f32 %v1183, %v2467
        %v2593 = vmul.f32 %v1188, %v2468
        %v2594 = vmul.f32 %v1191, %v2469
        %v2595 = vmul.f32 %v1196, %v2470
        %v2596 = vmul.f32 %v1199, %v2471
        %v2597 = vmul.f32 %v1204, %v2472
        %v2598 = vmul.f32 %v1207, %v2473
        %v2599 = vmul.f32 %v1212, %v2474
        %v2600 = vmul.f32 %v1215, %v2475
        %v2601 = vmul.f32 %v1220, %v2476
        %v2602 = vmul.f32 %v1223, %v2477
        %v2603 = vmul.f32 %v1228, %v2478
        %v2604 = vmul.f32 %v1231, %v2479
        %v2605 = vmul.f32 %v1236, %v2480
        %v2606 = vmul.f32 %v1239, %v2481
        %v2607 = vmul.f32 %v1244, %v2482
        %v2608 = vmul.f32 %v1247, %v2483
        %v2609 = vmul.f32 %v1252, %v2484
        %v2610 = vmul.f32 %v1255, %v2485
        %v2611 = vmul.f32 %v1260, %v2486
        %v2612 = vmul.f32 %v1263, %v2487
        %v2613 = vmul.f32 %v1268, %v2488
        %v2614 = vmul.f32 %v1271, %v2489
        %v2615 = vmul.f32 %v1276, %v2490
        %v2616 = vmul.f32 %v1279, %v2491
        %v2617 = vmul.f32 %v1284, %v2492
        %v2618 = vmul.f32 %v1287, %v2493
        %v2619 = vmul.f32 %v1292, %v2494
        %v2620 = vmul.f32 %v1295, %v2495
        %v2621 = vmul.f32 %v1300, %v2496
        %v2622 = vmul.f32 %v1303, %v2497
        %v2623 = vmul.f32 %v1308, %v2498
        %v2624 = vmul.f32 %v1311, %v2499
        %v2625 = vmul.f32 %v1316, %v2500
        %v2626 = vmul.f32 %v1319, %v2501
        %v2627 = vmul.f32 %v1324, %v2502
        %v2628 = vmul.f32 %v1327, %v2503
        %v2629 = vmul.f32 %v1332, %v2504
        %v2630 = vmul.f32 %v1335, %v2505
        %v2631 = vmul.f32 %v1340, %v2506
        %v2632 = vmul.f32 %v1343, %v2507
        %v2633 = vmul.f32 %v1348, %v2508
        %v2634 = vmul.f32 %v1351, %v2509
        %v2635 = vmul.f32 %v1356, %v2510
        %v2636 = vmul.f32 %v1359, %v2511
        %v2637 = vmul.f32 %v1364, %v2512
        %v2638 = vmul.f32 %v1367, %v2513
        %v2639 = vmul.f32 %v1372, %v2514
        %v2640 = vmul.f32 %v1375, %v2515
        %v2641 = vmul.f32 %v1380, %v2516
        %v2642 = vmul.f32 %v1383, %v2517
        %v2643 = vmul.f32 %v1388, %v2518
        %v2644 = vmul.f32 %v1391, %v2519
        %v2645 = vmul.f32 %v1396, %v2520
        %v2646 = vmul.f32 %v1399, %v2521
        %v2647 = vmul.f32 %v1404, %v2522
        %v2648 = vmul.f32 %v1407, %v2523
        %v2649 = vmul.f32 %v1412, %v2524
        %v2650 = vmul.f32 %v1415, %v2525
        %v2651 = vmul.f32 %v1420, %v2526
        %v2652 = vmul.f32 %v1423, %v2527
        %v2653 = vmul.f32 %v1428, %v2528
        %v2654 = vmul.f32 %v1431, %v2529
        %v2655 = vmul.f32 %v1436, %v2530
        %v2656 = vmul.f32 %v1439, %v2531
        %v2657 = vmul.f32 %v1444, %v2532
        %v2658 = vmul.f32 %v1447, %v2533
        %v2659 = vmul.f32 %v1452, %v2534
        %v2660 = vmul.f32 %v1455, %v2535
        %v2661 = vmul.f32 %v1460, %v2536
        %v2662 = vmul.f32 %v1463, %v2537
        %v2663 = vmul.f32 %v1468, %v2538
        %v2664 = vmul.f32 %v1471, %v2539
        %v2665 = vmul.f32 %v1476, %v2540
        %v2666 = vmul.f32 %v1479, %v2541
        %v2667 = vmul.f32 %v1484, %v2542
        %v2668 = vmul.f32 %v1487, %v2543
        %v2669 = vmul.f32 %v1492, %v2544
        %v2670 = vmul.f32 %v1495, %v2545
        %v2671 = vmul.f32 %v1500, %v2546
        %v2672 = vmul.f32 %v1503, %v2547
        %v2673 = vmul.f32 %v1508, %v2548
        %v2674 = vmul.f32 %v1511, %v2549
        %v2675 = vmul.f32 %v1516, %v2550
        %v2676 = vmul.f32 %v1519, %v2551
        %v2677 = vmul.f32 %v1524, %v2552
        %v2678 = vmul.f32 %v1527, %v2553
        %v2679 = vmul.f32 %v1532, %v2554
        %v2680 = vmul.f32 %v1535, %v2555
        %v2681 = vmul.f32 %v1540, %v2556
        %v2682 = vmul.f32 %v1543, %v2557
        %v2683 = vmul.f32 %v1548, %v2558
        %v2684 = vmul.f32 %v1551, %v2559
        %v2685 = vmul.f32 %v1556, %v2560
        %v2686 = vpack.c.bf16 %v2562, %v2561
        %v2687 = vpack.c.bf16 %v2564, %v2563
        %v2688 = vpack.c.bf16 %v2566, %v2565
        %v2689 = vpack.c.bf16 %v2568, %v2567
        %v2690 = vpack.c.bf16 %v2570, %v2569
        %v2691 = vpack.c.bf16 %v2572, %v2571
        %v2692 = vpack.c.bf16 %v2574, %v2573
        %v2693 = vpack.c.bf16 %v2576, %v2575
        %v2694 = vpack.c.bf16 %v2578, %v2577
        %v2695 = vpack.c.bf16 %v2580, %v2579
        %v2696 = vpack.c.bf16 %v2582, %v2581
        %v2697 = vpack.c.bf16 %v2584, %v2583
        %v2698 = vpack.c.bf16 %v2586, %v2585
        %v2699 = vpack.c.bf16 %v2588, %v2587
        %v2700 = vpack.c.bf16 %v2590, %v2589
        %v2701 = vpack.c.bf16 %v2592, %v2591
        %v2702 = vpack.c.bf16 %v2594, %v2593
        %v2703 = vpack.c.bf16 %v2596, %v2595
        %v2704 = vpack.c.bf16 %v2598, %v2597
        %v2705 = vpack.c.bf16 %v2600, %v2599
        %v2706 = vpack.c.bf16 %v2602, %v2601
        %v2707 = vpack.c.bf16 %v2604, %v2603
        %v2708 = vpack.c.bf16 %v2606, %v2605
        %v2709 = vpack.c.bf16 %v2608, %v2607
        %v2710 = vpack.c.bf16 %v2610, %v2609
        %v2711 = vpack.c.bf16 %v2612, %v2611
        %v2712 = vpack.c.bf16 %v2614, %v2613
        %v2713 = vpack.c.bf16 %v2616, %v2615
        %v2714 = vpack.c.bf16 %v2618, %v2617
        %v2715 = vpack.c.bf16 %v2620, %v2619
        %v2716 = vpack.c.bf16 %v2622, %v2621
        %v2717 = vpack.c.bf16 %v2624, %v2623
        %v2718 = vpack.c.bf16 %v2626, %v2625
        %v2719 = vpack.c.bf16 %v2628, %v2627
        %v2720 = vpack.c.bf16 %v2630, %v2629
        %v2721 = vpack.c.bf16 %v2632, %v2631
        %v2722 = vpack.c.bf16 %v2634, %v2633
        %v2723 = vpack.c.bf16 %v2636, %v2635
        %v2724 = vpack.c.bf16 %v2638, %v2637
        %v2725 = vpack.c.bf16 %v2640, %v2639
        %v2726 = vpack.c.bf16 %v2642, %v2641
        %v2727 = vpack.c.bf16 %v2644, %v2643
        %v2728 = vpack.c.bf16 %v2646, %v2645
        %v2729 = vpack.c.bf16 %v2648, %v2647
        %v2730 = vpack.c.bf16 %v2650, %v2649
        %v2731 = vpack.c.bf16 %v2652, %v2651
        %v2732 = vpack.c.bf16 %v2654, %v2653
        %v2733 = vpack.c.bf16 %v2656, %v2655
        %v2734 = vpack.c.bf16 %v2658, %v2657
        %v2735 = vpack.c.bf16 %v2660, %v2659
        %v2736 = vpack.c.bf16 %v2662, %v2661
        %v2737 = vpack.c.bf16 %v2664, %v2663
        %v2738 = vpack.c.bf16 %v2666, %v2665
        %v2739 = vpack.c.bf16 %v2668, %v2667
        %v2740 = vpack.c.bf16 %v2670, %v2669
        %v2741 = vpack.c.bf16 %v2672, %v2671
        %v2742 = vpack.c.bf16 %v2674, %v2673
        %v2743 = vpack.c.bf16 %v2676, %v2675
        %v2744 = vpack.c.bf16 %v2678, %v2677
        %v2745 = vpack.c.bf16 %v2680, %v2679
        %v2746 = vpack.c.bf16 %v2682, %v2681
        %v2747 = vpack.c.bf16 %v2684, %v2683
        %v2748 = vpack.c.bf16 %v2685, %v2685
        %v2749 = vld [vmem:[%s3] sm:$0xf]
        %v2750 = vld [vmem:[%s3 + $0x4] sm:$0xf]
        %v2751 = vld [vmem:[%s3 + $0x8] sm:$0xf]
        %v2752 = vld [vmem:[%s3 + $0xc] sm:$0xf]
        %v2753 = vld [vmem:[%s3 + $0x10] sm:$0xf]
        %v2754 = vld [vmem:[%s3 + $0x14] sm:$0xf]
        %v2755 = vld [vmem:[%s3 + $0x18] sm:$0xf]
        %v2756 = vld [vmem:[%s3 + $0x1c] sm:$0xf]
        %v2757 = vld [vmem:[%s4] sm:$0x1]
        %v2759 = vlaneseq
        %v2760 = vshrl.u32 %v2759, 7
        %v2761 = vsub.s32 0, %v2760
        %v2762 = vrot.slane %v2757, %v2761
        %v2772 = vunpack.c.l.b16 %v2749
        %v2773 = vunpack.c.l.b16 %v2750
        %v2774 = vunpack.c.l.b16 %v2751
        %v2775 = vunpack.c.l.b16 %v2752
        %v2776 = vunpack.c.l.b16 %v2753
        %v2777 = vunpack.c.l.b16 %v2754
        %v2778 = vunpack.c.l.b16 %v2755
        %v2779 = vunpack.c.l.b16 %v2756
        %v2780 = vpack.c.b16 %v2773, %v2772
        %v2781 = vpack.c.b16 %v2775, %v2774
        %v2782 = vpack.c.b16 %v2777, %v2776
        %v2783 = vpack.c.b16 %v2779, %v2778
        %vm2788 = vcmask 523264
        %v2790 = vsel %vm2788, %v2686, 0
        %v2793 = vsel %vm2788, %v2687, 0
        %v2796 = vsel %vm2788, %v2688, 0
        %v2799 = vsel %vm2788, %v2689, 0
        %v2802 = vsel %vm2788, %v2690, 0
        %v2805 = vsel %vm2788, %v2691, 0
        %v2808 = vsel %vm2788, %v2692, 0
        %v2811 = vsel %vm2788, %v2693, 0
        %v2814 = vsel %vm2788, %v2694, 0
        %v2817 = vsel %vm2788, %v2695, 0
        %v2820 = vsel %vm2788, %v2696, 0
        %v2823 = vsel %vm2788, %v2697, 0
        %v2826 = vsel %vm2788, %v2698, 0
        %v2829 = vsel %vm2788, %v2699, 0
        %v2832 = vsel %vm2788, %v2700, 0
        %v2835 = vsel %vm2788, %v2701, 0
        %v2838 = vsel %vm2788, %v2702, 0
        %v2841 = vsel %vm2788, %v2703, 0
        %v2844 = vsel %vm2788, %v2704, 0
        %v2847 = vsel %vm2788, %v2705, 0
        %v2850 = vsel %vm2788, %v2706, 0
        %v2853 = vsel %vm2788, %v2707, 0
        %v2856 = vsel %vm2788, %v2708, 0
        %v2859 = vsel %vm2788, %v2709, 0
        %v2862 = vsel %vm2788, %v2710, 0
        %v2865 = vsel %vm2788, %v2711, 0
        %v2868 = vsel %vm2788, %v2712, 0
        %v2871 = vsel %vm2788, %v2713, 0
        %v2874 = vsel %vm2788, %v2714, 0
        %v2877 = vsel %vm2788, %v2715, 0
        %v2880 = vsel %vm2788, %v2716, 0
        %v2883 = vsel %vm2788, %v2717, 0
        %v2886 = vsel %vm2788, %v2718, 0
        %v2889 = vsel %vm2788, %v2719, 0
        %v2892 = vsel %vm2788, %v2720, 0
        %v2895 = vsel %vm2788, %v2721, 0
        %v2898 = vsel %vm2788, %v2722, 0
        %v2901 = vsel %vm2788, %v2723, 0
        %v2904 = vsel %vm2788, %v2724, 0
        %v2907 = vsel %vm2788, %v2725, 0
        %v2910 = vsel %vm2788, %v2726, 0
        %v2913 = vsel %vm2788, %v2727, 0
        %v2916 = vsel %vm2788, %v2728, 0
        %v2919 = vsel %vm2788, %v2729, 0
        %v2922 = vsel %vm2788, %v2730, 0
        %v2925 = vsel %vm2788, %v2731, 0
        %v2928 = vsel %vm2788, %v2732, 0
        %v2931 = vsel %vm2788, %v2733, 0
        %v2934 = vsel %vm2788, %v2734, 0
        %v2937 = vsel %vm2788, %v2735, 0
        %v2940 = vsel %vm2788, %v2736, 0
        %v2943 = vsel %vm2788, %v2737, 0
        %v2946 = vsel %vm2788, %v2738, 0
        %v2949 = vsel %vm2788, %v2739, 0
        %v2952 = vsel %vm2788, %v2740, 0
        %v2955 = vsel %vm2788, %v2741, 0
        %v2958 = vsel %vm2788, %v2742, 0
        %v2961 = vsel %vm2788, %v2743, 0
        %v2964 = vsel %vm2788, %v2744, 0
        %v2967 = vsel %vm2788, %v2745, 0
        %v2970 = vsel %vm2788, %v2746, 0
        %v2973 = vsel %vm2788, %v2747, 0
        %v2976 = vsel %vm2788, %v2748, 0
        %2978 = vmatprep.subr.bf16.mxu0 0
        %2979 = vmatpush1.bf16.msra.mxu0 0
        %2980 = vmatprep.subr.bf16.mxu0 0
        %2981 = vmatpush1.bf16.msra.mxu0 0
        %2982 = vmatprep.subr.bf16.mxu0 0
        %2983 = vmatpush1.bf16.msra.mxu0 0
        %2984 = vmatprep.subr.bf16.mxu0 0
        %2985 = vmatpush1.bf16.msra.mxu0 0
        %2986 = vmatprep.subr.bf16.mxu0 0
        %2987 = vmatpush1.bf16.msra.mxu0 %v2783
        %2988 = vmatprep.subr.bf16.mxu0 0
        %2989 = vmatpush1.bf16.msra.mxu0 %v2782
        %2990 = vmatprep.subr.bf16.mxu0 0
        %2991 = vmatpush1.bf16.msra.mxu0 %v2781
        %2992 = vmatprep.subr.bf16.mxu0 0
        %2993 = vmatpush1.bf16.msra.mxu0 %v2780
        %2994 = vmatprep.subr.bf16.mxu0 0
        %2995 = vmatpush2.bf16.msra.mxu0 0
        %2996 = vmatprep.subr.bf16.mxu0 0
        %2997 = vmatpush2.bf16.msra.mxu0 0
        %2998 = vmatprep.subr.bf16.mxu0 0
        %2999 = vmatpush2.bf16.msra.mxu0 0
        %3000 = vmatprep.subr.bf16.mxu0 0
        %3001 = vmatpush2.bf16.msra.mxu0 0
        %3002 = vmatprep.subr.bf16.mxu0 0
        %3003 = vmatpush2.bf16.msra.mxu0 0
        %3004 = vmatprep.subr.bf16.mxu0 0
        %3005 = vmatpush2.bf16.msra.mxu0 0
        %3006 = vmatprep.subr.bf16.mxu0 0
        %3007 = vmatpush2.bf16.msra.mxu0 0
        %3008 = vmatprep.subr.bf16.mxu0 0
        %3009 = vmatpush2.bf16.msra.mxu0 0
        %3010 = vmatprep.mubr.bf16.mxu0 0
        %3011 = vmatmul.mubr.bf16.gmra.mxu0 %v2790
        %v3012 = vpop.f32.mrf.mxu0
        %v3013 = vadd.f32 %v2762, %v3012
        %v3014 = vpop.f32.mrf.mxu0
        %v3015 = vpop.f32.mrf.mxu0
        %v3016 = vadd.f32 %v2762, %v3015
        %v3017 = vpop.f32.mrf.mxu0
        %3018 = vmatprep.mubr.bf16.mxu0 0
        %3019 = vmatmul.mubr.bf16.gmra.mxu0 %v2793
        %v3020 = vpop.f32.mrf.mxu0
        %v3021 = vadd.f32 %v2762, %v3020
        %v3022 = vpop.f32.mrf.mxu0
        %v3023 = vpop.f32.mrf.mxu0
        %v3024 = vadd.f32 %v2762, %v3023
        %v3025 = vpop.f32.mrf.mxu0
        %3026 = vmatprep.mubr.bf16.mxu0 0
        %3027 = vmatmul.mubr.bf16.gmra.mxu0 %v2796
        %v3028 = vpop.f32.mrf.mxu0
        %v3029 = vadd.f32 %v2762, %v3028
        %v3030 = vpop.f32.mrf.mxu0
        %v3031 = vpop.f32.mrf.mxu0
        %v3032 = vadd.f32 %v2762, %v3031
        %v3033 = vpop.f32.mrf.mxu0
        %3034 = vmatprep.mubr.bf16.mxu0 0
        %3035 = vmatmul.mubr.bf16.gmra.mxu0 %v2799
        %v3036 = vpop.f32.mrf.mxu0
        %v3037 = vadd.f32 %v2762, %v3036
        %v3038 = vpop.f32.mrf.mxu0
        %v3039 = vpop.f32.mrf.mxu0
        %v3040 = vadd.f32 %v2762, %v3039
        %v3041 = vpop.f32.mrf.mxu0
        %3042 = vmatprep.mubr.bf16.mxu0 0
        %3043 = vmatmul.mubr.bf16.gmra.mxu0 %v2802
        %v3044 = vpop.f32.mrf.mxu0
        %v3045 = vadd.f32 %v2762, %v3044
        %v3046 = vpop.f32.mrf.mxu0
        %v3047 = vpop.f32.mrf.mxu0
        %v3048 = vadd.f32 %v2762, %v3047
        %v3049 = vpop.f32.mrf.mxu0
        %3050 = vmatprep.mubr.bf16.mxu0 0
        %3051 = vmatmul.mubr.bf16.gmra.mxu0 %v2805
        %v3052 = vpop.f32.mrf.mxu0
        %v3053 = vadd.f32 %v2762, %v3052
        %v3054 = vpop.f32.mrf.mxu0
        %v3055 = vpop.f32.mrf.mxu0
        %v3056 = vadd.f32 %v2762, %v3055
        %v3057 = vpop.f32.mrf.mxu0
        %3058 = vmatprep.mubr.bf16.mxu0 0
        %3059 = vmatmul.mubr.bf16.gmra.mxu0 %v2808
        %v3060 = vpop.f32.mrf.mxu0
        %v3061 = vadd.f32 %v2762, %v3060
        %v3062 = vpop.f32.mrf.mxu0
        %v3063 = vpop.f32.mrf.mxu0
        %v3064 = vadd.f32 %v2762, %v3063
        %v3065 = vpop.f32.mrf.mxu0
        %3066 = vmatprep.mubr.bf16.mxu0 0
        %3067 = vmatmul.mubr.bf16.gmra.mxu0 %v2811
        %v3068 = vpop.f32.mrf.mxu0
        %v3069 = vadd.f32 %v2762, %v3068
        %v3070 = vpop.f32.mrf.mxu0
        %v3071 = vpop.f32.mrf.mxu0
        %v3072 = vadd.f32 %v2762, %v3071
        %v3073 = vpop.f32.mrf.mxu0
        %3074 = vmatprep.mubr.bf16.mxu0 0
        %3075 = vmatmul.mubr.bf16.gmra.mxu0 %v2814
        %v3076 = vpop.f32.mrf.mxu0
        %v3077 = vadd.f32 %v2762, %v3076
        %v3078 = vpop.f32.mrf.mxu0
        %v3079 = vpop.f32.mrf.mxu0
        %v3080 = vadd.f32 %v2762, %v3079
        %v3081 = vpop.f32.mrf.mxu0
        %3082 = vmatprep.mubr.bf16.mxu0 0
        %3083 = vmatmul.mubr.bf16.gmra.mxu0 %v2817
        %v3084 = vpop.f32.mrf.mxu0
        %v3085 = vadd.f32 %v2762, %v3084
        %v3086 = vpop.f32.mrf.mxu0
        %v3087 = vpop.f32.mrf.mxu0
        %v3088 = vadd.f32 %v2762, %v3087
        %v3089 = vpop.f32.mrf.mxu0
        %3090 = vmatprep.mubr.bf16.mxu0 0
        %3091 = vmatmul.mubr.bf16.gmra.mxu0 %v2820
        %v3092 = vpop.f32.mrf.mxu0
        %v3093 = vadd.f32 %v2762, %v3092
        %v3094 = vpop.f32.mrf.mxu0
        %v3095 = vpop.f32.mrf.mxu0
        %v3096 = vadd.f32 %v2762, %v3095
        %v3097 = vpop.f32.mrf.mxu0
        %3098 = vmatprep.mubr.bf16.mxu0 0
        %3099 = vmatmul.mubr.bf16.gmra.mxu0 %v2823
        %v3100 = vpop.f32.mrf.mxu0
        %v3101 = vadd.f32 %v2762, %v3100
        %v3102 = vpop.f32.mrf.mxu0
        %v3103 = vpop.f32.mrf.mxu0
        %v3104 = vadd.f32 %v2762, %v3103
        %v3105 = vpop.f32.mrf.mxu0
        %3106 = vmatprep.mubr.bf16.mxu0 0
        %3107 = vmatmul.mubr.bf16.gmra.mxu0 %v2826
        %v3108 = vpop.f32.mrf.mxu0
        %v3109 = vadd.f32 %v2762, %v3108
        %v3110 = vpop.f32.mrf.mxu0
        %v3111 = vpop.f32.mrf.mxu0
        %v3112 = vadd.f32 %v2762, %v3111
        %v3113 = vpop.f32.mrf.mxu0
        %3114 = vmatprep.mubr.bf16.mxu0 0
        %3115 = vmatmul.mubr.bf16.gmra.mxu0 %v2829
        %v3116 = vpop.f32.mrf.mxu0
        %v3117 = vadd.f32 %v2762, %v3116
        %v3118 = vpop.f32.mrf.mxu0
        %v3119 = vpop.f32.mrf.mxu0
        %v3120 = vadd.f32 %v2762, %v3119
        %v3121 = vpop.f32.mrf.mxu0
        %3122 = vmatprep.mubr.bf16.mxu0 0
        %3123 = vmatmul.mubr.bf16.gmra.mxu0 %v2832
        %v3124 = vpop.f32.mrf.mxu0
        %v3125 = vadd.f32 %v2762, %v3124
        %v3126 = vpop.f32.mrf.mxu0
        %v3127 = vpop.f32.mrf.mxu0
        %v3128 = vadd.f32 %v2762, %v3127
        %v3129 = vpop.f32.mrf.mxu0
        %3130 = vmatprep.mubr.bf16.mxu0 0
        %3131 = vmatmul.mubr.bf16.gmra.mxu0 %v2835
        %v3132 = vpop.f32.mrf.mxu0
        %v3133 = vadd.f32 %v2762, %v3132
        %v3134 = vpop.f32.mrf.mxu0
        %v3135 = vpop.f32.mrf.mxu0
        %v3136 = vadd.f32 %v2762, %v3135
        %v3137 = vpop.f32.mrf.mxu0
        %3138 = vmatprep.mubr.bf16.mxu0 0
        %3139 = vmatmul.mubr.bf16.gmra.mxu0 %v2838
        %v3140 = vpop.f32.mrf.mxu0
        %v3141 = vadd.f32 %v2762, %v3140
        %v3142 = vpop.f32.mrf.mxu0
        %v3143 = vpop.f32.mrf.mxu0
        %v3144 = vadd.f32 %v2762, %v3143
        %v3145 = vpop.f32.mrf.mxu0
        %3146 = vmatprep.mubr.bf16.mxu0 0
        %3147 = vmatmul.mubr.bf16.gmra.mxu0 %v2841
        %v3148 = vpop.f32.mrf.mxu0
        %v3149 = vadd.f32 %v2762, %v3148
        %v3150 = vpop.f32.mrf.mxu0
        %v3151 = vpop.f32.mrf.mxu0
        %v3152 = vadd.f32 %v2762, %v3151
        %v3153 = vpop.f32.mrf.mxu0
        %3154 = vmatprep.mubr.bf16.mxu0 0
        %3155 = vmatmul.mubr.bf16.gmra.mxu0 %v2844
        %v3156 = vpop.f32.mrf.mxu0
        %v3157 = vadd.f32 %v2762, %v3156
        %v3158 = vpop.f32.mrf.mxu0
        %v3159 = vpop.f32.mrf.mxu0
        %v3160 = vadd.f32 %v2762, %v3159
        %v3161 = vpop.f32.mrf.mxu0
        %3162 = vmatprep.mubr.bf16.mxu0 0
        %3163 = vmatmul.mubr.bf16.gmra.mxu0 %v2847
        %v3164 = vpop.f32.mrf.mxu0
        %v3165 = vadd.f32 %v2762, %v3164
        %v3166 = vpop.f32.mrf.mxu0
        %v3167 = vpop.f32.mrf.mxu0
        %v3168 = vadd.f32 %v2762, %v3167
        %v3169 = vpop.f32.mrf.mxu0
        %3170 = vmatprep.mubr.bf16.mxu0 0
        %3171 = vmatmul.mubr.bf16.gmra.mxu0 %v2850
        %v3172 = vpop.f32.mrf.mxu0
        %v3173 = vadd.f32 %v2762, %v3172
        %v3174 = vpop.f32.mrf.mxu0
        %v3175 = vpop.f32.mrf.mxu0
        %v3176 = vadd.f32 %v2762, %v3175
        %v3177 = vpop.f32.mrf.mxu0
        %3178 = vmatprep.mubr.bf16.mxu0 0
        %3179 = vmatmul.mubr.bf16.gmra.mxu0 %v2853
        %v3180 = vpop.f32.mrf.mxu0
        %v3181 = vadd.f32 %v2762, %v3180
        %v3182 = vpop.f32.mrf.mxu0
        %v3183 = vpop.f32.mrf.mxu0
        %v3184 = vadd.f32 %v2762, %v3183
        %v3185 = vpop.f32.mrf.mxu0
        %3186 = vmatprep.mubr.bf16.mxu0 0
        %3187 = vmatmul.mubr.bf16.gmra.mxu0 %v2856
        %v3188 = vpop.f32.mrf.mxu0
        %v3189 = vadd.f32 %v2762, %v3188
        %v3190 = vpop.f32.mrf.mxu0
        %v3191 = vpop.f32.mrf.mxu0
        %v3192 = vadd.f32 %v2762, %v3191
        %v3193 = vpop.f32.mrf.mxu0
        %3194 = vmatprep.mubr.bf16.mxu0 0
        %3195 = vmatmul.mubr.bf16.gmra.mxu0 %v2859
        %v3196 = vpop.f32.mrf.mxu0
        %v3197 = vadd.f32 %v2762, %v3196
        %v3198 = vpop.f32.mrf.mxu0
        %v3199 = vpop.f32.mrf.mxu0
        %v3200 = vadd.f32 %v2762, %v3199
        %v3201 = vpop.f32.mrf.mxu0
        %3202 = vmatprep.mubr.bf16.mxu0 0
        %3203 = vmatmul.mubr.bf16.gmra.mxu0 %v2862
        %v3204 = vpop.f32.mrf.mxu0
        %v3205 = vadd.f32 %v2762, %v3204
        %v3206 = vpop.f32.mrf.mxu0
        %v3207 = vpop.f32.mrf.mxu0
        %v3208 = vadd.f32 %v2762, %v3207
        %v3209 = vpop.f32.mrf.mxu0
        %3210 = vmatprep.mubr.bf16.mxu0 0
        %3211 = vmatmul.mubr.bf16.gmra.mxu0 %v2865
        %v3212 = vpop.f32.mrf.mxu0
        %v3213 = vadd.f32 %v2762, %v3212
        %v3214 = vpop.f32.mrf.mxu0
        %v3215 = vpop.f32.mrf.mxu0
        %v3216 = vadd.f32 %v2762, %v3215
        %v3217 = vpop.f32.mrf.mxu0
        %3218 = vmatprep.mubr.bf16.mxu0 0
        %3219 = vmatmul.mubr.bf16.gmra.mxu0 %v2868
        %v3220 = vpop.f32.mrf.mxu0
        %v3221 = vadd.f32 %v2762, %v3220
        %v3222 = vpop.f32.mrf.mxu0
        %v3223 = vpop.f32.mrf.mxu0
        %v3224 = vadd.f32 %v2762, %v3223
        %v3225 = vpop.f32.mrf.mxu0
        %3226 = vmatprep.mubr.bf16.mxu0 0
        %3227 = vmatmul.mubr.bf16.gmra.mxu0 %v2871
        %v3228 = vpop.f32.mrf.mxu0
        %v3229 = vadd.f32 %v2762, %v3228
        %v3230 = vpop.f32.mrf.mxu0
        %v3231 = vpop.f32.mrf.mxu0
        %v3232 = vadd.f32 %v2762, %v3231
        %v3233 = vpop.f32.mrf.mxu0
        %3234 = vmatprep.mubr.bf16.mxu0 0
        %3235 = vmatmul.mubr.bf16.gmra.mxu0 %v2874
        %v3236 = vpop.f32.mrf.mxu0
        %v3237 = vadd.f32 %v2762, %v3236
        %v3238 = vpop.f32.mrf.mxu0
        %v3239 = vpop.f32.mrf.mxu0
        %v3240 = vadd.f32 %v2762, %v3239
        %v3241 = vpop.f32.mrf.mxu0
        %3242 = vmatprep.mubr.bf16.mxu0 0
        %3243 = vmatmul.mubr.bf16.gmra.mxu0 %v2877
        %v3244 = vpop.f32.mrf.mxu0
        %v3245 = vadd.f32 %v2762, %v3244
        %v3246 = vpop.f32.mrf.mxu0
        %v3247 = vpop.f32.mrf.mxu0
        %v3248 = vadd.f32 %v2762, %v3247
        %v3249 = vpop.f32.mrf.mxu0
        %3250 = vmatprep.mubr.bf16.mxu0 0
        %3251 = vmatmul.mubr.bf16.gmra.mxu0 %v2880
        %v3252 = vpop.f32.mrf.mxu0
        %v3253 = vadd.f32 %v2762, %v3252
        %v3254 = vpop.f32.mrf.mxu0
        %v3255 = vpop.f32.mrf.mxu0
        %v3256 = vadd.f32 %v2762, %v3255
        %v3257 = vpop.f32.mrf.mxu0
        %3258 = vmatprep.mubr.bf16.mxu0 0
        %3259 = vmatmul.mubr.bf16.gmra.mxu0 %v2883
        %v3260 = vpop.f32.mrf.mxu0
        %v3261 = vadd.f32 %v2762, %v3260
        %v3262 = vpop.f32.mrf.mxu0
        %v3263 = vpop.f32.mrf.mxu0
        %v3264 = vadd.f32 %v2762, %v3263
        %v3265 = vpop.f32.mrf.mxu0
        %3266 = vmatprep.mubr.bf16.mxu0 0
        %3267 = vmatmul.mubr.bf16.gmra.mxu0 %v2886
        %v3268 = vpop.f32.mrf.mxu0
        %v3269 = vadd.f32 %v2762, %v3268
        %v3270 = vpop.f32.mrf.mxu0
        %v3271 = vpop.f32.mrf.mxu0
        %v3272 = vadd.f32 %v2762, %v3271
        %v3273 = vpop.f32.mrf.mxu0
        %3274 = vmatprep.mubr.bf16.mxu0 0
        %3275 = vmatmul.mubr.bf16.gmra.mxu0 %v2889
        %v3276 = vpop.f32.mrf.mxu0
        %v3277 = vadd.f32 %v2762, %v3276
        %v3278 = vpop.f32.mrf.mxu0
        %v3279 = vpop.f32.mrf.mxu0
        %v3280 = vadd.f32 %v2762, %v3279
        %v3281 = vpop.f32.mrf.mxu0
        %3282 = vmatprep.mubr.bf16.mxu0 0
        %3283 = vmatmul.mubr.bf16.gmra.mxu0 %v2892
        %v3284 = vpop.f32.mrf.mxu0
        %v3285 = vadd.f32 %v2762, %v3284
        %v3286 = vpop.f32.mrf.mxu0
        %v3287 = vpop.f32.mrf.mxu0
        %v3288 = vadd.f32 %v2762, %v3287
        %v3289 = vpop.f32.mrf.mxu0
        %3290 = vmatprep.mubr.bf16.mxu0 0
        %3291 = vmatmul.mubr.bf16.gmra.mxu0 %v2895
        %v3292 = vpop.f32.mrf.mxu0
        %v3293 = vadd.f32 %v2762, %v3292
        %v3294 = vpop.f32.mrf.mxu0
        %v3295 = vpop.f32.mrf.mxu0
        %v3296 = vadd.f32 %v2762, %v3295
        %v3297 = vpop.f32.mrf.mxu0
        %3298 = vmatprep.mubr.bf16.mxu0 0
        %3299 = vmatmul.mubr.bf16.gmra.mxu0 %v2898
        %v3300 = vpop.f32.mrf.mxu0
        %v3301 = vadd.f32 %v2762, %v3300
        %v3302 = vpop.f32.mrf.mxu0
        %v3303 = vpop.f32.mrf.mxu0
        %v3304 = vadd.f32 %v2762, %v3303
        %v3305 = vpop.f32.mrf.mxu0
        %3306 = vmatprep.mubr.bf16.mxu0 0
        %3307 = vmatmul.mubr.bf16.gmra.mxu0 %v2901
        %v3308 = vpop.f32.mrf.mxu0
        %v3309 = vadd.f32 %v2762, %v3308
        %v3310 = vpop.f32.mrf.mxu0
        %v3311 = vpop.f32.mrf.mxu0
        %v3312 = vadd.f32 %v2762, %v3311
        %v3313 = vpop.f32.mrf.mxu0
        %3314 = vmatprep.mubr.bf16.mxu0 0
        %3315 = vmatmul.mubr.bf16.gmra.mxu0 %v2904
        %v3316 = vpop.f32.mrf.mxu0
        %v3317 = vadd.f32 %v2762, %v3316
        %v3318 = vpop.f32.mrf.mxu0
        %v3319 = vpop.f32.mrf.mxu0
        %v3320 = vadd.f32 %v2762, %v3319
        %v3321 = vpop.f32.mrf.mxu0
        %3322 = vmatprep.mubr.bf16.mxu0 0
        %3323 = vmatmul.mubr.bf16.gmra.mxu0 %v2907
        %v3324 = vpop.f32.mrf.mxu0
        %v3325 = vadd.f32 %v2762, %v3324
        %v3326 = vpop.f32.mrf.mxu0
        %v3327 = vpop.f32.mrf.mxu0
        %v3328 = vadd.f32 %v2762, %v3327
        %v3329 = vpop.f32.mrf.mxu0
        %3330 = vmatprep.mubr.bf16.mxu0 0
        %3331 = vmatmul.mubr.bf16.gmra.mxu0 %v2910
        %v3332 = vpop.f32.mrf.mxu0
        %v3333 = vadd.f32 %v2762, %v3332
        %v3334 = vpop.f32.mrf.mxu0
        %v3335 = vpop.f32.mrf.mxu0
        %v3336 = vadd.f32 %v2762, %v3335
        %v3337 = vpop.f32.mrf.mxu0
        %3338 = vmatprep.mubr.bf16.mxu0 0
        %3339 = vmatmul.mubr.bf16.gmra.mxu0 %v2913
        %v3340 = vpop.f32.mrf.mxu0
        %v3341 = vadd.f32 %v2762, %v3340
        %v3342 = vpop.f32.mrf.mxu0
        %v3343 = vpop.f32.mrf.mxu0
        %v3344 = vadd.f32 %v2762, %v3343
        %v3345 = vpop.f32.mrf.mxu0
        %3346 = vmatprep.mubr.bf16.mxu0 0
        %3347 = vmatmul.mubr.bf16.gmra.mxu0 %v2916
        %v3348 = vpop.f32.mrf.mxu0
        %v3349 = vadd.f32 %v2762, %v3348
        %v3350 = vpop.f32.mrf.mxu0
        %v3351 = vpop.f32.mrf.mxu0
        %v3352 = vadd.f32 %v2762, %v3351
        %v3353 = vpop.f32.mrf.mxu0
        %3354 = vmatprep.mubr.bf16.mxu0 0
        %3355 = vmatmul.mubr.bf16.gmra.mxu0 %v2919
        %v3356 = vpop.f32.mrf.mxu0
        %v3357 = vadd.f32 %v2762, %v3356
        %v3358 = vpop.f32.mrf.mxu0
        %v3359 = vpop.f32.mrf.mxu0
        %v3360 = vadd.f32 %v2762, %v3359
        %v3361 = vpop.f32.mrf.mxu0
        %3362 = vmatprep.mubr.bf16.mxu0 0
        %3363 = vmatmul.mubr.bf16.gmra.mxu0 %v2922
        %v3364 = vpop.f32.mrf.mxu0
        %v3365 = vadd.f32 %v2762, %v3364
        %v3366 = vpop.f32.mrf.mxu0
        %v3367 = vpop.f32.mrf.mxu0
        %v3368 = vadd.f32 %v2762, %v3367
        %v3369 = vpop.f32.mrf.mxu0
        %3370 = vmatprep.mubr.bf16.mxu0 0
        %3371 = vmatmul.mubr.bf16.gmra.mxu0 %v2925
        %v3372 = vpop.f32.mrf.mxu0
        %v3373 = vadd.f32 %v2762, %v3372
        %v3374 = vpop.f32.mrf.mxu0
        %v3375 = vpop.f32.mrf.mxu0
        %v3376 = vadd.f32 %v2762, %v3375
        %v3377 = vpop.f32.mrf.mxu0
        %3378 = vmatprep.mubr.bf16.mxu0 0
        %3379 = vmatmul.mubr.bf16.gmra.mxu0 %v2928
        %v3380 = vpop.f32.mrf.mxu0
        %v3381 = vadd.f32 %v2762, %v3380
        %v3382 = vpop.f32.mrf.mxu0
        %v3383 = vpop.f32.mrf.mxu0
        %v3384 = vadd.f32 %v2762, %v3383
        %v3385 = vpop.f32.mrf.mxu0
        %3386 = vmatprep.mubr.bf16.mxu0 0
        %3387 = vmatmul.mubr.bf16.gmra.mxu0 %v2931
        %v3388 = vpop.f32.mrf.mxu0
        %v3389 = vadd.f32 %v2762, %v3388
        %v3390 = vpop.f32.mrf.mxu0
        %v3391 = vpop.f32.mrf.mxu0
        %v3392 = vadd.f32 %v2762, %v3391
        %v3393 = vpop.f32.mrf.mxu0
        %3394 = vmatprep.mubr.bf16.mxu0 0
        %3395 = vmatmul.mubr.bf16.gmra.mxu0 %v2934
        %v3396 = vpop.f32.mrf.mxu0
        %v3397 = vadd.f32 %v2762, %v3396
        %v3398 = vpop.f32.mrf.mxu0
        %v3399 = vpop.f32.mrf.mxu0
        %v3400 = vadd.f32 %v2762, %v3399
        %v3401 = vpop.f32.mrf.mxu0
        %3402 = vmatprep.mubr.bf16.mxu0 0
        %3403 = vmatmul.mubr.bf16.gmra.mxu0 %v2937
        %v3404 = vpop.f32.mrf.mxu0
        %v3405 = vadd.f32 %v2762, %v3404
        %v3406 = vpop.f32.mrf.mxu0
        %v3407 = vpop.f32.mrf.mxu0
        %v3408 = vadd.f32 %v2762, %v3407
        %v3409 = vpop.f32.mrf.mxu0
        %3410 = vmatprep.mubr.bf16.mxu0 0
        %3411 = vmatmul.mubr.bf16.gmra.mxu0 %v2940
        %v3412 = vpop.f32.mrf.mxu0
        %v3413 = vadd.f32 %v2762, %v3412
        %v3414 = vpop.f32.mrf.mxu0
        %v3415 = vpop.f32.mrf.mxu0
        %v3416 = vadd.f32 %v2762, %v3415
        %v3417 = vpop.f32.mrf.mxu0
        %3418 = vmatprep.mubr.bf16.mxu0 0
        %3419 = vmatmul.mubr.bf16.gmra.mxu0 %v2943
        %v3420 = vpop.f32.mrf.mxu0
        %v3421 = vadd.f32 %v2762, %v3420
        %v3422 = vpop.f32.mrf.mxu0
        %v3423 = vpop.f32.mrf.mxu0
        %v3424 = vadd.f32 %v2762, %v3423
        %v3425 = vpop.f32.mrf.mxu0
        %3426 = vmatprep.mubr.bf16.mxu0 0
        %3427 = vmatmul.mubr.bf16.gmra.mxu0 %v2946
        %v3428 = vpop.f32.mrf.mxu0
        %v3429 = vadd.f32 %v2762, %v3428
        %v3430 = vpop.f32.mrf.mxu0
        %v3431 = vpop.f32.mrf.mxu0
        %v3432 = vadd.f32 %v2762, %v3431
        %v3433 = vpop.f32.mrf.mxu0
        %3434 = vmatprep.mubr.bf16.mxu0 0
        %3435 = vmatmul.mubr.bf16.gmra.mxu0 %v2949
        %v3436 = vpop.f32.mrf.mxu0
        %v3437 = vadd.f32 %v2762, %v3436
        %v3438 = vpop.f32.mrf.mxu0
        %v3439 = vpop.f32.mrf.mxu0
        %v3440 = vadd.f32 %v2762, %v3439
        %v3441 = vpop.f32.mrf.mxu0
        %3442 = vmatprep.mubr.bf16.mxu0 0
        %3443 = vmatmul.mubr.bf16.gmra.mxu0 %v2952
        %v3444 = vpop.f32.mrf.mxu0
        %v3445 = vadd.f32 %v2762, %v3444
        %v3446 = vpop.f32.mrf.mxu0
        %v3447 = vpop.f32.mrf.mxu0
        %v3448 = vadd.f32 %v2762, %v3447
        %v3449 = vpop.f32.mrf.mxu0
        %3450 = vmatprep.mubr.bf16.mxu0 0
        %3451 = vmatmul.mubr.bf16.gmra.mxu0 %v2955
        %v3452 = vpop.f32.mrf.mxu0
        %v3453 = vadd.f32 %v2762, %v3452
        %v3454 = vpop.f32.mrf.mxu0
        %v3455 = vpop.f32.mrf.mxu0
        %v3456 = vadd.f32 %v2762, %v3455
        %v3457 = vpop.f32.mrf.mxu0
        %3458 = vmatprep.mubr.bf16.mxu0 0
        %3459 = vmatmul.mubr.bf16.gmra.mxu0 %v2958
        %v3460 = vpop.f32.mrf.mxu0
        %v3461 = vadd.f32 %v2762, %v3460
        %v3462 = vpop.f32.mrf.mxu0
        %v3463 = vpop.f32.mrf.mxu0
        %v3464 = vadd.f32 %v2762, %v3463
        %v3465 = vpop.f32.mrf.mxu0
        %3466 = vmatprep.mubr.bf16.mxu0 0
        %3467 = vmatmul.mubr.bf16.gmra.mxu0 %v2961
        %v3468 = vpop.f32.mrf.mxu0
        %v3469 = vadd.f32 %v2762, %v3468
        %v3470 = vpop.f32.mrf.mxu0
        %v3471 = vpop.f32.mrf.mxu0
        %v3472 = vadd.f32 %v2762, %v3471
        %v3473 = vpop.f32.mrf.mxu0
        %3474 = vmatprep.mubr.bf16.mxu0 0
        %3475 = vmatmul.mubr.bf16.gmra.mxu0 %v2964
        %v3476 = vpop.f32.mrf.mxu0
        %v3477 = vadd.f32 %v2762, %v3476
        %v3478 = vpop.f32.mrf.mxu0
        %v3479 = vpop.f32.mrf.mxu0
        %v3480 = vadd.f32 %v2762, %v3479
        %v3481 = vpop.f32.mrf.mxu0
        %3482 = vmatprep.mubr.bf16.mxu0 0
        %3483 = vmatmul.mubr.bf16.gmra.mxu0 %v2967
        %v3484 = vpop.f32.mrf.mxu0
        %v3485 = vadd.f32 %v2762, %v3484
        %v3486 = vpop.f32.mrf.mxu0
        %v3487 = vpop.f32.mrf.mxu0
        %v3488 = vadd.f32 %v2762, %v3487
        %v3489 = vpop.f32.mrf.mxu0
        %3490 = vmatprep.mubr.bf16.mxu0 0
        %3491 = vmatmul.mubr.bf16.gmra.mxu0 %v2970
        %v3492 = vpop.f32.mrf.mxu0
        %v3493 = vadd.f32 %v2762, %v3492
        %v3494 = vpop.f32.mrf.mxu0
        %v3495 = vpop.f32.mrf.mxu0
        %v3496 = vadd.f32 %v2762, %v3495
        %v3497 = vpop.f32.mrf.mxu0
        %3498 = vmatprep.mubr.bf16.mxu0 0
        %3499 = vmatmul.mubr.bf16.gmra.mxu0 %v2973
        %v3500 = vpop.f32.mrf.mxu0
        %v3501 = vadd.f32 %v2762, %v3500
        %v3502 = vpop.f32.mrf.mxu0
        %v3503 = vpop.f32.mrf.mxu0
        %v3504 = vadd.f32 %v2762, %v3503
        %v3505 = vpop.f32.mrf.mxu0
        %3506 = vmatprep.mubr.bf16.mxu0 0
        %3507 = vmatmul.mubr.bf16.gmra.mxu0 %v2976
        %v3508 = vpop.f32.mrf.mxu0
        %v3509 = vadd.f32 %v2762, %v3508
        %v3510 = vpop.f32.mrf.mxu0
        %v3511 = vpop.f32.mrf.mxu0
        %v3512 = vpop.f32.mrf.mxu0
        %3513 = vdwg.mxu0
        %v3514 = vmul.f32 %v3013, %v3013
        %v3515 = vmul.f32 %v3016, %v3016
        %v3516 = vmul.f32 %v3021, %v3021
        %v3517 = vmul.f32 %v3024, %v3024
        %v3518 = vmul.f32 %v3029, %v3029
        %v3519 = vmul.f32 %v3032, %v3032
        %v3520 = vmul.f32 %v3037, %v3037
        %v3521 = vmul.f32 %v3040, %v3040
        %v3522 = vmul.f32 %v3045, %v3045
        %v3523 = vmul.f32 %v3048, %v3048
        %v3524 = vmul.f32 %v3053, %v3053
        %v3525 = vmul.f32 %v3056, %v3056
        %v3526 = vmul.f32 %v3061, %v3061
        %v3527 = vmul.f32 %v3064, %v3064
        %v3528 = vmul.f32 %v3069, %v3069
        %v3529 = vmul.f32 %v3072, %v3072
        %v3530 = vmul.f32 %v3077, %v3077
        %v3531 = vmul.f32 %v3080, %v3080
        %v3532 = vmul.f32 %v3085, %v3085
        %v3533 = vmul.f32 %v3088, %v3088
        %v3534 = vmul.f32 %v3093, %v3093
        %v3535 = vmul.f32 %v3096, %v3096
        %v3536 = vmul.f32 %v3101, %v3101
        %v3537 = vmul.f32 %v3104, %v3104
        %v3538 = vmul.f32 %v3109, %v3109
        %v3539 = vmul.f32 %v3112, %v3112
        %v3540 = vmul.f32 %v3117, %v3117
        %v3541 = vmul.f32 %v3120, %v3120
        %v3542 = vmul.f32 %v3125, %v3125
        %v3543 = vmul.f32 %v3128, %v3128
        %v3544 = vmul.f32 %v3133, %v3133
        %v3545 = vmul.f32 %v3136, %v3136
        %v3546 = vmul.f32 %v3141, %v3141
        %v3547 = vmul.f32 %v3144, %v3144
        %v3548 = vmul.f32 %v3149, %v3149
        %v3549 = vmul.f32 %v3152, %v3152
        %v3550 = vmul.f32 %v3157, %v3157
        %v3551 = vmul.f32 %v3160, %v3160
        %v3552 = vmul.f32 %v3165, %v3165
        %v3553 = vmul.f32 %v3168, %v3168
        %v3554 = vmul.f32 %v3173, %v3173
        %v3555 = vmul.f32 %v3176, %v3176
        %v3556 = vmul.f32 %v3181, %v3181
        %v3557 = vmul.f32 %v3184, %v3184
        %v3558 = vmul.f32 %v3189, %v3189
        %v3559 = vmul.f32 %v3192, %v3192
        %v3560 = vmul.f32 %v3197, %v3197
        %v3561 = vmul.f32 %v3200, %v3200
        %v3562 = vmul.f32 %v3205, %v3205
        %v3563 = vmul.f32 %v3208, %v3208
        %v3564 = vmul.f32 %v3213, %v3213
        %v3565 = vmul.f32 %v3216, %v3216
        %v3566 = vmul.f32 %v3221, %v3221
        %v3567 = vmul.f32 %v3224, %v3224
        %v3568 = vmul.f32 %v3229, %v3229
        %v3569 = vmul.f32 %v3232, %v3232
        %v3570 = vmul.f32 %v3237, %v3237
        %v3571 = vmul.f32 %v3240, %v3240
        %v3572 = vmul.f32 %v3245, %v3245
        %v3573 = vmul.f32 %v3248, %v3248
        %v3574 = vmul.f32 %v3253, %v3253
        %v3575 = vmul.f32 %v3256, %v3256
        %v3576 = vmul.f32 %v3261, %v3261
        %v3577 = vmul.f32 %v3264, %v3264
        %v3578 = vmul.f32 %v3269, %v3269
        %v3579 = vmul.f32 %v3272, %v3272
        %v3580 = vmul.f32 %v3277, %v3277
        %v3581 = vmul.f32 %v3280, %v3280
        %v3582 = vmul.f32 %v3285, %v3285
        %v3583 = vmul.f32 %v3288, %v3288
        %v3584 = vmul.f32 %v3293, %v3293
        %v3585 = vmul.f32 %v3296, %v3296
        %v3586 = vmul.f32 %v3301, %v3301
        %v3587 = vmul.f32 %v3304, %v3304
        %v3588 = vmul.f32 %v3309, %v3309
        %v3589 = vmul.f32 %v3312, %v3312
        %v3590 = vmul.f32 %v3317, %v3317
        %v3591 = vmul.f32 %v3320, %v3320
        %v3592 = vmul.f32 %v3325, %v3325
        %v3593 = vmul.f32 %v3328, %v3328
        %v3594 = vmul.f32 %v3333, %v3333
        %v3595 = vmul.f32 %v3336, %v3336
        %v3596 = vmul.f32 %v3341, %v3341
        %v3597 = vmul.f32 %v3344, %v3344
        %v3598 = vmul.f32 %v3349, %v3349
        %v3599 = vmul.f32 %v3352, %v3352
        %v3600 = vmul.f32 %v3357, %v3357
        %v3601 = vmul.f32 %v3360, %v3360
        %v3602 = vmul.f32 %v3365, %v3365
        %v3603 = vmul.f32 %v3368, %v3368
        %v3604 = vmul.f32 %v3373, %v3373
        %v3605 = vmul.f32 %v3376, %v3376
        %v3606 = vmul.f32 %v3381, %v3381
        %v3607 = vmul.f32 %v3384, %v3384
        %v3608 = vmul.f32 %v3389, %v3389
        %v3609 = vmul.f32 %v3392, %v3392
        %v3610 = vmul.f32 %v3397, %v3397
        %v3611 = vmul.f32 %v3400, %v3400
        %v3612 = vmul.f32 %v3405, %v3405
        %v3613 = vmul.f32 %v3408, %v3408
        %v3614 = vmul.f32 %v3413, %v3413
        %v3615 = vmul.f32 %v3416, %v3416
        %v3616 = vmul.f32 %v3421, %v3421
        %v3617 = vmul.f32 %v3424, %v3424
        %v3618 = vmul.f32 %v3429, %v3429
        %v3619 = vmul.f32 %v3432, %v3432
        %v3620 = vmul.f32 %v3437, %v3437
        %v3621 = vmul.f32 %v3440, %v3440
        %v3622 = vmul.f32 %v3445, %v3445
        %v3623 = vmul.f32 %v3448, %v3448
        %v3624 = vmul.f32 %v3453, %v3453
        %v3625 = vmul.f32 %v3456, %v3456
        %v3626 = vmul.f32 %v3461, %v3461
        %v3627 = vmul.f32 %v3464, %v3464
        %v3628 = vmul.f32 %v3469, %v3469
        %v3629 = vmul.f32 %v3472, %v3472
        %v3630 = vmul.f32 %v3477, %v3477
        %v3631 = vmul.f32 %v3480, %v3480
        %v3632 = vmul.f32 %v3485, %v3485
        %v3633 = vmul.f32 %v3488, %v3488
        %v3634 = vmul.f32 %v3493, %v3493
        %v3635 = vmul.f32 %v3496, %v3496
        %v3636 = vmul.f32 %v3501, %v3501
        %v3637 = vmul.f32 %v3504, %v3504
        %v3638 = vmul.f32 %v3509, %v3509
        %v3639 = vmul.f32 %v3013, %v3514
        %v3640 = vmul.f32 %v3016, %v3515
        %v3641 = vmul.f32 %v3021, %v3516
        %v3642 = vmul.f32 %v3024, %v3517
        %v3643 = vmul.f32 %v3029, %v3518
        %v3644 = vmul.f32 %v3032, %v3519
        %v3645 = vmul.f32 %v3037, %v3520
        %v3646 = vmul.f32 %v3040, %v3521
        %v3647 = vmul.f32 %v3045, %v3522
        %v3648 = vmul.f32 %v3048, %v3523
        %v3649 = vmul.f32 %v3053, %v3524
        %v3650 = vmul.f32 %v3056, %v3525
        %v3651 = vmul.f32 %v3061, %v3526
        %v3652 = vmul.f32 %v3064, %v3527
        %v3653 = vmul.f32 %v3069, %v3528
        %v3654 = vmul.f32 %v3072, %v3529
        %v3655 = vmul.f32 %v3077, %v3530
        %v3656 = vmul.f32 %v3080, %v3531
        %v3657 = vmul.f32 %v3085, %v3532
        %v3658 = vmul.f32 %v3088, %v3533
        %v3659 = vmul.f32 %v3093, %v3534
        %v3660 = vmul.f32 %v3096, %v3535
        %v3661 = vmul.f32 %v3101, %v3536
        %v3662 = vmul.f32 %v3104, %v3537
        %v3663 = vmul.f32 %v3109, %v3538
        %v3664 = vmul.f32 %v3112, %v3539
        %v3665 = vmul.f32 %v3117, %v3540
        %v3666 = vmul.f32 %v3120, %v3541
        %v3667 = vmul.f32 %v3125, %v3542
        %v3668 = vmul.f32 %v3128, %v3543
        %v3669 = vmul.f32 %v3133, %v3544
        %v3670 = vmul.f32 %v3136, %v3545
        %v3671 = vmul.f32 %v3141, %v3546
        %v3672 = vmul.f32 %v3144, %v3547
        %v3673 = vmul.f32 %v3149, %v3548
        %v3674 = vmul.f32 %v3152, %v3549
        %v3675 = vmul.f32 %v3157, %v3550
        %v3676 = vmul.f32 %v3160, %v3551
        %v3677 = vmul.f32 %v3165, %v3552
        %v3678 = vmul.f32 %v3168, %v3553
        %v3679 = vmul.f32 %v3173, %v3554
        %v3680 = vmul.f32 %v3176, %v3555
        %v3681 = vmul.f32 %v3181, %v3556
        %v3682 = vmul.f32 %v3184, %v3557
        %v3683 = vmul.f32 %v3189, %v3558
        %v3684 = vmul.f32 %v3192, %v3559
        %v3685 = vmul.f32 %v3197, %v3560
        %v3686 = vmul.f32 %v3200, %v3561
        %v3687 = vmul.f32 %v3205, %v3562
        %v3688 = vmul.f32 %v3208, %v3563
        %v3689 = vmul.f32 %v3213, %v3564
        %v3690 = vmul.f32 %v3216, %v3565
        %v3691 = vmul.f32 %v3221, %v3566
        %v3692 = vmul.f32 %v3224, %v3567
        %v3693 = vmul.f32 %v3229, %v3568
        %v3694 = vmul.f32 %v3232, %v3569
        %v3695 = vmul.f32 %v3237, %v3570
        %v3696 = vmul.f32 %v3240, %v3571
        %v3697 = vmul.f32 %v3245, %v3572
        %v3698 = vmul.f32 %v3248, %v3573
        %v3699 = vmul.f32 %v3253, %v3574
        %v3700 = vmul.f32 %v3256, %v3575
        %v3701 = vmul.f32 %v3261, %v3576
        %v3702 = vmul.f32 %v3264, %v3577
        %v3703 = vmul.f32 %v3269, %v3578
        %v3704 = vmul.f32 %v3272, %v3579
        %v3705 = vmul.f32 %v3277, %v3580
        %v3706 = vmul.f32 %v3280, %v3581
        %v3707 = vmul.f32 %v3285, %v3582
        %v3708 = vmul.f32 %v3288, %v3583
        %v3709 = vmul.f32 %v3293, %v3584
        %v3710 = vmul.f32 %v3296, %v3585
        %v3711 = vmul.f32 %v3301, %v3586
        %v3712 = vmul.f32 %v3304, %v3587
        %v3713 = vmul.f32 %v3309, %v3588
        %v3714 = vmul.f32 %v3312, %v3589
        %v3715 = vmul.f32 %v3317, %v3590
        %v3716 = vmul.f32 %v3320, %v3591
        %v3717 = vmul.f32 %v3325, %v3592
        %v3718 = vmul.f32 %v3328, %v3593
        %v3719 = vmul.f32 %v3333, %v3594
        %v3720 = vmul.f32 %v3336, %v3595
        %v3721 = vmul.f32 %v3341, %v3596
        %v3722 = vmul.f32 %v3344, %v3597
        %v3723 = vmul.f32 %v3349, %v3598
        %v3724 = vmul.f32 %v3352, %v3599
        %v3725 = vmul.f32 %v3357, %v3600
        %v3726 = vmul.f32 %v3360, %v3601
        %v3727 = vmul.f32 %v3365, %v3602
        %v3728 = vmul.f32 %v3368, %v3603
        %v3729 = vmul.f32 %v3373, %v3604
        %v3730 = vmul.f32 %v3376, %v3605
        %v3731 = vmul.f32 %v3381, %v3606
        %v3732 = vmul.f32 %v3384, %v3607
        %v3733 = vmul.f32 %v3389, %v3608
        %v3734 = vmul.f32 %v3392, %v3609
        %v3735 = vmul.f32 %v3397, %v3610
        %v3736 = vmul.f32 %v3400, %v3611
        %v3737 = vmul.f32 %v3405, %v3612
        %v3738 = vmul.f32 %v3408, %v3613
        %v3739 = vmul.f32 %v3413, %v3614
        %v3740 = vmul.f32 %v3416, %v3615
        %v3741 = vmul.f32 %v3421, %v3616
        %v3742 = vmul.f32 %v3424, %v3617
        %v3743 = vmul.f32 %v3429, %v3618
        %v3744 = vmul.f32 %v3432, %v3619
        %v3745 = vmul.f32 %v3437, %v3620
        %v3746 = vmul.f32 %v3440, %v3621
        %v3747 = vmul.f32 %v3445, %v3622
        %v3748 = vmul.f32 %v3448, %v3623
        %v3749 = vmul.f32 %v3453, %v3624
        %v3750 = vmul.f32 %v3456, %v3625
        %v3751 = vmul.f32 %v3461, %v3626
        %v3752 = vmul.f32 %v3464, %v3627
        %v3753 = vmul.f32 %v3469, %v3628
        %v3754 = vmul.f32 %v3472, %v3629
        %v3755 = vmul.f32 %v3477, %v3630
        %v3756 = vmul.f32 %v3480, %v3631
        %v3757 = vmul.f32 %v3485, %v3632
        %v3758 = vmul.f32 %v3488, %v3633
        %v3759 = vmul.f32 %v3493, %v3634
        %v3760 = vmul.f32 %v3496, %v3635
        %v3761 = vmul.f32 %v3501, %v3636
        %v3762 = vmul.f32 %v3504, %v3637
        %v3763 = vmul.f32 %v3509, %v3638
        %v3764 = vmul.f32 %v3639, 0.044715
        %v3765 = vmul.f32 %v3640, 0.044715
        %v3766 = vmul.f32 %v3641, 0.044715
        %v3767 = vmul.f32 %v3642, 0.044715
        %v3768 = vmul.f32 %v3643, 0.044715
        %v3769 = vmul.f32 %v3644, 0.044715
        %v3770 = vmul.f32 %v3645, 0.044715
        %v3771 = vmul.f32 %v3646, 0.044715
        %v3772 = vmul.f32 %v3647, 0.044715
        %v3773 = vmul.f32 %v3648, 0.044715
        %v3774 = vmul.f32 %v3649, 0.044715
        %v3775 = vmul.f32 %v3650, 0.044715
        %v3776 = vmul.f32 %v3651, 0.044715
        %v3777 = vmul.f32 %v3652, 0.044715
        %v3778 = vmul.f32 %v3653, 0.044715
        %v3779 = vmul.f32 %v3654, 0.044715
        %v3780 = vmul.f32 %v3655, 0.044715
        %v3781 = vmul.f32 %v3656, 0.044715
        %v3782 = vmul.f32 %v3657, 0.044715
        %v3783 = vmul.f32 %v3658, 0.044715
        %v3784 = vmul.f32 %v3659, 0.044715
        %v3785 = vmul.f32 %v3660, 0.044715
        %v3786 = vmul.f32 %v3661, 0.044715
        %v3787 = vmul.f32 %v3662, 0.044715
        %v3788 = vmul.f32 %v3663, 0.044715
        %v3789 = vmul.f32 %v3664, 0.044715
        %v3790 = vmul.f32 %v3665, 0.044715
        %v3791 = vmul.f32 %v3666, 0.044715
        %v3792 = vmul.f32 %v3667, 0.044715
        %v3793 = vmul.f32 %v3668, 0.044715
        %v3794 = vmul.f32 %v3669, 0.044715
        %v3795 = vmul.f32 %v3670, 0.044715
        %v3796 = vmul.f32 %v3671, 0.044715
        %v3797 = vmul.f32 %v3672, 0.044715
        %v3798 = vmul.f32 %v3673, 0.044715
        %v3799 = vmul.f32 %v3674, 0.044715
        %v3800 = vmul.f32 %v3675, 0.044715
        %v3801 = vmul.f32 %v3676, 0.044715
        %v3802 = vmul.f32 %v3677, 0.044715
        %v3803 = vmul.f32 %v3678, 0.044715
        %v3804 = vmul.f32 %v3679, 0.044715
        %v3805 = vmul.f32 %v3680, 0.044715
        %v3806 = vmul.f32 %v3681, 0.044715
        %v3807 = vmul.f32 %v3682, 0.044715
        %v3808 = vmul.f32 %v3683, 0.044715
        %v3809 = vmul.f32 %v3684, 0.044715
        %v3810 = vmul.f32 %v3685, 0.044715
        %v3811 = vmul.f32 %v3686, 0.044715
        %v3812 = vmul.f32 %v3687, 0.044715
        %v3813 = vmul.f32 %v3688, 0.044715
        %v3814 = vmul.f32 %v3689, 0.044715
        %v3815 = vmul.f32 %v3690, 0.044715
        %v3816 = vmul.f32 %v3691, 0.044715
        %v3817 = vmul.f32 %v3692, 0.044715
        %v3818 = vmul.f32 %v3693, 0.044715
        %v3819 = vmul.f32 %v3694, 0.044715
        %v3820 = vmul.f32 %v3695, 0.044715
        %v3821 = vmul.f32 %v3696, 0.044715
        %v3822 = vmul.f32 %v3697, 0.044715
        %v3823 = vmul.f32 %v3698, 0.044715
        %v3824 = vmul.f32 %v3699, 0.044715
        %v3825 = vmul.f32 %v3700, 0.044715
        %v3826 = vmul.f32 %v3701, 0.044715
        %v3827 = vmul.f32 %v3702, 0.044715
        %v3828 = vmul.f32 %v3703, 0.044715
        %v3829 = vmul.f32 %v3704, 0.044715
        %v3830 = vmul.f32 %v3705, 0.044715
        %v3831 = vmul.f32 %v3706, 0.044715
        %v3832 = vmul.f32 %v3707, 0.044715
        %v3833 = vmul.f32 %v3708, 0.044715
        %v3834 = vmul.f32 %v3709, 0.044715
        %v3835 = vmul.f32 %v3710, 0.044715
        %v3836 = vmul.f32 %v3711, 0.044715
        %v3837 = vmul.f32 %v3712, 0.044715
        %v3838 = vmul.f32 %v3713, 0.044715
        %v3839 = vmul.f32 %v3714, 0.044715
        %v3840 = vmul.f32 %v3715, 0.044715
        %v3841 = vmul.f32 %v3716, 0.044715
        %v3842 = vmul.f32 %v3717, 0.044715
        %v3843 = vmul.f32 %v3718, 0.044715
        %v3844 = vmul.f32 %v3719, 0.044715
        %v3845 = vmul.f32 %v3720, 0.044715
        %v3846 = vmul.f32 %v3721, 0.044715
        %v3847 = vmul.f32 %v3722, 0.044715
        %v3848 = vmul.f32 %v3723, 0.044715
        %v3849 = vmul.f32 %v3724, 0.044715
        %v3850 = vmul.f32 %v3725, 0.044715
        %v3851 = vmul.f32 %v3726, 0.044715
        %v3852 = vmul.f32 %v3727, 0.044715
        %v3853 = vmul.f32 %v3728, 0.044715
        %v3854 = vmul.f32 %v3729, 0.044715
        %v3855 = vmul.f32 %v3730, 0.044715
        %v3856 = vmul.f32 %v3731, 0.044715
        %v3857 = vmul.f32 %v3732, 0.044715
        %v3858 = vmul.f32 %v3733, 0.044715
        %v3859 = vmul.f32 %v3734, 0.044715
        %v3860 = vmul.f32 %v3735, 0.044715
        %v3861 = vmul.f32 %v3736, 0.044715
        %v3862 = vmul.f32 %v3737, 0.044715
        %v3863 = vmul.f32 %v3738, 0.044715
        %v3864 = vmul.f32 %v3739, 0.044715
        %v3865 = vmul.f32 %v3740, 0.044715
        %v3866 = vmul.f32 %v3741, 0.044715
        %v3867 = vmul.f32 %v3742, 0.044715
        %v3868 = vmul.f32 %v3743, 0.044715
        %v3869 = vmul.f32 %v3744, 0.044715
        %v3870 = vmul.f32 %v3745, 0.044715
        %v3871 = vmul.f32 %v3746, 0.044715
        %v3872 = vmul.f32 %v3747, 0.044715
        %v3873 = vmul.f32 %v3748, 0.044715
        %v3874 = vmul.f32 %v3749, 0.044715
        %v3875 = vmul.f32 %v3750, 0.044715
        %v3876 = vmul.f32 %v3751, 0.044715
        %v3877 = vmul.f32 %v3752, 0.044715
        %v3878 = vmul.f32 %v3753, 0.044715
        %v3879 = vmul.f32 %v3754, 0.044715
        %v3880 = vmul.f32 %v3755, 0.044715
        %v3881 = vmul.f32 %v3756, 0.044715
        %v3882 = vmul.f32 %v3757, 0.044715
        %v3883 = vmul.f32 %v3758, 0.044715
        %v3884 = vmul.f32 %v3759, 0.044715
        %v3885 = vmul.f32 %v3760, 0.044715
        %v3886 = vmul.f32 %v3761, 0.044715
        %v3887 = vmul.f32 %v3762, 0.044715
        %v3888 = vmul.f32 %v3763, 0.044715
        %v3889 = vadd.f32 %v3013, %v3764
        %v3890 = vadd.f32 %v3016, %v3765
        %v3891 = vadd.f32 %v3021, %v3766
        %v3892 = vadd.f32 %v3024, %v3767
        %v3893 = vadd.f32 %v3029, %v3768
        %v3894 = vadd.f32 %v3032, %v3769
        %v3895 = vadd.f32 %v3037, %v3770
        %v3896 = vadd.f32 %v3040, %v3771
        %v3897 = vadd.f32 %v3045, %v3772
        %v3898 = vadd.f32 %v3048, %v3773
        %v3899 = vadd.f32 %v3053, %v3774
        %v3900 = vadd.f32 %v3056, %v3775
        %v3901 = vadd.f32 %v3061, %v3776
        %v3902 = vadd.f32 %v3064, %v3777
        %v3903 = vadd.f32 %v3069, %v3778
        %v3904 = vadd.f32 %v3072, %v3779
        %v3905 = vadd.f32 %v3077, %v3780
        %v3906 = vadd.f32 %v3080, %v3781
        %v3907 = vadd.f32 %v3085, %v3782
        %v3908 = vadd.f32 %v3088, %v3783
        %v3909 = vadd.f32 %v3093, %v3784
        %v3910 = vadd.f32 %v3096, %v3785
        %v3911 = vadd.f32 %v3101, %v3786
        %v3912 = vadd.f32 %v3104, %v3787
        %v3913 = vadd.f32 %v3109, %v3788
        %v3914 = vadd.f32 %v3112, %v3789
        %v3915 = vadd.f32 %v3117, %v3790
        %v3916 = vadd.f32 %v3120, %v3791
        %v3917 = vadd.f32 %v3125, %v3792
        %v3918 = vadd.f32 %v3128, %v3793
        %v3919 = vadd.f32 %v3133, %v3794
        %v3920 = vadd.f32 %v3136, %v3795
        %v3921 = vadd.f32 %v3141, %v3796
        %v3922 = vadd.f32 %v3144, %v3797
        %v3923 = vadd.f32 %v3149, %v3798
        %v3924 = vadd.f32 %v3152, %v3799
        %v3925 = vadd.f32 %v3157, %v3800
        %v3926 = vadd.f32 %v3160, %v3801
        %v3927 = vadd.f32 %v3165, %v3802
        %v3928 = vadd.f32 %v3168, %v3803
        %v3929 = vadd.f32 %v3173, %v3804
        %v3930 = vadd.f32 %v3176, %v3805
        %v3931 = vadd.f32 %v3181, %v3806
        %v3932 = vadd.f32 %v3184, %v3807
        %v3933 = vadd.f32 %v3189, %v3808
        %v3934 = vadd.f32 %v3192, %v3809
        %v3935 = vadd.f32 %v3197, %v3810
        %v3936 = vadd.f32 %v3200, %v3811
        %v3937 = vadd.f32 %v3205, %v3812
        %v3938 = vadd.f32 %v3208, %v3813
        %v3939 = vadd.f32 %v3213, %v3814
        %v3940 = vadd.f32 %v3216, %v3815
        %v3941 = vadd.f32 %v3221, %v3816
        %v3942 = vadd.f32 %v3224, %v3817
        %v3943 = vadd.f32 %v3229, %v3818
        %v3944 = vadd.f32 %v3232, %v3819
        %v3945 = vadd.f32 %v3237, %v3820
        %v3946 = vadd.f32 %v3240, %v3821
        %v3947 = vadd.f32 %v3245, %v3822
        %v3948 = vadd.f32 %v3248, %v3823
        %v3949 = vadd.f32 %v3253, %v3824
        %v3950 = vadd.f32 %v3256, %v3825
        %v3951 = vadd.f32 %v3261, %v3826
        %v3952 = vadd.f32 %v3264, %v3827
        %v3953 = vadd.f32 %v3269, %v3828
        %v3954 = vadd.f32 %v3272, %v3829
        %v3955 = vadd.f32 %v3277, %v3830
        %v3956 = vadd.f32 %v3280, %v3831
        %v3957 = vadd.f32 %v3285, %v3832
        %v3958 = vadd.f32 %v3288, %v3833
        %v3959 = vadd.f32 %v3293, %v3834
        %v3960 = vadd.f32 %v3296, %v3835
        %v3961 = vadd.f32 %v3301, %v3836
        %v3962 = vadd.f32 %v3304, %v3837
        %v3963 = vadd.f32 %v3309, %v3838
        %v3964 = vadd.f32 %v3312, %v3839
        %v3965 = vadd.f32 %v3317, %v3840
        %v3966 = vadd.f32 %v3320, %v3841
        %v3967 = vadd.f32 %v3325, %v3842
        %v3968 = vadd.f32 %v3328, %v3843
        %v3969 = vadd.f32 %v3333, %v3844
        %v3970 = vadd.f32 %v3336, %v3845
        %v3971 = vadd.f32 %v3341, %v3846
        %v3972 = vadd.f32 %v3344, %v3847
        %v3973 = vadd.f32 %v3349, %v3848
        %v3974 = vadd.f32 %v3352, %v3849
        %v3975 = vadd.f32 %v3357, %v3850
        %v3976 = vadd.f32 %v3360, %v3851
        %v3977 = vadd.f32 %v3365, %v3852
        %v3978 = vadd.f32 %v3368, %v3853
        %v3979 = vadd.f32 %v3373, %v3854
        %v3980 = vadd.f32 %v3376, %v3855
        %v3981 = vadd.f32 %v3381, %v3856
        %v3982 = vadd.f32 %v3384, %v3857
        %v3983 = vadd.f32 %v3389, %v3858
        %v3984 = vadd.f32 %v3392, %v3859
        %v3985 = vadd.f32 %v3397, %v3860
        %v3986 = vadd.f32 %v3400, %v3861
        %v3987 = vadd.f32 %v3405, %v3862
        %v3988 = vadd.f32 %v3408, %v3863
        %v3989 = vadd.f32 %v3413, %v3864
        %v3990 = vadd.f32 %v3416, %v3865
        %v3991 = vadd.f32 %v3421, %v3866
        %v3992 = vadd.f32 %v3424, %v3867
        %v3993 = vadd.f32 %v3429, %v3868
        %v3994 = vadd.f32 %v3432, %v3869
        %v3995 = vadd.f32 %v3437, %v3870
        %v3996 = vadd.f32 %v3440, %v3871
        %v3997 = vadd.f32 %v3445, %v3872
        %v3998 = vadd.f32 %v3448, %v3873
        %v3999 = vadd.f32 %v3453, %v3874
        %v4000 = vadd.f32 %v3456, %v3875
        %v4001 = vadd.f32 %v3461, %v3876
        %v4002 = vadd.f32 %v3464, %v3877
        %v4003 = vadd.f32 %v3469, %v3878
        %v4004 = vadd.f32 %v3472, %v3879
        %v4005 = vadd.f32 %v3477, %v3880
        %v4006 = vadd.f32 %v3480, %v3881
        %v4007 = vadd.f32 %v3485, %v3882
        %v4008 = vadd.f32 %v3488, %v3883
        %v4009 = vadd.f32 %v3493, %v3884
        %v4010 = vadd.f32 %v3496, %v3885
        %v4011 = vadd.f32 %v3501, %v3886
        %v4012 = vadd.f32 %v3504, %v3887
        %v4013 = vadd.f32 %v3509, %v3888
        %v4014 = vmul.f32 %v3889, 0.7978846
        %v4015 = vmul.f32 %v3890, 0.7978846
        %v4016 = vmul.f32 %v3891, 0.7978846
        %v4017 = vmul.f32 %v3892, 0.7978846
        %v4018 = vmul.f32 %v3893, 0.7978846
        %v4019 = vmul.f32 %v3894, 0.7978846
        %v4020 = vmul.f32 %v3895, 0.7978846
        %v4021 = vmul.f32 %v3896, 0.7978846
        %v4022 = vmul.f32 %v3897, 0.7978846
        %v4023 = vmul.f32 %v3898, 0.7978846
        %v4024 = vmul.f32 %v3899, 0.7978846
        %v4025 = vmul.f32 %v3900, 0.7978846
        %v4026 = vmul.f32 %v3901, 0.7978846
        %v4027 = vmul.f32 %v3902, 0.7978846
        %v4028 = vmul.f32 %v3903, 0.7978846
        %v4029 = vmul.f32 %v3904, 0.7978846
        %v4030 = vmul.f32 %v3905, 0.7978846
        %v4031 = vmul.f32 %v3906, 0.7978846
        %v4032 = vmul.f32 %v3907, 0.7978846
        %v4033 = vmul.f32 %v3908, 0.7978846
        %v4034 = vmul.f32 %v3909, 0.7978846
        %v4035 = vmul.f32 %v3910, 0.7978846
        %v4036 = vmul.f32 %v3911, 0.7978846
        %v4037 = vmul.f32 %v3912, 0.7978846
        %v4038 = vmul.f32 %v3913, 0.7978846
        %v4039 = vmul.f32 %v3914, 0.7978846
        %v4040 = vmul.f32 %v3915, 0.7978846
        %v4041 = vmul.f32 %v3916, 0.7978846
        %v4042 = vmul.f32 %v3917, 0.7978846
        %v4043 = vmul.f32 %v3918, 0.7978846
        %v4044 = vmul.f32 %v3919, 0.7978846
        %v4045 = vmul.f32 %v3920, 0.7978846
        %v4046 = vmul.f32 %v3921, 0.7978846
        %v4047 = vmul.f32 %v3922, 0.7978846
        %v4048 = vmul.f32 %v3923, 0.7978846
        %v4049 = vmul.f32 %v3924, 0.7978846
        %v4050 = vmul.f32 %v3925, 0.7978846
        %v4051 = vmul.f32 %v3926, 0.7978846
        %v4052 = vmul.f32 %v3927, 0.7978846
        %v4053 = vmul.f32 %v3928, 0.7978846
        %v4054 = vmul.f32 %v3929, 0.7978846
        %v4055 = vmul.f32 %v3930, 0.7978846
        %v4056 = vmul.f32 %v3931, 0.7978846
        %v4057 = vmul.f32 %v3932, 0.7978846
        %v4058 = vmul.f32 %v3933, 0.7978846
        %v4059 = vmul.f32 %v3934, 0.7978846
        %v4060 = vmul.f32 %v3935, 0.7978846
        %v4061 = vmul.f32 %v3936, 0.7978846
        %v4062 = vmul.f32 %v3937, 0.7978846
        %v4063 = vmul.f32 %v3938, 0.7978846
        %v4064 = vmul.f32 %v3939, 0.7978846
        %v4065 = vmul.f32 %v3940, 0.7978846
        %v4066 = vmul.f32 %v3941, 0.7978846
        %v4067 = vmul.f32 %v3942, 0.7978846
        %v4068 = vmul.f32 %v3943, 0.7978846
        %v4069 = vmul.f32 %v3944, 0.7978846
        %v4070 = vmul.f32 %v3945, 0.7978846
        %v4071 = vmul.f32 %v3946, 0.7978846
        %v4072 = vmul.f32 %v3947, 0.7978846
        %v4073 = vmul.f32 %v3948, 0.7978846
        %v4074 = vmul.f32 %v3949, 0.7978846
        %v4075 = vmul.f32 %v3950, 0.7978846
        %v4076 = vmul.f32 %v3951, 0.7978846
        %v4077 = vmul.f32 %v3952, 0.7978846
        %v4078 = vmul.f32 %v3953, 0.7978846
        %v4079 = vmul.f32 %v3954, 0.7978846
        %v4080 = vmul.f32 %v3955, 0.7978846
        %v4081 = vmul.f32 %v3956, 0.7978846
        %v4082 = vmul.f32 %v3957, 0.7978846
        %v4083 = vmul.f32 %v3958, 0.7978846
        %v4084 = vmul.f32 %v3959, 0.7978846
        %v4085 = vmul.f32 %v3960, 0.7978846
        %v4086 = vmul.f32 %v3961, 0.7978846
        %v4087 = vmul.f32 %v3962, 0.7978846
        %v4088 = vmul.f32 %v3963, 0.7978846
        %v4089 = vmul.f32 %v3964, 0.7978846
        %v4090 = vmul.f32 %v3965, 0.7978846
        %v4091 = vmul.f32 %v3966, 0.7978846
        %v4092 = vmul.f32 %v3967, 0.7978846
        %v4093 = vmul.f32 %v3968, 0.7978846
        %v4094 = vmul.f32 %v3969, 0.7978846
        %v4095 = vmul.f32 %v3970, 0.7978846
        %v4096 = vmul.f32 %v3971, 0.7978846
        %v4097 = vmul.f32 %v3972, 0.7978846
        %v4098 = vmul.f32 %v3973, 0.7978846
        %v4099 = vmul.f32 %v3974, 0.7978846
        %v4100 = vmul.f32 %v3975, 0.7978846
        %v4101 = vmul.f32 %v3976, 0.7978846
        %v4102 = vmul.f32 %v3977, 0.7978846
        %v4103 = vmul.f32 %v3978, 0.7978846
        %v4104 = vmul.f32 %v3979, 0.7978846
        %v4105 = vmul.f32 %v3980, 0.7978846
        %v4106 = vmul.f32 %v3981, 0.7978846
        %v4107 = vmul.f32 %v3982, 0.7978846
        %v4108 = vmul.f32 %v3983, 0.7978846
        %v4109 = vmul.f32 %v3984, 0.7978846
        %v4110 = vmul.f32 %v3985, 0.7978846
        %v4111 = vmul.f32 %v3986, 0.7978846
        %v4112 = vmul.f32 %v3987, 0.7978846
        %v4113 = vmul.f32 %v3988, 0.7978846
        %v4114 = vmul.f32 %v3989, 0.7978846
        %v4115 = vmul.f32 %v3990, 0.7978846
        %v4116 = vmul.f32 %v3991, 0.7978846
        %v4117 = vmul.f32 %v3992, 0.7978846
        %v4118 = vmul.f32 %v3993, 0.7978846
        %v4119 = vmul.f32 %v3994, 0.7978846
        %v4120 = vmul.f32 %v3995, 0.7978846
        %v4121 = vmul.f32 %v3996, 0.7978846
        %v4122 = vmul.f32 %v3997, 0.7978846
        %v4123 = vmul.f32 %v3998, 0.7978846
        %v4124 = vmul.f32 %v3999, 0.7978846
        %v4125 = vmul.f32 %v4000, 0.7978846
        %v4126 = vmul.f32 %v4001, 0.7978846
        %v4127 = vmul.f32 %v4002, 0.7978846
        %v4128 = vmul.f32 %v4003, 0.7978846
        %v4129 = vmul.f32 %v4004, 0.7978846
        %v4130 = vmul.f32 %v4005, 0.7978846
        %v4131 = vmul.f32 %v4006, 0.7978846
        %v4132 = vmul.f32 %v4007, 0.7978846
        %v4133 = vmul.f32 %v4008, 0.7978846
        %v4134 = vmul.f32 %v4009, 0.7978846
        %v4135 = vmul.f32 %v4010, 0.7978846
        %v4136 = vmul.f32 %v4011, 0.7978846
        %v4137 = vmul.f32 %v4012, 0.7978846
        %v4138 = vmul.f32 %v4013, 0.7978846
        %v4139 = vtanh.pop %v4014
        %v4140 = vtanh.pop %v4015
        %v4141 = vtanh.pop %v4016
        %v4142 = vtanh.pop %v4017
        %v4143 = vtanh.pop %v4018
        %v4144 = vtanh.pop %v4019
        %v4145 = vtanh.pop %v4020
        %v4146 = vtanh.pop %v4021
        %v4147 = vtanh.pop %v4022
        %v4148 = vtanh.pop %v4023
        %v4149 = vtanh.pop %v4024
        %v4150 = vtanh.pop %v4025
        %v4151 = vtanh.pop %v4026
        %v4152 = vtanh.pop %v4027
        %v4153 = vtanh.pop %v4028
        %v4154 = vtanh.pop %v4029
        %v4155 = vtanh.pop %v4030
        %v4156 = vtanh.pop %v4031
        %v4157 = vtanh.pop %v4032
        %v4158 = vtanh.pop %v4033
        %v4159 = vtanh.pop %v4034
        %v4160 = vtanh.pop %v4035
        %v4161 = vtanh.pop %v4036
        %v4162 = vtanh.pop %v4037
        %v4163 = vtanh.pop %v4038
        %v4164 = vtanh.pop %v4039
        %v4165 = vtanh.pop %v4040
        %v4166 = vtanh.pop %v4041
        %v4167 = vtanh.pop %v4042
        %v4168 = vtanh.pop %v4043
        %v4169 = vtanh.pop %v4044
        %v4170 = vtanh.pop %v4045
        %v4171 = vtanh.pop %v4046
        %v4172 = vtanh.pop %v4047
        %v4173 = vtanh.pop %v4048
        %v4174 = vtanh.pop %v4049
        %v4175 = vtanh.pop %v4050
        %v4176 = vtanh.pop %v4051
        %v4177 = vtanh.pop %v4052
        %v4178 = vtanh.pop %v4053
        %v4179 = vtanh.pop %v4054
        %v4180 = vtanh.pop %v4055
        %v4181 = vtanh.pop %v4056
        %v4182 = vtanh.pop %v4057
        %v4183 = vtanh.pop %v4058
        %v4184 = vtanh.pop %v4059
        %v4185 = vtanh.pop %v4060
        %v4186 = vtanh.pop %v4061
        %v4187 = vtanh.pop %v4062
        %v4188 = vtanh.pop %v4063
        %v4189 = vtanh.pop %v4064
        %v4190 = vtanh.pop %v4065
        %v4191 = vtanh.pop %v4066
        %v4192 = vtanh.pop %v4067
        %v4193 = vtanh.pop %v4068
        %v4194 = vtanh.pop %v4069
        %v4195 = vtanh.pop %v4070
        %v4196 = vtanh.pop %v4071
        %v4197 = vtanh.pop %v4072
        %v4198 = vtanh.pop %v4073
        %v4199 = vtanh.pop %v4074
        %v4200 = vtanh.pop %v4075
        %v4201 = vtanh.pop %v4076
        %v4202 = vtanh.pop %v4077
        %v4203 = vtanh.pop %v4078
        %v4204 = vtanh.pop %v4079
        %v4205 = vtanh.pop %v4080
        %v4206 = vtanh.pop %v4081
        %v4207 = vtanh.pop %v4082
        %v4208 = vtanh.pop %v4083
        %v4209 = vtanh.pop %v4084
        %v4210 = vtanh.pop %v4085
        %v4211 = vtanh.pop %v4086
        %v4212 = vtanh.pop %v4087
        %v4213 = vtanh.pop %v4088
        %v4214 = vtanh.pop %v4089
        %v4215 = vtanh.pop %v4090
        %v4216 = vtanh.pop %v4091
        %v4217 = vtanh.pop %v4092
        %v4218 = vtanh.pop %v4093
        %v4219 = vtanh.pop %v4094
        %v4220 = vtanh.pop %v4095
        %v4221 = vtanh.pop %v4096
        %v4222 = vtanh.pop %v4097
        %v4223 = vtanh.pop %v4098
        %v4224 = vtanh.pop %v4099
        %v4225 = vtanh.pop %v4100
        %v4226 = vtanh.pop %v4101
        %v4227 = vtanh.pop %v4102
        %v4228 = vtanh.pop %v4103
        %v4229 = vtanh.pop %v4104
        %v4230 = vtanh.pop %v4105
        %v4231 = vtanh.pop %v4106
        %v4232 = vtanh.pop %v4107
        %v4233 = vtanh.pop %v4108
        %v4234 = vtanh.pop %v4109
        %v4235 = vtanh.pop %v4110
        %v4236 = vtanh.pop %v4111
        %v4237 = vtanh.pop %v4112
        %v4238 = vtanh.pop %v4113
        %v4239 = vtanh.pop %v4114
        %v4240 = vtanh.pop %v4115
        %v4241 = vtanh.pop %v4116
        %v4242 = vtanh.pop %v4117
        %v4243 = vtanh.pop %v4118
        %v4244 = vtanh.pop %v4119
        %v4245 = vtanh.pop %v4120
        %v4246 = vtanh.pop %v4121
        %v4247 = vtanh.pop %v4122
        %v4248 = vtanh.pop %v4123
        %v4249 = vtanh.pop %v4124
        %v4250 = vtanh.pop %v4125
        %v4251 = vtanh.pop %v4126
        %v4252 = vtanh.pop %v4127
        %v4253 = vtanh.pop %v4128
        %v4254 = vtanh.pop %v4129
        %v4255 = vtanh.pop %v4130
        %v4256 = vtanh.pop %v4131
        %v4257 = vtanh.pop %v4132
        %v4258 = vtanh.pop %v4133
        %v4259 = vtanh.pop %v4134
        %v4260 = vtanh.pop %v4135
        %v4261 = vtanh.pop %v4136
        %v4262 = vtanh.pop %v4137
        %v4263 = vtanh.pop %v4138
        %v4264 = vadd.f32 %v4139, 1.0
        %v4265 = vadd.f32 %v4140, 1.0
        %v4266 = vadd.f32 %v4141, 1.0
        %v4267 = vadd.f32 %v4142, 1.0
        %v4268 = vadd.f32 %v4143, 1.0
        %v4269 = vadd.f32 %v4144, 1.0
        %v4270 = vadd.f32 %v4145, 1.0
        %v4271 = vadd.f32 %v4146, 1.0
        %v4272 = vadd.f32 %v4147, 1.0
        %v4273 = vadd.f32 %v4148, 1.0
        %v4274 = vadd.f32 %v4149, 1.0
        %v4275 = vadd.f32 %v4150, 1.0
        %v4276 = vadd.f32 %v4151, 1.0
        %v4277 = vadd.f32 %v4152, 1.0
        %v4278 = vadd.f32 %v4153, 1.0
        %v4279 = vadd.f32 %v4154, 1.0
        %v4280 = vadd.f32 %v4155, 1.0
        %v4281 = vadd.f32 %v4156, 1.0
        %v4282 = vadd.f32 %v4157, 1.0
        %v4283 = vadd.f32 %v4158, 1.0
        %v4284 = vadd.f32 %v4159, 1.0
        %v4285 = vadd.f32 %v4160, 1.0
        %v4286 = vadd.f32 %v4161, 1.0
        %v4287 = vadd.f32 %v4162, 1.0
        %v4288 = vadd.f32 %v4163, 1.0
        %v4289 = vadd.f32 %v4164, 1.0
        %v4290 = vadd.f32 %v4165, 1.0
        %v4291 = vadd.f32 %v4166, 1.0
        %v4292 = vadd.f32 %v4167, 1.0
        %v4293 = vadd.f32 %v4168, 1.0
        %v4294 = vadd.f32 %v4169, 1.0
        %v4295 = vadd.f32 %v4170, 1.0
        %v4296 = vadd.f32 %v4171, 1.0
        %v4297 = vadd.f32 %v4172, 1.0
        %v4298 = vadd.f32 %v4173, 1.0
        %v4299 = vadd.f32 %v4174, 1.0
        %v4300 = vadd.f32 %v4175, 1.0
        %v4301 = vadd.f32 %v4176, 1.0
        %v4302 = vadd.f32 %v4177, 1.0
        %v4303 = vadd.f32 %v4178, 1.0
        %v4304 = vadd.f32 %v4179, 1.0
        %v4305 = vadd.f32 %v4180, 1.0
        %v4306 = vadd.f32 %v4181, 1.0
        %v4307 = vadd.f32 %v4182, 1.0
        %v4308 = vadd.f32 %v4183, 1.0
        %v4309 = vadd.f32 %v4184, 1.0
        %v4310 = vadd.f32 %v4185, 1.0
        %v4311 = vadd.f32 %v4186, 1.0
        %v4312 = vadd.f32 %v4187, 1.0
        %v4313 = vadd.f32 %v4188, 1.0
        %v4314 = vadd.f32 %v4189, 1.0
        %v4315 = vadd.f32 %v4190, 1.0
        %v4316 = vadd.f32 %v4191, 1.0
        %v4317 = vadd.f32 %v4192, 1.0
        %v4318 = vadd.f32 %v4193, 1.0
        %v4319 = vadd.f32 %v4194, 1.0
        %v4320 = vadd.f32 %v4195, 1.0
        %v4321 = vadd.f32 %v4196, 1.0
        %v4322 = vadd.f32 %v4197, 1.0
        %v4323 = vadd.f32 %v4198, 1.0
        %v4324 = vadd.f32 %v4199, 1.0
        %v4325 = vadd.f32 %v4200, 1.0
        %v4326 = vadd.f32 %v4201, 1.0
        %v4327 = vadd.f32 %v4202, 1.0
        %v4328 = vadd.f32 %v4203, 1.0
        %v4329 = vadd.f32 %v4204, 1.0
        %v4330 = vadd.f32 %v4205, 1.0
        %v4331 = vadd.f32 %v4206, 1.0
        %v4332 = vadd.f32 %v4207, 1.0
        %v4333 = vadd.f32 %v4208, 1.0
        %v4334 = vadd.f32 %v4209, 1.0
        %v4335 = vadd.f32 %v4210, 1.0
        %v4336 = vadd.f32 %v4211, 1.0
        %v4337 = vadd.f32 %v4212, 1.0
        %v4338 = vadd.f32 %v4213, 1.0
        %v4339 = vadd.f32 %v4214, 1.0
        %v4340 = vadd.f32 %v4215, 1.0
        %v4341 = vadd.f32 %v4216, 1.0
        %v4342 = vadd.f32 %v4217, 1.0
        %v4343 = vadd.f32 %v4218, 1.0
        %v4344 = vadd.f32 %v4219, 1.0
        %v4345 = vadd.f32 %v4220, 1.0
        %v4346 = vadd.f32 %v4221, 1.0
        %v4347 = vadd.f32 %v4222, 1.0
        %v4348 = vadd.f32 %v4223, 1.0
        %v4349 = vadd.f32 %v4224, 1.0
        %v4350 = vadd.f32 %v4225, 1.0
        %v4351 = vadd.f32 %v4226, 1.0
        %v4352 = vadd.f32 %v4227, 1.0
        %v4353 = vadd.f32 %v4228, 1.0
        %v4354 = vadd.f32 %v4229, 1.0
        %v4355 = vadd.f32 %v4230, 1.0
        %v4356 = vadd.f32 %v4231, 1.0
        %v4357 = vadd.f32 %v4232, 1.0
        %v4358 = vadd.f32 %v4233, 1.0
        %v4359 = vadd.f32 %v4234, 1.0
        %v4360 = vadd.f32 %v4235, 1.0
        %v4361 = vadd.f32 %v4236, 1.0
        %v4362 = vadd.f32 %v4237, 1.0
        %v4363 = vadd.f32 %v4238, 1.0
        %v4364 = vadd.f32 %v4239, 1.0
        %v4365 = vadd.f32 %v4240, 1.0
        %v4366 = vadd.f32 %v4241, 1.0
        %v4367 = vadd.f32 %v4242, 1.0
        %v4368 = vadd.f32 %v4243, 1.0
        %v4369 = vadd.f32 %v4244, 1.0
        %v4370 = vadd.f32 %v4245, 1.0
        %v4371 = vadd.f32 %v4246, 1.0
        %v4372 = vadd.f32 %v4247, 1.0
        %v4373 = vadd.f32 %v4248, 1.0
        %v4374 = vadd.f32 %v4249, 1.0
        %v4375 = vadd.f32 %v4250, 1.0
        %v4376 = vadd.f32 %v4251, 1.0
        %v4377 = vadd.f32 %v4252, 1.0
        %v4378 = vadd.f32 %v4253, 1.0
        %v4379 = vadd.f32 %v4254, 1.0
        %v4380 = vadd.f32 %v4255, 1.0
        %v4381 = vadd.f32 %v4256, 1.0
        %v4382 = vadd.f32 %v4257, 1.0
        %v4383 = vadd.f32 %v4258, 1.0
        %v4384 = vadd.f32 %v4259, 1.0
        %v4385 = vadd.f32 %v4260, 1.0
        %v4386 = vadd.f32 %v4261, 1.0
        %v4387 = vadd.f32 %v4262, 1.0
        %v4388 = vadd.f32 %v4263, 1.0
        %v4389 = vmul.f32 %v4264, 0.5
        %v4390 = vmul.f32 %v4265, 0.5
        %v4391 = vmul.f32 %v4266, 0.5
        %v4392 = vmul.f32 %v4267, 0.5
        %v4393 = vmul.f32 %v4268, 0.5
        %v4394 = vmul.f32 %v4269, 0.5
        %v4395 = vmul.f32 %v4270, 0.5
        %v4396 = vmul.f32 %v4271, 0.5
        %v4397 = vmul.f32 %v4272, 0.5
        %v4398 = vmul.f32 %v4273, 0.5
        %v4399 = vmul.f32 %v4274, 0.5
        %v4400 = vmul.f32 %v4275, 0.5
        %v4401 = vmul.f32 %v4276, 0.5
        %v4402 = vmul.f32 %v4277, 0.5
        %v4403 = vmul.f32 %v4278, 0.5
        %v4404 = vmul.f32 %v4279, 0.5
        %v4405 = vmul.f32 %v4280, 0.5
        %v4406 = vmul.f32 %v4281, 0.5
        %v4407 = vmul.f32 %v4282, 0.5
        %v4408 = vmul.f32 %v4283, 0.5
        %v4409 = vmul.f32 %v4284, 0.5
        %v4410 = vmul.f32 %v4285, 0.5
        %v4411 = vmul.f32 %v4286, 0.5
        %v4412 = vmul.f32 %v4287, 0.5
        %v4413 = vmul.f32 %v4288, 0.5
        %v4414 = vmul.f32 %v4289, 0.5
        %v4415 = vmul.f32 %v4290, 0.5
        %v4416 = vmul.f32 %v4291, 0.5
        %v4417 = vmul.f32 %v4292, 0.5
        %v4418 = vmul.f32 %v4293, 0.5
        %v4419 = vmul.f32 %v4294, 0.5
        %v4420 = vmul.f32 %v4295, 0.5
        %v4421 = vmul.f32 %v4296, 0.5
        %v4422 = vmul.f32 %v4297, 0.5
        %v4423 = vmul.f32 %v4298, 0.5
        %v4424 = vmul.f32 %v4299, 0.5
        %v4425 = vmul.f32 %v4300, 0.5
        %v4426 = vmul.f32 %v4301, 0.5
        %v4427 = vmul.f32 %v4302, 0.5
        %v4428 = vmul.f32 %v4303, 0.5
        %v4429 = vmul.f32 %v4304, 0.5
        %v4430 = vmul.f32 %v4305, 0.5
        %v4431 = vmul.f32 %v4306, 0.5
        %v4432 = vmul.f32 %v4307, 0.5
        %v4433 = vmul.f32 %v4308, 0.5
        %v4434 = vmul.f32 %v4309, 0.5
        %v4435 = vmul.f32 %v4310, 0.5
        %v4436 = vmul.f32 %v4311, 0.5
        %v4437 = vmul.f32 %v4312, 0.5
        %v4438 = vmul.f32 %v4313, 0.5
        %v4439 = vmul.f32 %v4314, 0.5
        %v4440 = vmul.f32 %v4315, 0.5
        %v4441 = vmul.f32 %v4316, 0.5
        %v4442 = vmul.f32 %v4317, 0.5
        %v4443 = vmul.f32 %v4318, 0.5
        %v4444 = vmul.f32 %v4319, 0.5
        %v4445 = vmul.f32 %v4320, 0.5
        %v4446 = vmul.f32 %v4321, 0.5
        %v4447 = vmul.f32 %v4322, 0.5
        %v4448 = vmul.f32 %v4323, 0.5
        %v4449 = vmul.f32 %v4324, 0.5
        %v4450 = vmul.f32 %v4325, 0.5
        %v4451 = vmul.f32 %v4326, 0.5
        %v4452 = vmul.f32 %v4327, 0.5
        %v4453 = vmul.f32 %v4328, 0.5
        %v4454 = vmul.f32 %v4329, 0.5
        %v4455 = vmul.f32 %v4330, 0.5
        %v4456 = vmul.f32 %v4331, 0.5
        %v4457 = vmul.f32 %v4332, 0.5
        %v4458 = vmul.f32 %v4333, 0.5
        %v4459 = vmul.f32 %v4334, 0.5
        %v4460 = vmul.f32 %v4335, 0.5
        %v4461 = vmul.f32 %v4336, 0.5
        %v4462 = vmul.f32 %v4337, 0.5
        %v4463 = vmul.f32 %v4338, 0.5
        %v4464 = vmul.f32 %v4339, 0.5
        %v4465 = vmul.f32 %v4340, 0.5
        %v4466 = vmul.f32 %v4341, 0.5
        %v4467 = vmul.f32 %v4342, 0.5
        %v4468 = vmul.f32 %v4343, 0.5
        %v4469 = vmul.f32 %v4344, 0.5
        %v4470 = vmul.f32 %v4345, 0.5
        %v4471 = vmul.f32 %v4346, 0.5
        %v4472 = vmul.f32 %v4347, 0.5
        %v4473 = vmul.f32 %v4348, 0.5
        %v4474 = vmul.f32 %v4349, 0.5
        %v4475 = vmul.f32 %v4350, 0.5
        %v4476 = vmul.f32 %v4351, 0.5
        %v4477 = vmul.f32 %v4352, 0.5
        %v4478 = vmul.f32 %v4353, 0.5
        %v4479 = vmul.f32 %v4354, 0.5
        %v4480 = vmul.f32 %v4355, 0.5
        %v4481 = vmul.f32 %v4356, 0.5
        %v4482 = vmul.f32 %v4357, 0.5
        %v4483 = vmul.f32 %v4358, 0.5
        %v4484 = vmul.f32 %v4359, 0.5
        %v4485 = vmul.f32 %v4360, 0.5
        %v4486 = vmul.f32 %v4361, 0.5
        %v4487 = vmul.f32 %v4362, 0.5
        %v4488 = vmul.f32 %v4363, 0.5
        %v4489 = vmul.f32 %v4364, 0.5
        %v4490 = vmul.f32 %v4365, 0.5
        %v4491 = vmul.f32 %v4366, 0.5
        %v4492 = vmul.f32 %v4367, 0.5
        %v4493 = vmul.f32 %v4368, 0.5
        %v4494 = vmul.f32 %v4369, 0.5
        %v4495 = vmul.f32 %v4370, 0.5
        %v4496 = vmul.f32 %v4371, 0.5
        %v4497 = vmul.f32 %v4372, 0.5
        %v4498 = vmul.f32 %v4373, 0.5
        %v4499 = vmul.f32 %v4374, 0.5
        %v4500 = vmul.f32 %v4375, 0.5
        %v4501 = vmul.f32 %v4376, 0.5
        %v4502 = vmul.f32 %v4377, 0.5
        %v4503 = vmul.f32 %v4378, 0.5
        %v4504 = vmul.f32 %v4379, 0.5
        %v4505 = vmul.f32 %v4380, 0.5
        %v4506 = vmul.f32 %v4381, 0.5
        %v4507 = vmul.f32 %v4382, 0.5
        %v4508 = vmul.f32 %v4383, 0.5
        %v4509 = vmul.f32 %v4384, 0.5
        %v4510 = vmul.f32 %v4385, 0.5
        %v4511 = vmul.f32 %v4386, 0.5
        %v4512 = vmul.f32 %v4387, 0.5
        %v4513 = vmul.f32 %v4388, 0.5
        %v4514 = vmul.f32 %v3013, %v4389
        %v4515 = vmul.f32 %v3016, %v4390
        %v4516 = vmul.f32 %v3021, %v4391
        %v4517 = vmul.f32 %v3024, %v4392
        %v4518 = vmul.f32 %v3029, %v4393
        %v4519 = vmul.f32 %v3032, %v4394
        %v4520 = vmul.f32 %v3037, %v4395
        %v4521 = vmul.f32 %v3040, %v4396
        %v4522 = vmul.f32 %v3045, %v4397
        %v4523 = vmul.f32 %v3048, %v4398
        %v4524 = vmul.f32 %v3053, %v4399
        %v4525 = vmul.f32 %v3056, %v4400
        %v4526 = vmul.f32 %v3061, %v4401
        %v4527 = vmul.f32 %v3064, %v4402
        %v4528 = vmul.f32 %v3069, %v4403
        %v4529 = vmul.f32 %v3072, %v4404
        %v4530 = vmul.f32 %v3077, %v4405
        %v4531 = vmul.f32 %v3080, %v4406
        %v4532 = vmul.f32 %v3085, %v4407
        %v4533 = vmul.f32 %v3088, %v4408
        %v4534 = vmul.f32 %v3093, %v4409
        %v4535 = vmul.f32 %v3096, %v4410
        %v4536 = vmul.f32 %v3101, %v4411
        %v4537 = vmul.f32 %v3104, %v4412
        %v4538 = vmul.f32 %v3109, %v4413
        %v4539 = vmul.f32 %v3112, %v4414
        %v4540 = vmul.f32 %v3117, %v4415
        %v4541 = vmul.f32 %v3120, %v4416
        %v4542 = vmul.f32 %v3125, %v4417
        %v4543 = vmul.f32 %v3128, %v4418
        %v4544 = vmul.f32 %v3133, %v4419
        %v4545 = vmul.f32 %v3136, %v4420
        %v4546 = vmul.f32 %v3141, %v4421
        %v4547 = vmul.f32 %v3144, %v4422
        %v4548 = vmul.f32 %v3149, %v4423
        %v4549 = vmul.f32 %v3152, %v4424
        %v4550 = vmul.f32 %v3157, %v4425
        %v4551 = vmul.f32 %v3160, %v4426
        %v4552 = vmul.f32 %v3165, %v4427
        %v4553 = vmul.f32 %v3168, %v4428
        %v4554 = vmul.f32 %v3173, %v4429
        %v4555 = vmul.f32 %v3176, %v4430
        %v4556 = vmul.f32 %v3181, %v4431
        %v4557 = vmul.f32 %v3184, %v4432
        %v4558 = vmul.f32 %v3189, %v4433
        %v4559 = vmul.f32 %v3192, %v4434
        %v4560 = vmul.f32 %v3197, %v4435
        %v4561 = vmul.f32 %v3200, %v4436
        %v4562 = vmul.f32 %v3205, %v4437
        %v4563 = vmul.f32 %v3208, %v4438
        %v4564 = vmul.f32 %v3213, %v4439
        %v4565 = vmul.f32 %v3216, %v4440
        %v4566 = vmul.f32 %v3221, %v4441
        %v4567 = vmul.f32 %v3224, %v4442
        %v4568 = vmul.f32 %v3229, %v4443
        %v4569 = vmul.f32 %v3232, %v4444
        %v4570 = vmul.f32 %v3237, %v4445
        %v4571 = vmul.f32 %v3240, %v4446
        %v4572 = vmul.f32 %v3245, %v4447
        %v4573 = vmul.f32 %v3248, %v4448
        %v4574 = vmul.f32 %v3253, %v4449
        %v4575 = vmul.f32 %v3256, %v4450
        %v4576 = vmul.f32 %v3261, %v4451
        %v4577 = vmul.f32 %v3264, %v4452
        %v4578 = vmul.f32 %v3269, %v4453
        %v4579 = vmul.f32 %v3272, %v4454
        %v4580 = vmul.f32 %v3277, %v4455
        %v4581 = vmul.f32 %v3280, %v4456
        %v4582 = vmul.f32 %v3285, %v4457
        %v4583 = vmul.f32 %v3288, %v4458
        %v4584 = vmul.f32 %v3293, %v4459
        %v4585 = vmul.f32 %v3296, %v4460
        %v4586 = vmul.f32 %v3301, %v4461
        %v4587 = vmul.f32 %v3304, %v4462
        %v4588 = vmul.f32 %v3309, %v4463
        %v4589 = vmul.f32 %v3312, %v4464
        %v4590 = vmul.f32 %v3317, %v4465
        %v4591 = vmul.f32 %v3320, %v4466
        %v4592 = vmul.f32 %v3325, %v4467
        %v4593 = vmul.f32 %v3328, %v4468
        %v4594 = vmul.f32 %v3333, %v4469
        %v4595 = vmul.f32 %v3336, %v4470
        %v4596 = vmul.f32 %v3341, %v4471
        %v4597 = vmul.f32 %v3344, %v4472
        %v4598 = vmul.f32 %v3349, %v4473
        %v4599 = vmul.f32 %v3352, %v4474
        %v4600 = vmul.f32 %v3357, %v4475
        %v4601 = vmul.f32 %v3360, %v4476
        %v4602 = vmul.f32 %v3365, %v4477
        %v4603 = vmul.f32 %v3368, %v4478
        %v4604 = vmul.f32 %v3373, %v4479
        %v4605 = vmul.f32 %v3376, %v4480
        %v4606 = vmul.f32 %v3381, %v4481
        %v4607 = vmul.f32 %v3384, %v4482
        %v4608 = vmul.f32 %v3389, %v4483
        %v4609 = vmul.f32 %v3392, %v4484
        %v4610 = vmul.f32 %v3397, %v4485
        %v4611 = vmul.f32 %v3400, %v4486
        %v4612 = vmul.f32 %v3405, %v4487
        %v4613 = vmul.f32 %v3408, %v4488
        %v4614 = vmul.f32 %v3413, %v4489
        %v4615 = vmul.f32 %v3416, %v4490
        %v4616 = vmul.f32 %v3421, %v4491
        %v4617 = vmul.f32 %v3424, %v4492
        %v4618 = vmul.f32 %v3429, %v4493
        %v4619 = vmul.f32 %v3432, %v4494
        %v4620 = vmul.f32 %v3437, %v4495
        %v4621 = vmul.f32 %v3440, %v4496
        %v4622 = vmul.f32 %v3445, %v4497
        %v4623 = vmul.f32 %v3448, %v4498
        %v4624 = vmul.f32 %v3453, %v4499
        %v4625 = vmul.f32 %v3456, %v4500
        %v4626 = vmul.f32 %v3461, %v4501
        %v4627 = vmul.f32 %v3464, %v4502
        %v4628 = vmul.f32 %v3469, %v4503
        %v4629 = vmul.f32 %v3472, %v4504
        %v4630 = vmul.f32 %v3477, %v4505
        %v4631 = vmul.f32 %v3480, %v4506
        %v4632 = vmul.f32 %v3485, %v4507
        %v4633 = vmul.f32 %v3488, %v4508
        %v4634 = vmul.f32 %v3493, %v4509
        %v4635 = vmul.f32 %v3496, %v4510
        %v4636 = vmul.f32 %v3501, %v4511
        %v4637 = vmul.f32 %v3504, %v4512
        %v4638 = vmul.f32 %v3509, %v4513
        %v4639 = vpack.c.bf16 %v4515, %v4514
        %v4640 = vpack.c.bf16 %v4517, %v4516
        %v4641 = vpack.c.bf16 %v4519, %v4518
        %v4642 = vpack.c.bf16 %v4521, %v4520
        %v4643 = vpack.c.bf16 %v4523, %v4522
        %v4644 = vpack.c.bf16 %v4525, %v4524
        %v4645 = vpack.c.bf16 %v4527, %v4526
        %v4646 = vpack.c.bf16 %v4529, %v4528
        %v4647 = vpack.c.bf16 %v4531, %v4530
        %v4648 = vpack.c.bf16 %v4533, %v4532
        %v4649 = vpack.c.bf16 %v4535, %v4534
        %v4650 = vpack.c.bf16 %v4537, %v4536
        %v4651 = vpack.c.bf16 %v4539, %v4538
        %v4652 = vpack.c.bf16 %v4541, %v4540
        %v4653 = vpack.c.bf16 %v4543, %v4542
        %v4654 = vpack.c.bf16 %v4545, %v4544
        %v4655 = vpack.c.bf16 %v4547, %v4546
        %v4656 = vpack.c.bf16 %v4549, %v4548
        %v4657 = vpack.c.bf16 %v4551, %v4550
        %v4658 = vpack.c.bf16 %v4553, %v4552
        %v4659 = vpack.c.bf16 %v4555, %v4554
        %v4660 = vpack.c.bf16 %v4557, %v4556
        %v4661 = vpack.c.bf16 %v4559, %v4558
        %v4662 = vpack.c.bf16 %v4561, %v4560
        %v4663 = vpack.c.bf16 %v4563, %v4562
        %v4664 = vpack.c.bf16 %v4565, %v4564
        %v4665 = vpack.c.bf16 %v4567, %v4566
        %v4666 = vpack.c.bf16 %v4569, %v4568
        %v4667 = vpack.c.bf16 %v4571, %v4570
        %v4668 = vpack.c.bf16 %v4573, %v4572
        %v4669 = vpack.c.bf16 %v4575, %v4574
        %v4670 = vpack.c.bf16 %v4577, %v4576
        %v4671 = vpack.c.bf16 %v4579, %v4578
        %v4672 = vpack.c.bf16 %v4581, %v4580
        %v4673 = vpack.c.bf16 %v4583, %v4582
        %v4674 = vpack.c.bf16 %v4585, %v4584
        %v4675 = vpack.c.bf16 %v4587, %v4586
        %v4676 = vpack.c.bf16 %v4589, %v4588
        %v4677 = vpack.c.bf16 %v4591, %v4590
        %v4678 = vpack.c.bf16 %v4593, %v4592
        %v4679 = vpack.c.bf16 %v4595, %v4594
        %v4680 = vpack.c.bf16 %v4597, %v4596
        %v4681 = vpack.c.bf16 %v4599, %v4598
        %v4682 = vpack.c.bf16 %v4601, %v4600
        %v4683 = vpack.c.bf16 %v4603, %v4602
        %v4684 = vpack.c.bf16 %v4605, %v4604
        %v4685 = vpack.c.bf16 %v4607, %v4606
        %v4686 = vpack.c.bf16 %v4609, %v4608
        %v4687 = vpack.c.bf16 %v4611, %v4610
        %v4688 = vpack.c.bf16 %v4613, %v4612
        %v4689 = vpack.c.bf16 %v4615, %v4614
        %v4690 = vpack.c.bf16 %v4617, %v4616
        %v4691 = vpack.c.bf16 %v4619, %v4618
        %v4692 = vpack.c.bf16 %v4621, %v4620
        %v4693 = vpack.c.bf16 %v4623, %v4622
        %v4694 = vpack.c.bf16 %v4625, %v4624
        %v4695 = vpack.c.bf16 %v4627, %v4626
        %v4696 = vpack.c.bf16 %v4629, %v4628
        %v4697 = vpack.c.bf16 %v4631, %v4630
        %v4698 = vpack.c.bf16 %v4633, %v4632
        %v4699 = vpack.c.bf16 %v4635, %v4634
        %v4700 = vpack.c.bf16 %v4637, %v4636
        %v4701 = vpack.c.bf16 %v4638, %v4638
        %v4702 = vld [vmem:[%s5] sm:$0xf]
        %v4703 = vld [vmem:[%s5 + $0x4] sm:$0xf]
        %v4704 = vld [vmem:[%s5 + $0x8] sm:$0xf]
        %v4705 = vld [vmem:[%s5 + $0xc] sm:$0xf]
        %v4706 = vld [vmem:[%s5 + $0x10] sm:$0xf]
        %v4707 = vld [vmem:[%s5 + $0x14] sm:$0xf]
        %v4708 = vld [vmem:[%s5 + $0x18] sm:$0xf]
        %v4709 = vld [vmem:[%s5 + $0x1c] sm:$0xf]
        %v4710 = vld [vmem:[%s6] sm:$0x1]
        %v4712 = vlaneseq
        %v4713 = vshrl.u32 %v4712, 7
        %v4714 = vsub.s32 0, %v4713
        %v4715 = vrot.slane %v4710, %v4714
        %v4725 = vunpack.c.l.b16 %v4702
        %v4726 = vunpack.c.l.b16 %v4703
        %v4727 = vunpack.c.l.b16 %v4704
        %v4728 = vunpack.c.l.b16 %v4705
        %v4729 = vunpack.c.l.b16 %v4706
        %v4730 = vunpack.c.l.b16 %v4707
        %v4731 = vunpack.c.l.b16 %v4708
        %v4732 = vunpack.c.l.b16 %v4709
        %v4733 = vpack.c.b16 %v4726, %v4725
        %v4734 = vpack.c.b16 %v4728, %v4727
        %v4735 = vpack.c.b16 %v4730, %v4729
        %v4736 = vpack.c.b16 %v4732, %v4731
        %v4742 = vsel %vm2788, %v4639, 0
        %v4745 = vsel %vm2788, %v4640, 0
        %v4748 = vsel %vm2788, %v4641, 0
        %v4751 = vsel %vm2788, %v4642, 0
        %v4754 = vsel %vm2788, %v4643, 0
        %v4757 = vsel %vm2788, %v4644, 0
        %v4760 = vsel %vm2788, %v4645, 0
        %v4763 = vsel %vm2788, %v4646, 0
        %v4766 = vsel %vm2788, %v4647, 0
        %v4769 = vsel %vm2788, %v4648, 0
        %v4772 = vsel %vm2788, %v4649, 0
        %v4775 = vsel %vm2788, %v4650, 0
        %v4778 = vsel %vm2788, %v4651, 0
        %v4781 = vsel %vm2788, %v4652, 0
        %v4784 = vsel %vm2788, %v4653, 0
        %v4787 = vsel %vm2788, %v4654, 0
        %v4790 = vsel %vm2788, %v4655, 0
        %v4793 = vsel %vm2788, %v4656, 0
        %v4796 = vsel %vm2788, %v4657, 0
        %v4799 = vsel %vm2788, %v4658, 0
        %v4802 = vsel %vm2788, %v4659, 0
        %v4805 = vsel %vm2788, %v4660, 0
        %v4808 = vsel %vm2788, %v4661, 0
        %v4811 = vsel %vm2788, %v4662, 0
        %v4814 = vsel %vm2788, %v4663, 0
        %v4817 = vsel %vm2788, %v4664, 0
        %v4820 = vsel %vm2788, %v4665, 0
        %v4823 = vsel %vm2788, %v4666, 0
        %v4826 = vsel %vm2788, %v4667, 0
        %v4829 = vsel %vm2788, %v4668, 0
        %v4832 = vsel %vm2788, %v4669, 0
        %v4835 = vsel %vm2788, %v4670, 0
        %v4838 = vsel %vm2788, %v4671, 0
        %v4841 = vsel %vm2788, %v4672, 0
        %v4844 = vsel %vm2788, %v4673, 0
        %v4847 = vsel %vm2788, %v4674, 0
        %v4850 = vsel %vm2788, %v4675, 0
        %v4853 = vsel %vm2788, %v4676, 0
        %v4856 = vsel %vm2788, %v4677, 0
        %v4859 = vsel %vm2788, %v4678, 0
        %v4862 = vsel %vm2788, %v4679, 0
        %v4865 = vsel %vm2788, %v4680, 0
        %v4868 = vsel %vm2788, %v4681, 0
        %v4871 = vsel %vm2788, %v4682, 0
        %v4874 = vsel %vm2788, %v4683, 0
        %v4877 = vsel %vm2788, %v4684, 0
        %v4880 = vsel %vm2788, %v4685, 0
        %v4883 = vsel %vm2788, %v4686, 0
        %v4886 = vsel %vm2788, %v4687, 0
        %v4889 = vsel %vm2788, %v4688, 0
        %v4892 = vsel %vm2788, %v4689, 0
        %v4895 = vsel %vm2788, %v4690, 0
        %v4898 = vsel %vm2788, %v4691, 0
        %v4901 = vsel %vm2788, %v4692, 0
        %v4904 = vsel %vm2788, %v4693, 0
        %v4907 = vsel %vm2788, %v4694, 0
        %v4910 = vsel %vm2788, %v4695, 0
        %v4913 = vsel %vm2788, %v4696, 0
        %v4916 = vsel %vm2788, %v4697, 0
        %v4919 = vsel %vm2788, %v4698, 0
        %v4922 = vsel %vm2788, %v4699, 0
        %v4925 = vsel %vm2788, %v4700, 0
        %v4928 = vsel %vm2788, %v4701, 0
        %4930 = vmatprep.subr.bf16.mxu0 0
        %4931 = vmatpush1.bf16.msra.mxu0 0
        %4932 = vmatprep.subr.bf16.mxu0 0
        %4933 = vmatpush1.bf16.msra.mxu0 0
        %4934 = vmatprep.subr.bf16.mxu0 0
        %4935 = vmatpush1.bf16.msra.mxu0 0
        %4936 = vmatprep.subr.bf16.mxu0 0
        %4937 = vmatpush1.bf16.msra.mxu0 0
        %4938 = vmatprep.subr.bf16.mxu0 0
        %4939 = vmatpush1.bf16.msra.mxu0 %v4736
        %4940 = vmatprep.subr.bf16.mxu0 0
        %4941 = vmatpush1.bf16.msra.mxu0 %v4735
        %4942 = vmatprep.subr.bf16.mxu0 0
        %4943 = vmatpush1.bf16.msra.mxu0 %v4734
        %4944 = vmatprep.subr.bf16.mxu0 0
        %4945 = vmatpush1.bf16.msra.mxu0 %v4733
        %4946 = vmatprep.subr.bf16.mxu0 0
        %4947 = vmatpush2.bf16.msra.mxu0 0
        %4948 = vmatprep.subr.bf16.mxu0 0
        %4949 = vmatpush2.bf16.msra.mxu0 0
        %4950 = vmatprep.subr.bf16.mxu0 0
        %4951 = vmatpush2.bf16.msra.mxu0 0
        %4952 = vmatprep.subr.bf16.mxu0 0
        %4953 = vmatpush2.bf16.msra.mxu0 0
        %4954 = vmatprep.subr.bf16.mxu0 0
        %4955 = vmatpush2.bf16.msra.mxu0 0
        %4956 = vmatprep.subr.bf16.mxu0 0
        %4957 = vmatpush2.bf16.msra.mxu0 0
        %4958 = vmatprep.subr.bf16.mxu0 0
        %4959 = vmatpush2.bf16.msra.mxu0 0
        %4960 = vmatprep.subr.bf16.mxu0 0
        %4961 = vmatpush2.bf16.msra.mxu0 0
        %4962 = vmatprep.mubr.bf16.mxu0 0
        %4963 = vmatmul.mubr.bf16.gmra.mxu0 %v4742
        %v4964 = vpop.f32.mrf.mxu0
        %v4965 = vadd.f32 %v4715, %v4964
        %v4966 = vpop.f32.mrf.mxu0
        %v4967 = vpop.f32.mrf.mxu0
        %v4968 = vadd.f32 %v4715, %v4967
        %v4969 = vpop.f32.mrf.mxu0
        %4970 = vmatprep.mubr.bf16.mxu0 0
        %4971 = vmatmul.mubr.bf16.gmra.mxu0 %v4745
        %v4972 = vpop.f32.mrf.mxu0
        %v4973 = vadd.f32 %v4715, %v4972
        %v4974 = vpop.f32.mrf.mxu0
        %v4975 = vpop.f32.mrf.mxu0
        %v4976 = vadd.f32 %v4715, %v4975
        %v4977 = vpop.f32.mrf.mxu0
        %4978 = vmatprep.mubr.bf16.mxu0 0
        %4979 = vmatmul.mubr.bf16.gmra.mxu0 %v4748
        %v4980 = vpop.f32.mrf.mxu0
        %v4981 = vadd.f32 %v4715, %v4980
        %v4982 = vpop.f32.mrf.mxu0
        %v4983 = vpop.f32.mrf.mxu0
        %v4984 = vadd.f32 %v4715, %v4983
        %v4985 = vpop.f32.mrf.mxu0
        %4986 = vmatprep.mubr.bf16.mxu0 0
        %4987 = vmatmul.mubr.bf16.gmra.mxu0 %v4751
        %v4988 = vpop.f32.mrf.mxu0
        %v4989 = vadd.f32 %v4715, %v4988
        %v4990 = vpop.f32.mrf.mxu0
        %v4991 = vpop.f32.mrf.mxu0
        %v4992 = vadd.f32 %v4715, %v4991
        %v4993 = vpop.f32.mrf.mxu0
        %4994 = vmatprep.mubr.bf16.mxu0 0
        %4995 = vmatmul.mubr.bf16.gmra.mxu0 %v4754
        %v4996 = vpop.f32.mrf.mxu0
        %v4997 = vadd.f32 %v4715, %v4996
        %v4998 = vpop.f32.mrf.mxu0
        %v4999 = vpop.f32.mrf.mxu0
        %v5000 = vadd.f32 %v4715, %v4999
        %v5001 = vpop.f32.mrf.mxu0
        %5002 = vmatprep.mubr.bf16.mxu0 0
        %5003 = vmatmul.mubr.bf16.gmra.mxu0 %v4757
        %v5004 = vpop.f32.mrf.mxu0
        %v5005 = vadd.f32 %v4715, %v5004
        %v5006 = vpop.f32.mrf.mxu0
        %v5007 = vpop.f32.mrf.mxu0
        %v5008 = vadd.f32 %v4715, %v5007
        %v5009 = vpop.f32.mrf.mxu0
        %5010 = vmatprep.mubr.bf16.mxu0 0
        %5011 = vmatmul.mubr.bf16.gmra.mxu0 %v4760
        %v5012 = vpop.f32.mrf.mxu0
        %v5013 = vadd.f32 %v4715, %v5012
        %v5014 = vpop.f32.mrf.mxu0
        %v5015 = vpop.f32.mrf.mxu0
        %v5016 = vadd.f32 %v4715, %v5015
        %v5017 = vpop.f32.mrf.mxu0
        %5018 = vmatprep.mubr.bf16.mxu0 0
        %5019 = vmatmul.mubr.bf16.gmra.mxu0 %v4763
        %v5020 = vpop.f32.mrf.mxu0
        %v5021 = vadd.f32 %v4715, %v5020
        %v5022 = vpop.f32.mrf.mxu0
        %v5023 = vpop.f32.mrf.mxu0
        %v5024 = vadd.f32 %v4715, %v5023
        %v5025 = vpop.f32.mrf.mxu0
        %5026 = vmatprep.mubr.bf16.mxu0 0
        %5027 = vmatmul.mubr.bf16.gmra.mxu0 %v4766
        %v5028 = vpop.f32.mrf.mxu0
        %v5029 = vadd.f32 %v4715, %v5028
        %v5030 = vpop.f32.mrf.mxu0
        %v5031 = vpop.f32.mrf.mxu0
        %v5032 = vadd.f32 %v4715, %v5031
        %v5033 = vpop.f32.mrf.mxu0
        %5034 = vmatprep.mubr.bf16.mxu0 0
        %5035 = vmatmul.mubr.bf16.gmra.mxu0 %v4769
        %v5036 = vpop.f32.mrf.mxu0
        %v5037 = vadd.f32 %v4715, %v5036
        %v5038 = vpop.f32.mrf.mxu0
        %v5039 = vpop.f32.mrf.mxu0
        %v5040 = vadd.f32 %v4715, %v5039
        %v5041 = vpop.f32.mrf.mxu0
        %5042 = vmatprep.mubr.bf16.mxu0 0
        %5043 = vmatmul.mubr.bf16.gmra.mxu0 %v4772
        %v5044 = vpop.f32.mrf.mxu0
        %v5045 = vadd.f32 %v4715, %v5044
        %v5046 = vpop.f32.mrf.mxu0
        %v5047 = vpop.f32.mrf.mxu0
        %v5048 = vadd.f32 %v4715, %v5047
        %v5049 = vpop.f32.mrf.mxu0
        %5050 = vmatprep.mubr.bf16.mxu0 0
        %5051 = vmatmul.mubr.bf16.gmra.mxu0 %v4775
        %v5052 = vpop.f32.mrf.mxu0
        %v5053 = vadd.f32 %v4715, %v5052
        %v5054 = vpop.f32.mrf.mxu0
        %v5055 = vpop.f32.mrf.mxu0
        %v5056 = vadd.f32 %v4715, %v5055
        %v5057 = vpop.f32.mrf.mxu0
        %5058 = vmatprep.mubr.bf16.mxu0 0
        %5059 = vmatmul.mubr.bf16.gmra.mxu0 %v4778
        %v5060 = vpop.f32.mrf.mxu0
        %v5061 = vadd.f32 %v4715, %v5060
        %v5062 = vpop.f32.mrf.mxu0
        %v5063 = vpop.f32.mrf.mxu0
        %v5064 = vadd.f32 %v4715, %v5063
        %v5065 = vpop.f32.mrf.mxu0
        %5066 = vmatprep.mubr.bf16.mxu0 0
        %5067 = vmatmul.mubr.bf16.gmra.mxu0 %v4781
        %v5068 = vpop.f32.mrf.mxu0
        %v5069 = vadd.f32 %v4715, %v5068
        %v5070 = vpop.f32.mrf.mxu0
        %v5071 = vpop.f32.mrf.mxu0
        %v5072 = vadd.f32 %v4715, %v5071
        %v5073 = vpop.f32.mrf.mxu0
        %5074 = vmatprep.mubr.bf16.mxu0 0
        %5075 = vmatmul.mubr.bf16.gmra.mxu0 %v4784
        %v5076 = vpop.f32.mrf.mxu0
        %v5077 = vadd.f32 %v4715, %v5076
        %v5078 = vpop.f32.mrf.mxu0
        %v5079 = vpop.f32.mrf.mxu0
        %v5080 = vadd.f32 %v4715, %v5079
        %v5081 = vpop.f32.mrf.mxu0
        %5082 = vmatprep.mubr.bf16.mxu0 0
        %5083 = vmatmul.mubr.bf16.gmra.mxu0 %v4787
        %v5084 = vpop.f32.mrf.mxu0
        %v5085 = vadd.f32 %v4715, %v5084
        %v5086 = vpop.f32.mrf.mxu0
        %v5087 = vpop.f32.mrf.mxu0
        %v5088 = vadd.f32 %v4715, %v5087
        %v5089 = vpop.f32.mrf.mxu0
        %5090 = vmatprep.mubr.bf16.mxu0 0
        %5091 = vmatmul.mubr.bf16.gmra.mxu0 %v4790
        %v5092 = vpop.f32.mrf.mxu0
        %v5093 = vadd.f32 %v4715, %v5092
        %v5094 = vpop.f32.mrf.mxu0
        %v5095 = vpop.f32.mrf.mxu0
        %v5096 = vadd.f32 %v4715, %v5095
        %v5097 = vpop.f32.mrf.mxu0
        %5098 = vmatprep.mubr.bf16.mxu0 0
        %5099 = vmatmul.mubr.bf16.gmra.mxu0 %v4793
        %v5100 = vpop.f32.mrf.mxu0
        %v5101 = vadd.f32 %v4715, %v5100
        %v5102 = vpop.f32.mrf.mxu0
        %v5103 = vpop.f32.mrf.mxu0
        %v5104 = vadd.f32 %v4715, %v5103
        %v5105 = vpop.f32.mrf.mxu0
        %5106 = vmatprep.mubr.bf16.mxu0 0
        %5107 = vmatmul.mubr.bf16.gmra.mxu0 %v4796
        %v5108 = vpop.f32.mrf.mxu0
        %v5109 = vadd.f32 %v4715, %v5108
        %v5110 = vpop.f32.mrf.mxu0
        %v5111 = vpop.f32.mrf.mxu0
        %v5112 = vadd.f32 %v4715, %v5111
        %v5113 = vpop.f32.mrf.mxu0
        %5114 = vmatprep.mubr.bf16.mxu0 0
        %5115 = vmatmul.mubr.bf16.gmra.mxu0 %v4799
        %v5116 = vpop.f32.mrf.mxu0
        %v5117 = vadd.f32 %v4715, %v5116
        %v5118 = vpop.f32.mrf.mxu0
        %v5119 = vpop.f32.mrf.mxu0
        %v5120 = vadd.f32 %v4715, %v5119
        %v5121 = vpop.f32.mrf.mxu0
        %5122 = vmatprep.mubr.bf16.mxu0 0
        %5123 = vmatmul.mubr.bf16.gmra.mxu0 %v4802
        %v5124 = vpop.f32.mrf.mxu0
        %v5125 = vadd.f32 %v4715, %v5124
        %v5126 = vpop.f32.mrf.mxu0
        %v5127 = vpop.f32.mrf.mxu0
        %v5128 = vadd.f32 %v4715, %v5127
        %v5129 = vpop.f32.mrf.mxu0
        %5130 = vmatprep.mubr.bf16.mxu0 0
        %5131 = vmatmul.mubr.bf16.gmra.mxu0 %v4805
        %v5132 = vpop.f32.mrf.mxu0
        %v5133 = vadd.f32 %v4715, %v5132
        %v5134 = vpop.f32.mrf.mxu0
        %v5135 = vpop.f32.mrf.mxu0
        %v5136 = vadd.f32 %v4715, %v5135
        %v5137 = vpop.f32.mrf.mxu0
        %5138 = vmatprep.mubr.bf16.mxu0 0
        %5139 = vmatmul.mubr.bf16.gmra.mxu0 %v4808
        %v5140 = vpop.f32.mrf.mxu0
        %v5141 = vadd.f32 %v4715, %v5140
        %v5142 = vpop.f32.mrf.mxu0
        %v5143 = vpop.f32.mrf.mxu0
        %v5144 = vadd.f32 %v4715, %v5143
        %v5145 = vpop.f32.mrf.mxu0
        %5146 = vmatprep.mubr.bf16.mxu0 0
        %5147 = vmatmul.mubr.bf16.gmra.mxu0 %v4811
        %v5148 = vpop.f32.mrf.mxu0
        %v5149 = vadd.f32 %v4715, %v5148
        %v5150 = vpop.f32.mrf.mxu0
        %v5151 = vpop.f32.mrf.mxu0
        %v5152 = vadd.f32 %v4715, %v5151
        %v5153 = vpop.f32.mrf.mxu0
        %5154 = vmatprep.mubr.bf16.mxu0 0
        %5155 = vmatmul.mubr.bf16.gmra.mxu0 %v4814
        %v5156 = vpop.f32.mrf.mxu0
        %v5157 = vadd.f32 %v4715, %v5156
        %v5158 = vpop.f32.mrf.mxu0
        %v5159 = vpop.f32.mrf.mxu0
        %v5160 = vadd.f32 %v4715, %v5159
        %v5161 = vpop.f32.mrf.mxu0
        %5162 = vmatprep.mubr.bf16.mxu0 0
        %5163 = vmatmul.mubr.bf16.gmra.mxu0 %v4817
        %v5164 = vpop.f32.mrf.mxu0
        %v5165 = vadd.f32 %v4715, %v5164
        %v5166 = vpop.f32.mrf.mxu0
        %v5167 = vpop.f32.mrf.mxu0
        %v5168 = vadd.f32 %v4715, %v5167
        %v5169 = vpop.f32.mrf.mxu0
        %5170 = vmatprep.mubr.bf16.mxu0 0
        %5171 = vmatmul.mubr.bf16.gmra.mxu0 %v4820
        %v5172 = vpop.f32.mrf.mxu0
        %v5173 = vadd.f32 %v4715, %v5172
        %v5174 = vpop.f32.mrf.mxu0
        %v5175 = vpop.f32.mrf.mxu0
        %v5176 = vadd.f32 %v4715, %v5175
        %v5177 = vpop.f32.mrf.mxu0
        %5178 = vmatprep.mubr.bf16.mxu0 0
        %5179 = vmatmul.mubr.bf16.gmra.mxu0 %v4823
        %v5180 = vpop.f32.mrf.mxu0
        %v5181 = vadd.f32 %v4715, %v5180
        %v5182 = vpop.f32.mrf.mxu0
        %v5183 = vpop.f32.mrf.mxu0
        %v5184 = vadd.f32 %v4715, %v5183
        %v5185 = vpop.f32.mrf.mxu0
        %5186 = vmatprep.mubr.bf16.mxu0 0
        %5187 = vmatmul.mubr.bf16.gmra.mxu0 %v4826
        %v5188 = vpop.f32.mrf.mxu0
        %v5189 = vadd.f32 %v4715, %v5188
        %v5190 = vpop.f32.mrf.mxu0
        %v5191 = vpop.f32.mrf.mxu0
        %v5192 = vadd.f32 %v4715, %v5191
        %v5193 = vpop.f32.mrf.mxu0
        %5194 = vmatprep.mubr.bf16.mxu0 0
        %5195 = vmatmul.mubr.bf16.gmra.mxu0 %v4829
        %v5196 = vpop.f32.mrf.mxu0
        %v5197 = vadd.f32 %v4715, %v5196
        %v5198 = vpop.f32.mrf.mxu0
        %v5199 = vpop.f32.mrf.mxu0
        %v5200 = vadd.f32 %v4715, %v5199
        %v5201 = vpop.f32.mrf.mxu0
        %5202 = vmatprep.mubr.bf16.mxu0 0
        %5203 = vmatmul.mubr.bf16.gmra.mxu0 %v4832
        %v5204 = vpop.f32.mrf.mxu0
        %v5205 = vadd.f32 %v4715, %v5204
        %v5206 = vpop.f32.mrf.mxu0
        %v5207 = vpop.f32.mrf.mxu0
        %v5208 = vadd.f32 %v4715, %v5207
        %v5209 = vpop.f32.mrf.mxu0
        %5210 = vmatprep.mubr.bf16.mxu0 0
        %5211 = vmatmul.mubr.bf16.gmra.mxu0 %v4835
        %v5212 = vpop.f32.mrf.mxu0
        %v5213 = vadd.f32 %v4715, %v5212
        %v5214 = vpop.f32.mrf.mxu0
        %v5215 = vpop.f32.mrf.mxu0
        %v5216 = vadd.f32 %v4715, %v5215
        %v5217 = vpop.f32.mrf.mxu0
        %5218 = vmatprep.mubr.bf16.mxu0 0
        %5219 = vmatmul.mubr.bf16.gmra.mxu0 %v4838
        %v5220 = vpop.f32.mrf.mxu0
        %v5221 = vadd.f32 %v4715, %v5220
        %v5222 = vpop.f32.mrf.mxu0
        %v5223 = vpop.f32.mrf.mxu0
        %v5224 = vadd.f32 %v4715, %v5223
        %v5225 = vpop.f32.mrf.mxu0
        %5226 = vmatprep.mubr.bf16.mxu0 0
        %5227 = vmatmul.mubr.bf16.gmra.mxu0 %v4841
        %v5228 = vpop.f32.mrf.mxu0
        %v5229 = vadd.f32 %v4715, %v5228
        %v5230 = vpop.f32.mrf.mxu0
        %v5231 = vpop.f32.mrf.mxu0
        %v5232 = vadd.f32 %v4715, %v5231
        %v5233 = vpop.f32.mrf.mxu0
        %5234 = vmatprep.mubr.bf16.mxu0 0
        %5235 = vmatmul.mubr.bf16.gmra.mxu0 %v4844
        %v5236 = vpop.f32.mrf.mxu0
        %v5237 = vadd.f32 %v4715, %v5236
        %v5238 = vpop.f32.mrf.mxu0
        %v5239 = vpop.f32.mrf.mxu0
        %v5240 = vadd.f32 %v4715, %v5239
        %v5241 = vpop.f32.mrf.mxu0
        %5242 = vmatprep.mubr.bf16.mxu0 0
        %5243 = vmatmul.mubr.bf16.gmra.mxu0 %v4847
        %v5244 = vpop.f32.mrf.mxu0
        %v5245 = vadd.f32 %v4715, %v5244
        %v5246 = vpop.f32.mrf.mxu0
        %v5247 = vpop.f32.mrf.mxu0
        %v5248 = vadd.f32 %v4715, %v5247
        %v5249 = vpop.f32.mrf.mxu0
        %5250 = vmatprep.mubr.bf16.mxu0 0
        %5251 = vmatmul.mubr.bf16.gmra.mxu0 %v4850
        %v5252 = vpop.f32.mrf.mxu0
        %v5253 = vadd.f32 %v4715, %v5252
        %v5254 = vpop.f32.mrf.mxu0
        %v5255 = vpop.f32.mrf.mxu0
        %v5256 = vadd.f32 %v4715, %v5255
        %v5257 = vpop.f32.mrf.mxu0
        %5258 = vmatprep.mubr.bf16.mxu0 0
        %5259 = vmatmul.mubr.bf16.gmra.mxu0 %v4853
        %v5260 = vpop.f32.mrf.mxu0
        %v5261 = vadd.f32 %v4715, %v5260
        %v5262 = vpop.f32.mrf.mxu0
        %v5263 = vpop.f32.mrf.mxu0
        %v5264 = vadd.f32 %v4715, %v5263
        %v5265 = vpop.f32.mrf.mxu0
        %5266 = vmatprep.mubr.bf16.mxu0 0
        %5267 = vmatmul.mubr.bf16.gmra.mxu0 %v4856
        %v5268 = vpop.f32.mrf.mxu0
        %v5269 = vadd.f32 %v4715, %v5268
        %v5270 = vpop.f32.mrf.mxu0
        %v5271 = vpop.f32.mrf.mxu0
        %v5272 = vadd.f32 %v4715, %v5271
        %v5273 = vpop.f32.mrf.mxu0
        %5274 = vmatprep.mubr.bf16.mxu0 0
        %5275 = vmatmul.mubr.bf16.gmra.mxu0 %v4859
        %v5276 = vpop.f32.mrf.mxu0
        %v5277 = vadd.f32 %v4715, %v5276
        %v5278 = vpop.f32.mrf.mxu0
        %v5279 = vpop.f32.mrf.mxu0
        %v5280 = vadd.f32 %v4715, %v5279
        %v5281 = vpop.f32.mrf.mxu0
        %5282 = vmatprep.mubr.bf16.mxu0 0
        %5283 = vmatmul.mubr.bf16.gmra.mxu0 %v4862
        %v5284 = vpop.f32.mrf.mxu0
        %v5285 = vadd.f32 %v4715, %v5284
        %v5286 = vpop.f32.mrf.mxu0
        %v5287 = vpop.f32.mrf.mxu0
        %v5288 = vadd.f32 %v4715, %v5287
        %v5289 = vpop.f32.mrf.mxu0
        %5290 = vmatprep.mubr.bf16.mxu0 0
        %5291 = vmatmul.mubr.bf16.gmra.mxu0 %v4865
        %v5292 = vpop.f32.mrf.mxu0
        %v5293 = vadd.f32 %v4715, %v5292
        %v5294 = vpop.f32.mrf.mxu0
        %v5295 = vpop.f32.mrf.mxu0
        %v5296 = vadd.f32 %v4715, %v5295
        %v5297 = vpop.f32.mrf.mxu0
        %5298 = vmatprep.mubr.bf16.mxu0 0
        %5299 = vmatmul.mubr.bf16.gmra.mxu0 %v4868
        %v5300 = vpop.f32.mrf.mxu0
        %v5301 = vadd.f32 %v4715, %v5300
        %v5302 = vpop.f32.mrf.mxu0
        %v5303 = vpop.f32.mrf.mxu0
        %v5304 = vadd.f32 %v4715, %v5303
        %v5305 = vpop.f32.mrf.mxu0
        %5306 = vmatprep.mubr.bf16.mxu0 0
        %5307 = vmatmul.mubr.bf16.gmra.mxu0 %v4871
        %v5308 = vpop.f32.mrf.mxu0
        %v5309 = vadd.f32 %v4715, %v5308
        %v5310 = vpop.f32.mrf.mxu0
        %v5311 = vpop.f32.mrf.mxu0
        %v5312 = vadd.f32 %v4715, %v5311
        %v5313 = vpop.f32.mrf.mxu0
        %5314 = vmatprep.mubr.bf16.mxu0 0
        %5315 = vmatmul.mubr.bf16.gmra.mxu0 %v4874
        %v5316 = vpop.f32.mrf.mxu0
        %v5317 = vadd.f32 %v4715, %v5316
        %v5318 = vpop.f32.mrf.mxu0
        %v5319 = vpop.f32.mrf.mxu0
        %v5320 = vadd.f32 %v4715, %v5319
        %v5321 = vpop.f32.mrf.mxu0
        %5322 = vmatprep.mubr.bf16.mxu0 0
        %5323 = vmatmul.mubr.bf16.gmra.mxu0 %v4877
        %v5324 = vpop.f32.mrf.mxu0
        %v5325 = vadd.f32 %v4715, %v5324
        %v5326 = vpop.f32.mrf.mxu0
        %v5327 = vpop.f32.mrf.mxu0
        %v5328 = vadd.f32 %v4715, %v5327
        %v5329 = vpop.f32.mrf.mxu0
        %5330 = vmatprep.mubr.bf16.mxu0 0
        %5331 = vmatmul.mubr.bf16.gmra.mxu0 %v4880
        %v5332 = vpop.f32.mrf.mxu0
        %v5333 = vadd.f32 %v4715, %v5332
        %v5334 = vpop.f32.mrf.mxu0
        %v5335 = vpop.f32.mrf.mxu0
        %v5336 = vadd.f32 %v4715, %v5335
        %v5337 = vpop.f32.mrf.mxu0
        %5338 = vmatprep.mubr.bf16.mxu0 0
        %5339 = vmatmul.mubr.bf16.gmra.mxu0 %v4883
        %v5340 = vpop.f32.mrf.mxu0
        %v5341 = vadd.f32 %v4715, %v5340
        %v5342 = vpop.f32.mrf.mxu0
        %v5343 = vpop.f32.mrf.mxu0
        %v5344 = vadd.f32 %v4715, %v5343
        %v5345 = vpop.f32.mrf.mxu0
        %5346 = vmatprep.mubr.bf16.mxu0 0
        %5347 = vmatmul.mubr.bf16.gmra.mxu0 %v4886
        %v5348 = vpop.f32.mrf.mxu0
        %v5349 = vadd.f32 %v4715, %v5348
        %v5350 = vpop.f32.mrf.mxu0
        %v5351 = vpop.f32.mrf.mxu0
        %v5352 = vadd.f32 %v4715, %v5351
        %v5353 = vpop.f32.mrf.mxu0
        %5354 = vmatprep.mubr.bf16.mxu0 0
        %5355 = vmatmul.mubr.bf16.gmra.mxu0 %v4889
        %v5356 = vpop.f32.mrf.mxu0
        %v5357 = vadd.f32 %v4715, %v5356
        %v5358 = vpop.f32.mrf.mxu0
        %v5359 = vpop.f32.mrf.mxu0
        %v5360 = vadd.f32 %v4715, %v5359
        %v5361 = vpop.f32.mrf.mxu0
        %5362 = vmatprep.mubr.bf16.mxu0 0
        %5363 = vmatmul.mubr.bf16.gmra.mxu0 %v4892
        %v5364 = vpop.f32.mrf.mxu0
        %v5365 = vadd.f32 %v4715, %v5364
        %v5366 = vpop.f32.mrf.mxu0
        %v5367 = vpop.f32.mrf.mxu0
        %v5368 = vadd.f32 %v4715, %v5367
        %v5369 = vpop.f32.mrf.mxu0
        %5370 = vmatprep.mubr.bf16.mxu0 0
        %5371 = vmatmul.mubr.bf16.gmra.mxu0 %v4895
        %v5372 = vpop.f32.mrf.mxu0
        %v5373 = vadd.f32 %v4715, %v5372
        %v5374 = vpop.f32.mrf.mxu0
        %v5375 = vpop.f32.mrf.mxu0
        %v5376 = vadd.f32 %v4715, %v5375
        %v5377 = vpop.f32.mrf.mxu0
        %5378 = vmatprep.mubr.bf16.mxu0 0
        %5379 = vmatmul.mubr.bf16.gmra.mxu0 %v4898
        %v5380 = vpop.f32.mrf.mxu0
        %v5381 = vadd.f32 %v4715, %v5380
        %v5382 = vpop.f32.mrf.mxu0
        %v5383 = vpop.f32.mrf.mxu0
        %v5384 = vadd.f32 %v4715, %v5383
        %v5385 = vpop.f32.mrf.mxu0
        %5386 = vmatprep.mubr.bf16.mxu0 0
        %5387 = vmatmul.mubr.bf16.gmra.mxu0 %v4901
        %v5388 = vpop.f32.mrf.mxu0
        %v5389 = vadd.f32 %v4715, %v5388
        %v5390 = vpop.f32.mrf.mxu0
        %v5391 = vpop.f32.mrf.mxu0
        %v5392 = vadd.f32 %v4715, %v5391
        %v5393 = vpop.f32.mrf.mxu0
        %5394 = vmatprep.mubr.bf16.mxu0 0
        %5395 = vmatmul.mubr.bf16.gmra.mxu0 %v4904
        %v5396 = vpop.f32.mrf.mxu0
        %v5397 = vadd.f32 %v4715, %v5396
        %v5398 = vpop.f32.mrf.mxu0
        %v5399 = vpop.f32.mrf.mxu0
        %v5400 = vadd.f32 %v4715, %v5399
        %v5401 = vpop.f32.mrf.mxu0
        %5402 = vmatprep.mubr.bf16.mxu0 0
        %5403 = vmatmul.mubr.bf16.gmra.mxu0 %v4907
        %v5404 = vpop.f32.mrf.mxu0
        %v5405 = vadd.f32 %v4715, %v5404
        %v5406 = vpop.f32.mrf.mxu0
        %v5407 = vpop.f32.mrf.mxu0
        %v5408 = vadd.f32 %v4715, %v5407
        %v5409 = vpop.f32.mrf.mxu0
        %5410 = vmatprep.mubr.bf16.mxu0 0
        %5411 = vmatmul.mubr.bf16.gmra.mxu0 %v4910
        %v5412 = vpop.f32.mrf.mxu0
        %v5413 = vadd.f32 %v4715, %v5412
        %v5414 = vpop.f32.mrf.mxu0
        %v5415 = vpop.f32.mrf.mxu0
        %v5416 = vadd.f32 %v4715, %v5415
        %v5417 = vpop.f32.mrf.mxu0
        %5418 = vmatprep.mubr.bf16.mxu0 0
        %5419 = vmatmul.mubr.bf16.gmra.mxu0 %v4913
        %v5420 = vpop.f32.mrf.mxu0
        %v5421 = vadd.f32 %v4715, %v5420
        %v5422 = vpop.f32.mrf.mxu0
        %v5423 = vpop.f32.mrf.mxu0
        %v5424 = vadd.f32 %v4715, %v5423
        %v5425 = vpop.f32.mrf.mxu0
        %5426 = vmatprep.mubr.bf16.mxu0 0
        %5427 = vmatmul.mubr.bf16.gmra.mxu0 %v4916
        %v5428 = vpop.f32.mrf.mxu0
        %v5429 = vadd.f32 %v4715, %v5428
        %v5430 = vpop.f32.mrf.mxu0
        %v5431 = vpop.f32.mrf.mxu0
        %v5432 = vadd.f32 %v4715, %v5431
        %v5433 = vpop.f32.mrf.mxu0
        %5434 = vmatprep.mubr.bf16.mxu0 0
        %5435 = vmatmul.mubr.bf16.gmra.mxu0 %v4919
        %v5436 = vpop.f32.mrf.mxu0
        %v5437 = vadd.f32 %v4715, %v5436
        %v5438 = vpop.f32.mrf.mxu0
        %v5439 = vpop.f32.mrf.mxu0
        %v5440 = vadd.f32 %v4715, %v5439
        %v5441 = vpop.f32.mrf.mxu0
        %5442 = vmatprep.mubr.bf16.mxu0 0
        %5443 = vmatmul.mubr.bf16.gmra.mxu0 %v4922
        %v5444 = vpop.f32.mrf.mxu0
        %v5445 = vadd.f32 %v4715, %v5444
        %v5446 = vpop.f32.mrf.mxu0
        %v5447 = vpop.f32.mrf.mxu0
        %v5448 = vadd.f32 %v4715, %v5447
        %v5449 = vpop.f32.mrf.mxu0
        %5450 = vmatprep.mubr.bf16.mxu0 0
        %5451 = vmatmul.mubr.bf16.gmra.mxu0 %v4925
        %v5452 = vpop.f32.mrf.mxu0
        %v5453 = vadd.f32 %v4715, %v5452
        %v5454 = vpop.f32.mrf.mxu0
        %v5455 = vpop.f32.mrf.mxu0
        %v5456 = vadd.f32 %v4715, %v5455
        %v5457 = vpop.f32.mrf.mxu0
        %5458 = vmatprep.mubr.bf16.mxu0 0
        %5459 = vmatmul.mubr.bf16.gmra.mxu0 %v4928
        %v5460 = vpop.f32.mrf.mxu0
        %v5461 = vadd.f32 %v4715, %v5460
        %v5462 = vpop.f32.mrf.mxu0
        %v5463 = vpop.f32.mrf.mxu0
        %v5464 = vpop.f32.mrf.mxu0
        %5465 = vdwg.mxu0
        %v5466 = vmul.f32 %v4965, %v4965
        %v5467 = vmul.f32 %v4968, %v4968
        %v5468 = vmul.f32 %v4973, %v4973
        %v5469 = vmul.f32 %v4976, %v4976
        %v5470 = vmul.f32 %v4981, %v4981
        %v5471 = vmul.f32 %v4984, %v4984
        %v5472 = vmul.f32 %v4989, %v4989
        %v5473 = vmul.f32 %v4992, %v4992
        %v5474 = vmul.f32 %v4997, %v4997
        %v5475 = vmul.f32 %v5000, %v5000
        %v5476 = vmul.f32 %v5005, %v5005
        %v5477 = vmul.f32 %v5008, %v5008
        %v5478 = vmul.f32 %v5013, %v5013
        %v5479 = vmul.f32 %v5016, %v5016
        %v5480 = vmul.f32 %v5021, %v5021
        %v5481 = vmul.f32 %v5024, %v5024
        %v5482 = vmul.f32 %v5029, %v5029
        %v5483 = vmul.f32 %v5032, %v5032
        %v5484 = vmul.f32 %v5037, %v5037
        %v5485 = vmul.f32 %v5040, %v5040
        %v5486 = vmul.f32 %v5045, %v5045
        %v5487 = vmul.f32 %v5048, %v5048
        %v5488 = vmul.f32 %v5053, %v5053
        %v5489 = vmul.f32 %v5056, %v5056
        %v5490 = vmul.f32 %v5061, %v5061
        %v5491 = vmul.f32 %v5064, %v5064
        %v5492 = vmul.f32 %v5069, %v5069
        %v5493 = vmul.f32 %v5072, %v5072
        %v5494 = vmul.f32 %v5077, %v5077
        %v5495 = vmul.f32 %v5080, %v5080
        %v5496 = vmul.f32 %v5085, %v5085
        %v5497 = vmul.f32 %v5088, %v5088
        %v5498 = vmul.f32 %v5093, %v5093
        %v5499 = vmul.f32 %v5096, %v5096
        %v5500 = vmul.f32 %v5101, %v5101
        %v5501 = vmul.f32 %v5104, %v5104
        %v5502 = vmul.f32 %v5109, %v5109
        %v5503 = vmul.f32 %v5112, %v5112
        %v5504 = vmul.f32 %v5117, %v5117
        %v5505 = vmul.f32 %v5120, %v5120
        %v5506 = vmul.f32 %v5125, %v5125
        %v5507 = vmul.f32 %v5128, %v5128
        %v5508 = vmul.f32 %v5133, %v5133
        %v5509 = vmul.f32 %v5136, %v5136
        %v5510 = vmul.f32 %v5141, %v5141
        %v5511 = vmul.f32 %v5144, %v5144
        %v5512 = vmul.f32 %v5149, %v5149
        %v5513 = vmul.f32 %v5152, %v5152
        %v5514 = vmul.f32 %v5157, %v5157
        %v5515 = vmul.f32 %v5160, %v5160
        %v5516 = vmul.f32 %v5165, %v5165
        %v5517 = vmul.f32 %v5168, %v5168
        %v5518 = vmul.f32 %v5173, %v5173
        %v5519 = vmul.f32 %v5176, %v5176
        %v5520 = vmul.f32 %v5181, %v5181
        %v5521 = vmul.f32 %v5184, %v5184
        %v5522 = vmul.f32 %v5189, %v5189
        %v5523 = vmul.f32 %v5192, %v5192
        %v5524 = vmul.f32 %v5197, %v5197
        %v5525 = vmul.f32 %v5200, %v5200
        %v5526 = vmul.f32 %v5205, %v5205
        %v5527 = vmul.f32 %v5208, %v5208
        %v5528 = vmul.f32 %v5213, %v5213
        %v5529 = vmul.f32 %v5216, %v5216
        %v5530 = vmul.f32 %v5221, %v5221
        %v5531 = vmul.f32 %v5224, %v5224
        %v5532 = vmul.f32 %v5229, %v5229
        %v5533 = vmul.f32 %v5232, %v5232
        %v5534 = vmul.f32 %v5237, %v5237
        %v5535 = vmul.f32 %v5240, %v5240
        %v5536 = vmul.f32 %v5245, %v5245
        %v5537 = vmul.f32 %v5248, %v5248
        %v5538 = vmul.f32 %v5253, %v5253
        %v5539 = vmul.f32 %v5256, %v5256
        %v5540 = vmul.f32 %v5261, %v5261
        %v5541 = vmul.f32 %v5264, %v5264
        %v5542 = vmul.f32 %v5269, %v5269
        %v5543 = vmul.f32 %v5272, %v5272
        %v5544 = vmul.f32 %v5277, %v5277
        %v5545 = vmul.f32 %v5280, %v5280
        %v5546 = vmul.f32 %v5285, %v5285
        %v5547 = vmul.f32 %v5288, %v5288
        %v5548 = vmul.f32 %v5293, %v5293
        %v5549 = vmul.f32 %v5296, %v5296
        %v5550 = vmul.f32 %v5301, %v5301
        %v5551 = vmul.f32 %v5304, %v5304
        %v5552 = vmul.f32 %v5309, %v5309
        %v5553 = vmul.f32 %v5312, %v5312
        %v5554 = vmul.f32 %v5317, %v5317
        %v5555 = vmul.f32 %v5320, %v5320
        %v5556 = vmul.f32 %v5325, %v5325
        %v5557 = vmul.f32 %v5328, %v5328
        %v5558 = vmul.f32 %v5333, %v5333
        %v5559 = vmul.f32 %v5336, %v5336
        %v5560 = vmul.f32 %v5341, %v5341
        %v5561 = vmul.f32 %v5344, %v5344
        %v5562 = vmul.f32 %v5349, %v5349
        %v5563 = vmul.f32 %v5352, %v5352
        %v5564 = vmul.f32 %v5357, %v5357
        %v5565 = vmul.f32 %v5360, %v5360
        %v5566 = vmul.f32 %v5365, %v5365
        %v5567 = vmul.f32 %v5368, %v5368
        %v5568 = vmul.f32 %v5373, %v5373
        %v5569 = vmul.f32 %v5376, %v5376
        %v5570 = vmul.f32 %v5381, %v5381
        %v5571 = vmul.f32 %v5384, %v5384
        %v5572 = vmul.f32 %v5389, %v5389
        %v5573 = vmul.f32 %v5392, %v5392
        %v5574 = vmul.f32 %v5397, %v5397
        %v5575 = vmul.f32 %v5400, %v5400
        %v5576 = vmul.f32 %v5405, %v5405
        %v5577 = vmul.f32 %v5408, %v5408
        %v5578 = vmul.f32 %v5413, %v5413
        %v5579 = vmul.f32 %v5416, %v5416
        %v5580 = vmul.f32 %v5421, %v5421
        %v5581 = vmul.f32 %v5424, %v5424
        %v5582 = vmul.f32 %v5429, %v5429
        %v5583 = vmul.f32 %v5432, %v5432
        %v5584 = vmul.f32 %v5437, %v5437
        %v5585 = vmul.f32 %v5440, %v5440
        %v5586 = vmul.f32 %v5445, %v5445
        %v5587 = vmul.f32 %v5448, %v5448
        %v5588 = vmul.f32 %v5453, %v5453
        %v5589 = vmul.f32 %v5456, %v5456
        %v5590 = vmul.f32 %v5461, %v5461
        %v5591 = vmul.f32 %v4965, %v5466
        %v5592 = vmul.f32 %v4968, %v5467
        %v5593 = vmul.f32 %v4973, %v5468
        %v5594 = vmul.f32 %v4976, %v5469
        %v5595 = vmul.f32 %v4981, %v5470
        %v5596 = vmul.f32 %v4984, %v5471
        %v5597 = vmul.f32 %v4989, %v5472
        %v5598 = vmul.f32 %v4992, %v5473
        %v5599 = vmul.f32 %v4997, %v5474
        %v5600 = vmul.f32 %v5000, %v5475
        %v5601 = vmul.f32 %v5005, %v5476
        %v5602 = vmul.f32 %v5008, %v5477
        %v5603 = vmul.f32 %v5013, %v5478
        %v5604 = vmul.f32 %v5016, %v5479
        %v5605 = vmul.f32 %v5021, %v5480
        %v5606 = vmul.f32 %v5024, %v5481
        %v5607 = vmul.f32 %v5029, %v5482
        %v5608 = vmul.f32 %v5032, %v5483
        %v5609 = vmul.f32 %v5037, %v5484
        %v5610 = vmul.f32 %v5040, %v5485
        %v5611 = vmul.f32 %v5045, %v5486
        %v5612 = vmul.f32 %v5048, %v5487
        %v5613 = vmul.f32 %v5053, %v5488
        %v5614 = vmul.f32 %v5056, %v5489
        %v5615 = vmul.f32 %v5061, %v5490
        %v5616 = vmul.f32 %v5064, %v5491
        %v5617 = vmul.f32 %v5069, %v5492
        %v5618 = vmul.f32 %v5072, %v5493
        %v5619 = vmul.f32 %v5077, %v5494
        %v5620 = vmul.f32 %v5080, %v5495
        %v5621 = vmul.f32 %v5085, %v5496
        %v5622 = vmul.f32 %v5088, %v5497
        %v5623 = vmul.f32 %v5093, %v5498
        %v5624 = vmul.f32 %v5096, %v5499
        %v5625 = vmul.f32 %v5101, %v5500
        %v5626 = vmul.f32 %v5104, %v5501
        %v5627 = vmul.f32 %v5109, %v5502
        %v5628 = vmul.f32 %v5112, %v5503
        %v5629 = vmul.f32 %v5117, %v5504
        %v5630 = vmul.f32 %v5120, %v5505
        %v5631 = vmul.f32 %v5125, %v5506
        %v5632 = vmul.f32 %v5128, %v5507
        %v5633 = vmul.f32 %v5133, %v5508
        %v5634 = vmul.f32 %v5136, %v5509
        %v5635 = vmul.f32 %v5141, %v5510
        %v5636 = vmul.f32 %v5144, %v5511
        %v5637 = vmul.f32 %v5149, %v5512
        %v5638 = vmul.f32 %v5152, %v5513
        %v5639 = vmul.f32 %v5157, %v5514
        %v5640 = vmul.f32 %v5160, %v5515
        %v5641 = vmul.f32 %v5165, %v5516
        %v5642 = vmul.f32 %v5168, %v5517
        %v5643 = vmul.f32 %v5173, %v5518
        %v5644 = vmul.f32 %v5176, %v5519
        %v5645 = vmul.f32 %v5181, %v5520
        %v5646 = vmul.f32 %v5184, %v5521
        %v5647 = vmul.f32 %v5189, %v5522
        %v5648 = vmul.f32 %v5192, %v5523
        %v5649 = vmul.f32 %v5197, %v5524
        %v5650 = vmul.f32 %v5200, %v5525
        %v5651 = vmul.f32 %v5205, %v5526
        %v5652 = vmul.f32 %v5208, %v5527
        %v5653 = vmul.f32 %v5213, %v5528
        %v5654 = vmul.f32 %v5216, %v5529
        %v5655 = vmul.f32 %v5221, %v5530
        %v5656 = vmul.f32 %v5224, %v5531
        %v5657 = vmul.f32 %v5229, %v5532
        %v5658 = vmul.f32 %v5232, %v5533
        %v5659 = vmul.f32 %v5237, %v5534
        %v5660 = vmul.f32 %v5240, %v5535
        %v5661 = vmul.f32 %v5245, %v5536
        %v5662 = vmul.f32 %v5248, %v5537
        %v5663 = vmul.f32 %v5253, %v5538
        %v5664 = vmul.f32 %v5256, %v5539
        %v5665 = vmul.f32 %v5261, %v5540
        %v5666 = vmul.f32 %v5264, %v5541
        %v5667 = vmul.f32 %v5269, %v5542
        %v5668 = vmul.f32 %v5272, %v5543
        %v5669 = vmul.f32 %v5277, %v5544
        %v5670 = vmul.f32 %v5280, %v5545
        %v5671 = vmul.f32 %v5285, %v5546
        %v5672 = vmul.f32 %v5288, %v5547
        %v5673 = vmul.f32 %v5293, %v5548
        %v5674 = vmul.f32 %v5296, %v5549
        %v5675 = vmul.f32 %v5301, %v5550
        %v5676 = vmul.f32 %v5304, %v5551
        %v5677 = vmul.f32 %v5309, %v5552
        %v5678 = vmul.f32 %v5312, %v5553
        %v5679 = vmul.f32 %v5317, %v5554
        %v5680 = vmul.f32 %v5320, %v5555
        %v5681 = vmul.f32 %v5325, %v5556
        %v5682 = vmul.f32 %v5328, %v5557
        %v5683 = vmul.f32 %v5333, %v5558
        %v5684 = vmul.f32 %v5336, %v5559
        %v5685 = vmul.f32 %v5341, %v5560
        %v5686 = vmul.f32 %v5344, %v5561
        %v5687 = vmul.f32 %v5349, %v5562
        %v5688 = vmul.f32 %v5352, %v5563
        %v5689 = vmul.f32 %v5357, %v5564
        %v5690 = vmul.f32 %v5360, %v5565
        %v5691 = vmul.f32 %v5365, %v5566
        %v5692 = vmul.f32 %v5368, %v5567
        %v5693 = vmul.f32 %v5373, %v5568
        %v5694 = vmul.f32 %v5376, %v5569
        %v5695 = vmul.f32 %v5381, %v5570
        %v5696 = vmul.f32 %v5384, %v5571
        %v5697 = vmul.f32 %v5389, %v5572
        %v5698 = vmul.f32 %v5392, %v5573
        %v5699 = vmul.f32 %v5397, %v5574
        %v5700 = vmul.f32 %v5400, %v5575
        %v5701 = vmul.f32 %v5405, %v5576
        %v5702 = vmul.f32 %v5408, %v5577
        %v5703 = vmul.f32 %v5413, %v5578
        %v5704 = vmul.f32 %v5416, %v5579
        %v5705 = vmul.f32 %v5421, %v5580
        %v5706 = vmul.f32 %v5424, %v5581
        %v5707 = vmul.f32 %v5429, %v5582
        %v5708 = vmul.f32 %v5432, %v5583
        %v5709 = vmul.f32 %v5437, %v5584
        %v5710 = vmul.f32 %v5440, %v5585
        %v5711 = vmul.f32 %v5445, %v5586
        %v5712 = vmul.f32 %v5448, %v5587
        %v5713 = vmul.f32 %v5453, %v5588
        %v5714 = vmul.f32 %v5456, %v5589
        %v5715 = vmul.f32 %v5461, %v5590
        %v5716 = vmul.f32 %v5591, 0.044715
        %v5717 = vmul.f32 %v5592, 0.044715
        %v5718 = vmul.f32 %v5593, 0.044715
        %v5719 = vmul.f32 %v5594, 0.044715
        %v5720 = vmul.f32 %v5595, 0.044715
        %v5721 = vmul.f32 %v5596, 0.044715
        %v5722 = vmul.f32 %v5597, 0.044715
        %v5723 = vmul.f32 %v5598, 0.044715
        %v5724 = vmul.f32 %v5599, 0.044715
        %v5725 = vmul.f32 %v5600, 0.044715
        %v5726 = vmul.f32 %v5601, 0.044715
        %v5727 = vmul.f32 %v5602, 0.044715
        %v5728 = vmul.f32 %v5603, 0.044715
        %v5729 = vmul.f32 %v5604, 0.044715
        %v5730 = vmul.f32 %v5605, 0.044715
        %v5731 = vmul.f32 %v5606, 0.044715
        %v5732 = vmul.f32 %v5607, 0.044715
        %v5733 = vmul.f32 %v5608, 0.044715
        %v5734 = vmul.f32 %v5609, 0.044715
        %v5735 = vmul.f32 %v5610, 0.044715
        %v5736 = vmul.f32 %v5611, 0.044715
        %v5737 = vmul.f32 %v5612, 0.044715
        %v5738 = vmul.f32 %v5613, 0.044715
        %v5739 = vmul.f32 %v5614, 0.044715
        %v5740 = vmul.f32 %v5615, 0.044715
        %v5741 = vmul.f32 %v5616, 0.044715
        %v5742 = vmul.f32 %v5617, 0.044715
        %v5743 = vmul.f32 %v5618, 0.044715
        %v5744 = vmul.f32 %v5619, 0.044715
        %v5745 = vmul.f32 %v5620, 0.044715
        %v5746 = vmul.f32 %v5621, 0.044715
        %v5747 = vmul.f32 %v5622, 0.044715
        %v5748 = vmul.f32 %v5623, 0.044715
        %v5749 = vmul.f32 %v5624, 0.044715
        %v5750 = vmul.f32 %v5625, 0.044715
        %v5751 = vmul.f32 %v5626, 0.044715
        %v5752 = vmul.f32 %v5627, 0.044715
        %v5753 = vmul.f32 %v5628, 0.044715
        %v5754 = vmul.f32 %v5629, 0.044715
        %v5755 = vmul.f32 %v5630, 0.044715
        %v5756 = vmul.f32 %v5631, 0.044715
        %v5757 = vmul.f32 %v5632, 0.044715
        %v5758 = vmul.f32 %v5633, 0.044715
        %v5759 = vmul.f32 %v5634, 0.044715
        %v5760 = vmul.f32 %v5635, 0.044715
        %v5761 = vmul.f32 %v5636, 0.044715
        %v5762 = vmul.f32 %v5637, 0.044715
        %v5763 = vmul.f32 %v5638, 0.044715
        %v5764 = vmul.f32 %v5639, 0.044715
        %v5765 = vmul.f32 %v5640, 0.044715
        %v5766 = vmul.f32 %v5641, 0.044715
        %v5767 = vmul.f32 %v5642, 0.044715
        %v5768 = vmul.f32 %v5643, 0.044715
        %v5769 = vmul.f32 %v5644, 0.044715
        %v5770 = vmul.f32 %v5645, 0.044715
        %v5771 = vmul.f32 %v5646, 0.044715
        %v5772 = vmul.f32 %v5647, 0.044715
        %v5773 = vmul.f32 %v5648, 0.044715
        %v5774 = vmul.f32 %v5649, 0.044715
        %v5775 = vmul.f32 %v5650, 0.044715
        %v5776 = vmul.f32 %v5651, 0.044715
        %v5777 = vmul.f32 %v5652, 0.044715
        %v5778 = vmul.f32 %v5653, 0.044715
        %v5779 = vmul.f32 %v5654, 0.044715
        %v5780 = vmul.f32 %v5655, 0.044715
        %v5781 = vmul.f32 %v5656, 0.044715
        %v5782 = vmul.f32 %v5657, 0.044715
        %v5783 = vmul.f32 %v5658, 0.044715
        %v5784 = vmul.f32 %v5659, 0.044715
        %v5785 = vmul.f32 %v5660, 0.044715
        %v5786 = vmul.f32 %v5661, 0.044715
        %v5787 = vmul.f32 %v5662, 0.044715
        %v5788 = vmul.f32 %v5663, 0.044715
        %v5789 = vmul.f32 %v5664, 0.044715
        %v5790 = vmul.f32 %v5665, 0.044715
        %v5791 = vmul.f32 %v5666, 0.044715
        %v5792 = vmul.f32 %v5667, 0.044715
        %v5793 = vmul.f32 %v5668, 0.044715
        %v5794 = vmul.f32 %v5669, 0.044715
        %v5795 = vmul.f32 %v5670, 0.044715
        %v5796 = vmul.f32 %v5671, 0.044715
        %v5797 = vmul.f32 %v5672, 0.044715
        %v5798 = vmul.f32 %v5673, 0.044715
        %v5799 = vmul.f32 %v5674, 0.044715
        %v5800 = vmul.f32 %v5675, 0.044715
        %v5801 = vmul.f32 %v5676, 0.044715
        %v5802 = vmul.f32 %v5677, 0.044715
        %v5803 = vmul.f32 %v5678, 0.044715
        %v5804 = vmul.f32 %v5679, 0.044715
        %v5805 = vmul.f32 %v5680, 0.044715
        %v5806 = vmul.f32 %v5681, 0.044715
        %v5807 = vmul.f32 %v5682, 0.044715
        %v5808 = vmul.f32 %v5683, 0.044715
        %v5809 = vmul.f32 %v5684, 0.044715
        %v5810 = vmul.f32 %v5685, 0.044715
        %v5811 = vmul.f32 %v5686, 0.044715
        %v5812 = vmul.f32 %v5687, 0.044715
        %v5813 = vmul.f32 %v5688, 0.044715
        %v5814 = vmul.f32 %v5689, 0.044715
        %v5815 = vmul.f32 %v5690, 0.044715
        %v5816 = vmul.f32 %v5691, 0.044715
        %v5817 = vmul.f32 %v5692, 0.044715
        %v5818 = vmul.f32 %v5693, 0.044715
        %v5819 = vmul.f32 %v5694, 0.044715
        %v5820 = vmul.f32 %v5695, 0.044715
        %v5821 = vmul.f32 %v5696, 0.044715
        %v5822 = vmul.f32 %v5697, 0.044715
        %v5823 = vmul.f32 %v5698, 0.044715
        %v5824 = vmul.f32 %v5699, 0.044715
        %v5825 = vmul.f32 %v5700, 0.044715
        %v5826 = vmul.f32 %v5701, 0.044715
        %v5827 = vmul.f32 %v5702, 0.044715
        %v5828 = vmul.f32 %v5703, 0.044715
        %v5829 = vmul.f32 %v5704, 0.044715
        %v5830 = vmul.f32 %v5705, 0.044715
        %v5831 = vmul.f32 %v5706, 0.044715
        %v5832 = vmul.f32 %v5707, 0.044715
        %v5833 = vmul.f32 %v5708, 0.044715
        %v5834 = vmul.f32 %v5709, 0.044715
        %v5835 = vmul.f32 %v5710, 0.044715
        %v5836 = vmul.f32 %v5711, 0.044715
        %v5837 = vmul.f32 %v5712, 0.044715
        %v5838 = vmul.f32 %v5713, 0.044715
        %v5839 = vmul.f32 %v5714, 0.044715
        %v5840 = vmul.f32 %v5715, 0.044715
        %v5841 = vadd.f32 %v4965, %v5716
        %v5842 = vadd.f32 %v4968, %v5717
        %v5843 = vadd.f32 %v4973, %v5718
        %v5844 = vadd.f32 %v4976, %v5719
        %v5845 = vadd.f32 %v4981, %v5720
        %v5846 = vadd.f32 %v4984, %v5721
        %v5847 = vadd.f32 %v4989, %v5722
        %v5848 = vadd.f32 %v4992, %v5723
        %v5849 = vadd.f32 %v4997, %v5724
        %v5850 = vadd.f32 %v5000, %v5725
        %v5851 = vadd.f32 %v5005, %v5726
        %v5852 = vadd.f32 %v5008, %v5727
        %v5853 = vadd.f32 %v5013, %v5728
        %v5854 = vadd.f32 %v5016, %v5729
        %v5855 = vadd.f32 %v5021, %v5730
        %v5856 = vadd.f32 %v5024, %v5731
        %v5857 = vadd.f32 %v5029, %v5732
        %v5858 = vadd.f32 %v5032, %v5733
        %v5859 = vadd.f32 %v5037, %v5734
        %v5860 = vadd.f32 %v5040, %v5735
        %v5861 = vadd.f32 %v5045, %v5736
        %v5862 = vadd.f32 %v5048, %v5737
        %v5863 = vadd.f32 %v5053, %v5738
        %v5864 = vadd.f32 %v5056, %v5739
        %v5865 = vadd.f32 %v5061, %v5740
        %v5866 = vadd.f32 %v5064, %v5741
        %v5867 = vadd.f32 %v5069, %v5742
        %v5868 = vadd.f32 %v5072, %v5743
        %v5869 = vadd.f32 %v5077, %v5744
        %v5870 = vadd.f32 %v5080, %v5745
        %v5871 = vadd.f32 %v5085, %v5746
        %v5872 = vadd.f32 %v5088, %v5747
        %v5873 = vadd.f32 %v5093, %v5748
        %v5874 = vadd.f32 %v5096, %v5749
        %v5875 = vadd.f32 %v5101, %v5750
        %v5876 = vadd.f32 %v5104, %v5751
        %v5877 = vadd.f32 %v5109, %v5752
        %v5878 = vadd.f32 %v5112, %v5753
        %v5879 = vadd.f32 %v5117, %v5754
        %v5880 = vadd.f32 %v5120, %v5755
        %v5881 = vadd.f32 %v5125, %v5756
        %v5882 = vadd.f32 %v5128, %v5757
        %v5883 = vadd.f32 %v5133, %v5758
        %v5884 = vadd.f32 %v5136, %v5759
        %v5885 = vadd.f32 %v5141, %v5760
        %v5886 = vadd.f32 %v5144, %v5761
        %v5887 = vadd.f32 %v5149, %v5762
        %v5888 = vadd.f32 %v5152, %v5763
        %v5889 = vadd.f32 %v5157, %v5764
        %v5890 = vadd.f32 %v5160, %v5765
        %v5891 = vadd.f32 %v5165, %v5766
        %v5892 = vadd.f32 %v5168, %v5767
        %v5893 = vadd.f32 %v5173, %v5768
        %v5894 = vadd.f32 %v5176, %v5769
        %v5895 = vadd.f32 %v5181, %v5770
        %v5896 = vadd.f32 %v5184, %v5771
        %v5897 = vadd.f32 %v5189, %v5772
        %v5898 = vadd.f32 %v5192, %v5773
        %v5899 = vadd.f32 %v5197, %v5774
        %v5900 = vadd.f32 %v5200, %v5775
        %v5901 = vadd.f32 %v5205, %v5776
        %v5902 = vadd.f32 %v5208, %v5777
        %v5903 = vadd.f32 %v5213, %v5778
        %v5904 = vadd.f32 %v5216, %v5779
        %v5905 = vadd.f32 %v5221, %v5780
        %v5906 = vadd.f32 %v5224, %v5781
        %v5907 = vadd.f32 %v5229, %v5782
        %v5908 = vadd.f32 %v5232, %v5783
        %v5909 = vadd.f32 %v5237, %v5784
        %v5910 = vadd.f32 %v5240, %v5785
        %v5911 = vadd.f32 %v5245, %v5786
        %v5912 = vadd.f32 %v5248, %v5787
        %v5913 = vadd.f32 %v5253, %v5788
        %v5914 = vadd.f32 %v5256, %v5789
        %v5915 = vadd.f32 %v5261, %v5790
        %v5916 = vadd.f32 %v5264, %v5791
        %v5917 = vadd.f32 %v5269, %v5792
        %v5918 = vadd.f32 %v5272, %v5793
        %v5919 = vadd.f32 %v5277, %v5794
        %v5920 = vadd.f32 %v5280, %v5795
        %v5921 = vadd.f32 %v5285, %v5796
        %v5922 = vadd.f32 %v5288, %v5797
        %v5923 = vadd.f32 %v5293, %v5798
        %v5924 = vadd.f32 %v5296, %v5799
        %v5925 = vadd.f32 %v5301, %v5800
        %v5926 = vadd.f32 %v5304, %v5801
        %v5927 = vadd.f32 %v5309, %v5802
        %v5928 = vadd.f32 %v5312, %v5803
        %v5929 = vadd.f32 %v5317, %v5804
        %v5930 = vadd.f32 %v5320, %v5805
        %v5931 = vadd.f32 %v5325, %v5806
        %v5932 = vadd.f32 %v5328, %v5807
        %v5933 = vadd.f32 %v5333, %v5808
        %v5934 = vadd.f32 %v5336, %v5809
        %v5935 = vadd.f32 %v5341, %v5810
        %v5936 = vadd.f32 %v5344, %v5811
        %v5937 = vadd.f32 %v5349, %v5812
        %v5938 = vadd.f32 %v5352, %v5813
        %v5939 = vadd.f32 %v5357, %v5814
        %v5940 = vadd.f32 %v5360, %v5815
        %v5941 = vadd.f32 %v5365, %v5816
        %v5942 = vadd.f32 %v5368, %v5817
        %v5943 = vadd.f32 %v5373, %v5818
        %v5944 = vadd.f32 %v5376, %v5819
        %v5945 = vadd.f32 %v5381, %v5820
        %v5946 = vadd.f32 %v5384, %v5821
        %v5947 = vadd.f32 %v5389, %v5822
        %v5948 = vadd.f32 %v5392, %v5823
        %v5949 = vadd.f32 %v5397, %v5824
        %v5950 = vadd.f32 %v5400, %v5825
        %v5951 = vadd.f32 %v5405, %v5826
        %v5952 = vadd.f32 %v5408, %v5827
        %v5953 = vadd.f32 %v5413, %v5828
        %v5954 = vadd.f32 %v5416, %v5829
        %v5955 = vadd.f32 %v5421, %v5830
        %v5956 = vadd.f32 %v5424, %v5831
        %v5957 = vadd.f32 %v5429, %v5832
        %v5958 = vadd.f32 %v5432, %v5833
        %v5959 = vadd.f32 %v5437, %v5834
        %v5960 = vadd.f32 %v5440, %v5835
        %v5961 = vadd.f32 %v5445, %v5836
        %v5962 = vadd.f32 %v5448, %v5837
        %v5963 = vadd.f32 %v5453, %v5838
        %v5964 = vadd.f32 %v5456, %v5839
        %v5965 = vadd.f32 %v5461, %v5840
        %v5966 = vmul.f32 %v5841, 0.7978846
        %v5967 = vmul.f32 %v5842, 0.7978846
        %v5968 = vmul.f32 %v5843, 0.7978846
        %v5969 = vmul.f32 %v5844, 0.7978846
        %v5970 = vmul.f32 %v5845, 0.7978846
        %v5971 = vmul.f32 %v5846, 0.7978846
        %v5972 = vmul.f32 %v5847, 0.7978846
        %v5973 = vmul.f32 %v5848, 0.7978846
        %v5974 = vmul.f32 %v5849, 0.7978846
        %v5975 = vmul.f32 %v5850, 0.7978846
        %v5976 = vmul.f32 %v5851, 0.7978846
        %v5977 = vmul.f32 %v5852, 0.7978846
        %v5978 = vmul.f32 %v5853, 0.7978846
        %v5979 = vmul.f32 %v5854, 0.7978846
        %v5980 = vmul.f32 %v5855, 0.7978846
        %v5981 = vmul.f32 %v5856, 0.7978846
        %v5982 = vmul.f32 %v5857, 0.7978846
        %v5983 = vmul.f32 %v5858, 0.7978846
        %v5984 = vmul.f32 %v5859, 0.7978846
        %v5985 = vmul.f32 %v5860, 0.7978846
        %v5986 = vmul.f32 %v5861, 0.7978846
        %v5987 = vmul.f32 %v5862, 0.7978846
        %v5988 = vmul.f32 %v5863, 0.7978846
        %v5989 = vmul.f32 %v5864, 0.7978846
        %v5990 = vmul.f32 %v5865, 0.7978846
        %v5991 = vmul.f32 %v5866, 0.7978846
        %v5992 = vmul.f32 %v5867, 0.7978846
        %v5993 = vmul.f32 %v5868, 0.7978846
        %v5994 = vmul.f32 %v5869, 0.7978846
        %v5995 = vmul.f32 %v5870, 0.7978846
        %v5996 = vmul.f32 %v5871, 0.7978846
        %v5997 = vmul.f32 %v5872, 0.7978846
        %v5998 = vmul.f32 %v5873, 0.7978846
        %v5999 = vmul.f32 %v5874, 0.7978846
        %v6000 = vmul.f32 %v5875, 0.7978846
        %v6001 = vmul.f32 %v5876, 0.7978846
        %v6002 = vmul.f32 %v5877, 0.7978846
        %v6003 = vmul.f32 %v5878, 0.7978846
        %v6004 = vmul.f32 %v5879, 0.7978846
        %v6005 = vmul.f32 %v5880, 0.7978846
        %v6006 = vmul.f32 %v5881, 0.7978846
        %v6007 = vmul.f32 %v5882, 0.7978846
        %v6008 = vmul.f32 %v5883, 0.7978846
        %v6009 = vmul.f32 %v5884, 0.7978846
        %v6010 = vmul.f32 %v5885, 0.7978846
        %v6011 = vmul.f32 %v5886, 0.7978846
        %v6012 = vmul.f32 %v5887, 0.7978846
        %v6013 = vmul.f32 %v5888, 0.7978846
        %v6014 = vmul.f32 %v5889, 0.7978846
        %v6015 = vmul.f32 %v5890, 0.7978846
        %v6016 = vmul.f32 %v5891, 0.7978846
        %v6017 = vmul.f32 %v5892, 0.7978846
        %v6018 = vmul.f32 %v5893, 0.7978846
        %v6019 = vmul.f32 %v5894, 0.7978846
        %v6020 = vmul.f32 %v5895, 0.7978846
        %v6021 = vmul.f32 %v5896, 0.7978846
        %v6022 = vmul.f32 %v5897, 0.7978846
        %v6023 = vmul.f32 %v5898, 0.7978846
        %v6024 = vmul.f32 %v5899, 0.7978846
        %v6025 = vmul.f32 %v5900, 0.7978846
        %v6026 = vmul.f32 %v5901, 0.7978846
        %v6027 = vmul.f32 %v5902, 0.7978846
        %v6028 = vmul.f32 %v5903, 0.7978846
        %v6029 = vmul.f32 %v5904, 0.7978846
        %v6030 = vmul.f32 %v5905, 0.7978846
        %v6031 = vmul.f32 %v5906, 0.7978846
        %v6032 = vmul.f32 %v5907, 0.7978846
        %v6033 = vmul.f32 %v5908, 0.7978846
        %v6034 = vmul.f32 %v5909, 0.7978846
        %v6035 = vmul.f32 %v5910, 0.7978846
        %v6036 = vmul.f32 %v5911, 0.7978846
        %v6037 = vmul.f32 %v5912, 0.7978846
        %v6038 = vmul.f32 %v5913, 0.7978846
        %v6039 = vmul.f32 %v5914, 0.7978846
        %v6040 = vmul.f32 %v5915, 0.7978846
        %v6041 = vmul.f32 %v5916, 0.7978846
        %v6042 = vmul.f32 %v5917, 0.7978846
        %v6043 = vmul.f32 %v5918, 0.7978846
        %v6044 = vmul.f32 %v5919, 0.7978846
        %v6045 = vmul.f32 %v5920, 0.7978846
        %v6046 = vmul.f32 %v5921, 0.7978846
        %v6047 = vmul.f32 %v5922, 0.7978846
        %v6048 = vmul.f32 %v5923, 0.7978846
        %v6049 = vmul.f32 %v5924, 0.7978846
        %v6050 = vmul.f32 %v5925, 0.7978846
        %v6051 = vmul.f32 %v5926, 0.7978846
        %v6052 = vmul.f32 %v5927, 0.7978846
        %v6053 = vmul.f32 %v5928, 0.7978846
        %v6054 = vmul.f32 %v5929, 0.7978846
        %v6055 = vmul.f32 %v5930, 0.7978846
        %v6056 = vmul.f32 %v5931, 0.7978846
        %v6057 = vmul.f32 %v5932, 0.7978846
        %v6058 = vmul.f32 %v5933, 0.7978846
        %v6059 = vmul.f32 %v5934, 0.7978846
        %v6060 = vmul.f32 %v5935, 0.7978846
        %v6061 = vmul.f32 %v5936, 0.7978846
        %v6062 = vmul.f32 %v5937, 0.7978846
        %v6063 = vmul.f32 %v5938, 0.7978846
        %v6064 = vmul.f32 %v5939, 0.7978846
        %v6065 = vmul.f32 %v5940, 0.7978846
        %v6066 = vmul.f32 %v5941, 0.7978846
        %v6067 = vmul.f32 %v5942, 0.7978846
        %v6068 = vmul.f32 %v5943, 0.7978846
        %v6069 = vmul.f32 %v5944, 0.7978846
        %v6070 = vmul.f32 %v5945, 0.7978846
        %v6071 = vmul.f32 %v5946, 0.7978846
        %v6072 = vmul.f32 %v5947, 0.7978846
        %v6073 = vmul.f32 %v5948, 0.7978846
        %v6074 = vmul.f32 %v5949, 0.7978846
        %v6075 = vmul.f32 %v5950, 0.7978846
        %v6076 = vmul.f32 %v5951, 0.7978846
        %v6077 = vmul.f32 %v5952, 0.7978846
        %v6078 = vmul.f32 %v5953, 0.7978846
        %v6079 = vmul.f32 %v5954, 0.7978846
        %v6080 = vmul.f32 %v5955, 0.7978846
        %v6081 = vmul.f32 %v5956, 0.7978846
        %v6082 = vmul.f32 %v5957, 0.7978846
        %v6083 = vmul.f32 %v5958, 0.7978846
        %v6084 = vmul.f32 %v5959, 0.7978846
        %v6085 = vmul.f32 %v5960, 0.7978846
        %v6086 = vmul.f32 %v5961, 0.7978846
        %v6087 = vmul.f32 %v5962, 0.7978846
        %v6088 = vmul.f32 %v5963, 0.7978846
        %v6089 = vmul.f32 %v5964, 0.7978846
        %v6090 = vmul.f32 %v5965, 0.7978846
        %v6091 = vtanh.pop %v5966
        %v6092 = vtanh.pop %v5967
        %v6093 = vtanh.pop %v5968
        %v6094 = vtanh.pop %v5969
        %v6095 = vtanh.pop %v5970
        %v6096 = vtanh.pop %v5971
        %v6097 = vtanh.pop %v5972
        %v6098 = vtanh.pop %v5973
        %v6099 = vtanh.pop %v5974
        %v6100 = vtanh.pop %v5975
        %v6101 = vtanh.pop %v5976
        %v6102 = vtanh.pop %v5977
        %v6103 = vtanh.pop %v5978
        %v6104 = vtanh.pop %v5979
        %v6105 = vtanh.pop %v5980
        %v6106 = vtanh.pop %v5981
        %v6107 = vtanh.pop %v5982
        %v6108 = vtanh.pop %v5983
        %v6109 = vtanh.pop %v5984
        %v6110 = vtanh.pop %v5985
        %v6111 = vtanh.pop %v5986
        %v6112 = vtanh.pop %v5987
        %v6113 = vtanh.pop %v5988
        %v6114 = vtanh.pop %v5989
        %v6115 = vtanh.pop %v5990
        %v6116 = vtanh.pop %v5991
        %v6117 = vtanh.pop %v5992
        %v6118 = vtanh.pop %v5993
        %v6119 = vtanh.pop %v5994
        %v6120 = vtanh.pop %v5995
        %v6121 = vtanh.pop %v5996
        %v6122 = vtanh.pop %v5997
        %v6123 = vtanh.pop %v5998
        %v6124 = vtanh.pop %v5999
        %v6125 = vtanh.pop %v6000
        %v6126 = vtanh.pop %v6001
        %v6127 = vtanh.pop %v6002
        %v6128 = vtanh.pop %v6003
        %v6129 = vtanh.pop %v6004
        %v6130 = vtanh.pop %v6005
        %v6131 = vtanh.pop %v6006
        %v6132 = vtanh.pop %v6007
        %v6133 = vtanh.pop %v6008
        %v6134 = vtanh.pop %v6009
        %v6135 = vtanh.pop %v6010
        %v6136 = vtanh.pop %v6011
        %v6137 = vtanh.pop %v6012
        %v6138 = vtanh.pop %v6013
        %v6139 = vtanh.pop %v6014
        %v6140 = vtanh.pop %v6015
        %v6141 = vtanh.pop %v6016
        %v6142 = vtanh.pop %v6017
        %v6143 = vtanh.pop %v6018
        %v6144 = vtanh.pop %v6019
        %v6145 = vtanh.pop %v6020
        %v6146 = vtanh.pop %v6021
        %v6147 = vtanh.pop %v6022
        %v6148 = vtanh.pop %v6023
        %v6149 = vtanh.pop %v6024
        %v6150 = vtanh.pop %v6025
        %v6151 = vtanh.pop %v6026
        %v6152 = vtanh.pop %v6027
        %v6153 = vtanh.pop %v6028
        %v6154 = vtanh.pop %v6029
        %v6155 = vtanh.pop %v6030
        %v6156 = vtanh.pop %v6031
        %v6157 = vtanh.pop %v6032
        %v6158 = vtanh.pop %v6033
        %v6159 = vtanh.pop %v6034
        %v6160 = vtanh.pop %v6035
        %v6161 = vtanh.pop %v6036
        %v6162 = vtanh.pop %v6037
        %v6163 = vtanh.pop %v6038
        %v6164 = vtanh.pop %v6039
        %v6165 = vtanh.pop %v6040
        %v6166 = vtanh.pop %v6041
        %v6167 = vtanh.pop %v6042
        %v6168 = vtanh.pop %v6043
        %v6169 = vtanh.pop %v6044
        %v6170 = vtanh.pop %v6045
        %v6171 = vtanh.pop %v6046
        %v6172 = vtanh.pop %v6047
        %v6173 = vtanh.pop %v6048
        %v6174 = vtanh.pop %v6049
        %v6175 = vtanh.pop %v6050
        %v6176 = vtanh.pop %v6051
        %v6177 = vtanh.pop %v6052
        %v6178 = vtanh.pop %v6053
        %v6179 = vtanh.pop %v6054
        %v6180 = vtanh.pop %v6055
        %v6181 = vtanh.pop %v6056
        %v6182 = vtanh.pop %v6057
        %v6183 = vtanh.pop %v6058
        %v6184 = vtanh.pop %v6059
        %v6185 = vtanh.pop %v6060
        %v6186 = vtanh.pop %v6061
        %v6187 = vtanh.pop %v6062
        %v6188 = vtanh.pop %v6063
        %v6189 = vtanh.pop %v6064
        %v6190 = vtanh.pop %v6065
        %v6191 = vtanh.pop %v6066
        %v6192 = vtanh.pop %v6067
        %v6193 = vtanh.pop %v6068
        %v6194 = vtanh.pop %v6069
        %v6195 = vtanh.pop %v6070
        %v6196 = vtanh.pop %v6071
        %v6197 = vtanh.pop %v6072
        %v6198 = vtanh.pop %v6073
        %v6199 = vtanh.pop %v6074
        %v6200 = vtanh.pop %v6075
        %v6201 = vtanh.pop %v6076
        %v6202 = vtanh.pop %v6077
        %v6203 = vtanh.pop %v6078
        %v6204 = vtanh.pop %v6079
        %v6205 = vtanh.pop %v6080
        %v6206 = vtanh.pop %v6081
        %v6207 = vtanh.pop %v6082
        %v6208 = vtanh.pop %v6083
        %v6209 = vtanh.pop %v6084
        %v6210 = vtanh.pop %v6085
        %v6211 = vtanh.pop %v6086
        %v6212 = vtanh.pop %v6087
        %v6213 = vtanh.pop %v6088
        %v6214 = vtanh.pop %v6089
        %v6215 = vtanh.pop %v6090
        %v6216 = vadd.f32 %v6091, 1.0
        %v6217 = vadd.f32 %v6092, 1.0
        %v6218 = vadd.f32 %v6093, 1.0
        %v6219 = vadd.f32 %v6094, 1.0
        %v6220 = vadd.f32 %v6095, 1.0
        %v6221 = vadd.f32 %v6096, 1.0
        %v6222 = vadd.f32 %v6097, 1.0
        %v6223 = vadd.f32 %v6098, 1.0
        %v6224 = vadd.f32 %v6099, 1.0
        %v6225 = vadd.f32 %v6100, 1.0
        %v6226 = vadd.f32 %v6101, 1.0
        %v6227 = vadd.f32 %v6102, 1.0
        %v6228 = vadd.f32 %v6103, 1.0
        %v6229 = vadd.f32 %v6104, 1.0
        %v6230 = vadd.f32 %v6105, 1.0
        %v6231 = vadd.f32 %v6106, 1.0
        %v6232 = vadd.f32 %v6107, 1.0
        %v6233 = vadd.f32 %v6108, 1.0
        %v6234 = vadd.f32 %v6109, 1.0
        %v6235 = vadd.f32 %v6110, 1.0
        %v6236 = vadd.f32 %v6111, 1.0
        %v6237 = vadd.f32 %v6112, 1.0
        %v6238 = vadd.f32 %v6113, 1.0
        %v6239 = vadd.f32 %v6114, 1.0
        %v6240 = vadd.f32 %v6115, 1.0
        %v6241 = vadd.f32 %v6116, 1.0
        %v6242 = vadd.f32 %v6117, 1.0
        %v6243 = vadd.f32 %v6118, 1.0
        %v6244 = vadd.f32 %v6119, 1.0
        %v6245 = vadd.f32 %v6120, 1.0
        %v6246 = vadd.f32 %v6121, 1.0
        %v6247 = vadd.f32 %v6122, 1.0
        %v6248 = vadd.f32 %v6123, 1.0
        %v6249 = vadd.f32 %v6124, 1.0
        %v6250 = vadd.f32 %v6125, 1.0
        %v6251 = vadd.f32 %v6126, 1.0
        %v6252 = vadd.f32 %v6127, 1.0
        %v6253 = vadd.f32 %v6128, 1.0
        %v6254 = vadd.f32 %v6129, 1.0
        %v6255 = vadd.f32 %v6130, 1.0
        %v6256 = vadd.f32 %v6131, 1.0
        %v6257 = vadd.f32 %v6132, 1.0
        %v6258 = vadd.f32 %v6133, 1.0
        %v6259 = vadd.f32 %v6134, 1.0
        %v6260 = vadd.f32 %v6135, 1.0
        %v6261 = vadd.f32 %v6136, 1.0
        %v6262 = vadd.f32 %v6137, 1.0
        %v6263 = vadd.f32 %v6138, 1.0
        %v6264 = vadd.f32 %v6139, 1.0
        %v6265 = vadd.f32 %v6140, 1.0
        %v6266 = vadd.f32 %v6141, 1.0
        %v6267 = vadd.f32 %v6142, 1.0
        %v6268 = vadd.f32 %v6143, 1.0
        %v6269 = vadd.f32 %v6144, 1.0
        %v6270 = vadd.f32 %v6145, 1.0
        %v6271 = vadd.f32 %v6146, 1.0
        %v6272 = vadd.f32 %v6147, 1.0
        %v6273 = vadd.f32 %v6148, 1.0
        %v6274 = vadd.f32 %v6149, 1.0
        %v6275 = vadd.f32 %v6150, 1.0
        %v6276 = vadd.f32 %v6151, 1.0
        %v6277 = vadd.f32 %v6152, 1.0
        %v6278 = vadd.f32 %v6153, 1.0
        %v6279 = vadd.f32 %v6154, 1.0
        %v6280 = vadd.f32 %v6155, 1.0
        %v6281 = vadd.f32 %v6156, 1.0
        %v6282 = vadd.f32 %v6157, 1.0
        %v6283 = vadd.f32 %v6158, 1.0
        %v6284 = vadd.f32 %v6159, 1.0
        %v6285 = vadd.f32 %v6160, 1.0
        %v6286 = vadd.f32 %v6161, 1.0
        %v6287 = vadd.f32 %v6162, 1.0
        %v6288 = vadd.f32 %v6163, 1.0
        %v6289 = vadd.f32 %v6164, 1.0
        %v6290 = vadd.f32 %v6165, 1.0
        %v6291 = vadd.f32 %v6166, 1.0
        %v6292 = vadd.f32 %v6167, 1.0
        %v6293 = vadd.f32 %v6168, 1.0
        %v6294 = vadd.f32 %v6169, 1.0
        %v6295 = vadd.f32 %v6170, 1.0
        %v6296 = vadd.f32 %v6171, 1.0
        %v6297 = vadd.f32 %v6172, 1.0
        %v6298 = vadd.f32 %v6173, 1.0
        %v6299 = vadd.f32 %v6174, 1.0
        %v6300 = vadd.f32 %v6175, 1.0
        %v6301 = vadd.f32 %v6176, 1.0
        %v6302 = vadd.f32 %v6177, 1.0
        %v6303 = vadd.f32 %v6178, 1.0
        %v6304 = vadd.f32 %v6179, 1.0
        %v6305 = vadd.f32 %v6180, 1.0
        %v6306 = vadd.f32 %v6181, 1.0
        %v6307 = vadd.f32 %v6182, 1.0
        %v6308 = vadd.f32 %v6183, 1.0
        %v6309 = vadd.f32 %v6184, 1.0
        %v6310 = vadd.f32 %v6185, 1.0
        %v6311 = vadd.f32 %v6186, 1.0
        %v6312 = vadd.f32 %v6187, 1.0
        %v6313 = vadd.f32 %v6188, 1.0
        %v6314 = vadd.f32 %v6189, 1.0
        %v6315 = vadd.f32 %v6190, 1.0
        %v6316 = vadd.f32 %v6191, 1.0
        %v6317 = vadd.f32 %v6192, 1.0
        %v6318 = vadd.f32 %v6193, 1.0
        %v6319 = vadd.f32 %v6194, 1.0
        %v6320 = vadd.f32 %v6195, 1.0
        %v6321 = vadd.f32 %v6196, 1.0
        %v6322 = vadd.f32 %v6197, 1.0
        %v6323 = vadd.f32 %v6198, 1.0
        %v6324 = vadd.f32 %v6199, 1.0
        %v6325 = vadd.f32 %v6200, 1.0
        %v6326 = vadd.f32 %v6201, 1.0
        %v6327 = vadd.f32 %v6202, 1.0
        %v6328 = vadd.f32 %v6203, 1.0
        %v6329 = vadd.f32 %v6204, 1.0
        %v6330 = vadd.f32 %v6205, 1.0
        %v6331 = vadd.f32 %v6206, 1.0
        %v6332 = vadd.f32 %v6207, 1.0
        %v6333 = vadd.f32 %v6208, 1.0
        %v6334 = vadd.f32 %v6209, 1.0
        %v6335 = vadd.f32 %v6210, 1.0
        %v6336 = vadd.f32 %v6211, 1.0
        %v6337 = vadd.f32 %v6212, 1.0
        %v6338 = vadd.f32 %v6213, 1.0
        %v6339 = vadd.f32 %v6214, 1.0
        %v6340 = vadd.f32 %v6215, 1.0
        %v6341 = vmul.f32 %v6216, 0.5
        %v6342 = vmul.f32 %v6217, 0.5
        %v6343 = vmul.f32 %v6218, 0.5
        %v6344 = vmul.f32 %v6219, 0.5
        %v6345 = vmul.f32 %v6220, 0.5
        %v6346 = vmul.f32 %v6221, 0.5
        %v6347 = vmul.f32 %v6222, 0.5
        %v6348 = vmul.f32 %v6223, 0.5
        %v6349 = vmul.f32 %v6224, 0.5
        %v6350 = vmul.f32 %v6225, 0.5
        %v6351 = vmul.f32 %v6226, 0.5
        %v6352 = vmul.f32 %v6227, 0.5
        %v6353 = vmul.f32 %v6228, 0.5
        %v6354 = vmul.f32 %v6229, 0.5
        %v6355 = vmul.f32 %v6230, 0.5
        %v6356 = vmul.f32 %v6231, 0.5
        %v6357 = vmul.f32 %v6232, 0.5
        %v6358 = vmul.f32 %v6233, 0.5
        %v6359 = vmul.f32 %v6234, 0.5
        %v6360 = vmul.f32 %v6235, 0.5
        %v6361 = vmul.f32 %v6236, 0.5
        %v6362 = vmul.f32 %v6237, 0.5
        %v6363 = vmul.f32 %v6238, 0.5
        %v6364 = vmul.f32 %v6239, 0.5
        %v6365 = vmul.f32 %v6240, 0.5
        %v6366 = vmul.f32 %v6241, 0.5
        %v6367 = vmul.f32 %v6242, 0.5
        %v6368 = vmul.f32 %v6243, 0.5
        %v6369 = vmul.f32 %v6244, 0.5
        %v6370 = vmul.f32 %v6245, 0.5
        %v6371 = vmul.f32 %v6246, 0.5
        %v6372 = vmul.f32 %v6247, 0.5
        %v6373 = vmul.f32 %v6248, 0.5
        %v6374 = vmul.f32 %v6249, 0.5
        %v6375 = vmul.f32 %v6250, 0.5
        %v6376 = vmul.f32 %v6251, 0.5
        %v6377 = vmul.f32 %v6252, 0.5
        %v6378 = vmul.f32 %v6253, 0.5
        %v6379 = vmul.f32 %v6254, 0.5
        %v6380 = vmul.f32 %v6255, 0.5
        %v6381 = vmul.f32 %v6256, 0.5
        %v6382 = vmul.f32 %v6257, 0.5
        %v6383 = vmul.f32 %v6258, 0.5
        %v6384 = vmul.f32 %v6259, 0.5
        %v6385 = vmul.f32 %v6260, 0.5
        %v6386 = vmul.f32 %v6261, 0.5
        %v6387 = vmul.f32 %v6262, 0.5
        %v6388 = vmul.f32 %v6263, 0.5
        %v6389 = vmul.f32 %v6264, 0.5
        %v6390 = vmul.f32 %v6265, 0.5
        %v6391 = vmul.f32 %v6266, 0.5
        %v6392 = vmul.f32 %v6267, 0.5
        %v6393 = vmul.f32 %v6268, 0.5
        %v6394 = vmul.f32 %v6269, 0.5
        %v6395 = vmul.f32 %v6270, 0.5
        %v6396 = vmul.f32 %v6271, 0.5
        %v6397 = vmul.f32 %v6272, 0.5
        %v6398 = vmul.f32 %v6273, 0.5
        %v6399 = vmul.f32 %v6274, 0.5
        %v6400 = vmul.f32 %v6275, 0.5
        %v6401 = vmul.f32 %v6276, 0.5
        %v6402 = vmul.f32 %v6277, 0.5
        %v6403 = vmul.f32 %v6278, 0.5
        %v6404 = vmul.f32 %v6279, 0.5
        %v6405 = vmul.f32 %v6280, 0.5
        %v6406 = vmul.f32 %v6281, 0.5
        %v6407 = vmul.f32 %v6282, 0.5
        %v6408 = vmul.f32 %v6283, 0.5
        %v6409 = vmul.f32 %v6284, 0.5
        %v6410 = vmul.f32 %v6285, 0.5
        %v6411 = vmul.f32 %v6286, 0.5
        %v6412 = vmul.f32 %v6287, 0.5
        %v6413 = vmul.f32 %v6288, 0.5
        %v6414 = vmul.f32 %v6289, 0.5
        %v6415 = vmul.f32 %v6290, 0.5
        %v6416 = vmul.f32 %v6291, 0.5
        %v6417 = vmul.f32 %v6292, 0.5
        %v6418 = vmul.f32 %v6293, 0.5
        %v6419 = vmul.f32 %v6294, 0.5
        %v6420 = vmul.f32 %v6295, 0.5
        %v6421 = vmul.f32 %v6296, 0.5
        %v6422 = vmul.f32 %v6297, 0.5
        %v6423 = vmul.f32 %v6298, 0.5
        %v6424 = vmul.f32 %v6299, 0.5
        %v6425 = vmul.f32 %v6300, 0.5
        %v6426 = vmul.f32 %v6301, 0.5
        %v6427 = vmul.f32 %v6302, 0.5
        %v6428 = vmul.f32 %v6303, 0.5
        %v6429 = vmul.f32 %v6304, 0.5
        %v6430 = vmul.f32 %v6305, 0.5
        %v6431 = vmul.f32 %v6306, 0.5
        %v6432 = vmul.f32 %v6307, 0.5
        %v6433 = vmul.f32 %v6308, 0.5
        %v6434 = vmul.f32 %v6309, 0.5
        %v6435 = vmul.f32 %v6310, 0.5
        %v6436 = vmul.f32 %v6311, 0.5
        %v6437 = vmul.f32 %v6312, 0.5
        %v6438 = vmul.f32 %v6313, 0.5
        %v6439 = vmul.f32 %v6314, 0.5
        %v6440 = vmul.f32 %v6315, 0.5
        %v6441 = vmul.f32 %v6316, 0.5
        %v6442 = vmul.f32 %v6317, 0.5
        %v6443 = vmul.f32 %v6318, 0.5
        %v6444 = vmul.f32 %v6319, 0.5
        %v6445 = vmul.f32 %v6320, 0.5
        %v6446 = vmul.f32 %v6321, 0.5
        %v6447 = vmul.f32 %v6322, 0.5
        %v6448 = vmul.f32 %v6323, 0.5
        %v6449 = vmul.f32 %v6324, 0.5
        %v6450 = vmul.f32 %v6325, 0.5
        %v6451 = vmul.f32 %v6326, 0.5
        %v6452 = vmul.f32 %v6327, 0.5
        %v6453 = vmul.f32 %v6328, 0.5
        %v6454 = vmul.f32 %v6329, 0.5
        %v6455 = vmul.f32 %v6330, 0.5
        %v6456 = vmul.f32 %v6331, 0.5
        %v6457 = vmul.f32 %v6332, 0.5
        %v6458 = vmul.f32 %v6333, 0.5
        %v6459 = vmul.f32 %v6334, 0.5
        %v6460 = vmul.f32 %v6335, 0.5
        %v6461 = vmul.f32 %v6336, 0.5
        %v6462 = vmul.f32 %v6337, 0.5
        %v6463 = vmul.f32 %v6338, 0.5
        %v6464 = vmul.f32 %v6339, 0.5
        %v6465 = vmul.f32 %v6340, 0.5
        %v6466 = vmul.f32 %v4965, %v6341
        %v6467 = vmul.f32 %v4968, %v6342
        %v6468 = vmul.f32 %v4973, %v6343
        %v6469 = vmul.f32 %v4976, %v6344
        %v6470 = vmul.f32 %v4981, %v6345
        %v6471 = vmul.f32 %v4984, %v6346
        %v6472 = vmul.f32 %v4989, %v6347
        %v6473 = vmul.f32 %v4992, %v6348
        %v6474 = vmul.f32 %v4997, %v6349
        %v6475 = vmul.f32 %v5000, %v6350
        %v6476 = vmul.f32 %v5005, %v6351
        %v6477 = vmul.f32 %v5008, %v6352
        %v6478 = vmul.f32 %v5013, %v6353
        %v6479 = vmul.f32 %v5016, %v6354
        %v6480 = vmul.f32 %v5021, %v6355
        %v6481 = vmul.f32 %v5024, %v6356
        %v6482 = vmul.f32 %v5029, %v6357
        %v6483 = vmul.f32 %v5032, %v6358
        %v6484 = vmul.f32 %v5037, %v6359
        %v6485 = vmul.f32 %v5040, %v6360
        %v6486 = vmul.f32 %v5045, %v6361
        %v6487 = vmul.f32 %v5048, %v6362
        %v6488 = vmul.f32 %v5053, %v6363
        %v6489 = vmul.f32 %v5056, %v6364
        %v6490 = vmul.f32 %v5061, %v6365
        %v6491 = vmul.f32 %v5064, %v6366
        %v6492 = vmul.f32 %v5069, %v6367
        %v6493 = vmul.f32 %v5072, %v6368
        %v6494 = vmul.f32 %v5077, %v6369
        %v6495 = vmul.f32 %v5080, %v6370
        %v6496 = vmul.f32 %v5085, %v6371
        %v6497 = vmul.f32 %v5088, %v6372
        %v6498 = vmul.f32 %v5093, %v6373
        %v6499 = vmul.f32 %v5096, %v6374
        %v6500 = vmul.f32 %v5101, %v6375
        %v6501 = vmul.f32 %v5104, %v6376
        %v6502 = vmul.f32 %v5109, %v6377
        %v6503 = vmul.f32 %v5112, %v6378
        %v6504 = vmul.f32 %v5117, %v6379
        %v6505 = vmul.f32 %v5120, %v6380
        %v6506 = vmul.f32 %v5125, %v6381
        %v6507 = vmul.f32 %v5128, %v6382
        %v6508 = vmul.f32 %v5133, %v6383
        %v6509 = vmul.f32 %v5136, %v6384
        %v6510 = vmul.f32 %v5141, %v6385
        %v6511 = vmul.f32 %v5144, %v6386
        %v6512 = vmul.f32 %v5149, %v6387
        %v6513 = vmul.f32 %v5152, %v6388
        %v6514 = vmul.f32 %v5157, %v6389
        %v6515 = vmul.f32 %v5160, %v6390
        %v6516 = vmul.f32 %v5165, %v6391
        %v6517 = vmul.f32 %v5168, %v6392
        %v6518 = vmul.f32 %v5173, %v6393
        %v6519 = vmul.f32 %v5176, %v6394
        %v6520 = vmul.f32 %v5181, %v6395
        %v6521 = vmul.f32 %v5184, %v6396
        %v6522 = vmul.f32 %v5189, %v6397
        %v6523 = vmul.f32 %v5192, %v6398
        %v6524 = vmul.f32 %v5197, %v6399
        %v6525 = vmul.f32 %v5200, %v6400
        %v6526 = vmul.f32 %v5205, %v6401
        %v6527 = vmul.f32 %v5208, %v6402
        %v6528 = vmul.f32 %v5213, %v6403
        %v6529 = vmul.f32 %v5216, %v6404
        %v6530 = vmul.f32 %v5221, %v6405
        %v6531 = vmul.f32 %v5224, %v6406
        %v6532 = vmul.f32 %v5229, %v6407
        %v6533 = vmul.f32 %v5232, %v6408
        %v6534 = vmul.f32 %v5237, %v6409
        %v6535 = vmul.f32 %v5240, %v6410
        %v6536 = vmul.f32 %v5245, %v6411
        %v6537 = vmul.f32 %v5248, %v6412
        %v6538 = vmul.f32 %v5253, %v6413
        %v6539 = vmul.f32 %v5256, %v6414
        %v6540 = vmul.f32 %v5261, %v6415
        %v6541 = vmul.f32 %v5264, %v6416
        %v6542 = vmul.f32 %v5269, %v6417
        %v6543 = vmul.f32 %v5272, %v6418
        %v6544 = vmul.f32 %v5277, %v6419
        %v6545 = vmul.f32 %v5280, %v6420
        %v6546 = vmul.f32 %v5285, %v6421
        %v6547 = vmul.f32 %v5288, %v6422
        %v6548 = vmul.f32 %v5293, %v6423
        %v6549 = vmul.f32 %v5296, %v6424
        %v6550 = vmul.f32 %v5301, %v6425
        %v6551 = vmul.f32 %v5304, %v6426
        %v6552 = vmul.f32 %v5309, %v6427
        %v6553 = vmul.f32 %v5312, %v6428
        %v6554 = vmul.f32 %v5317, %v6429
        %v6555 = vmul.f32 %v5320, %v6430
        %v6556 = vmul.f32 %v5325, %v6431
        %v6557 = vmul.f32 %v5328, %v6432
        %v6558 = vmul.f32 %v5333, %v6433
        %v6559 = vmul.f32 %v5336, %v6434
        %v6560 = vmul.f32 %v5341, %v6435
        %v6561 = vmul.f32 %v5344, %v6436
        %v6562 = vmul.f32 %v5349, %v6437
        %v6563 = vmul.f32 %v5352, %v6438
        %v6564 = vmul.f32 %v5357, %v6439
        %v6565 = vmul.f32 %v5360, %v6440
        %v6566 = vmul.f32 %v5365, %v6441
        %v6567 = vmul.f32 %v5368, %v6442
        %v6568 = vmul.f32 %v5373, %v6443
        %v6569 = vmul.f32 %v5376, %v6444
        %v6570 = vmul.f32 %v5381, %v6445
        %v6571 = vmul.f32 %v5384, %v6446
        %v6572 = vmul.f32 %v5389, %v6447
        %v6573 = vmul.f32 %v5392, %v6448
        %v6574 = vmul.f32 %v5397, %v6449
        %v6575 = vmul.f32 %v5400, %v6450
        %v6576 = vmul.f32 %v5405, %v6451
        %v6577 = vmul.f32 %v5408, %v6452
        %v6578 = vmul.f32 %v5413, %v6453
        %v6579 = vmul.f32 %v5416, %v6454
        %v6580 = vmul.f32 %v5421, %v6455
        %v6581 = vmul.f32 %v5424, %v6456
        %v6582 = vmul.f32 %v5429, %v6457
        %v6583 = vmul.f32 %v5432, %v6458
        %v6584 = vmul.f32 %v5437, %v6459
        %v6585 = vmul.f32 %v5440, %v6460
        %v6586 = vmul.f32 %v5445, %v6461
        %v6587 = vmul.f32 %v5448, %v6462
        %v6588 = vmul.f32 %v5453, %v6463
        %v6589 = vmul.f32 %v5456, %v6464
        %v6590 = vmul.f32 %v5461, %v6465
        %v6591 = vpack.c.bf16 %v6467, %v6466
        %v6592 = vpack.c.bf16 %v6469, %v6468
        %v6593 = vpack.c.bf16 %v6471, %v6470
        %v6594 = vpack.c.bf16 %v6473, %v6472
        %v6595 = vpack.c.bf16 %v6475, %v6474
        %v6596 = vpack.c.bf16 %v6477, %v6476
        %v6597 = vpack.c.bf16 %v6479, %v6478
        %v6598 = vpack.c.bf16 %v6481, %v6480
        %v6599 = vpack.c.bf16 %v6483, %v6482
        %v6600 = vpack.c.bf16 %v6485, %v6484
        %v6601 = vpack.c.bf16 %v6487, %v6486
        %v6602 = vpack.c.bf16 %v6489, %v6488
        %v6603 = vpack.c.bf16 %v6491, %v6490
        %v6604 = vpack.c.bf16 %v6493, %v6492
        %v6605 = vpack.c.bf16 %v6495, %v6494
        %v6606 = vpack.c.bf16 %v6497, %v6496
        %v6607 = vpack.c.bf16 %v6499, %v6498
        %v6608 = vpack.c.bf16 %v6501, %v6500
        %v6609 = vpack.c.bf16 %v6503, %v6502
        %v6610 = vpack.c.bf16 %v6505, %v6504
        %v6611 = vpack.c.bf16 %v6507, %v6506
        %v6612 = vpack.c.bf16 %v6509, %v6508
        %v6613 = vpack.c.bf16 %v6511, %v6510
        %v6614 = vpack.c.bf16 %v6513, %v6512
        %v6615 = vpack.c.bf16 %v6515, %v6514
        %v6616 = vpack.c.bf16 %v6517, %v6516
        %v6617 = vpack.c.bf16 %v6519, %v6518
        %v6618 = vpack.c.bf16 %v6521, %v6520
        %v6619 = vpack.c.bf16 %v6523, %v6522
        %v6620 = vpack.c.bf16 %v6525, %v6524
        %v6621 = vpack.c.bf16 %v6527, %v6526
        %v6622 = vpack.c.bf16 %v6529, %v6528
        %v6623 = vpack.c.bf16 %v6531, %v6530
        %v6624 = vpack.c.bf16 %v6533, %v6532
        %v6625 = vpack.c.bf16 %v6535, %v6534
        %v6626 = vpack.c.bf16 %v6537, %v6536
        %v6627 = vpack.c.bf16 %v6539, %v6538
        %v6628 = vpack.c.bf16 %v6541, %v6540
        %v6629 = vpack.c.bf16 %v6543, %v6542
        %v6630 = vpack.c.bf16 %v6545, %v6544
        %v6631 = vpack.c.bf16 %v6547, %v6546
        %v6632 = vpack.c.bf16 %v6549, %v6548
        %v6633 = vpack.c.bf16 %v6551, %v6550
        %v6634 = vpack.c.bf16 %v6553, %v6552
        %v6635 = vpack.c.bf16 %v6555, %v6554
        %v6636 = vpack.c.bf16 %v6557, %v6556
        %v6637 = vpack.c.bf16 %v6559, %v6558
        %v6638 = vpack.c.bf16 %v6561, %v6560
        %v6639 = vpack.c.bf16 %v6563, %v6562
        %v6640 = vpack.c.bf16 %v6565, %v6564
        %v6641 = vpack.c.bf16 %v6567, %v6566
        %v6642 = vpack.c.bf16 %v6569, %v6568
        %v6643 = vpack.c.bf16 %v6571, %v6570
        %v6644 = vpack.c.bf16 %v6573, %v6572
        %v6645 = vpack.c.bf16 %v6575, %v6574
        %v6646 = vpack.c.bf16 %v6577, %v6576
        %v6647 = vpack.c.bf16 %v6579, %v6578
        %v6648 = vpack.c.bf16 %v6581, %v6580
        %v6649 = vpack.c.bf16 %v6583, %v6582
        %v6650 = vpack.c.bf16 %v6585, %v6584
        %v6651 = vpack.c.bf16 %v6587, %v6586
        %v6652 = vpack.c.bf16 %v6589, %v6588
        %v6653 = vpack.c.bf16 %v6590, %v6590
        %v6654 = vld [vmem:[%s7] sm:$0xff]
        %v6655 = vld [vmem:[%s7 + $0x8] sm:$0xff]
        %v6656 = vld [vmem:[%s7 + $0x10] sm:$0xff]
        %v6657 = vld [vmem:[%s7 + $0x18] sm:$0xff]
        %v6658 = vld [vmem:[%s7 + $0x20] sm:$0xff]
        %v6659 = vld [vmem:[%s7 + $0x28] sm:$0xff]
        %v6660 = vld [vmem:[%s7 + $0x30] sm:$0xff]
        %v6661 = vld [vmem:[%s7 + $0x38] sm:$0xff]
        %v6662 = vld [vmem:[%s7 + $0x40] sm:$0xff]
        %v6663 = vld [vmem:[%s7 + $0x48] sm:$0xff]
        %v6664 = vld [vmem:[%s7 + $0x50] sm:$0xff]
        %v6665 = vld [vmem:[%s7 + $0x58] sm:$0xff]
        %v6666 = vld [vmem:[%s7 + $0x60] sm:$0xff]
        %v6667 = vld [vmem:[%s7 + $0x68] sm:$0xff]
        %v6668 = vld [vmem:[%s7 + $0x70] sm:$0xff]
        %v6669 = vld [vmem:[%s7 + $0x78] sm:$0xff]
        %v6670 = vld [vmem:[%s8] sm:$0x3]
        %v6672 = vlaneseq
        %v6673 = vshrl.u32 %v6672, 7
        %v6674 = vsub.s32 0, %v6673
        %v6675 = vrot.slane %v6670, %v6674
        %v6676 = vlaneseq
        %v6677 = vshrl.u32 %v6676, 7
        %v6678 = vsub.s32 1, %v6677
        %v6679 = vrot.slane %v6670, %v6678
        %v6698 = vunpack.c.l.b16 %v6654
        %v6699 = vunpack.c.h.b16 %v6654
        %v6700 = vunpack.c.l.b16 %v6655
        %v6701 = vunpack.c.h.b16 %v6655
        %v6702 = vunpack.c.l.b16 %v6656
        %v6703 = vunpack.c.h.b16 %v6656
        %v6704 = vunpack.c.l.b16 %v6657
        %v6705 = vunpack.c.h.b16 %v6657
        %v6706 = vunpack.c.l.b16 %v6658
        %v6707 = vunpack.c.h.b16 %v6658
        %v6708 = vunpack.c.l.b16 %v6659
        %v6709 = vunpack.c.h.b16 %v6659
        %v6710 = vunpack.c.l.b16 %v6660
        %v6711 = vunpack.c.h.b16 %v6660
        %v6712 = vunpack.c.l.b16 %v6661
        %v6713 = vunpack.c.h.b16 %v6661
        %v6714 = vunpack.c.l.b16 %v6662
        %v6715 = vunpack.c.h.b16 %v6662
        %v6716 = vunpack.c.l.b16 %v6663
        %v6717 = vunpack.c.h.b16 %v6663
        %v6718 = vunpack.c.l.b16 %v6664
        %v6719 = vunpack.c.h.b16 %v6664
        %v6720 = vunpack.c.l.b16 %v6665
        %v6721 = vunpack.c.h.b16 %v6665
        %v6722 = vunpack.c.l.b16 %v6666
        %v6723 = vunpack.c.h.b16 %v6666
        %v6724 = vunpack.c.l.b16 %v6667
        %v6725 = vunpack.c.h.b16 %v6667
        %v6726 = vunpack.c.l.b16 %v6668
        %v6727 = vunpack.c.h.b16 %v6668
        %v6728 = vunpack.c.l.b16 %v6669
        %v6729 = vunpack.c.h.b16 %v6669
        %v6730 = vpack.c.b16 %v6700, %v6698
        %v6731 = vpack.c.b16 %v6701, %v6699
        %v6732 = vpack.c.b16 %v6704, %v6702
        %v6733 = vpack.c.b16 %v6705, %v6703
        %v6734 = vpack.c.b16 %v6708, %v6706
        %v6735 = vpack.c.b16 %v6709, %v6707
        %v6736 = vpack.c.b16 %v6712, %v6710
        %v6737 = vpack.c.b16 %v6713, %v6711
        %v6738 = vpack.c.b16 %v6716, %v6714
        %v6739 = vpack.c.b16 %v6717, %v6715
        %v6740 = vpack.c.b16 %v6720, %v6718
        %v6741 = vpack.c.b16 %v6721, %v6719
        %v6742 = vpack.c.b16 %v6724, %v6722
        %v6743 = vpack.c.b16 %v6725, %v6723
        %v6744 = vpack.c.b16 %v6728, %v6726
        %v6745 = vpack.c.b16 %v6729, %v6727
        %6762 = vmatprep.subr.bf16.mxu0 %v6745
        %6763 = vmatpush1.bf16.msra.mxu0 %v6744
        %6764 = vmatprep.subr.bf16.mxu0 %v6743
        %6765 = vmatpush1.bf16.msra.mxu0 %v6742
        %6766 = vmatprep.subr.bf16.mxu0 %v6741
        %6767 = vmatpush1.bf16.msra.mxu0 %v6740
        %6768 = vmatprep.subr.bf16.mxu0 %v6739
        %6769 = vmatpush1.bf16.msra.mxu0 %v6738
        %6770 = vmatprep.subr.bf16.mxu0 %v6737
        %6771 = vmatpush1.bf16.msra.mxu0 %v6736
        %6772 = vmatprep.subr.bf16.mxu0 %v6735
        %6773 = vmatpush1.bf16.msra.mxu0 %v6734
        %6774 = vmatprep.subr.bf16.mxu0 %v6733
        %6775 = vmatpush1.bf16.msra.mxu0 %v6732
        %6776 = vmatprep.subr.bf16.mxu0 %v6731
        %6777 = vmatpush1.bf16.msra.mxu0 %v6730
        %6778 = vmatprep.subr.bf16.mxu0 0
        %6779 = vmatpush2.bf16.msra.mxu0 0
        %6780 = vmatprep.subr.bf16.mxu0 0
        %6781 = vmatpush2.bf16.msra.mxu0 0
        %6782 = vmatprep.subr.bf16.mxu0 0
        %6783 = vmatpush2.bf16.msra.mxu0 0
        %6784 = vmatprep.subr.bf16.mxu0 0
        %6785 = vmatpush2.bf16.msra.mxu0 0
        %6786 = vmatprep.subr.bf16.mxu0 0
        %6787 = vmatpush2.bf16.msra.mxu0 0
        %6788 = vmatprep.subr.bf16.mxu0 0
        %6789 = vmatpush2.bf16.msra.mxu0 0
        %6790 = vmatprep.subr.bf16.mxu0 0
        %6791 = vmatpush2.bf16.msra.mxu0 0
        %6792 = vmatprep.subr.bf16.mxu0 0
        %6793 = vmatpush2.bf16.msra.mxu0 0
        %6794 = vmatprep.mubr.bf16.mxu0 0
        %6795 = vmatmul.mubr.bf16.gmra.mxu0 %v6591
        %v6796 = vpop.f32.mrf.mxu0
        %v6797 = vadd.f32 %v6675, %v6796
        %v6798 = vpop.f32.mrf.mxu0
        %v6799 = vadd.f32 %v6679, %v6798
        %v6800 = vpop.f32.mrf.mxu0
        %v6801 = vadd.f32 %v6675, %v6800
        %v6802 = vpop.f32.mrf.mxu0
        %v6803 = vadd.f32 %v6679, %v6802
        %6804 = vmatprep.mubr.bf16.mxu0 0
        %6805 = vmatmul.mubr.bf16.gmra.mxu0 %v6592
        %v6806 = vpop.f32.mrf.mxu0
        %v6807 = vadd.f32 %v6675, %v6806
        %v6808 = vpop.f32.mrf.mxu0
        %v6809 = vadd.f32 %v6679, %v6808
        %v6810 = vpop.f32.mrf.mxu0
        %v6811 = vadd.f32 %v6675, %v6810
        %v6812 = vpop.f32.mrf.mxu0
        %v6813 = vadd.f32 %v6679, %v6812
        %6814 = vmatprep.mubr.bf16.mxu0 0
        %6815 = vmatmul.mubr.bf16.gmra.mxu0 %v6593
        %v6816 = vpop.f32.mrf.mxu0
        %v6817 = vadd.f32 %v6675, %v6816
        %v6818 = vpop.f32.mrf.mxu0
        %v6819 = vadd.f32 %v6679, %v6818
        %v6820 = vpop.f32.mrf.mxu0
        %v6821 = vadd.f32 %v6675, %v6820
        %v6822 = vpop.f32.mrf.mxu0
        %v6823 = vadd.f32 %v6679, %v6822
        %6824 = vmatprep.mubr.bf16.mxu0 0
        %6825 = vmatmul.mubr.bf16.gmra.mxu0 %v6594
        %v6826 = vpop.f32.mrf.mxu0
        %v6827 = vadd.f32 %v6675, %v6826
        %v6828 = vpop.f32.mrf.mxu0
        %v6829 = vadd.f32 %v6679, %v6828
        %v6830 = vpop.f32.mrf.mxu0
        %v6831 = vadd.f32 %v6675, %v6830
        %v6832 = vpop.f32.mrf.mxu0
        %v6833 = vadd.f32 %v6679, %v6832
        %6834 = vmatprep.mubr.bf16.mxu0 0
        %6835 = vmatmul.mubr.bf16.gmra.mxu0 %v6595
        %v6836 = vpop.f32.mrf.mxu0
        %v6837 = vadd.f32 %v6675, %v6836
        %v6838 = vpop.f32.mrf.mxu0
        %v6839 = vadd.f32 %v6679, %v6838
        %v6840 = vpop.f32.mrf.mxu0
        %v6841 = vadd.f32 %v6675, %v6840
        %v6842 = vpop.f32.mrf.mxu0
        %v6843 = vadd.f32 %v6679, %v6842
        %6844 = vmatprep.mubr.bf16.mxu0 0
        %6845 = vmatmul.mubr.bf16.gmra.mxu0 %v6596
        %v6846 = vpop.f32.mrf.mxu0
        %v6847 = vadd.f32 %v6675, %v6846
        %v6848 = vpop.f32.mrf.mxu0
        %v6849 = vadd.f32 %v6679, %v6848
        %v6850 = vpop.f32.mrf.mxu0
        %v6851 = vadd.f32 %v6675, %v6850
        %v6852 = vpop.f32.mrf.mxu0
        %v6853 = vadd.f32 %v6679, %v6852
        %6854 = vmatprep.mubr.bf16.mxu0 0
        %6855 = vmatmul.mubr.bf16.gmra.mxu0 %v6597
        %v6856 = vpop.f32.mrf.mxu0
        %v6857 = vadd.f32 %v6675, %v6856
        %v6858 = vpop.f32.mrf.mxu0
        %v6859 = vadd.f32 %v6679, %v6858
        %v6860 = vpop.f32.mrf.mxu0
        %v6861 = vadd.f32 %v6675, %v6860
        %v6862 = vpop.f32.mrf.mxu0
        %v6863 = vadd.f32 %v6679, %v6862
        %6864 = vmatprep.mubr.bf16.mxu0 0
        %6865 = vmatmul.mubr.bf16.gmra.mxu0 %v6598
        %v6866 = vpop.f32.mrf.mxu0
        %v6867 = vadd.f32 %v6675, %v6866
        %v6868 = vpop.f32.mrf.mxu0
        %v6869 = vadd.f32 %v6679, %v6868
        %v6870 = vpop.f32.mrf.mxu0
        %v6871 = vadd.f32 %v6675, %v6870
        %v6872 = vpop.f32.mrf.mxu0
        %v6873 = vadd.f32 %v6679, %v6872
        %6874 = vmatprep.mubr.bf16.mxu0 0
        %6875 = vmatmul.mubr.bf16.gmra.mxu0 %v6599
        %v6876 = vpop.f32.mrf.mxu0
        %v6877 = vadd.f32 %v6675, %v6876
        %v6878 = vpop.f32.mrf.mxu0
        %v6879 = vadd.f32 %v6679, %v6878
        %v6880 = vpop.f32.mrf.mxu0
        %v6881 = vadd.f32 %v6675, %v6880
        %v6882 = vpop.f32.mrf.mxu0
        %v6883 = vadd.f32 %v6679, %v6882
        %6884 = vmatprep.mubr.bf16.mxu0 0
        %6885 = vmatmul.mubr.bf16.gmra.mxu0 %v6600
        %v6886 = vpop.f32.mrf.mxu0
        %v6887 = vadd.f32 %v6675, %v6886
        %v6888 = vpop.f32.mrf.mxu0
        %v6889 = vadd.f32 %v6679, %v6888
        %v6890 = vpop.f32.mrf.mxu0
        %v6891 = vadd.f32 %v6675, %v6890
        %v6892 = vpop.f32.mrf.mxu0
        %v6893 = vadd.f32 %v6679, %v6892
        %6894 = vmatprep.mubr.bf16.mxu0 0
        %6895 = vmatmul.mubr.bf16.gmra.mxu0 %v6601
        %v6896 = vpop.f32.mrf.mxu0
        %v6897 = vadd.f32 %v6675, %v6896
        %v6898 = vpop.f32.mrf.mxu0
        %v6899 = vadd.f32 %v6679, %v6898
        %v6900 = vpop.f32.mrf.mxu0
        %v6901 = vadd.f32 %v6675, %v6900
        %v6902 = vpop.f32.mrf.mxu0
        %v6903 = vadd.f32 %v6679, %v6902
        %6904 = vmatprep.mubr.bf16.mxu0 0
        %6905 = vmatmul.mubr.bf16.gmra.mxu0 %v6602
        %v6906 = vpop.f32.mrf.mxu0
        %v6907 = vadd.f32 %v6675, %v6906
        %v6908 = vpop.f32.mrf.mxu0
        %v6909 = vadd.f32 %v6679, %v6908
        %v6910 = vpop.f32.mrf.mxu0
        %v6911 = vadd.f32 %v6675, %v6910
        %v6912 = vpop.f32.mrf.mxu0
        %v6913 = vadd.f32 %v6679, %v6912
        %6914 = vmatprep.mubr.bf16.mxu0 0
        %6915 = vmatmul.mubr.bf16.gmra.mxu0 %v6603
        %v6916 = vpop.f32.mrf.mxu0
        %v6917 = vadd.f32 %v6675, %v6916
        %v6918 = vpop.f32.mrf.mxu0
        %v6919 = vadd.f32 %v6679, %v6918
        %v6920 = vpop.f32.mrf.mxu0
        %v6921 = vadd.f32 %v6675, %v6920
        %v6922 = vpop.f32.mrf.mxu0
        %v6923 = vadd.f32 %v6679, %v6922
        %6924 = vmatprep.mubr.bf16.mxu0 0
        %6925 = vmatmul.mubr.bf16.gmra.mxu0 %v6604
        %v6926 = vpop.f32.mrf.mxu0
        %v6927 = vadd.f32 %v6675, %v6926
        %v6928 = vpop.f32.mrf.mxu0
        %v6929 = vadd.f32 %v6679, %v6928
        %v6930 = vpop.f32.mrf.mxu0
        %v6931 = vadd.f32 %v6675, %v6930
        %v6932 = vpop.f32.mrf.mxu0
        %v6933 = vadd.f32 %v6679, %v6932
        %6934 = vmatprep.mubr.bf16.mxu0 0
        %6935 = vmatmul.mubr.bf16.gmra.mxu0 %v6605
        %v6936 = vpop.f32.mrf.mxu0
        %v6937 = vadd.f32 %v6675, %v6936
        %v6938 = vpop.f32.mrf.mxu0
        %v6939 = vadd.f32 %v6679, %v6938
        %v6940 = vpop.f32.mrf.mxu0
        %v6941 = vadd.f32 %v6675, %v6940
        %v6942 = vpop.f32.mrf.mxu0
        %v6943 = vadd.f32 %v6679, %v6942
        %6944 = vmatprep.mubr.bf16.mxu0 0
        %6945 = vmatmul.mubr.bf16.gmra.mxu0 %v6606
        %v6946 = vpop.f32.mrf.mxu0
        %v6947 = vadd.f32 %v6675, %v6946
        %v6948 = vpop.f32.mrf.mxu0
        %v6949 = vadd.f32 %v6679, %v6948
        %v6950 = vpop.f32.mrf.mxu0
        %v6951 = vadd.f32 %v6675, %v6950
        %v6952 = vpop.f32.mrf.mxu0
        %v6953 = vadd.f32 %v6679, %v6952
        %6954 = vmatprep.mubr.bf16.mxu0 0
        %6955 = vmatmul.mubr.bf16.gmra.mxu0 %v6607
        %v6956 = vpop.f32.mrf.mxu0
        %v6957 = vadd.f32 %v6675, %v6956
        %v6958 = vpop.f32.mrf.mxu0
        %v6959 = vadd.f32 %v6679, %v6958
        %v6960 = vpop.f32.mrf.mxu0
        %v6961 = vadd.f32 %v6675, %v6960
        %v6962 = vpop.f32.mrf.mxu0
        %v6963 = vadd.f32 %v6679, %v6962
        %6964 = vmatprep.mubr.bf16.mxu0 0
        %6965 = vmatmul.mubr.bf16.gmra.mxu0 %v6608
        %v6966 = vpop.f32.mrf.mxu0
        %v6967 = vadd.f32 %v6675, %v6966
        %v6968 = vpop.f32.mrf.mxu0
        %v6969 = vadd.f32 %v6679, %v6968
        %v6970 = vpop.f32.mrf.mxu0
        %v6971 = vadd.f32 %v6675, %v6970
        %v6972 = vpop.f32.mrf.mxu0
        %v6973 = vadd.f32 %v6679, %v6972
        %6974 = vmatprep.mubr.bf16.mxu0 0
        %6975 = vmatmul.mubr.bf16.gmra.mxu0 %v6609
        %v6976 = vpop.f32.mrf.mxu0
        %v6977 = vadd.f32 %v6675, %v6976
        %v6978 = vpop.f32.mrf.mxu0
        %v6979 = vadd.f32 %v6679, %v6978
        %v6980 = vpop.f32.mrf.mxu0
        %v6981 = vadd.f32 %v6675, %v6980
        %v6982 = vpop.f32.mrf.mxu0
        %v6983 = vadd.f32 %v6679, %v6982
        %6984 = vmatprep.mubr.bf16.mxu0 0
        %6985 = vmatmul.mubr.bf16.gmra.mxu0 %v6610
        %v6986 = vpop.f32.mrf.mxu0
        %v6987 = vadd.f32 %v6675, %v6986
        %v6988 = vpop.f32.mrf.mxu0
        %v6989 = vadd.f32 %v6679, %v6988
        %v6990 = vpop.f32.mrf.mxu0
        %v6991 = vadd.f32 %v6675, %v6990
        %v6992 = vpop.f32.mrf.mxu0
        %v6993 = vadd.f32 %v6679, %v6992
        %6994 = vmatprep.mubr.bf16.mxu0 0
        %6995 = vmatmul.mubr.bf16.gmra.mxu0 %v6611
        %v6996 = vpop.f32.mrf.mxu0
        %v6997 = vadd.f32 %v6675, %v6996
        %v6998 = vpop.f32.mrf.mxu0
        %v6999 = vadd.f32 %v6679, %v6998
        %v7000 = vpop.f32.mrf.mxu0
        %v7001 = vadd.f32 %v6675, %v7000
        %v7002 = vpop.f32.mrf.mxu0
        %v7003 = vadd.f32 %v6679, %v7002
        %7004 = vmatprep.mubr.bf16.mxu0 0
        %7005 = vmatmul.mubr.bf16.gmra.mxu0 %v6612
        %v7006 = vpop.f32.mrf.mxu0
        %v7007 = vadd.f32 %v6675, %v7006
        %v7008 = vpop.f32.mrf.mxu0
        %v7009 = vadd.f32 %v6679, %v7008
        %v7010 = vpop.f32.mrf.mxu0
        %v7011 = vadd.f32 %v6675, %v7010
        %v7012 = vpop.f32.mrf.mxu0
        %v7013 = vadd.f32 %v6679, %v7012
        %7014 = vmatprep.mubr.bf16.mxu0 0
        %7015 = vmatmul.mubr.bf16.gmra.mxu0 %v6613
        %v7016 = vpop.f32.mrf.mxu0
        %v7017 = vadd.f32 %v6675, %v7016
        %v7018 = vpop.f32.mrf.mxu0
        %v7019 = vadd.f32 %v6679, %v7018
        %v7020 = vpop.f32.mrf.mxu0
        %v7021 = vadd.f32 %v6675, %v7020
        %v7022 = vpop.f32.mrf.mxu0
        %v7023 = vadd.f32 %v6679, %v7022
        %7024 = vmatprep.mubr.bf16.mxu0 0
        %7025 = vmatmul.mubr.bf16.gmra.mxu0 %v6614
        %v7026 = vpop.f32.mrf.mxu0
        %v7027 = vadd.f32 %v6675, %v7026
        %v7028 = vpop.f32.mrf.mxu0
        %v7029 = vadd.f32 %v6679, %v7028
        %v7030 = vpop.f32.mrf.mxu0
        %v7031 = vadd.f32 %v6675, %v7030
        %v7032 = vpop.f32.mrf.mxu0
        %v7033 = vadd.f32 %v6679, %v7032
        %7034 = vmatprep.mubr.bf16.mxu0 0
        %7035 = vmatmul.mubr.bf16.gmra.mxu0 %v6615
        %v7036 = vpop.f32.mrf.mxu0
        %v7037 = vadd.f32 %v6675, %v7036
        %v7038 = vpop.f32.mrf.mxu0
        %v7039 = vadd.f32 %v6679, %v7038
        %v7040 = vpop.f32.mrf.mxu0
        %v7041 = vadd.f32 %v6675, %v7040
        %v7042 = vpop.f32.mrf.mxu0
        %v7043 = vadd.f32 %v6679, %v7042
        %7044 = vmatprep.mubr.bf16.mxu0 0
        %7045 = vmatmul.mubr.bf16.gmra.mxu0 %v6616
        %v7046 = vpop.f32.mrf.mxu0
        %v7047 = vadd.f32 %v6675, %v7046
        %v7048 = vpop.f32.mrf.mxu0
        %v7049 = vadd.f32 %v6679, %v7048
        %v7050 = vpop.f32.mrf.mxu0
        %v7051 = vadd.f32 %v6675, %v7050
        %v7052 = vpop.f32.mrf.mxu0
        %v7053 = vadd.f32 %v6679, %v7052
        %7054 = vmatprep.mubr.bf16.mxu0 0
        %7055 = vmatmul.mubr.bf16.gmra.mxu0 %v6617
        %v7056 = vpop.f32.mrf.mxu0
        %v7057 = vadd.f32 %v6675, %v7056
        %v7058 = vpop.f32.mrf.mxu0
        %v7059 = vadd.f32 %v6679, %v7058
        %v7060 = vpop.f32.mrf.mxu0
        %v7061 = vadd.f32 %v6675, %v7060
        %v7062 = vpop.f32.mrf.mxu0
        %v7063 = vadd.f32 %v6679, %v7062
        %7064 = vmatprep.mubr.bf16.mxu0 0
        %7065 = vmatmul.mubr.bf16.gmra.mxu0 %v6618
        %v7066 = vpop.f32.mrf.mxu0
        %v7067 = vadd.f32 %v6675, %v7066
        %v7068 = vpop.f32.mrf.mxu0
        %v7069 = vadd.f32 %v6679, %v7068
        %v7070 = vpop.f32.mrf.mxu0
        %v7071 = vadd.f32 %v6675, %v7070
        %v7072 = vpop.f32.mrf.mxu0
        %v7073 = vadd.f32 %v6679, %v7072
        %7074 = vmatprep.mubr.bf16.mxu0 0
        %7075 = vmatmul.mubr.bf16.gmra.mxu0 %v6619
        %v7076 = vpop.f32.mrf.mxu0
        %v7077 = vadd.f32 %v6675, %v7076
        %v7078 = vpop.f32.mrf.mxu0
        %v7079 = vadd.f32 %v6679, %v7078
        %v7080 = vpop.f32.mrf.mxu0
        %v7081 = vadd.f32 %v6675, %v7080
        %v7082 = vpop.f32.mrf.mxu0
        %v7083 = vadd.f32 %v6679, %v7082
        %7084 = vmatprep.mubr.bf16.mxu0 0
        %7085 = vmatmul.mubr.bf16.gmra.mxu0 %v6620
        %v7086 = vpop.f32.mrf.mxu0
        %v7087 = vadd.f32 %v6675, %v7086
        %v7088 = vpop.f32.mrf.mxu0
        %v7089 = vadd.f32 %v6679, %v7088
        %v7090 = vpop.f32.mrf.mxu0
        %v7091 = vadd.f32 %v6675, %v7090
        %v7092 = vpop.f32.mrf.mxu0
        %v7093 = vadd.f32 %v6679, %v7092
        %7094 = vmatprep.mubr.bf16.mxu0 0
        %7095 = vmatmul.mubr.bf16.gmra.mxu0 %v6621
        %v7096 = vpop.f32.mrf.mxu0
        %v7097 = vadd.f32 %v6675, %v7096
        %v7098 = vpop.f32.mrf.mxu0
        %v7099 = vadd.f32 %v6679, %v7098
        %v7100 = vpop.f32.mrf.mxu0
        %v7101 = vadd.f32 %v6675, %v7100
        %v7102 = vpop.f32.mrf.mxu0
        %v7103 = vadd.f32 %v6679, %v7102
        %7104 = vmatprep.mubr.bf16.mxu0 0
        %7105 = vmatmul.mubr.bf16.gmra.mxu0 %v6622
        %v7106 = vpop.f32.mrf.mxu0
        %v7107 = vadd.f32 %v6675, %v7106
        %v7108 = vpop.f32.mrf.mxu0
        %v7109 = vadd.f32 %v6679, %v7108
        %v7110 = vpop.f32.mrf.mxu0
        %v7111 = vadd.f32 %v6675, %v7110
        %v7112 = vpop.f32.mrf.mxu0
        %v7113 = vadd.f32 %v6679, %v7112
        %7114 = vmatprep.mubr.bf16.mxu0 0
        %7115 = vmatmul.mubr.bf16.gmra.mxu0 %v6623
        %v7116 = vpop.f32.mrf.mxu0
        %v7117 = vadd.f32 %v6675, %v7116
        %v7118 = vpop.f32.mrf.mxu0
        %v7119 = vadd.f32 %v6679, %v7118
        %v7120 = vpop.f32.mrf.mxu0
        %v7121 = vadd.f32 %v6675, %v7120
        %v7122 = vpop.f32.mrf.mxu0
        %v7123 = vadd.f32 %v6679, %v7122
        %7124 = vmatprep.mubr.bf16.mxu0 0
        %7125 = vmatmul.mubr.bf16.gmra.mxu0 %v6624
        %v7126 = vpop.f32.mrf.mxu0
        %v7127 = vadd.f32 %v6675, %v7126
        %v7128 = vpop.f32.mrf.mxu0
        %v7129 = vadd.f32 %v6679, %v7128
        %v7130 = vpop.f32.mrf.mxu0
        %v7131 = vadd.f32 %v6675, %v7130
        %v7132 = vpop.f32.mrf.mxu0
        %v7133 = vadd.f32 %v6679, %v7132
        %7134 = vmatprep.mubr.bf16.mxu0 0
        %7135 = vmatmul.mubr.bf16.gmra.mxu0 %v6625
        %v7136 = vpop.f32.mrf.mxu0
        %v7137 = vadd.f32 %v6675, %v7136
        %v7138 = vpop.f32.mrf.mxu0
        %v7139 = vadd.f32 %v6679, %v7138
        %v7140 = vpop.f32.mrf.mxu0
        %v7141 = vadd.f32 %v6675, %v7140
        %v7142 = vpop.f32.mrf.mxu0
        %v7143 = vadd.f32 %v6679, %v7142
        %7144 = vmatprep.mubr.bf16.mxu0 0
        %7145 = vmatmul.mubr.bf16.gmra.mxu0 %v6626
        %v7146 = vpop.f32.mrf.mxu0
        %v7147 = vadd.f32 %v6675, %v7146
        %v7148 = vpop.f32.mrf.mxu0
        %v7149 = vadd.f32 %v6679, %v7148
        %v7150 = vpop.f32.mrf.mxu0
        %v7151 = vadd.f32 %v6675, %v7150
        %v7152 = vpop.f32.mrf.mxu0
        %v7153 = vadd.f32 %v6679, %v7152
        %7154 = vmatprep.mubr.bf16.mxu0 0
        %7155 = vmatmul.mubr.bf16.gmra.mxu0 %v6627
        %v7156 = vpop.f32.mrf.mxu0
        %v7157 = vadd.f32 %v6675, %v7156
        %v7158 = vpop.f32.mrf.mxu0
        %v7159 = vadd.f32 %v6679, %v7158
        %v7160 = vpop.f32.mrf.mxu0
        %v7161 = vadd.f32 %v6675, %v7160
        %v7162 = vpop.f32.mrf.mxu0
        %v7163 = vadd.f32 %v6679, %v7162
        %7164 = vmatprep.mubr.bf16.mxu0 0
        %7165 = vmatmul.mubr.bf16.gmra.mxu0 %v6628
        %v7166 = vpop.f32.mrf.mxu0
        %v7167 = vadd.f32 %v6675, %v7166
        %v7168 = vpop.f32.mrf.mxu0
        %v7169 = vadd.f32 %v6679, %v7168
        %v7170 = vpop.f32.mrf.mxu0
        %v7171 = vadd.f32 %v6675, %v7170
        %v7172 = vpop.f32.mrf.mxu0
        %v7173 = vadd.f32 %v6679, %v7172
        %7174 = vmatprep.mubr.bf16.mxu0 0
        %7175 = vmatmul.mubr.bf16.gmra.mxu0 %v6629
        %v7176 = vpop.f32.mrf.mxu0
        %v7177 = vadd.f32 %v6675, %v7176
        %v7178 = vpop.f32.mrf.mxu0
        %v7179 = vadd.f32 %v6679, %v7178
        %v7180 = vpop.f32.mrf.mxu0
        %v7181 = vadd.f32 %v6675, %v7180
        %v7182 = vpop.f32.mrf.mxu0
        %v7183 = vadd.f32 %v6679, %v7182
        %7184 = vmatprep.mubr.bf16.mxu0 0
        %7185 = vmatmul.mubr.bf16.gmra.mxu0 %v6630
        %v7186 = vpop.f32.mrf.mxu0
        %v7187 = vadd.f32 %v6675, %v7186
        %v7188 = vpop.f32.mrf.mxu0
        %v7189 = vadd.f32 %v6679, %v7188
        %v7190 = vpop.f32.mrf.mxu0
        %v7191 = vadd.f32 %v6675, %v7190
        %v7192 = vpop.f32.mrf.mxu0
        %v7193 = vadd.f32 %v6679, %v7192
        %7194 = vmatprep.mubr.bf16.mxu0 0
        %7195 = vmatmul.mubr.bf16.gmra.mxu0 %v6631
        %v7196 = vpop.f32.mrf.mxu0
        %v7197 = vadd.f32 %v6675, %v7196
        %v7198 = vpop.f32.mrf.mxu0
        %v7199 = vadd.f32 %v6679, %v7198
        %v7200 = vpop.f32.mrf.mxu0
        %v7201 = vadd.f32 %v6675, %v7200
        %v7202 = vpop.f32.mrf.mxu0
        %v7203 = vadd.f32 %v6679, %v7202
        %7204 = vmatprep.mubr.bf16.mxu0 0
        %7205 = vmatmul.mubr.bf16.gmra.mxu0 %v6632
        %v7206 = vpop.f32.mrf.mxu0
        %v7207 = vadd.f32 %v6675, %v7206
        %v7208 = vpop.f32.mrf.mxu0
        %v7209 = vadd.f32 %v6679, %v7208
        %v7210 = vpop.f32.mrf.mxu0
        %v7211 = vadd.f32 %v6675, %v7210
        %v7212 = vpop.f32.mrf.mxu0
        %v7213 = vadd.f32 %v6679, %v7212
        %7214 = vmatprep.mubr.bf16.mxu0 0
        %7215 = vmatmul.mubr.bf16.gmra.mxu0 %v6633
        %v7216 = vpop.f32.mrf.mxu0
        %v7217 = vadd.f32 %v6675, %v7216
        %v7218 = vpop.f32.mrf.mxu0
        %v7219 = vadd.f32 %v6679, %v7218
        %v7220 = vpop.f32.mrf.mxu0
        %v7221 = vadd.f32 %v6675, %v7220
        %v7222 = vpop.f32.mrf.mxu0
        %v7223 = vadd.f32 %v6679, %v7222
        %7224 = vmatprep.mubr.bf16.mxu0 0
        %7225 = vmatmul.mubr.bf16.gmra.mxu0 %v6634
        %v7226 = vpop.f32.mrf.mxu0
        %v7227 = vadd.f32 %v6675, %v7226
        %v7228 = vpop.f32.mrf.mxu0
        %v7229 = vadd.f32 %v6679, %v7228
        %v7230 = vpop.f32.mrf.mxu0
        %v7231 = vadd.f32 %v6675, %v7230
        %v7232 = vpop.f32.mrf.mxu0
        %v7233 = vadd.f32 %v6679, %v7232
        %7234 = vmatprep.mubr.bf16.mxu0 0
        %7235 = vmatmul.mubr.bf16.gmra.mxu0 %v6635
        %v7236 = vpop.f32.mrf.mxu0
        %v7237 = vadd.f32 %v6675, %v7236
        %v7238 = vpop.f32.mrf.mxu0
        %v7239 = vadd.f32 %v6679, %v7238
        %v7240 = vpop.f32.mrf.mxu0
        %v7241 = vadd.f32 %v6675, %v7240
        %v7242 = vpop.f32.mrf.mxu0
        %v7243 = vadd.f32 %v6679, %v7242
        %7244 = vmatprep.mubr.bf16.mxu0 0
        %7245 = vmatmul.mubr.bf16.gmra.mxu0 %v6636
        %v7246 = vpop.f32.mrf.mxu0
        %v7247 = vadd.f32 %v6675, %v7246
        %v7248 = vpop.f32.mrf.mxu0
        %v7249 = vadd.f32 %v6679, %v7248
        %v7250 = vpop.f32.mrf.mxu0
        %v7251 = vadd.f32 %v6675, %v7250
        %v7252 = vpop.f32.mrf.mxu0
        %v7253 = vadd.f32 %v6679, %v7252
        %7254 = vmatprep.mubr.bf16.mxu0 0
        %7255 = vmatmul.mubr.bf16.gmra.mxu0 %v6637
        %v7256 = vpop.f32.mrf.mxu0
        %v7257 = vadd.f32 %v6675, %v7256
        %v7258 = vpop.f32.mrf.mxu0
        %v7259 = vadd.f32 %v6679, %v7258
        %v7260 = vpop.f32.mrf.mxu0
        %v7261 = vadd.f32 %v6675, %v7260
        %v7262 = vpop.f32.mrf.mxu0
        %v7263 = vadd.f32 %v6679, %v7262
        %7264 = vmatprep.mubr.bf16.mxu0 0
        %7265 = vmatmul.mubr.bf16.gmra.mxu0 %v6638
        %v7266 = vpop.f32.mrf.mxu0
        %v7267 = vadd.f32 %v6675, %v7266
        %v7268 = vpop.f32.mrf.mxu0
        %v7269 = vadd.f32 %v6679, %v7268
        %v7270 = vpop.f32.mrf.mxu0
        %v7271 = vadd.f32 %v6675, %v7270
        %v7272 = vpop.f32.mrf.mxu0
        %v7273 = vadd.f32 %v6679, %v7272
        %7274 = vmatprep.mubr.bf16.mxu0 0
        %7275 = vmatmul.mubr.bf16.gmra.mxu0 %v6639
        %v7276 = vpop.f32.mrf.mxu0
        %v7277 = vadd.f32 %v6675, %v7276
        %v7278 = vpop.f32.mrf.mxu0
        %v7279 = vadd.f32 %v6679, %v7278
        %v7280 = vpop.f32.mrf.mxu0
        %v7281 = vadd.f32 %v6675, %v7280
        %v7282 = vpop.f32.mrf.mxu0
        %v7283 = vadd.f32 %v6679, %v7282
        %7284 = vmatprep.mubr.bf16.mxu0 0
        %7285 = vmatmul.mubr.bf16.gmra.mxu0 %v6640
        %v7286 = vpop.f32.mrf.mxu0
        %v7287 = vadd.f32 %v6675, %v7286
        %v7288 = vpop.f32.mrf.mxu0
        %v7289 = vadd.f32 %v6679, %v7288
        %v7290 = vpop.f32.mrf.mxu0
        %v7291 = vadd.f32 %v6675, %v7290
        %v7292 = vpop.f32.mrf.mxu0
        %v7293 = vadd.f32 %v6679, %v7292
        %7294 = vmatprep.mubr.bf16.mxu0 0
        %7295 = vmatmul.mubr.bf16.gmra.mxu0 %v6641
        %v7296 = vpop.f32.mrf.mxu0
        %v7297 = vadd.f32 %v6675, %v7296
        %v7298 = vpop.f32.mrf.mxu0
        %v7299 = vadd.f32 %v6679, %v7298
        %v7300 = vpop.f32.mrf.mxu0
        %v7301 = vadd.f32 %v6675, %v7300
        %v7302 = vpop.f32.mrf.mxu0
        %v7303 = vadd.f32 %v6679, %v7302
        %7304 = vmatprep.mubr.bf16.mxu0 0
        %7305 = vmatmul.mubr.bf16.gmra.mxu0 %v6642
        %v7306 = vpop.f32.mrf.mxu0
        %v7307 = vadd.f32 %v6675, %v7306
        %v7308 = vpop.f32.mrf.mxu0
        %v7309 = vadd.f32 %v6679, %v7308
        %v7310 = vpop.f32.mrf.mxu0
        %v7311 = vadd.f32 %v6675, %v7310
        %v7312 = vpop.f32.mrf.mxu0
        %v7313 = vadd.f32 %v6679, %v7312
        %7314 = vmatprep.mubr.bf16.mxu0 0
        %7315 = vmatmul.mubr.bf16.gmra.mxu0 %v6643
        %v7316 = vpop.f32.mrf.mxu0
        %v7317 = vadd.f32 %v6675, %v7316
        %v7318 = vpop.f32.mrf.mxu0
        %v7319 = vadd.f32 %v6679, %v7318
        %v7320 = vpop.f32.mrf.mxu0
        %v7321 = vadd.f32 %v6675, %v7320
        %v7322 = vpop.f32.mrf.mxu0
        %v7323 = vadd.f32 %v6679, %v7322
        %7324 = vmatprep.mubr.bf16.mxu0 0
        %7325 = vmatmul.mubr.bf16.gmra.mxu0 %v6644
        %v7326 = vpop.f32.mrf.mxu0
        %v7327 = vadd.f32 %v6675, %v7326
        %v7328 = vpop.f32.mrf.mxu0
        %v7329 = vadd.f32 %v6679, %v7328
        %v7330 = vpop.f32.mrf.mxu0
        %v7331 = vadd.f32 %v6675, %v7330
        %v7332 = vpop.f32.mrf.mxu0
        %v7333 = vadd.f32 %v6679, %v7332
        %7334 = vmatprep.mubr.bf16.mxu0 0
        %7335 = vmatmul.mubr.bf16.gmra.mxu0 %v6645
        %v7336 = vpop.f32.mrf.mxu0
        %v7337 = vadd.f32 %v6675, %v7336
        %v7338 = vpop.f32.mrf.mxu0
        %v7339 = vadd.f32 %v6679, %v7338
        %v7340 = vpop.f32.mrf.mxu0
        %v7341 = vadd.f32 %v6675, %v7340
        %v7342 = vpop.f32.mrf.mxu0
        %v7343 = vadd.f32 %v6679, %v7342
        %7344 = vmatprep.mubr.bf16.mxu0 0
        %7345 = vmatmul.mubr.bf16.gmra.mxu0 %v6646
        %v7346 = vpop.f32.mrf.mxu0
        %v7347 = vadd.f32 %v6675, %v7346
        %v7348 = vpop.f32.mrf.mxu0
        %v7349 = vadd.f32 %v6679, %v7348
        %v7350 = vpop.f32.mrf.mxu0
        %v7351 = vadd.f32 %v6675, %v7350
        %v7352 = vpop.f32.mrf.mxu0
        %v7353 = vadd.f32 %v6679, %v7352
        %7354 = vmatprep.mubr.bf16.mxu0 0
        %7355 = vmatmul.mubr.bf16.gmra.mxu0 %v6647
        %v7356 = vpop.f32.mrf.mxu0
        %v7357 = vadd.f32 %v6675, %v7356
        %v7358 = vpop.f32.mrf.mxu0
        %v7359 = vadd.f32 %v6679, %v7358
        %v7360 = vpop.f32.mrf.mxu0
        %v7361 = vadd.f32 %v6675, %v7360
        %v7362 = vpop.f32.mrf.mxu0
        %v7363 = vadd.f32 %v6679, %v7362
        %7364 = vmatprep.mubr.bf16.mxu0 0
        %7365 = vmatmul.mubr.bf16.gmra.mxu0 %v6648
        %v7366 = vpop.f32.mrf.mxu0
        %v7367 = vadd.f32 %v6675, %v7366
        %v7368 = vpop.f32.mrf.mxu0
        %v7369 = vadd.f32 %v6679, %v7368
        %v7370 = vpop.f32.mrf.mxu0
        %v7371 = vadd.f32 %v6675, %v7370
        %v7372 = vpop.f32.mrf.mxu0
        %v7373 = vadd.f32 %v6679, %v7372
        %7374 = vmatprep.mubr.bf16.mxu0 0
        %7375 = vmatmul.mubr.bf16.gmra.mxu0 %v6649
        %v7376 = vpop.f32.mrf.mxu0
        %v7377 = vadd.f32 %v6675, %v7376
        %v7378 = vpop.f32.mrf.mxu0
        %v7379 = vadd.f32 %v6679, %v7378
        %v7380 = vpop.f32.mrf.mxu0
        %v7381 = vadd.f32 %v6675, %v7380
        %v7382 = vpop.f32.mrf.mxu0
        %v7383 = vadd.f32 %v6679, %v7382
        %7384 = vmatprep.mubr.bf16.mxu0 0
        %7385 = vmatmul.mubr.bf16.gmra.mxu0 %v6650
        %v7386 = vpop.f32.mrf.mxu0
        %v7387 = vadd.f32 %v6675, %v7386
        %v7388 = vpop.f32.mrf.mxu0
        %v7389 = vadd.f32 %v6679, %v7388
        %v7390 = vpop.f32.mrf.mxu0
        %v7391 = vadd.f32 %v6675, %v7390
        %v7392 = vpop.f32.mrf.mxu0
        %v7393 = vadd.f32 %v6679, %v7392
        %7394 = vmatprep.mubr.bf16.mxu0 0
        %7395 = vmatmul.mubr.bf16.gmra.mxu0 %v6651
        %v7396 = vpop.f32.mrf.mxu0
        %v7397 = vadd.f32 %v6675, %v7396
        %v7398 = vpop.f32.mrf.mxu0
        %v7399 = vadd.f32 %v6679, %v7398
        %v7400 = vpop.f32.mrf.mxu0
        %v7401 = vadd.f32 %v6675, %v7400
        %v7402 = vpop.f32.mrf.mxu0
        %v7403 = vadd.f32 %v6679, %v7402
        %7404 = vmatprep.mubr.bf16.mxu0 0
        %7405 = vmatmul.mubr.bf16.gmra.mxu0 %v6652
        %v7406 = vpop.f32.mrf.mxu0
        %v7407 = vadd.f32 %v6675, %v7406
        %v7408 = vpop.f32.mrf.mxu0
        %v7409 = vadd.f32 %v6679, %v7408
        %v7410 = vpop.f32.mrf.mxu0
        %v7411 = vadd.f32 %v6675, %v7410
        %v7412 = vpop.f32.mrf.mxu0
        %v7413 = vadd.f32 %v6679, %v7412
        %7414 = vmatprep.mubr.bf16.mxu0 0
        %7415 = vmatmul.mubr.bf16.gmra.mxu0 %v6653
        %v7416 = vpop.f32.mrf.mxu0
        %v7417 = vadd.f32 %v6675, %v7416
        %v7418 = vpop.f32.mrf.mxu0
        %v7419 = vadd.f32 %v6679, %v7418
        %v7420 = vpop.f32.mrf.mxu0
        %v7421 = vpop.f32.mrf.mxu0
        %7422 = vdwg.mxu0
        %v7423 = vld [vmem:[#allocation2] sm:$0xff]
        %v7424 = vld [vmem:[#allocation2 + $0x8] sm:$0xff]
        %v7425 = vmax.f32 %v6797, %v6807
        %v7426 = vmax.f32 %v6801, %v6811
        %v7427 = vmax.f32 %v7425, %v6817
        %v7428 = vmax.f32 %v7426, %v6821
        %v7429 = vmax.f32 %v7427, %v6827
        %v7430 = vmax.f32 %v7428, %v6831
        %v7431 = vmax.f32 %v7429, %v6837
        %v7432 = vmax.f32 %v7430, %v6841
        %v7433 = vmax.f32 %v7431, %v6847
        %v7434 = vmax.f32 %v7432, %v6851
        %v7435 = vmax.f32 %v7433, %v6857
        %v7436 = vmax.f32 %v7434, %v6861
        %v7437 = vmax.f32 %v7435, %v6867
        %v7438 = vmax.f32 %v7436, %v6871
        %v7439 = vmax.f32 %v7437, %v6877
        %v7440 = vmax.f32 %v7438, %v6881
        %v7441 = vmax.f32 %v7439, %v6887
        %v7442 = vmax.f32 %v7440, %v6891
        %v7443 = vmax.f32 %v7441, %v6897
        %v7444 = vmax.f32 %v7442, %v6901
        %v7445 = vmax.f32 %v7443, %v6907
        %v7446 = vmax.f32 %v7444, %v6911
        %v7447 = vmax.f32 %v7445, %v6917
        %v7448 = vmax.f32 %v7446, %v6921
        %v7449 = vmax.f32 %v7447, %v6927
        %v7450 = vmax.f32 %v7448, %v6931
        %v7451 = vmax.f32 %v7449, %v6937
        %v7452 = vmax.f32 %v7450, %v6941
        %v7453 = vmax.f32 %v7451, %v6947
        %v7454 = vmax.f32 %v7452, %v6951
        %v7455 = vmax.f32 %v7453, %v6957
        %v7456 = vmax.f32 %v7454, %v6961
        %v7457 = vmax.f32 %v7455, %v6967
        %v7458 = vmax.f32 %v7456, %v6971
        %v7459 = vmax.f32 %v7457, %v6977
        %v7460 = vmax.f32 %v7458, %v6981
        %v7461 = vmax.f32 %v7459, %v6987
        %v7462 = vmax.f32 %v7460, %v6991
        %v7463 = vmax.f32 %v7461, %v6997
        %v7464 = vmax.f32 %v7462, %v7001
        %v7465 = vmax.f32 %v7463, %v7007
        %v7466 = vmax.f32 %v7464, %v7011
        %v7467 = vmax.f32 %v7465, %v7017
        %v7468 = vmax.f32 %v7466, %v7021
        %v7469 = vmax.f32 %v7467, %v7027
        %v7470 = vmax.f32 %v7468, %v7031
        %v7471 = vmax.f32 %v7469, %v7037
        %v7472 = vmax.f32 %v7470, %v7041
        %v7473 = vmax.f32 %v7471, %v7047
        %v7474 = vmax.f32 %v7472, %v7051
        %v7475 = vmax.f32 %v7473, %v7057
        %v7476 = vmax.f32 %v7474, %v7061
        %v7477 = vmax.f32 %v7475, %v7067
        %v7478 = vmax.f32 %v7476, %v7071
        %v7479 = vmax.f32 %v7477, %v7077
        %v7480 = vmax.f32 %v7478, %v7081
        %v7481 = vmax.f32 %v7479, %v7087
        %v7482 = vmax.f32 %v7480, %v7091
        %v7483 = vmax.f32 %v7481, %v7097
        %v7484 = vmax.f32 %v7482, %v7101
        %v7485 = vmax.f32 %v7483, %v7107
        %v7486 = vmax.f32 %v7484, %v7111
        %v7487 = vmax.f32 %v7485, %v7117
        %v7488 = vmax.f32 %v7486, %v7121
        %v7489 = vmax.f32 %v7487, %v7127
        %v7490 = vmax.f32 %v7488, %v7131
        %v7491 = vmax.f32 %v7489, %v7137
        %v7492 = vmax.f32 %v7490, %v7141
        %v7493 = vmax.f32 %v7491, %v7147
        %v7494 = vmax.f32 %v7492, %v7151
        %v7495 = vmax.f32 %v7493, %v7157
        %v7496 = vmax.f32 %v7494, %v7161
        %v7497 = vmax.f32 %v7495, %v7167
        %v7498 = vmax.f32 %v7496, %v7171
        %v7499 = vmax.f32 %v7497, %v7177
        %v7500 = vmax.f32 %v7498, %v7181
        %v7501 = vmax.f32 %v7499, %v7187
        %v7502 = vmax.f32 %v7500, %v7191
        %v7503 = vmax.f32 %v7501, %v7197
        %v7504 = vmax.f32 %v7502, %v7201
        %v7505 = vmax.f32 %v7503, %v7207
        %v7506 = vmax.f32 %v7504, %v7211
        %v7507 = vmax.f32 %v7505, %v7217
        %v7508 = vmax.f32 %v7506, %v7221
        %v7509 = vmax.f32 %v7507, %v7227
        %v7510 = vmax.f32 %v7508, %v7231
        %v7511 = vmax.f32 %v7509, %v7237
        %v7512 = vmax.f32 %v7510, %v7241
        %v7513 = vmax.f32 %v7511, %v7247
        %v7514 = vmax.f32 %v7512, %v7251
        %v7515 = vmax.f32 %v7513, %v7257
        %v7516 = vmax.f32 %v7514, %v7261
        %v7517 = vmax.f32 %v7515, %v7267
        %v7518 = vmax.f32 %v7516, %v7271
        %v7519 = vmax.f32 %v7517, %v7277
        %v7520 = vmax.f32 %v7518, %v7281
        %v7521 = vmax.f32 %v7519, %v7287
        %v7522 = vmax.f32 %v7520, %v7291
        %v7523 = vmax.f32 %v7521, %v7297
        %v7524 = vmax.f32 %v7522, %v7301
        %v7525 = vmax.f32 %v7523, %v7307
        %v7526 = vmax.f32 %v7524, %v7311
        %v7527 = vmax.f32 %v7525, %v7317
        %v7528 = vmax.f32 %v7526, %v7321
        %v7529 = vmax.f32 %v7527, %v7327
        %v7530 = vmax.f32 %v7528, %v7331
        %v7531 = vmax.f32 %v7529, %v7337
        %v7532 = vmax.f32 %v7530, %v7341
        %v7533 = vmax.f32 %v7531, %v7347
        %v7534 = vmax.f32 %v7532, %v7351
        %v7535 = vmax.f32 %v7533, %v7357
        %v7536 = vmax.f32 %v7534, %v7361
        %v7537 = vmax.f32 %v7535, %v7367
        %v7538 = vmax.f32 %v7536, %v7371
        %v7539 = vmax.f32 %v7537, %v7377
        %v7540 = vmax.f32 %v7538, %v7381
        %v7541 = vmax.f32 %v7539, %v7387
        %v7542 = vmax.f32 %v7540, %v7391
        %v7543 = vmax.f32 %v7541, %v7397
        %v7544 = vmax.f32 %v7542, %v7401
        %v7545 = vmax.f32 %v7543, %v7407
        %v7546 = vmax.f32 %v7544, %v7411
        %v7547 = vmax.f32 %v7545, %v7417
        %v7548 = vmax.f32 %v7547, %v7546
        %v7549 = vmax.f32 %v6799, %v6809
        %v7550 = vmax.f32 %v6803, %v6813
        %v7551 = vmax.f32 %v7549, %v6819
        %v7552 = vmax.f32 %v7550, %v6823
        %v7553 = vmax.f32 %v7551, %v6829
        %v7554 = vmax.f32 %v7552, %v6833
        %v7555 = vmax.f32 %v7553, %v6839
        %v7556 = vmax.f32 %v7554, %v6843
        %v7557 = vmax.f32 %v7555, %v6849
        %v7558 = vmax.f32 %v7556, %v6853
        %v7559 = vmax.f32 %v7557, %v6859
        %v7560 = vmax.f32 %v7558, %v6863
        %v7561 = vmax.f32 %v7559, %v6869
        %v7562 = vmax.f32 %v7560, %v6873
        %v7563 = vmax.f32 %v7561, %v6879
        %v7564 = vmax.f32 %v7562, %v6883
        %v7565 = vmax.f32 %v7563, %v6889
        %v7566 = vmax.f32 %v7564, %v6893
        %v7567 = vmax.f32 %v7565, %v6899
        %v7568 = vmax.f32 %v7566, %v6903
        %v7569 = vmax.f32 %v7567, %v6909
        %v7570 = vmax.f32 %v7568, %v6913
        %v7571 = vmax.f32 %v7569, %v6919
        %v7572 = vmax.f32 %v7570, %v6923
        %v7573 = vmax.f32 %v7571, %v6929
        %v7574 = vmax.f32 %v7572, %v6933
        %v7575 = vmax.f32 %v7573, %v6939
        %v7576 = vmax.f32 %v7574, %v6943
        %v7577 = vmax.f32 %v7575, %v6949
        %v7578 = vmax.f32 %v7576, %v6953
        %v7579 = vmax.f32 %v7577, %v6959
        %v7580 = vmax.f32 %v7578, %v6963
        %v7581 = vmax.f32 %v7579, %v6969
        %v7582 = vmax.f32 %v7580, %v6973
        %v7583 = vmax.f32 %v7581, %v6979
        %v7584 = vmax.f32 %v7582, %v6983
        %v7585 = vmax.f32 %v7583, %v6989
        %v7586 = vmax.f32 %v7584, %v6993
        %v7587 = vmax.f32 %v7585, %v6999
        %v7588 = vmax.f32 %v7586, %v7003
        %v7589 = vmax.f32 %v7587, %v7009
        %v7590 = vmax.f32 %v7588, %v7013
        %v7591 = vmax.f32 %v7589, %v7019
        %v7592 = vmax.f32 %v7590, %v7023
        %v7593 = vmax.f32 %v7591, %v7029
        %v7594 = vmax.f32 %v7592, %v7033
        %v7595 = vmax.f32 %v7593, %v7039
        %v7596 = vmax.f32 %v7594, %v7043
        %v7597 = vmax.f32 %v7595, %v7049
        %v7598 = vmax.f32 %v7596, %v7053
        %v7599 = vmax.f32 %v7597, %v7059
        %v7600 = vmax.f32 %v7598, %v7063
        %v7601 = vmax.f32 %v7599, %v7069
        %v7602 = vmax.f32 %v7600, %v7073
        %v7603 = vmax.f32 %v7601, %v7079
        %v7604 = vmax.f32 %v7602, %v7083
        %v7605 = vmax.f32 %v7603, %v7089
        %v7606 = vmax.f32 %v7604, %v7093
        %v7607 = vmax.f32 %v7605, %v7099
        %v7608 = vmax.f32 %v7606, %v7103
        %v7609 = vmax.f32 %v7607, %v7109
        %v7610 = vmax.f32 %v7608, %v7113
        %v7611 = vmax.f32 %v7609, %v7119
        %v7612 = vmax.f32 %v7610, %v7123
        %v7613 = vmax.f32 %v7611, %v7129
        %v7614 = vmax.f32 %v7612, %v7133
        %v7615 = vmax.f32 %v7613, %v7139
        %v7616 = vmax.f32 %v7614, %v7143
        %v7617 = vmax.f32 %v7615, %v7149
        %v7618 = vmax.f32 %v7616, %v7153
        %v7619 = vmax.f32 %v7617, %v7159
        %v7620 = vmax.f32 %v7618, %v7163
        %v7621 = vmax.f32 %v7619, %v7169
        %v7622 = vmax.f32 %v7620, %v7173
        %v7623 = vmax.f32 %v7621, %v7179
        %v7624 = vmax.f32 %v7622, %v7183
        %v7625 = vmax.f32 %v7623, %v7189
        %v7626 = vmax.f32 %v7624, %v7193
        %v7627 = vmax.f32 %v7625, %v7199
        %v7628 = vmax.f32 %v7626, %v7203
        %v7629 = vmax.f32 %v7627, %v7209
        %v7630 = vmax.f32 %v7628, %v7213
        %v7631 = vmax.f32 %v7629, %v7219
        %v7632 = vmax.f32 %v7630, %v7223
        %v7633 = vmax.f32 %v7631, %v7229
        %v7634 = vmax.f32 %v7632, %v7233
        %v7635 = vmax.f32 %v7633, %v7239
        %v7636 = vmax.f32 %v7634, %v7243
        %v7637 = vmax.f32 %v7635, %v7249
        %v7638 = vmax.f32 %v7636, %v7253
        %v7639 = vmax.f32 %v7637, %v7259
        %v7640 = vmax.f32 %v7638, %v7263
        %v7641 = vmax.f32 %v7639, %v7269
        %v7642 = vmax.f32 %v7640, %v7273
        %v7643 = vmax.f32 %v7641, %v7279
        %v7644 = vmax.f32 %v7642, %v7283
        %v7645 = vmax.f32 %v7643, %v7289
        %v7646 = vmax.f32 %v7644, %v7293
        %v7647 = vmax.f32 %v7645, %v7299
        %v7648 = vmax.f32 %v7646, %v7303
        %v7649 = vmax.f32 %v7647, %v7309
        %v7650 = vmax.f32 %v7648, %v7313
        %v7651 = vmax.f32 %v7649, %v7319
        %v7652 = vmax.f32 %v7650, %v7323
        %v7653 = vmax.f32 %v7651, %v7329
        %v7654 = vmax.f32 %v7652, %v7333
        %v7655 = vmax.f32 %v7653, %v7339
        %v7656 = vmax.f32 %v7654, %v7343
        %v7657 = vmax.f32 %v7655, %v7349
        %v7658 = vmax.f32 %v7656, %v7353
        %v7659 = vmax.f32 %v7657, %v7359
        %v7660 = vmax.f32 %v7658, %v7363
        %v7661 = vmax.f32 %v7659, %v7369
        %v7662 = vmax.f32 %v7660, %v7373
        %v7663 = vmax.f32 %v7661, %v7379
        %v7664 = vmax.f32 %v7662, %v7383
        %v7665 = vmax.f32 %v7663, %v7389
        %v7666 = vmax.f32 %v7664, %v7393
        %v7667 = vmax.f32 %v7665, %v7399
        %v7668 = vmax.f32 %v7666, %v7403
        %v7669 = vmax.f32 %v7667, %v7409
        %v7670 = vmax.f32 %v7668, %v7413
        %v7671 = vmax.f32 %v7669, %v7419
        %v7672 = vmax.f32 %v7671, %v7670
        %v7673 = vmax.f32 %v7423, %v7548
        %v7674 = vmax.f32 %v7424, %v7672
        %7675 = vst [vmem:[#allocation2] sm:$0xff] %v7673
        %7676 = vst [vmem:[#allocation2 + $0x8] sm:$0xff] %v7674
        // Predicated region
        $region61: #{tpu_custom_call.1} parent=55 // pred_check
          %p7677 = pneg %p376
        $region62: #{tpu_custom_call.1} parent=55 // pred_check_branch
          %7679 = sbr.rel (%p7677) target = $region64
        $region63: #{tpu_custom_call.1} parent=55 // pred_region
          %v7680 = vld [vmem:[#allocation2] sm:$0xff]
          %v7681 = vld [vmem:[#allocation2 + $0x8] sm:$0xff]
          %7682 = vst [vmem:[%s362] sm:$0xff] %v7680
          %7683 = vst [vmem:[%s362 + $0x8] sm:$0xff] %v7681
        $region64: #{tpu_custom_call.1} parent=55 // pred_fallthru
          _
        %s7684 = sand.u32 %s250, 1
        %s7685 = scalar_lea.sflag [#allocation4], %s7684
        %s7686 = sand.u32 %s250, 1
        %s7687 = smul.addr %s7686, 16
        %s7688 = scalar_lea.vmem [#allocation3], %s7687
        // Predicated region
        $region65: #{tpu_custom_call.1} parent=55 // pred_check
          %p7689 = pneg %p260
        $region66: #{tpu_custom_call.1} parent=55 // pred_check_branch
          %7691 = sbr.rel (%p7689) target = $region68
        $region67: #{tpu_custom_call.1} parent=55 // pred_region
          %s7693 = ssub.s32 256, 256
          %7694 = vsyncadd %s7685, %s7693
          %s7695 = smul.addr %s29, 2
          %s7696 = smul.addr %s28, 4
          %s7697 = sadd.s32 %s7695, %s7696
          %s7698 = smul.addr %s7697, 128
          %s7699 = scalar_lea.hbm %s9, %s7698
          %s7701 = sshll.u32 %s7688, 4
          %s7702 = int_to_ptr.vmem [resolvable:$true] %s7701
          %7704 = dma.vmem_to_hbm [thread:$0]  %s7702, 256, %s7699, %s7685
        $region68: #{tpu_custom_call.1} parent=55 // pred_fallthru
          _
      $region56: #{tpu_custom_call.1} parent=5 // pred_fallthru
        _
      %p7705 = scmp.le.s32.totalorder 2, %s18
      // Predicated region
      $region69: #{tpu_custom_call.1} parent=5 // pred_check
        %p7706 = pneg %p7705
      $region70: #{tpu_custom_call.1} parent=5 // pred_check_branch
        %7708 = sbr.rel (%p7706) target = $region72
      $region71: #{tpu_custom_call.1} parent=5 // pred_region
        %s7709 = ssub.s32 %s18, 2
        // Predicated region
        $region73: #{tpu_custom_call.1} parent=71 // pred_check
          %p7710 = pneg %p266
        $region74: #{tpu_custom_call.1} parent=71 // pred_check_branch
          %7712 = sbr.rel (%p7710) target = $region76
        $region75: #{tpu_custom_call.1} parent=71 // pred_region
          %s7713 = sand.u32 %s251, 1
          %s7714 = scalar_lea.sflag [#allocation4], %s7713
          %s7715 = sand.u32 %s251, 1
          %s7716 = smul.addr %s7715, 16
          %s7717 = scalar_lea.vmem [#allocation3], %s7716
          %7718 = dma.done %s7714, 256
        $region76: #{tpu_custom_call.1} parent=71 // pred_fallthru
          _
      $region72: #{tpu_custom_call.1} parent=5 // pred_fallthru
        _
    $region6: #{tpu_custom_call.1} parent=1 // loop_footer
      %s22 = sadd.s32 1, %s18
    $region7: #{tpu_custom_call.1} parent=1 // loop_footer_branch
      %17 = sbr.rel target = $region3
    $region8: #{tpu_custom_call.1} parent=1 // loop_exit
      _
    %7719 = vsyncpa [#allocation4], 1
    %s7720 = scalar_lea.sflag [#allocation4], 1
    %7721 = vsyncpa %s7720, 1

</llo_original>
